<compile_context>
chip_gen: v7x
topology: tpu7x:2x2x1
jax: 0.10.0
libtpu: 0.0.40
codegen_flags: <defaults>
</compile_context>

<pallas_src>
import math
import jax
import jax.numpy as jnp
from jax.experimental import pallas as pl
from jax.experimental.pallas import tpu as pltpu

# ----- hyper-parameters consistent with DecoderY.__init__ (small test config) -----
DEC_INP   = 3            # dec_inp_size
DEC_OUT   = 2            # dec_out_size
D_LATENT  = 16
N_LAYERS  = 2            # N
D_MODEL   = 32           # d_model
D_FF      = 64           # d_ff
H_HEADS   = 4            # h
D_MAP     = 8            # d_map_latent
D_E       = D_MODEL - D_MAP   # trg embedding width (before map-feature concat)
DK        = D_MODEL // H_HEADS
LN_EPS    = 1e-6
NEG_INF   = -1e9

_VMEM = pl.BlockSpec(memory_space=pltpu.MemorySpace.VMEM)


# ============================ fused Pallas kernel ============================

def _make_fused_kernel(B, T, S):
    """Builds the single fused forward kernel for static (B, T, S)."""
    scale = 1.0 / math.sqrt(DK)
    inv_dm1 = 1.0 / (D_MODEL - 1)

    def _ln(x, a, b):
        # Annotated-transformer LayerNorm: a*(x-mean)/(std+eps)+b, unbiased std.
        mean = jnp.mean(x, axis=-1, keepdims=True)
        xc = x - mean
        var = jnp.sum(xc * xc, axis=-1, keepdims=True) * inv_dm1
        std = jnp.sqrt(var)
        return a * xc * pl.reciprocal(std + LN_EPS, approx=True) + b

    def _attend(q2d, k2d, v2d, wo, bo, bias, Tq, Tk):
        # q2d: (B*Tq, D); k2d/v2d: (B*Tk, D); bias: (B, 1|Tq, Tk) additive mask.
        out = None
        for h in range(H_HEADS):
            sl = slice(h * DK, (h + 1) * DK)
            qh = q2d[:, sl].reshape(B, Tq, DK)
            kh = k2d[:, sl].reshape(B, Tk, DK)
            vh = v2d[:, sl].reshape(B, Tk, DK)
            s = jnp.einsum('bqd,bkd->bqk', qh, kh,
                           preferred_element_type=jnp.float32) * scale + bias
            mx = jnp.max(s, axis=-1, keepdims=True)
            e = jnp.exp(s - mx)
            p = e * pl.reciprocal(jnp.sum(e, axis=-1, keepdims=True), approx=True)
            ctx = jnp.einsum('bqk,bkd->bqd', p, vh,
                             preferred_element_type=jnp.float32).reshape(B * Tq, DK)
            contrib = jnp.dot(ctx, wo[sl, :], preferred_element_type=jnp.float32)
            out = contrib if out is None else out + contrib
        return out + bo

    def kernel(trg_ref, map_ref, x0_ref, embmap_w_ref, pool_w_ref, enc_ref, z_ref,
               smask_ref, tmask_ref,
               fc_w_ref, fc_b_ref, fln_a_ref, fln_b_ref,
               ln_a_ref, ln_b_ref,
               s_wqkv_ref, s_bqkv_ref, s_wo_ref, s_bo_ref,
               c_wq_ref, c_bq_ref, c_wkv_ref, c_bkv_ref, c_wo_ref, c_bo_ref,
               ff_w1_ref, ff_b1_ref, ff_w2_ref, ff_b2_ref,
               out_ref):
        f32 = jnp.float32

        # ---- fused map-encoder pooling + embedding + PE (lane-dense (BT, D_MODEL)) ----
        pooled = jnp.mean(map_ref[...], axis=-1)                      # (B*T, C)
        x = (jnp.dot(trg_ref[...], embmap_w_ref[...], preferred_element_type=f32)
             + jnp.dot(pooled, pool_w_ref[...], preferred_element_type=f32)
             + x0_ref[...])                                           # (B*T, D_MODEL)

        enc2d = enc_ref[...]                                          # (B*S, D_MODEL)
        z2d = z_ref[...]                                              # (B*T, D_LATENT)
        # compact masks -> additive biases, built once in-kernel (no HBM broadcast)
        tbias = jnp.where(tmask_ref[...] > 0.0, 0.0, NEG_INF)         # (B, T, T)
        sbias = jnp.where(smask_ref[...] > 0.0, 0.0, NEG_INF)         # (B, 1, S)

        for l in range(N_LAYERS):
            lna = ln_a_ref[l]                                         # (3, D_MODEL)
            lnb = ln_b_ref[l]

            # -- self-attention sublayer (fused QKV projection) --
            xn = _ln(x, lna[0:1], lnb[0:1])
            qkv = (jnp.dot(xn, s_wqkv_ref[l], preferred_element_type=f32)
                   + s_bqkv_ref[l])                                   # (B*T, 3*D_MODEL)
            x = x + _attend(qkv[:, :D_MODEL],
                            qkv[:, D_MODEL:2 * D_MODEL],
                            qkv[:, 2 * D_MODEL:],
                            s_wo_ref[l], s_bo_ref[l], tbias, T, T)

            # -- cross-attention sublayer (fused KV projection of enc_out) --
            xn = _ln(x, lna[1:2], lnb[1:2])
            q = jnp.dot(xn, c_wq_ref[l], preferred_element_type=f32) + c_bq_ref[l]
            kv = (jnp.dot(enc2d, c_wkv_ref[l], preferred_element_type=f32)
                  + c_bkv_ref[l])                                     # (B*S, 2*D_MODEL)
            x = x + _attend(q, kv[:, :D_MODEL], kv[:, D_MODEL:],
                            c_wo_ref[l], c_bo_ref[l], sbias, T, S)

            # -- concat-latent position-wise FFN (split matmul avoids concat) --
            xn = _ln(x, lna[2:3], lnb[2:3])
            w1 = ff_w1_ref[l]                                         # (D_MODEL+D_LATENT, D_FF)
            h = (jnp.dot(xn, w1[:D_MODEL], preferred_element_type=f32)
                 + jnp.dot(z2d, w1[D_MODEL:], preferred_element_type=f32)
                 + ff_b1_ref[l])
            h = jnp.maximum(h, 0.0)
            x = x + jnp.dot(h, ff_w2_ref[l], preferred_element_type=f32) + ff_b2_ref[l]

        # ---- final LayerNorm + output head, one packed store ----
        x = _ln(x, fln_a_ref[...], fln_b_ref[...])
        out_ref[...] = (jnp.dot(x, fc_w_ref[...], preferred_element_type=f32)
                        + fc_b_ref[...]).astype(out_ref.dtype)

    return kernel


# ============================ JAX wrapper ============================

def make_pe(max_len, d):
    pos = jnp.arange(max_len, dtype=jnp.float32)[:, None]
    div = jnp.exp(jnp.arange(0, d, 2, dtype=jnp.float32) * (-math.log(10000.0) / d))
    pe = jnp.zeros((max_len, d), jnp.float32)
    pe = pe.at[:, 0::2].set(jnp.sin(pos * div))
    pe = pe.at[:, 1::2].set(jnp.cos(pos * div))
    return pe


def decoder_y_forward(params, enc_out, latents, trg, src_mask, trg_mask, map_):
    f32 = jnp.float32
    B, T, _ = trg.shape
    S = enc_out.shape[1]
    C, Hm, Wm = map_.shape[2], map_.shape[3], map_.shape[4]
    BT = B * T

    # ---- trace-time weight packing (all constant-folded under jit) ----
    sqrt_de = math.sqrt(D_E)
    emb_w_s = params['emb_w'] * sqrt_de                          # (DEC_INP, D_E)
    emb_b_s = params['emb_b'] * sqrt_de                          # (D_E,)
    map_w = params['map_w']                                      # (2+C, D_MAP)

    # trg2d @ embmap_w == [ emb | pos2 @ map_w[:2] ]   (pos2 = trg[:, :2])
    embmap_w = jnp.concatenate(
        [emb_w_s,
         jnp.concatenate([map_w[:2], jnp.zeros((DEC_INP - 2, D_MAP), f32)], axis=0)],
        axis=1)                                                  # (DEC_INP, D_MODEL)
    # pooled @ pool_w == [ 0 | pooled @ map_w[2:] ]
    pool_w = jnp.concatenate([jnp.zeros((C, D_E), f32), map_w[2:]], axis=1)  # (C, D_MODEL)
    # additive term: [ emb_b*sqrt + pe[:T] | map_b ], broadcast over batch
    pe_pad = jnp.concatenate([params['pe'][:T], jnp.zeros((T, D_MAP), f32)], axis=1)
    bias0 = jnp.concatenate([emb_b_s, params['map_b']])[None, :]             # (1, D_MODEL)
    x0_add = (jnp.broadcast_to(pe_pad[None], (B, T, D_MODEL)).reshape(BT, D_MODEL)
              + bias0)

    trg2d = trg.reshape(BT, DEC_INP)
    map3 = map_.reshape(BT, C, Hm * Wm)
    enc2d = enc_out.reshape(B * S, D_MODEL)
    z2d = jnp.repeat(latents, T, axis=0)                         # (BT, D_LATENT)

    def stack(fn):
        return jnp.stack([fn(lp) for lp in params['layers']])

    ln_a = stack(lambda lp: jnp.stack([lp['ln0_a'], lp['ln1_a'], lp['ln2_a']]))
    ln_b = stack(lambda lp: jnp.stack([lp['ln0_b'], lp['ln1_b'], lp['ln2_b']]))
    s_wqkv = stack(lambda lp: jnp.concatenate(
        [lp['self_attn']['wq'], lp['self_attn']['wk'], lp['self_attn']['wv']], axis=1))
    s_bqkv = stack(lambda lp: jnp.concatenate(
        [lp['self_attn']['bq'], lp['self_attn']['bk'], lp['self_attn']['bv']])[None, :])
    s_wo = stack(lambda lp: lp['self_attn']['wo'])
    s_bo = stack(lambda lp: lp['self_attn']['bo'][None, :])
    c_wq = stack(lambda lp: lp['src_attn']['wq'])
    c_bq = stack(lambda lp: lp['src_attn']['bq'][None, :])
    c_wkv = stack(lambda lp: jnp.concatenate(
        [lp['src_attn']['wk'], lp['src_attn']['wv']], axis=1))
    c_bkv = stack(lambda lp: jnp.concatenate(
        [lp['src_attn']['bk'], lp['src_attn']['bv']])[None, :])
    c_wo = stack(lambda lp: lp['src_attn']['wo'])
    c_bo = stack(lambda lp: lp['src_attn']['bo'][None, :])
    ff_w1 = stack(lambda lp: lp['ff_w1'])
    ff_b1 = stack(lambda lp: lp['ff_b1'][None, :])
    ff_w2 = stack(lambda lp: lp['ff_w2'])
    ff_b2 = stack(lambda lp: lp['ff_b2'][None, :])

    kernel = _make_fused_kernel(B, T, S)
    operands = (trg2d, map3, x0_add, embmap_w, pool_w, enc2d, z2d,
                src_mask.astype(f32), trg_mask.astype(f32),
                params['fc_w'], params['fc_b'][None, :],
                params['final_ln_a'][None, :], params['final_ln_b'][None, :],
                ln_a, ln_b, s_wqkv, s_bqkv, s_wo, s_bo,
                c_wq, c_bq, c_wkv, c_bkv, c_wo, c_bo,
                ff_w1, ff_b1, ff_w2, ff_b2)

    stats = pl.pallas_call(
        kernel,
        out_shape=jax.ShapeDtypeStruct((BT, 2 * DEC_OUT), f32),
        in_specs=[_VMEM] * len(operands),
        out_specs=_VMEM,
    )(*operands)

    stats = stats.reshape(B, T, 2 * DEC_OUT)
    return stats[:, :, :DEC_OUT], stats[:, :, DEC_OUT:]


# ============================ parameter init ============================

def xavier(key, shape):
    fan_in, fan_out = shape
    lim = math.sqrt(6.0 / (fan_in + fan_out))
    return jax.random.uniform(key, shape, jnp.float32, -lim, lim)


def init_params(key, map_channels):
    keys = iter(jax.random.split(key, 128))
    params = {
        'emb_w': xavier(next(keys), (DEC_INP, D_E)),
        'emb_b': jnp.zeros((D_E,), jnp.float32),
        'map_w': xavier(next(keys), (2 + map_channels, D_MAP)),
        'map_b': jnp.zeros((D_MAP,), jnp.float32),
        'fc_w': xavier(next(keys), (D_MODEL, 2 * DEC_OUT)),
        'fc_b': jnp.zeros((2 * DEC_OUT,), jnp.float32),
        'final_ln_a': jnp.ones((D_MODEL,), jnp.float32),
        'final_ln_b': jnp.zeros((D_MODEL,), jnp.float32),
        'pe': make_pe(512, D_E),
        'layers': [],
    }
    for _ in range(N_LAYERS):
        def attn_params():
            return {
                'wq': xavier(next(keys), (D_MODEL, D_MODEL)), 'bq': jnp.zeros((D_MODEL,), jnp.float32),
                'wk': xavier(next(keys), (D_MODEL, D_MODEL)), 'bk': jnp.zeros((D_MODEL,), jnp.float32),
                'wv': xavier(next(keys), (D_MODEL, D_MODEL)), 'bv': jnp.zeros((D_MODEL,), jnp.float32),
                'wo': xavier(next(keys), (D_MODEL, D_MODEL)), 'bo': jnp.zeros((D_MODEL,), jnp.float32),
            }
        layer = {
            'self_attn': attn_params(),
            'src_attn': attn_params(),
            'ff_w1': xavier(next(keys), (D_MODEL + D_LATENT, D_FF)),
            'ff_b1': jnp.zeros((D_FF,), jnp.float32),
            'ff_w2': xavier(next(keys), (D_FF, D_MODEL)),
            'ff_b2': jnp.zeros((D_MODEL,), jnp.float32),
            'ln0_a': jnp.ones((D_MODEL,), jnp.float32), 'ln0_b': jnp.zeros((D_MODEL,), jnp.float32),
            'ln1_a': jnp.ones((D_MODEL,), jnp.float32), 'ln1_b': jnp.zeros((D_MODEL,), jnp.float32),
            'ln2_a': jnp.ones((D_MODEL,), jnp.float32), 'ln2_b': jnp.zeros((D_MODEL,), jnp.float32),
        }
        params['layers'].append(layer)
    return params


# ============================ main ============================

if __name__ == "__main__":
    key = jax.random.PRNGKey(0)
    kp, k1, k2, k3, k4 = jax.random.split(key, 5)

    B, T, S = 2, 8, 8
    C, Hm, Wm = 3, 16, 16

    params = init_params(kp, C)

    enc_out = jax.random.normal(k1, (B, S, D_MODEL), jnp.float32)
    latents = jax.random.normal(k2, (B, D_LATENT), jnp.float32)
    trg     = jax.random.normal(k3, (B, T, DEC_INP), jnp.float32)
    map_    = jax.random.normal(k4, (B, T, C, Hm, Wm), jnp.float32)   # NCHW per step
    src_mask = jnp.ones((B, 1, S), jnp.float32)
    trg_mask = jnp.broadcast_to(jnp.tril(jnp.ones((T, T), jnp.float32)), (B, T, T))

    fwd = jax.jit(decoder_y_forward)
    mu, logvar = fwd(params, enc_out, latents, trg, src_mask, trg_mask, map_)
    jax.block_until_ready((mu, logvar))
    assert mu.shape == (B, T, DEC_OUT) and logvar.shape == (B, T, DEC_OUT)
    assert bool(jnp.all(jnp.isfinite(mu))) and bool(jnp.all(jnp.isfinite(logvar)))
    print("KERNEL_OK")
</pallas_src>

<mosaic_0001>
module attributes {stable_mosaic.version = 11 : i64} {
  func.func @kernel(%arg0: memref<16x3xf32, #tpu.memory_space<vmem>>, %arg1: memref<16x3x256xf32, #tpu.memory_space<vmem>>, %arg2: memref<16x32xf32, #tpu.memory_space<vmem>>, %arg3: memref<3x32xf32, #tpu.memory_space<vmem>>, %arg4: memref<3x32xf32, #tpu.memory_space<vmem>>, %arg5: memref<16x32xf32, #tpu.memory_space<vmem>>, %arg6: memref<16x16xf32, #tpu.memory_space<vmem>>, %arg7: memref<2x1x8xf32, #tpu.memory_space<vmem>>, %arg8: memref<2x8x8xf32, #tpu.memory_space<vmem>>, %arg9: memref<32x4xf32, #tpu.memory_space<vmem>>, %arg10: memref<1x4xf32, #tpu.memory_space<vmem>>, %arg11: memref<1x32xf32, #tpu.memory_space<vmem>>, %arg12: memref<1x32xf32, #tpu.memory_space<vmem>>, %arg13: memref<2x3x32xf32, #tpu.memory_space<vmem>>, %arg14: memref<2x3x32xf32, #tpu.memory_space<vmem>>, %arg15: memref<2x32x96xf32, #tpu.memory_space<vmem>>, %arg16: memref<2x1x96xf32, #tpu.memory_space<vmem>>, %arg17: memref<2x32x32xf32, #tpu.memory_space<vmem>>, %arg18: memref<2x1x32xf32, #tpu.memory_space<vmem>>, %arg19: memref<2x32x32xf32, #tpu.memory_space<vmem>>, %arg20: memref<2x1x32xf32, #tpu.memory_space<vmem>>, %arg21: memref<2x32x64xf32, #tpu.memory_space<vmem>>, %arg22: memref<2x1x64xf32, #tpu.memory_space<vmem>>, %arg23: memref<2x32x32xf32, #tpu.memory_space<vmem>>, %arg24: memref<2x1x32xf32, #tpu.memory_space<vmem>>, %arg25: memref<2x48x64xf32, #tpu.memory_space<vmem>>, %arg26: memref<2x1x64xf32, #tpu.memory_space<vmem>>, %arg27: memref<2x64x32xf32, #tpu.memory_space<vmem>>, %arg28: memref<2x1x32xf32, #tpu.memory_space<vmem>>, %arg29: memref<16x4xf32, #tpu.memory_space<vmem>>) attributes {dimension_semantics = [], scalar_prefetch = 0 : i64, scratch_operands = 0 : i64, tpu.core_type = #tpu.core_type<tc>} {
    %c0 = arith.constant 0 : index
    %c0_0 = arith.constant 0 : index
    %c0_1 = arith.constant 0 : index
    %0 = vector.load %arg1[%c0, %c0_0, %c0_1] : memref<16x3x256xf32, #tpu.memory_space<vmem>>, vector<16x3x256xf32>
    %cst = arith.constant dense<0.000000e+00> : vector<16x3xf32>
    %1 = vector.multi_reduction <add>, %0, %cst [2] : vector<16x3x256xf32> to vector<16x3xf32>
    %cst_2 = arith.constant 2.560000e+02 : f32
    %2 = vector.broadcast %cst_2 : f32 to vector<16x3xf32>
    %3 = arith.divf %1, %2 : vector<16x3xf32>
    %c0_3 = arith.constant 0 : index
    %c0_4 = arith.constant 0 : index
    %4 = vector.load %arg0[%c0_3, %c0_4] : memref<16x3xf32, #tpu.memory_space<vmem>>, vector<16x3xf32>
    %c0_5 = arith.constant 0 : index
    %c0_6 = arith.constant 0 : index
    %5 = vector.load %arg3[%c0_5, %c0_6] : memref<3x32xf32, #tpu.memory_space<vmem>>, vector<3x32xf32>
    %cst_7 = arith.constant dense<0.000000e+00> : vector<16x32xf32>
    %6 = tpu.matmul %4, %5, %cst_7 {dimension_numbers = #tpu.dot_dimension_numbers<[1], [0], [0], [1], [0, 0, 1, 1], [], []>} : vector<16x3xf32>, vector<3x32xf32>, vector<16x32xf32> -> vector<16x32xf32>
    %c0_8 = arith.constant 0 : index
    %c0_9 = arith.constant 0 : index
    %7 = vector.load %arg4[%c0_8, %c0_9] : memref<3x32xf32, #tpu.memory_space<vmem>>, vector<3x32xf32>
    %cst_10 = arith.constant dense<0.000000e+00> : vector<16x32xf32>
    %8 = tpu.matmul %3, %7, %cst_10 {dimension_numbers = #tpu.dot_dimension_numbers<[1], [0], [0], [1], [0, 0, 1, 1], [], []>} : vector<16x3xf32>, vector<3x32xf32>, vector<16x32xf32> -> vector<16x32xf32>
    %9 = arith.addf %6, %8 : vector<16x32xf32>
    %c0_11 = arith.constant 0 : index
    %c0_12 = arith.constant 0 : index
    %10 = vector.load %arg2[%c0_11, %c0_12] : memref<16x32xf32, #tpu.memory_space<vmem>>, vector<16x32xf32>
    %11 = arith.addf %9, %10 : vector<16x32xf32>
    %c0_13 = arith.constant 0 : index
    %c0_14 = arith.constant 0 : index
    %12 = vector.load %arg5[%c0_13, %c0_14] : memref<16x32xf32, #tpu.memory_space<vmem>>, vector<16x32xf32>
    %c0_15 = arith.constant 0 : index
    %c0_16 = arith.constant 0 : index
    %13 = vector.load %arg6[%c0_15, %c0_16] : memref<16x16xf32, #tpu.memory_space<vmem>>, vector<16x16xf32>
    %c0_17 = arith.constant 0 : index
    %c0_18 = arith.constant 0 : index
    %c0_19 = arith.constant 0 : index
    %14 = vector.load %arg8[%c0_17, %c0_18, %c0_19] : memref<2x8x8xf32, #tpu.memory_space<vmem>>, vector<2x8x8xf32>
    %cst_20 = arith.constant 0.000000e+00 : f32
    %15 = vector.broadcast %cst_20 : f32 to vector<2x8x8xf32>
    %16 = arith.cmpf ogt, %14, %15 : vector<2x8x8xf32>
    %cst_21 = arith.constant 0.000000e+00 : f32
    %cst_22 = arith.constant -1.000000e+09 : f32
    %17 = vector.broadcast %cst_21 : f32 to vector<2x8x8xf32>
    %18 = vector.broadcast %cst_22 : f32 to vector<2x8x8xf32>
    %19 = arith.select %16, %17, %18 : vector<2x8x8xi1>, vector<2x8x8xf32>
    %c0_23 = arith.constant 0 : index
    %c0_24 = arith.constant 0 : index
    %c0_25 = arith.constant 0 : index
    %20 = vector.load %arg7[%c0_23, %c0_24, %c0_25] : memref<2x1x8xf32, #tpu.memory_space<vmem>>, vector<2x1x8xf32>
    %cst_26 = arith.constant 0.000000e+00 : f32
    %21 = vector.broadcast %cst_26 : f32 to vector<2x1x8xf32>
    %22 = arith.cmpf ogt, %20, %21 : vector<2x1x8xf32>
    %cst_27 = arith.constant 0.000000e+00 : f32
    %cst_28 = arith.constant -1.000000e+09 : f32
    %23 = vector.broadcast %cst_27 : f32 to vector<2x1x8xf32>
    %24 = vector.broadcast %cst_28 : f32 to vector<2x1x8xf32>
    %25 = arith.select %22, %23, %24 : vector<2x1x8xi1>, vector<2x1x8xf32>
    %c0_29 = arith.constant 0 : index
    %c0_30 = arith.constant 0 : index
    %c0_31 = arith.constant 0 : index
    %26 = vector.load %arg13[%c0_29, %c0_30, %c0_31] : memref<2x3x32xf32, #tpu.memory_space<vmem>>, vector<1x3x32xf32>
    %27 = vector.shape_cast %26 : vector<1x3x32xf32> to vector<3x32xf32>
    %c0_32 = arith.constant 0 : index
    %c0_33 = arith.constant 0 : index
    %c0_34 = arith.constant 0 : index
    %28 = vector.load %arg14[%c0_32, %c0_33, %c0_34] : memref<2x3x32xf32, #tpu.memory_space<vmem>>, vector<1x3x32xf32>
    %29 = vector.shape_cast %28 : vector<1x3x32xf32> to vector<3x32xf32>
    %30 = vector.extract_strided_slice %27 {offsets = [0, 0], sizes = [1, 32], strides = [1, 1]} : vector<3x32xf32> to vector<1x32xf32>
    %31 = vector.extract_strided_slice %29 {offsets = [0, 0], sizes = [1, 32], strides = [1, 1]} : vector<3x32xf32> to vector<1x32xf32>
    %cst_35 = arith.constant dense<0.000000e+00> : vector<16xf32>
    %32 = vector.multi_reduction <add>, %11, %cst_35 [1] : vector<16x32xf32> to vector<16xf32>
    %33 = vector.shape_cast %32 : vector<16xf32> to vector<16x1xf32>
    %cst_36 = arith.constant 3.200000e+01 : f32
    %34 = vector.broadcast %cst_36 : f32 to vector<16x1xf32>
    %35 = arith.divf %33, %34 : vector<16x1xf32>
    %36 = vector.broadcast %35 : vector<16x1xf32> to vector<16x32xf32>
    %37 = arith.subf %11, %36 : vector<16x32xf32>
    %38 = arith.mulf %37, %37 : vector<16x32xf32>
    %cst_37 = arith.constant dense<0.000000e+00> : vector<16xf32>
    %39 = vector.multi_reduction <add>, %38, %cst_37 [1] : vector<16x32xf32> to vector<16xf32>
    %40 = vector.shape_cast %39 : vector<16xf32> to vector<16x1xf32>
    %cst_38 = arith.constant 0.0322580636 : f32
    %41 = vector.broadcast %cst_38 : f32 to vector<16x1xf32>
    %42 = arith.mulf %40, %41 : vector<16x1xf32>
    %43 = math.sqrt %42 : vector<16x1xf32>
    %44 = vector.broadcast %30 : vector<1x32xf32> to vector<16x32xf32>
    %45 = arith.mulf %44, %37 : vector<16x32xf32>
    %cst_39 = arith.constant 9.99999997E-7 : f32
    %46 = vector.broadcast %cst_39 : f32 to vector<16x1xf32>
    %47 = arith.addf %43, %46 : vector<16x1xf32>
    %48 = tpu.reciprocal %47 {approx = true} : vector<16x1xf32> -> vector<16x1xf32>
    %49 = vector.broadcast %48 : vector<16x1xf32> to vector<16x32xf32>
    %50 = arith.mulf %45, %49 : vector<16x32xf32>
    %51 = vector.broadcast %31 : vector<1x32xf32> to vector<16x32xf32>
    %52 = arith.addf %50, %51 : vector<16x32xf32>
    %c0_40 = arith.constant 0 : index
    %c0_41 = arith.constant 0 : index
    %c0_42 = arith.constant 0 : index
    %53 = vector.load %arg15[%c0_40, %c0_41, %c0_42] : memref<2x32x96xf32, #tpu.memory_space<vmem>>, vector<1x32x96xf32>
    %54 = vector.shape_cast %53 : vector<1x32x96xf32> to vector<32x96xf32>
    %cst_43 = arith.constant dense<0.000000e+00> : vector<16x96xf32>
    %55 = tpu.matmul %52, %54, %cst_43 {dimension_numbers = #tpu.dot_dimension_numbers<[1], [0], [0], [1], [0, 0, 1, 1], [], []>} : vector<16x32xf32>, vector<32x96xf32>, vector<16x96xf32> -> vector<16x96xf32>
    %c0_44 = arith.constant 0 : index
    %c0_45 = arith.constant 0 : index
    %c0_46 = arith.constant 0 : index
    %56 = vector.load %arg16[%c0_44, %c0_45, %c0_46] : memref<2x1x96xf32, #tpu.memory_space<vmem>>, vector<1x1x96xf32>
    %57 = vector.shape_cast %56 : vector<1x1x96xf32> to vector<1x96xf32>
    %58 = vector.broadcast %57 : vector<1x96xf32> to vector<16x96xf32>
    %59 = arith.addf %55, %58 : vector<16x96xf32>
    %60 = vector.extract_strided_slice %59 {offsets = [0, 0], sizes = [16, 32], strides = [1, 1]} : vector<16x96xf32> to vector<16x32xf32>
    %61 = vector.extract_strided_slice %59 {offsets = [0, 32], sizes = [16, 32], strides = [1, 1]} : vector<16x96xf32> to vector<16x32xf32>
    %62 = vector.extract_strided_slice %59 {offsets = [0, 64], sizes = [16, 32], strides = [1, 1]} : vector<16x96xf32> to vector<16x32xf32>
    %c0_47 = arith.constant 0 : index
    %c0_48 = arith.constant 0 : index
    %c0_49 = arith.constant 0 : index
    %63 = vector.load %arg17[%c0_47, %c0_48, %c0_49] : memref<2x32x32xf32, #tpu.memory_space<vmem>>, vector<1x32x32xf32>
    %64 = vector.shape_cast %63 : vector<1x32x32xf32> to vector<32x32xf32>
    %c0_50 = arith.constant 0 : index
    %c0_51 = arith.constant 0 : index
    %c0_52 = arith.constant 0 : index
    %65 = vector.load %arg18[%c0_50, %c0_51, %c0_52] : memref<2x1x32xf32, #tpu.memory_space<vmem>>, vector<1x1x32xf32>
    %66 = vector.shape_cast %65 : vector<1x1x32xf32> to vector<1x32xf32>
    %67 = vector.extract_strided_slice %60 {offsets = [0, 0], sizes = [16, 8], strides = [1, 1]} : vector<16x32xf32> to vector<16x8xf32>
    %68 = vector.shape_cast %67 : vector<16x8xf32> to vector<2x8x8xf32>
    %69 = vector.extract_strided_slice %61 {offsets = [0, 0], sizes = [16, 8], strides = [1, 1]} : vector<16x32xf32> to vector<16x8xf32>
    %70 = vector.shape_cast %69 : vector<16x8xf32> to vector<2x8x8xf32>
    %71 = vector.extract_strided_slice %62 {offsets = [0, 0], sizes = [16, 8], strides = [1, 1]} : vector<16x32xf32> to vector<16x8xf32>
    %72 = vector.shape_cast %71 : vector<16x8xf32> to vector<2x8x8xf32>
    "tpu.trace_start"() <{level = 10 : i32, message = "bqd,bkd->bqk"}> : () -> ()
    %cst_53 = arith.constant dense<0.000000e+00> : vector<2x8x8xf32>
    %73 = tpu.matmul %68, %70, %cst_53 {dimension_numbers = #tpu.dot_dimension_numbers<[2], [2], [1], [1], [0, 0, 0, 1, 1, 1], [0], [0]>} : vector<2x8x8xf32>, vector<2x8x8xf32>, vector<2x8x8xf32> -> vector<2x8x8xf32>
    "tpu.trace_stop"() : () -> ()
    %cst_54 = arith.constant 0.353553385 : f32
    %74 = vector.broadcast %cst_54 : f32 to vector<2x8x8xf32>
    %75 = arith.mulf %73, %74 : vector<2x8x8xf32>
    %76 = arith.addf %75, %19 : vector<2x8x8xf32>
    %cst_55 = arith.constant dense<0xFF800000> : vector<2x8xf32>
    %77 = vector.multi_reduction <maximumf>, %76, %cst_55 [2] : vector<2x8x8xf32> to vector<2x8xf32>
    %78 = vector.shape_cast %77 : vector<2x8xf32> to vector<2x8x1xf32>
    %79 = vector.broadcast %78 : vector<2x8x1xf32> to vector<2x8x8xf32>
    %80 = arith.subf %76, %79 : vector<2x8x8xf32>
    %81 = math.exp %80 : vector<2x8x8xf32>
    %cst_56 = arith.constant dense<0.000000e+00> : vector<2x8xf32>
    %82 = vector.multi_reduction <add>, %81, %cst_56 [2] : vector<2x8x8xf32> to vector<2x8xf32>
    %83 = vector.shape_cast %82 : vector<2x8xf32> to vector<2x8x1xf32>
    %84 = tpu.reciprocal %83 {approx = true} : vector<2x8x1xf32> -> vector<2x8x1xf32>
    %85 = vector.broadcast %84 : vector<2x8x1xf32> to vector<2x8x8xf32>
    %86 = arith.mulf %81, %85 : vector<2x8x8xf32>
    "tpu.trace_start"() <{level = 10 : i32, message = "bqk,bkd->bqd"}> : () -> ()
    %cst_57 = arith.constant dense<0.000000e+00> : vector<2x8x8xf32>
    %87 = tpu.matmul %86, %72, %cst_57 {dimension_numbers = #tpu.dot_dimension_numbers<[2], [1], [1], [2], [0, 0, 0, 1, 1, 2], [0], [0]>} : vector<2x8x8xf32>, vector<2x8x8xf32>, vector<2x8x8xf32> -> vector<2x8x8xf32>
    "tpu.trace_stop"() : () -> ()
    %88 = vector.shape_cast %87 : vector<2x8x8xf32> to vector<16x8xf32>
    %89 = vector.extract_strided_slice %64 {offsets = [0, 0], sizes = [8, 32], strides = [1, 1]} : vector<32x32xf32> to vector<8x32xf32>
    %cst_58 = arith.constant dense<0.000000e+00> : vector<16x32xf32>
    %90 = tpu.matmul %88, %89, %cst_58 {dimension_numbers = #tpu.dot_dimension_numbers<[1], [0], [0], [1], [0, 0, 1, 1], [], []>} : vector<16x8xf32>, vector<8x32xf32>, vector<16x32xf32> -> vector<16x32xf32>
    %91 = vector.extract_strided_slice %60 {offsets = [0, 8], sizes = [16, 8], strides = [1, 1]} : vector<16x32xf32> to vector<16x8xf32>
    %92 = vector.shape_cast %91 : vector<16x8xf32> to vector<2x8x8xf32>
    %93 = vector.extract_strided_slice %61 {offsets = [0, 8], sizes = [16, 8], strides = [1, 1]} : vector<16x32xf32> to vector<16x8xf32>
    %94 = vector.shape_cast %93 : vector<16x8xf32> to vector<2x8x8xf32>
    %95 = vector.extract_strided_slice %62 {offsets = [0, 8], sizes = [16, 8], strides = [1, 1]} : vector<16x32xf32> to vector<16x8xf32>
    %96 = vector.shape_cast %95 : vector<16x8xf32> to vector<2x8x8xf32>
    "tpu.trace_start"() <{level = 10 : i32, message = "bqd,bkd->bqk"}> : () -> ()
    %cst_59 = arith.constant dense<0.000000e+00> : vector<2x8x8xf32>
    %97 = tpu.matmul %92, %94, %cst_59 {dimension_numbers = #tpu.dot_dimension_numbers<[2], [2], [1], [1], [0, 0, 0, 1, 1, 1], [0], [0]>} : vector<2x8x8xf32>, vector<2x8x8xf32>, vector<2x8x8xf32> -> vector<2x8x8xf32>
    "tpu.trace_stop"() : () -> ()
    %cst_60 = arith.constant 0.353553385 : f32
    %98 = vector.broadcast %cst_60 : f32 to vector<2x8x8xf32>
    %99 = arith.mulf %97, %98 : vector<2x8x8xf32>
    %100 = arith.addf %99, %19 : vector<2x8x8xf32>
    %cst_61 = arith.constant dense<0xFF800000> : vector<2x8xf32>
    %101 = vector.multi_reduction <maximumf>, %100, %cst_61 [2] : vector<2x8x8xf32> to vector<2x8xf32>
    %102 = vector.shape_cast %101 : vector<2x8xf32> to vector<2x8x1xf32>
    %103 = vector.broadcast %102 : vector<2x8x1xf32> to vector<2x8x8xf32>
    %104 = arith.subf %100, %103 : vector<2x8x8xf32>
    %105 = math.exp %104 : vector<2x8x8xf32>
    %cst_62 = arith.constant dense<0.000000e+00> : vector<2x8xf32>
    %106 = vector.multi_reduction <add>, %105, %cst_62 [2] : vector<2x8x8xf32> to vector<2x8xf32>
    %107 = vector.shape_cast %106 : vector<2x8xf32> to vector<2x8x1xf32>
    %108 = tpu.reciprocal %107 {approx = true} : vector<2x8x1xf32> -> vector<2x8x1xf32>
    %109 = vector.broadcast %108 : vector<2x8x1xf32> to vector<2x8x8xf32>
    %110 = arith.mulf %105, %109 : vector<2x8x8xf32>
    "tpu.trace_start"() <{level = 10 : i32, message = "bqk,bkd->bqd"}> : () -> ()
    %cst_63 = arith.constant dense<0.000000e+00> : vector<2x8x8xf32>
    %111 = tpu.matmul %110, %96, %cst_63 {dimension_numbers = #tpu.dot_dimension_numbers<[2], [1], [1], [2], [0, 0, 0, 1, 1, 2], [0], [0]>} : vector<2x8x8xf32>, vector<2x8x8xf32>, vector<2x8x8xf32> -> vector<2x8x8xf32>
    "tpu.trace_stop"() : () -> ()
    %112 = vector.shape_cast %111 : vector<2x8x8xf32> to vector<16x8xf32>
    %113 = vector.extract_strided_slice %64 {offsets = [8, 0], sizes = [8, 32], strides = [1, 1]} : vector<32x32xf32> to vector<8x32xf32>
    %cst_64 = arith.constant dense<0.000000e+00> : vector<16x32xf32>
    %114 = tpu.matmul %112, %113, %cst_64 {dimension_numbers = #tpu.dot_dimension_numbers<[1], [0], [0], [1], [0, 0, 1, 1], [], []>} : vector<16x8xf32>, vector<8x32xf32>, vector<16x32xf32> -> vector<16x32xf32>
    %115 = arith.addf %90, %114 : vector<16x32xf32>
    %116 = vector.extract_strided_slice %60 {offsets = [0, 16], sizes = [16, 8], strides = [1, 1]} : vector<16x32xf32> to vector<16x8xf32>
    %117 = vector.shape_cast %116 : vector<16x8xf32> to vector<2x8x8xf32>
    %118 = vector.extract_strided_slice %61 {offsets = [0, 16], sizes = [16, 8], strides = [1, 1]} : vector<16x32xf32> to vector<16x8xf32>
    %119 = vector.shape_cast %118 : vector<16x8xf32> to vector<2x8x8xf32>
    %120 = vector.extract_strided_slice %62 {offsets = [0, 16], sizes = [16, 8], strides = [1, 1]} : vector<16x32xf32> to vector<16x8xf32>
    %121 = vector.shape_cast %120 : vector<16x8xf32> to vector<2x8x8xf32>
    "tpu.trace_start"() <{level = 10 : i32, message = "bqd,bkd->bqk"}> : () -> ()
    %cst_65 = arith.constant dense<0.000000e+00> : vector<2x8x8xf32>
    %122 = tpu.matmul %117, %119, %cst_65 {dimension_numbers = #tpu.dot_dimension_numbers<[2], [2], [1], [1], [0, 0, 0, 1, 1, 1], [0], [0]>} : vector<2x8x8xf32>, vector<2x8x8xf32>, vector<2x8x8xf32> -> vector<2x8x8xf32>
    "tpu.trace_stop"() : () -> ()
    %cst_66 = arith.constant 0.353553385 : f32
    %123 = vector.broadcast %cst_66 : f32 to vector<2x8x8xf32>
    %124 = arith.mulf %122, %123 : vector<2x8x8xf32>
    %125 = arith.addf %124, %19 : vector<2x8x8xf32>
    %cst_67 = arith.constant dense<0xFF800000> : vector<2x8xf32>
    %126 = vector.multi_reduction <maximumf>, %125, %cst_67 [2] : vector<2x8x8xf32> to vector<2x8xf32>
    %127 = vector.shape_cast %126 : vector<2x8xf32> to vector<2x8x1xf32>
    %128 = vector.broadcast %127 : vector<2x8x1xf32> to vector<2x8x8xf32>
    %129 = arith.subf %125, %128 : vector<2x8x8xf32>
    %130 = math.exp %129 : vector<2x8x8xf32>
    %cst_68 = arith.constant dense<0.000000e+00> : vector<2x8xf32>
    %131 = vector.multi_reduction <add>, %130, %cst_68 [2] : vector<2x8x8xf32> to vector<2x8xf32>
    %132 = vector.shape_cast %131 : vector<2x8xf32> to vector<2x8x1xf32>
    %133 = tpu.reciprocal %132 {approx = true} : vector<2x8x1xf32> -> vector<2x8x1xf32>
    %134 = vector.broadcast %133 : vector<2x8x1xf32> to vector<2x8x8xf32>
    %135 = arith.mulf %130, %134 : vector<2x8x8xf32>
    "tpu.trace_start"() <{level = 10 : i32, message = "bqk,bkd->bqd"}> : () -> ()
    %cst_69 = arith.constant dense<0.000000e+00> : vector<2x8x8xf32>
    %136 = tpu.matmul %135, %121, %cst_69 {dimension_numbers = #tpu.dot_dimension_numbers<[2], [1], [1], [2], [0, 0, 0, 1, 1, 2], [0], [0]>} : vector<2x8x8xf32>, vector<2x8x8xf32>, vector<2x8x8xf32> -> vector<2x8x8xf32>
    "tpu.trace_stop"() : () -> ()
    %137 = vector.shape_cast %136 : vector<2x8x8xf32> to vector<16x8xf32>
    %138 = vector.extract_strided_slice %64 {offsets = [16, 0], sizes = [8, 32], strides = [1, 1]} : vector<32x32xf32> to vector<8x32xf32>
    %cst_70 = arith.constant dense<0.000000e+00> : vector<16x32xf32>
    %139 = tpu.matmul %137, %138, %cst_70 {dimension_numbers = #tpu.dot_dimension_numbers<[1], [0], [0], [1], [0, 0, 1, 1], [], []>} : vector<16x8xf32>, vector<8x32xf32>, vector<16x32xf32> -> vector<16x32xf32>
    %140 = arith.addf %115, %139 : vector<16x32xf32>
    %141 = vector.extract_strided_slice %60 {offsets = [0, 24], sizes = [16, 8], strides = [1, 1]} : vector<16x32xf32> to vector<16x8xf32>
    %142 = vector.shape_cast %141 : vector<16x8xf32> to vector<2x8x8xf32>
    %143 = vector.extract_strided_slice %61 {offsets = [0, 24], sizes = [16, 8], strides = [1, 1]} : vector<16x32xf32> to vector<16x8xf32>
    %144 = vector.shape_cast %143 : vector<16x8xf32> to vector<2x8x8xf32>
    %145 = vector.extract_strided_slice %62 {offsets = [0, 24], sizes = [16, 8], strides = [1, 1]} : vector<16x32xf32> to vector<16x8xf32>
    %146 = vector.shape_cast %145 : vector<16x8xf32> to vector<2x8x8xf32>
    "tpu.trace_start"() <{level = 10 : i32, message = "bqd,bkd->bqk"}> : () -> ()
    %cst_71 = arith.constant dense<0.000000e+00> : vector<2x8x8xf32>
    %147 = tpu.matmul %142, %144, %cst_71 {dimension_numbers = #tpu.dot_dimension_numbers<[2], [2], [1], [1], [0, 0, 0, 1, 1, 1], [0], [0]>} : vector<2x8x8xf32>, vector<2x8x8xf32>, vector<2x8x8xf32> -> vector<2x8x8xf32>
    "tpu.trace_stop"() : () -> ()
    %cst_72 = arith.constant 0.353553385 : f32
    %148 = vector.broadcast %cst_72 : f32 to vector<2x8x8xf32>
    %149 = arith.mulf %147, %148 : vector<2x8x8xf32>
    %150 = arith.addf %149, %19 : vector<2x8x8xf32>
    %cst_73 = arith.constant dense<0xFF800000> : vector<2x8xf32>
    %151 = vector.multi_reduction <maximumf>, %150, %cst_73 [2] : vector<2x8x8xf32> to vector<2x8xf32>
    %152 = vector.shape_cast %151 : vector<2x8xf32> to vector<2x8x1xf32>
    %153 = vector.broadcast %152 : vector<2x8x1xf32> to vector<2x8x8xf32>
    %154 = arith.subf %150, %153 : vector<2x8x8xf32>
    %155 = math.exp %154 : vector<2x8x8xf32>
    %cst_74 = arith.constant dense<0.000000e+00> : vector<2x8xf32>
    %156 = vector.multi_reduction <add>, %155, %cst_74 [2] : vector<2x8x8xf32> to vector<2x8xf32>
    %157 = vector.shape_cast %156 : vector<2x8xf32> to vector<2x8x1xf32>
    %158 = tpu.reciprocal %157 {approx = true} : vector<2x8x1xf32> -> vector<2x8x1xf32>
    %159 = vector.broadcast %158 : vector<2x8x1xf32> to vector<2x8x8xf32>
    %160 = arith.mulf %155, %159 : vector<2x8x8xf32>
    "tpu.trace_start"() <{level = 10 : i32, message = "bqk,bkd->bqd"}> : () -> ()
    %cst_75 = arith.constant dense<0.000000e+00> : vector<2x8x8xf32>
    %161 = tpu.matmul %160, %146, %cst_75 {dimension_numbers = #tpu.dot_dimension_numbers<[2], [1], [1], [2], [0, 0, 0, 1, 1, 2], [0], [0]>} : vector<2x8x8xf32>, vector<2x8x8xf32>, vector<2x8x8xf32> -> vector<2x8x8xf32>
    "tpu.trace_stop"() : () -> ()
    %162 = vector.shape_cast %161 : vector<2x8x8xf32> to vector<16x8xf32>
    %163 = vector.extract_strided_slice %64 {offsets = [24, 0], sizes = [8, 32], strides = [1, 1]} : vector<32x32xf32> to vector<8x32xf32>
    %cst_76 = arith.constant dense<0.000000e+00> : vector<16x32xf32>
    %164 = tpu.matmul %162, %163, %cst_76 {dimension_numbers = #tpu.dot_dimension_numbers<[1], [0], [0], [1], [0, 0, 1, 1], [], []>} : vector<16x8xf32>, vector<8x32xf32>, vector<16x32xf32> -> vector<16x32xf32>
    %165 = arith.addf %140, %164 : vector<16x32xf32>
    %166 = vector.broadcast %66 : vector<1x32xf32> to vector<16x32xf32>
    %167 = arith.addf %165, %166 : vector<16x32xf32>
    %168 = arith.addf %11, %167 : vector<16x32xf32>
    %169 = vector.extract_strided_slice %27 {offsets = [1, 0], sizes = [1, 32], strides = [1, 1]} : vector<3x32xf32> to vector<1x32xf32>
    %170 = vector.extract_strided_slice %29 {offsets = [1, 0], sizes = [1, 32], strides = [1, 1]} : vector<3x32xf32> to vector<1x32xf32>
    %cst_77 = arith.constant dense<0.000000e+00> : vector<16xf32>
    %171 = vector.multi_reduction <add>, %168, %cst_77 [1] : vector<16x32xf32> to vector<16xf32>
    %172 = vector.shape_cast %171 : vector<16xf32> to vector<16x1xf32>
    %cst_78 = arith.constant 3.200000e+01 : f32
    %173 = vector.broadcast %cst_78 : f32 to vector<16x1xf32>
    %174 = arith.divf %172, %173 : vector<16x1xf32>
    %175 = vector.broadcast %174 : vector<16x1xf32> to vector<16x32xf32>
    %176 = arith.subf %168, %175 : vector<16x32xf32>
    %177 = arith.mulf %176, %176 : vector<16x32xf32>
    %cst_79 = arith.constant dense<0.000000e+00> : vector<16xf32>
    %178 = vector.multi_reduction <add>, %177, %cst_79 [1] : vector<16x32xf32> to vector<16xf32>
    %179 = vector.shape_cast %178 : vector<16xf32> to vector<16x1xf32>
    %cst_80 = arith.constant 0.0322580636 : f32
    %180 = vector.broadcast %cst_80 : f32 to vector<16x1xf32>
    %181 = arith.mulf %179, %180 : vector<16x1xf32>
    %182 = math.sqrt %181 : vector<16x1xf32>
    %183 = vector.broadcast %169 : vector<1x32xf32> to vector<16x32xf32>
    %184 = arith.mulf %183, %176 : vector<16x32xf32>
    %cst_81 = arith.constant 9.99999997E-7 : f32
    %185 = vector.broadcast %cst_81 : f32 to vector<16x1xf32>
    %186 = arith.addf %182, %185 : vector<16x1xf32>
    %187 = tpu.reciprocal %186 {approx = true} : vector<16x1xf32> -> vector<16x1xf32>
    %188 = vector.broadcast %187 : vector<16x1xf32> to vector<16x32xf32>
    %189 = arith.mulf %184, %188 : vector<16x32xf32>
    %190 = vector.broadcast %170 : vector<1x32xf32> to vector<16x32xf32>
    %191 = arith.addf %189, %190 : vector<16x32xf32>
    %c0_82 = arith.constant 0 : index
    %c0_83 = arith.constant 0 : index
    %c0_84 = arith.constant 0 : index
    %192 = vector.load %arg19[%c0_82, %c0_83, %c0_84] : memref<2x32x32xf32, #tpu.memory_space<vmem>>, vector<1x32x32xf32>
    %193 = vector.shape_cast %192 : vector<1x32x32xf32> to vector<32x32xf32>
    %cst_85 = arith.constant dense<0.000000e+00> : vector<16x32xf32>
    %194 = tpu.matmul %191, %193, %cst_85 {dimension_numbers = #tpu.dot_dimension_numbers<[1], [0], [0], [1], [0, 0, 1, 1], [], []>} : vector<16x32xf32>, vector<32x32xf32>, vector<16x32xf32> -> vector<16x32xf32>
    %c0_86 = arith.constant 0 : index
    %c0_87 = arith.constant 0 : index
    %c0_88 = arith.constant 0 : index
    %195 = vector.load %arg20[%c0_86, %c0_87, %c0_88] : memref<2x1x32xf32, #tpu.memory_space<vmem>>, vector<1x1x32xf32>
    %196 = vector.shape_cast %195 : vector<1x1x32xf32> to vector<1x32xf32>
    %197 = vector.broadcast %196 : vector<1x32xf32> to vector<16x32xf32>
    %198 = arith.addf %194, %197 : vector<16x32xf32>
    %c0_89 = arith.constant 0 : index
    %c0_90 = arith.constant 0 : index
    %c0_91 = arith.constant 0 : index
    %199 = vector.load %arg21[%c0_89, %c0_90, %c0_91] : memref<2x32x64xf32, #tpu.memory_space<vmem>>, vector<1x32x64xf32>
    %200 = vector.shape_cast %199 : vector<1x32x64xf32> to vector<32x64xf32>
    %cst_92 = arith.constant dense<0.000000e+00> : vector<16x64xf32>
    %201 = tpu.matmul %12, %200, %cst_92 {dimension_numbers = #tpu.dot_dimension_numbers<[1], [0], [0], [1], [0, 0, 1, 1], [], []>} : vector<16x32xf32>, vector<32x64xf32>, vector<16x64xf32> -> vector<16x64xf32>
    %c0_93 = arith.constant 0 : index
    %c0_94 = arith.constant 0 : index
    %c0_95 = arith.constant 0 : index
    %202 = vector.load %arg22[%c0_93, %c0_94, %c0_95] : memref<2x1x64xf32, #tpu.memory_space<vmem>>, vector<1x1x64xf32>
    %203 = vector.shape_cast %202 : vector<1x1x64xf32> to vector<1x64xf32>
    %204 = vector.broadcast %203 : vector<1x64xf32> to vector<16x64xf32>
    %205 = arith.addf %201, %204 : vector<16x64xf32>
    %206 = vector.extract_strided_slice %205 {offsets = [0, 0], sizes = [16, 32], strides = [1, 1]} : vector<16x64xf32> to vector<16x32xf32>
    %207 = vector.extract_strided_slice %205 {offsets = [0, 32], sizes = [16, 32], strides = [1, 1]} : vector<16x64xf32> to vector<16x32xf32>
    %c0_96 = arith.constant 0 : index
    %c0_97 = arith.constant 0 : index
    %c0_98 = arith.constant 0 : index
    %208 = vector.load %arg23[%c0_96, %c0_97, %c0_98] : memref<2x32x32xf32, #tpu.memory_space<vmem>>, vector<1x32x32xf32>
    %209 = vector.shape_cast %208 : vector<1x32x32xf32> to vector<32x32xf32>
    %c0_99 = arith.constant 0 : index
    %c0_100 = arith.constant 0 : index
    %c0_101 = arith.constant 0 : index
    %210 = vector.load %arg24[%c0_99, %c0_100, %c0_101] : memref<2x1x32xf32, #tpu.memory_space<vmem>>, vector<1x1x32xf32>
    %211 = vector.shape_cast %210 : vector<1x1x32xf32> to vector<1x32xf32>
    %212 = vector.extract_strided_slice %198 {offsets = [0, 0], sizes = [16, 8], strides = [1, 1]} : vector<16x32xf32> to vector<16x8xf32>
    %213 = vector.shape_cast %212 : vector<16x8xf32> to vector<2x8x8xf32>
    %214 = vector.extract_strided_slice %206 {offsets = [0, 0], sizes = [16, 8], strides = [1, 1]} : vector<16x32xf32> to vector<16x8xf32>
    %215 = vector.shape_cast %214 : vector<16x8xf32> to vector<2x8x8xf32>
    %216 = vector.extract_strided_slice %207 {offsets = [0, 0], sizes = [16, 8], strides = [1, 1]} : vector<16x32xf32> to vector<16x8xf32>
    %217 = vector.shape_cast %216 : vector<16x8xf32> to vector<2x8x8xf32>
    "tpu.trace_start"() <{level = 10 : i32, message = "bqd,bkd->bqk"}> : () -> ()
    %cst_102 = arith.constant dense<0.000000e+00> : vector<2x8x8xf32>
    %218 = tpu.matmul %213, %215, %cst_102 {dimension_numbers = #tpu.dot_dimension_numbers<[2], [2], [1], [1], [0, 0, 0, 1, 1, 1], [0], [0]>} : vector<2x8x8xf32>, vector<2x8x8xf32>, vector<2x8x8xf32> -> vector<2x8x8xf32>
    "tpu.trace_stop"() : () -> ()
    %cst_103 = arith.constant 0.353553385 : f32
    %219 = vector.broadcast %cst_103 : f32 to vector<2x8x8xf32>
    %220 = arith.mulf %218, %219 : vector<2x8x8xf32>
    %221 = vector.broadcast %25 : vector<2x1x8xf32> to vector<2x8x8xf32>
    %222 = arith.addf %220, %221 : vector<2x8x8xf32>
    %cst_104 = arith.constant dense<0xFF800000> : vector<2x8xf32>
    %223 = vector.multi_reduction <maximumf>, %222, %cst_104 [2] : vector<2x8x8xf32> to vector<2x8xf32>
    %224 = vector.shape_cast %223 : vector<2x8xf32> to vector<2x8x1xf32>
    %225 = vector.broadcast %224 : vector<2x8x1xf32> to vector<2x8x8xf32>
    %226 = arith.subf %222, %225 : vector<2x8x8xf32>
    %227 = math.exp %226 : vector<2x8x8xf32>
    %cst_105 = arith.constant dense<0.000000e+00> : vector<2x8xf32>
    %228 = vector.multi_reduction <add>, %227, %cst_105 [2] : vector<2x8x8xf32> to vector<2x8xf32>
    %229 = vector.shape_cast %228 : vector<2x8xf32> to vector<2x8x1xf32>
    %230 = tpu.reciprocal %229 {approx = true} : vector<2x8x1xf32> -> vector<2x8x1xf32>
    %231 = vector.broadcast %230 : vector<2x8x1xf32> to vector<2x8x8xf32>
    %232 = arith.mulf %227, %231 : vector<2x8x8xf32>
    "tpu.trace_start"() <{level = 10 : i32, message = "bqk,bkd->bqd"}> : () -> ()
    %cst_106 = arith.constant dense<0.000000e+00> : vector<2x8x8xf32>
    %233 = tpu.matmul %232, %217, %cst_106 {dimension_numbers = #tpu.dot_dimension_numbers<[2], [1], [1], [2], [0, 0, 0, 1, 1, 2], [0], [0]>} : vector<2x8x8xf32>, vector<2x8x8xf32>, vector<2x8x8xf32> -> vector<2x8x8xf32>
    "tpu.trace_stop"() : () -> ()
    %234 = vector.shape_cast %233 : vector<2x8x8xf32> to vector<16x8xf32>
    %235 = vector.extract_strided_slice %209 {offsets = [0, 0], sizes = [8, 32], strides = [1, 1]} : vector<32x32xf32> to vector<8x32xf32>
    %cst_107 = arith.constant dense<0.000000e+00> : vector<16x32xf32>
    %236 = tpu.matmul %234, %235, %cst_107 {dimension_numbers = #tpu.dot_dimension_numbers<[1], [0], [0], [1], [0, 0, 1, 1], [], []>} : vector<16x8xf32>, vector<8x32xf32>, vector<16x32xf32> -> vector<16x32xf32>
    %237 = vector.extract_strided_slice %198 {offsets = [0, 8], sizes = [16, 8], strides = [1, 1]} : vector<16x32xf32> to vector<16x8xf32>
    %238 = vector.shape_cast %237 : vector<16x8xf32> to vector<2x8x8xf32>
    %239 = vector.extract_strided_slice %206 {offsets = [0, 8], sizes = [16, 8], strides = [1, 1]} : vector<16x32xf32> to vector<16x8xf32>
    %240 = vector.shape_cast %239 : vector<16x8xf32> to vector<2x8x8xf32>
    %241 = vector.extract_strided_slice %207 {offsets = [0, 8], sizes = [16, 8], strides = [1, 1]} : vector<16x32xf32> to vector<16x8xf32>
    %242 = vector.shape_cast %241 : vector<16x8xf32> to vector<2x8x8xf32>
    "tpu.trace_start"() <{level = 10 : i32, message = "bqd,bkd->bqk"}> : () -> ()
    %cst_108 = arith.constant dense<0.000000e+00> : vector<2x8x8xf32>
    %243 = tpu.matmul %238, %240, %cst_108 {dimension_numbers = #tpu.dot_dimension_numbers<[2], [2], [1], [1], [0, 0, 0, 1, 1, 1], [0], [0]>} : vector<2x8x8xf32>, vector<2x8x8xf32>, vector<2x8x8xf32> -> vector<2x8x8xf32>
    "tpu.trace_stop"() : () -> ()
    %cst_109 = arith.constant 0.353553385 : f32
    %244 = vector.broadcast %cst_109 : f32 to vector<2x8x8xf32>
    %245 = arith.mulf %243, %244 : vector<2x8x8xf32>
    %246 = vector.broadcast %25 : vector<2x1x8xf32> to vector<2x8x8xf32>
    %247 = arith.addf %245, %246 : vector<2x8x8xf32>
    %cst_110 = arith.constant dense<0xFF800000> : vector<2x8xf32>
    %248 = vector.multi_reduction <maximumf>, %247, %cst_110 [2] : vector<2x8x8xf32> to vector<2x8xf32>
    %249 = vector.shape_cast %248 : vector<2x8xf32> to vector<2x8x1xf32>
    %250 = vector.broadcast %249 : vector<2x8x1xf32> to vector<2x8x8xf32>
    %251 = arith.subf %247, %250 : vector<2x8x8xf32>
    %252 = math.exp %251 : vector<2x8x8xf32>
    %cst_111 = arith.constant dense<0.000000e+00> : vector<2x8xf32>
    %253 = vector.multi_reduction <add>, %252, %cst_111 [2] : vector<2x8x8xf32> to vector<2x8xf32>
    %254 = vector.shape_cast %253 : vector<2x8xf32> to vector<2x8x1xf32>
    %255 = tpu.reciprocal %254 {approx = true} : vector<2x8x1xf32> -> vector<2x8x1xf32>
    %256 = vector.broadcast %255 : vector<2x8x1xf32> to vector<2x8x8xf32>
    %257 = arith.mulf %252, %256 : vector<2x8x8xf32>
    "tpu.trace_start"() <{level = 10 : i32, message = "bqk,bkd->bqd"}> : () -> ()
    %cst_112 = arith.constant dense<0.000000e+00> : vector<2x8x8xf32>
    %258 = tpu.matmul %257, %242, %cst_112 {dimension_numbers = #tpu.dot_dimension_numbers<[2], [1], [1], [2], [0, 0, 0, 1, 1, 2], [0], [0]>} : vector<2x8x8xf32>, vector<2x8x8xf32>, vector<2x8x8xf32> -> vector<2x8x8xf32>
    "tpu.trace_stop"() : () -> ()
    %259 = vector.shape_cast %258 : vector<2x8x8xf32> to vector<16x8xf32>
    %260 = vector.extract_strided_slice %209 {offsets = [8, 0], sizes = [8, 32], strides = [1, 1]} : vector<32x32xf32> to vector<8x32xf32>
    %cst_113 = arith.constant dense<0.000000e+00> : vector<16x32xf32>
    %261 = tpu.matmul %259, %260, %cst_113 {dimension_numbers = #tpu.dot_dimension_numbers<[1], [0], [0], [1], [0, 0, 1, 1], [], []>} : vector<16x8xf32>, vector<8x32xf32>, vector<16x32xf32> -> vector<16x32xf32>
    %262 = arith.addf %236, %261 : vector<16x32xf32>
    %263 = vector.extract_strided_slice %198 {offsets = [0, 16], sizes = [16, 8], strides = [1, 1]} : vector<16x32xf32> to vector<16x8xf32>
    %264 = vector.shape_cast %263 : vector<16x8xf32> to vector<2x8x8xf32>
    %265 = vector.extract_strided_slice %206 {offsets = [0, 16], sizes = [16, 8], strides = [1, 1]} : vector<16x32xf32> to vector<16x8xf32>
    %266 = vector.shape_cast %265 : vector<16x8xf32> to vector<2x8x8xf32>
    %267 = vector.extract_strided_slice %207 {offsets = [0, 16], sizes = [16, 8], strides = [1, 1]} : vector<16x32xf32> to vector<16x8xf32>
    %268 = vector.shape_cast %267 : vector<16x8xf32> to vector<2x8x8xf32>
    "tpu.trace_start"() <{level = 10 : i32, message = "bqd,bkd->bqk"}> : () -> ()
    %cst_114 = arith.constant dense<0.000000e+00> : vector<2x8x8xf32>
    %269 = tpu.matmul %264, %266, %cst_114 {dimension_numbers = #tpu.dot_dimension_numbers<[2], [2], [1], [1], [0, 0, 0, 1, 1, 1], [0], [0]>} : vector<2x8x8xf32>, vector<2x8x8xf32>, vector<2x8x8xf32> -> vector<2x8x8xf32>
    "tpu.trace_stop"() : () -> ()
    %cst_115 = arith.constant 0.353553385 : f32
    %270 = vector.broadcast %cst_115 : f32 to vector<2x8x8xf32>
    %271 = arith.mulf %269, %270 : vector<2x8x8xf32>
    %272 = vector.broadcast %25 : vector<2x1x8xf32> to vector<2x8x8xf32>
    %273 = arith.addf %271, %272 : vector<2x8x8xf32>
    %cst_116 = arith.constant dense<0xFF800000> : vector<2x8xf32>
    %274 = vector.multi_reduction <maximumf>, %273, %cst_116 [2] : vector<2x8x8xf32> to vector<2x8xf32>
    %275 = vector.shape_cast %274 : vector<2x8xf32> to vector<2x8x1xf32>
    %276 = vector.broadcast %275 : vector<2x8x1xf32> to vector<2x8x8xf32>
    %277 = arith.subf %273, %276 : vector<2x8x8xf32>
    %278 = math.exp %277 : vector<2x8x8xf32>
    %cst_117 = arith.constant dense<0.000000e+00> : vector<2x8xf32>
    %279 = vector.multi_reduction <add>, %278, %cst_117 [2] : vector<2x8x8xf32> to vector<2x8xf32>
    %280 = vector.shape_cast %279 : vector<2x8xf32> to vector<2x8x1xf32>
    %281 = tpu.reciprocal %280 {approx = true} : vector<2x8x1xf32> -> vector<2x8x1xf32>
    %282 = vector.broadcast %281 : vector<2x8x1xf32> to vector<2x8x8xf32>
    %283 = arith.mulf %278, %282 : vector<2x8x8xf32>
    "tpu.trace_start"() <{level = 10 : i32, message = "bqk,bkd->bqd"}> : () -> ()
    %cst_118 = arith.constant dense<0.000000e+00> : vector<2x8x8xf32>
    %284 = tpu.matmul %283, %268, %cst_118 {dimension_numbers = #tpu.dot_dimension_numbers<[2], [1], [1], [2], [0, 0, 0, 1, 1, 2], [0], [0]>} : vector<2x8x8xf32>, vector<2x8x8xf32>, vector<2x8x8xf32> -> vector<2x8x8xf32>
    "tpu.trace_stop"() : () -> ()
    %285 = vector.shape_cast %284 : vector<2x8x8xf32> to vector<16x8xf32>
    %286 = vector.extract_strided_slice %209 {offsets = [16, 0], sizes = [8, 32], strides = [1, 1]} : vector<32x32xf32> to vector<8x32xf32>
    %cst_119 = arith.constant dense<0.000000e+00> : vector<16x32xf32>
    %287 = tpu.matmul %285, %286, %cst_119 {dimension_numbers = #tpu.dot_dimension_numbers<[1], [0], [0], [1], [0, 0, 1, 1], [], []>} : vector<16x8xf32>, vector<8x32xf32>, vector<16x32xf32> -> vector<16x32xf32>
    %288 = arith.addf %262, %287 : vector<16x32xf32>
    %289 = vector.extract_strided_slice %198 {offsets = [0, 24], sizes = [16, 8], strides = [1, 1]} : vector<16x32xf32> to vector<16x8xf32>
    %290 = vector.shape_cast %289 : vector<16x8xf32> to vector<2x8x8xf32>
    %291 = vector.extract_strided_slice %206 {offsets = [0, 24], sizes = [16, 8], strides = [1, 1]} : vector<16x32xf32> to vector<16x8xf32>
    %292 = vector.shape_cast %291 : vector<16x8xf32> to vector<2x8x8xf32>
    %293 = vector.extract_strided_slice %207 {offsets = [0, 24], sizes = [16, 8], strides = [1, 1]} : vector<16x32xf32> to vector<16x8xf32>
    %294 = vector.shape_cast %293 : vector<16x8xf32> to vector<2x8x8xf32>
    "tpu.trace_start"() <{level = 10 : i32, message = "bqd,bkd->bqk"}> : () -> ()
    %cst_120 = arith.constant dense<0.000000e+00> : vector<2x8x8xf32>
    %295 = tpu.matmul %290, %292, %cst_120 {dimension_numbers = #tpu.dot_dimension_numbers<[2], [2], [1], [1], [0, 0, 0, 1, 1, 1], [0], [0]>} : vector<2x8x8xf32>, vector<2x8x8xf32>, vector<2x8x8xf32> -> vector<2x8x8xf32>
    "tpu.trace_stop"() : () -> ()
    %cst_121 = arith.constant 0.353553385 : f32
    %296 = vector.broadcast %cst_121 : f32 to vector<2x8x8xf32>
    %297 = arith.mulf %295, %296 : vector<2x8x8xf32>
    %298 = vector.broadcast %25 : vector<2x1x8xf32> to vector<2x8x8xf32>
    %299 = arith.addf %297, %298 : vector<2x8x8xf32>
    %cst_122 = arith.constant dense<0xFF800000> : vector<2x8xf32>
    %300 = vector.multi_reduction <maximumf>, %299, %cst_122 [2] : vector<2x8x8xf32> to vector<2x8xf32>
    %301 = vector.shape_cast %300 : vector<2x8xf32> to vector<2x8x1xf32>
    %302 = vector.broadcast %301 : vector<2x8x1xf32> to vector<2x8x8xf32>
    %303 = arith.subf %299, %302 : vector<2x8x8xf32>
    %304 = math.exp %303 : vector<2x8x8xf32>
    %cst_123 = arith.constant dense<0.000000e+00> : vector<2x8xf32>
    %305 = vector.multi_reduction <add>, %304, %cst_123 [2] : vector<2x8x8xf32> to vector<2x8xf32>
    %306 = vector.shape_cast %305 : vector<2x8xf32> to vector<2x8x1xf32>
    %307 = tpu.reciprocal %306 {approx = true} : vector<2x8x1xf32> -> vector<2x8x1xf32>
    %308 = vector.broadcast %307 : vector<2x8x1xf32> to vector<2x8x8xf32>
    %309 = arith.mulf %304, %308 : vector<2x8x8xf32>
    "tpu.trace_start"() <{level = 10 : i32, message = "bqk,bkd->bqd"}> : () -> ()
    %cst_124 = arith.constant dense<0.000000e+00> : vector<2x8x8xf32>
    %310 = tpu.matmul %309, %294, %cst_124 {dimension_numbers = #tpu.dot_dimension_numbers<[2], [1], [1], [2], [0, 0, 0, 1, 1, 2], [0], [0]>} : vector<2x8x8xf32>, vector<2x8x8xf32>, vector<2x8x8xf32> -> vector<2x8x8xf32>
    "tpu.trace_stop"() : () -> ()
    %311 = vector.shape_cast %310 : vector<2x8x8xf32> to vector<16x8xf32>
    %312 = vector.extract_strided_slice %209 {offsets = [24, 0], sizes = [8, 32], strides = [1, 1]} : vector<32x32xf32> to vector<8x32xf32>
    %cst_125 = arith.constant dense<0.000000e+00> : vector<16x32xf32>
    %313 = tpu.matmul %311, %312, %cst_125 {dimension_numbers = #tpu.dot_dimension_numbers<[1], [0], [0], [1], [0, 0, 1, 1], [], []>} : vector<16x8xf32>, vector<8x32xf32>, vector<16x32xf32> -> vector<16x32xf32>
    %314 = arith.addf %288, %313 : vector<16x32xf32>
    %315 = vector.broadcast %211 : vector<1x32xf32> to vector<16x32xf32>
    %316 = arith.addf %314, %315 : vector<16x32xf32>
    %317 = arith.addf %168, %316 : vector<16x32xf32>
    %318 = vector.extract_strided_slice %27 {offsets = [2, 0], sizes = [1, 32], strides = [1, 1]} : vector<3x32xf32> to vector<1x32xf32>
    %319 = vector.extract_strided_slice %29 {offsets = [2, 0], sizes = [1, 32], strides = [1, 1]} : vector<3x32xf32> to vector<1x32xf32>
    %cst_126 = arith.constant dense<0.000000e+00> : vector<16xf32>
    %320 = vector.multi_reduction <add>, %317, %cst_126 [1] : vector<16x32xf32> to vector<16xf32>
    %321 = vector.shape_cast %320 : vector<16xf32> to vector<16x1xf32>
    %cst_127 = arith.constant 3.200000e+01 : f32
    %322 = vector.broadcast %cst_127 : f32 to vector<16x1xf32>
    %323 = arith.divf %321, %322 : vector<16x1xf32>
    %324 = vector.broadcast %323 : vector<16x1xf32> to vector<16x32xf32>
    %325 = arith.subf %317, %324 : vector<16x32xf32>
    %326 = arith.mulf %325, %325 : vector<16x32xf32>
    %cst_128 = arith.constant dense<0.000000e+00> : vector<16xf32>
    %327 = vector.multi_reduction <add>, %326, %cst_128 [1] : vector<16x32xf32> to vector<16xf32>
    %328 = vector.shape_cast %327 : vector<16xf32> to vector<16x1xf32>
    %cst_129 = arith.constant 0.0322580636 : f32
    %329 = vector.broadcast %cst_129 : f32 to vector<16x1xf32>
    %330 = arith.mulf %328, %329 : vector<16x1xf32>
    %331 = math.sqrt %330 : vector<16x1xf32>
    %332 = vector.broadcast %318 : vector<1x32xf32> to vector<16x32xf32>
    %333 = arith.mulf %332, %325 : vector<16x32xf32>
    %cst_130 = arith.constant 9.99999997E-7 : f32
    %334 = vector.broadcast %cst_130 : f32 to vector<16x1xf32>
    %335 = arith.addf %331, %334 : vector<16x1xf32>
    %336 = tpu.reciprocal %335 {approx = true} : vector<16x1xf32> -> vector<16x1xf32>
    %337 = vector.broadcast %336 : vector<16x1xf32> to vector<16x32xf32>
    %338 = arith.mulf %333, %337 : vector<16x32xf32>
    %339 = vector.broadcast %319 : vector<1x32xf32> to vector<16x32xf32>
    %340 = arith.addf %338, %339 : vector<16x32xf32>
    %c0_131 = arith.constant 0 : index
    %c0_132 = arith.constant 0 : index
    %c0_133 = arith.constant 0 : index
    %341 = vector.load %arg25[%c0_131, %c0_132, %c0_133] : memref<2x48x64xf32, #tpu.memory_space<vmem>>, vector<1x48x64xf32>
    %342 = vector.shape_cast %341 : vector<1x48x64xf32> to vector<48x64xf32>
    %343 = vector.extract_strided_slice %342 {offsets = [0, 0], sizes = [32, 64], strides = [1, 1]} : vector<48x64xf32> to vector<32x64xf32>
    %cst_134 = arith.constant dense<0.000000e+00> : vector<16x64xf32>
    %344 = tpu.matmul %340, %343, %cst_134 {dimension_numbers = #tpu.dot_dimension_numbers<[1], [0], [0], [1], [0, 0, 1, 1], [], []>} : vector<16x32xf32>, vector<32x64xf32>, vector<16x64xf32> -> vector<16x64xf32>
    %345 = vector.extract_strided_slice %342 {offsets = [32, 0], sizes = [16, 64], strides = [1, 1]} : vector<48x64xf32> to vector<16x64xf32>
    %cst_135 = arith.constant dense<0.000000e+00> : vector<16x64xf32>
    %346 = tpu.matmul %13, %345, %cst_135 {dimension_numbers = #tpu.dot_dimension_numbers<[1], [0], [0], [1], [0, 0, 1, 1], [], []>} : vector<16x16xf32>, vector<16x64xf32>, vector<16x64xf32> -> vector<16x64xf32>
    %347 = arith.addf %344, %346 : vector<16x64xf32>
    %c0_136 = arith.constant 0 : index
    %c0_137 = arith.constant 0 : index
    %c0_138 = arith.constant 0 : index
    %348 = vector.load %arg26[%c0_136, %c0_137, %c0_138] : memref<2x1x64xf32, #tpu.memory_space<vmem>>, vector<1x1x64xf32>
    %349 = vector.shape_cast %348 : vector<1x1x64xf32> to vector<1x64xf32>
    %350 = vector.broadcast %349 : vector<1x64xf32> to vector<16x64xf32>
    %351 = arith.addf %347, %350 : vector<16x64xf32>
    %cst_139 = arith.constant 0.000000e+00 : f32
    %352 = vector.broadcast %cst_139 : f32 to vector<16x64xf32>
    %353 = arith.maximumf %351, %352 : vector<16x64xf32>
    %c0_140 = arith.constant 0 : index
    %c0_141 = arith.constant 0 : index
    %c0_142 = arith.constant 0 : index
    %354 = vector.load %arg27[%c0_140, %c0_141, %c0_142] : memref<2x64x32xf32, #tpu.memory_space<vmem>>, vector<1x64x32xf32>
    %355 = vector.shape_cast %354 : vector<1x64x32xf32> to vector<64x32xf32>
    %cst_143 = arith.constant dense<0.000000e+00> : vector<16x32xf32>
    %356 = tpu.matmul %353, %355, %cst_143 {dimension_numbers = #tpu.dot_dimension_numbers<[1], [0], [0], [1], [0, 0, 1, 1], [], []>} : vector<16x64xf32>, vector<64x32xf32>, vector<16x32xf32> -> vector<16x32xf32>
    %357 = arith.addf %317, %356 : vector<16x32xf32>
    %c0_144 = arith.constant 0 : index
    %c0_145 = arith.constant 0 : index
    %c0_146 = arith.constant 0 : index
    %358 = vector.load %arg28[%c0_144, %c0_145, %c0_146] : memref<2x1x32xf32, #tpu.memory_space<vmem>>, vector<1x1x32xf32>
    %359 = vector.shape_cast %358 : vector<1x1x32xf32> to vector<1x32xf32>
    %360 = vector.broadcast %359 : vector<1x32xf32> to vector<16x32xf32>
    %361 = arith.addf %357, %360 : vector<16x32xf32>
    %c1 = arith.constant 1 : index
    %c0_147 = arith.constant 0 : index
    %c0_148 = arith.constant 0 : index
    %362 = vector.load %arg13[%c1, %c0_147, %c0_148] : memref<2x3x32xf32, #tpu.memory_space<vmem>>, vector<1x3x32xf32>
    %363 = vector.shape_cast %362 : vector<1x3x32xf32> to vector<3x32xf32>
    %c1_149 = arith.constant 1 : index
    %c0_150 = arith.constant 0 : index
    %c0_151 = arith.constant 0 : index
    %364 = vector.load %arg14[%c1_149, %c0_150, %c0_151] : memref<2x3x32xf32, #tpu.memory_space<vmem>>, vector<1x3x32xf32>
    %365 = vector.shape_cast %364 : vector<1x3x32xf32> to vector<3x32xf32>
    %366 = vector.extract_strided_slice %363 {offsets = [0, 0], sizes = [1, 32], strides = [1, 1]} : vector<3x32xf32> to vector<1x32xf32>
    %367 = vector.extract_strided_slice %365 {offsets = [0, 0], sizes = [1, 32], strides = [1, 1]} : vector<3x32xf32> to vector<1x32xf32>
    %cst_152 = arith.constant dense<0.000000e+00> : vector<16xf32>
    %368 = vector.multi_reduction <add>, %361, %cst_152 [1] : vector<16x32xf32> to vector<16xf32>
    %369 = vector.shape_cast %368 : vector<16xf32> to vector<16x1xf32>
    %cst_153 = arith.constant 3.200000e+01 : f32
    %370 = vector.broadcast %cst_153 : f32 to vector<16x1xf32>
    %371 = arith.divf %369, %370 : vector<16x1xf32>
    %372 = vector.broadcast %371 : vector<16x1xf32> to vector<16x32xf32>
    %373 = arith.subf %361, %372 : vector<16x32xf32>
    %374 = arith.mulf %373, %373 : vector<16x32xf32>
    %cst_154 = arith.constant dense<0.000000e+00> : vector<16xf32>
    %375 = vector.multi_reduction <add>, %374, %cst_154 [1] : vector<16x32xf32> to vector<16xf32>
    %376 = vector.shape_cast %375 : vector<16xf32> to vector<16x1xf32>
    %cst_155 = arith.constant 0.0322580636 : f32
    %377 = vector.broadcast %cst_155 : f32 to vector<16x1xf32>
    %378 = arith.mulf %376, %377 : vector<16x1xf32>
    %379 = math.sqrt %378 : vector<16x1xf32>
    %380 = vector.broadcast %366 : vector<1x32xf32> to vector<16x32xf32>
    %381 = arith.mulf %380, %373 : vector<16x32xf32>
    %cst_156 = arith.constant 9.99999997E-7 : f32
    %382 = vector.broadcast %cst_156 : f32 to vector<16x1xf32>
    %383 = arith.addf %379, %382 : vector<16x1xf32>
    %384 = tpu.reciprocal %383 {approx = true} : vector<16x1xf32> -> vector<16x1xf32>
    %385 = vector.broadcast %384 : vector<16x1xf32> to vector<16x32xf32>
    %386 = arith.mulf %381, %385 : vector<16x32xf32>
    %387 = vector.broadcast %367 : vector<1x32xf32> to vector<16x32xf32>
    %388 = arith.addf %386, %387 : vector<16x32xf32>
    %c1_157 = arith.constant 1 : index
    %c0_158 = arith.constant 0 : index
    %c0_159 = arith.constant 0 : index
    %389 = vector.load %arg15[%c1_157, %c0_158, %c0_159] : memref<2x32x96xf32, #tpu.memory_space<vmem>>, vector<1x32x96xf32>
    %390 = vector.shape_cast %389 : vector<1x32x96xf32> to vector<32x96xf32>
    %cst_160 = arith.constant dense<0.000000e+00> : vector<16x96xf32>
    %391 = tpu.matmul %388, %390, %cst_160 {dimension_numbers = #tpu.dot_dimension_numbers<[1], [0], [0], [1], [0, 0, 1, 1], [], []>} : vector<16x32xf32>, vector<32x96xf32>, vector<16x96xf32> -> vector<16x96xf32>
    %c1_161 = arith.constant 1 : index
    %c0_162 = arith.constant 0 : index
    %c0_163 = arith.constant 0 : index
    %392 = vector.load %arg16[%c1_161, %c0_162, %c0_163] : memref<2x1x96xf32, #tpu.memory_space<vmem>>, vector<1x1x96xf32>
    %393 = vector.shape_cast %392 : vector<1x1x96xf32> to vector<1x96xf32>
    %394 = vector.broadcast %393 : vector<1x96xf32> to vector<16x96xf32>
    %395 = arith.addf %391, %394 : vector<16x96xf32>
    %396 = vector.extract_strided_slice %395 {offsets = [0, 0], sizes = [16, 32], strides = [1, 1]} : vector<16x96xf32> to vector<16x32xf32>
    %397 = vector.extract_strided_slice %395 {offsets = [0, 32], sizes = [16, 32], strides = [1, 1]} : vector<16x96xf32> to vector<16x32xf32>
    %398 = vector.extract_strided_slice %395 {offsets = [0, 64], sizes = [16, 32], strides = [1, 1]} : vector<16x96xf32> to vector<16x32xf32>
    %c1_164 = arith.constant 1 : index
    %c0_165 = arith.constant 0 : index
    %c0_166 = arith.constant 0 : index
    %399 = vector.load %arg17[%c1_164, %c0_165, %c0_166] : memref<2x32x32xf32, #tpu.memory_space<vmem>>, vector<1x32x32xf32>
    %400 = vector.shape_cast %399 : vector<1x32x32xf32> to vector<32x32xf32>
    %c1_167 = arith.constant 1 : index
    %c0_168 = arith.constant 0 : index
    %c0_169 = arith.constant 0 : index
    %401 = vector.load %arg18[%c1_167, %c0_168, %c0_169] : memref<2x1x32xf32, #tpu.memory_space<vmem>>, vector<1x1x32xf32>
    %402 = vector.shape_cast %401 : vector<1x1x32xf32> to vector<1x32xf32>
    %403 = vector.extract_strided_slice %396 {offsets = [0, 0], sizes = [16, 8], strides = [1, 1]} : vector<16x32xf32> to vector<16x8xf32>
    %404 = vector.shape_cast %403 : vector<16x8xf32> to vector<2x8x8xf32>
    %405 = vector.extract_strided_slice %397 {offsets = [0, 0], sizes = [16, 8], strides = [1, 1]} : vector<16x32xf32> to vector<16x8xf32>
    %406 = vector.shape_cast %405 : vector<16x8xf32> to vector<2x8x8xf32>
    %407 = vector.extract_strided_slice %398 {offsets = [0, 0], sizes = [16, 8], strides = [1, 1]} : vector<16x32xf32> to vector<16x8xf32>
    %408 = vector.shape_cast %407 : vector<16x8xf32> to vector<2x8x8xf32>
    "tpu.trace_start"() <{level = 10 : i32, message = "bqd,bkd->bqk"}> : () -> ()
    %cst_170 = arith.constant dense<0.000000e+00> : vector<2x8x8xf32>
    %409 = tpu.matmul %404, %406, %cst_170 {dimension_numbers = #tpu.dot_dimension_numbers<[2], [2], [1], [1], [0, 0, 0, 1, 1, 1], [0], [0]>} : vector<2x8x8xf32>, vector<2x8x8xf32>, vector<2x8x8xf32> -> vector<2x8x8xf32>
    "tpu.trace_stop"() : () -> ()
    %cst_171 = arith.constant 0.353553385 : f32
    %410 = vector.broadcast %cst_171 : f32 to vector<2x8x8xf32>
    %411 = arith.mulf %409, %410 : vector<2x8x8xf32>
    %412 = arith.addf %411, %19 : vector<2x8x8xf32>
    %cst_172 = arith.constant dense<0xFF800000> : vector<2x8xf32>
    %413 = vector.multi_reduction <maximumf>, %412, %cst_172 [2] : vector<2x8x8xf32> to vector<2x8xf32>
    %414 = vector.shape_cast %413 : vector<2x8xf32> to vector<2x8x1xf32>
    %415 = vector.broadcast %414 : vector<2x8x1xf32> to vector<2x8x8xf32>
    %416 = arith.subf %412, %415 : vector<2x8x8xf32>
    %417 = math.exp %416 : vector<2x8x8xf32>
    %cst_173 = arith.constant dense<0.000000e+00> : vector<2x8xf32>
    %418 = vector.multi_reduction <add>, %417, %cst_173 [2] : vector<2x8x8xf32> to vector<2x8xf32>
    %419 = vector.shape_cast %418 : vector<2x8xf32> to vector<2x8x1xf32>
    %420 = tpu.reciprocal %419 {approx = true} : vector<2x8x1xf32> -> vector<2x8x1xf32>
    %421 = vector.broadcast %420 : vector<2x8x1xf32> to vector<2x8x8xf32>
    %422 = arith.mulf %417, %421 : vector<2x8x8xf32>
    "tpu.trace_start"() <{level = 10 : i32, message = "bqk,bkd->bqd"}> : () -> ()
    %cst_174 = arith.constant dense<0.000000e+00> : vector<2x8x8xf32>
    %423 = tpu.matmul %422, %408, %cst_174 {dimension_numbers = #tpu.dot_dimension_numbers<[2], [1], [1], [2], [0, 0, 0, 1, 1, 2], [0], [0]>} : vector<2x8x8xf32>, vector<2x8x8xf32>, vector<2x8x8xf32> -> vector<2x8x8xf32>
    "tpu.trace_stop"() : () -> ()
    %424 = vector.shape_cast %423 : vector<2x8x8xf32> to vector<16x8xf32>
    %425 = vector.extract_strided_slice %400 {offsets = [0, 0], sizes = [8, 32], strides = [1, 1]} : vector<32x32xf32> to vector<8x32xf32>
    %cst_175 = arith.constant dense<0.000000e+00> : vector<16x32xf32>
    %426 = tpu.matmul %424, %425, %cst_175 {dimension_numbers = #tpu.dot_dimension_numbers<[1], [0], [0], [1], [0, 0, 1, 1], [], []>} : vector<16x8xf32>, vector<8x32xf32>, vector<16x32xf32> -> vector<16x32xf32>
    %427 = vector.extract_strided_slice %396 {offsets = [0, 8], sizes = [16, 8], strides = [1, 1]} : vector<16x32xf32> to vector<16x8xf32>
    %428 = vector.shape_cast %427 : vector<16x8xf32> to vector<2x8x8xf32>
    %429 = vector.extract_strided_slice %397 {offsets = [0, 8], sizes = [16, 8], strides = [1, 1]} : vector<16x32xf32> to vector<16x8xf32>
    %430 = vector.shape_cast %429 : vector<16x8xf32> to vector<2x8x8xf32>
    %431 = vector.extract_strided_slice %398 {offsets = [0, 8], sizes = [16, 8], strides = [1, 1]} : vector<16x32xf32> to vector<16x8xf32>
    %432 = vector.shape_cast %431 : vector<16x8xf32> to vector<2x8x8xf32>
    "tpu.trace_start"() <{level = 10 : i32, message = "bqd,bkd->bqk"}> : () -> ()
    %cst_176 = arith.constant dense<0.000000e+00> : vector<2x8x8xf32>
    %433 = tpu.matmul %428, %430, %cst_176 {dimension_numbers = #tpu.dot_dimension_numbers<[2], [2], [1], [1], [0, 0, 0, 1, 1, 1], [0], [0]>} : vector<2x8x8xf32>, vector<2x8x8xf32>, vector<2x8x8xf32> -> vector<2x8x8xf32>
    "tpu.trace_stop"() : () -> ()
    %cst_177 = arith.constant 0.353553385 : f32
    %434 = vector.broadcast %cst_177 : f32 to vector<2x8x8xf32>
    %435 = arith.mulf %433, %434 : vector<2x8x8xf32>
    %436 = arith.addf %435, %19 : vector<2x8x8xf32>
    %cst_178 = arith.constant dense<0xFF800000> : vector<2x8xf32>
    %437 = vector.multi_reduction <maximumf>, %436, %cst_178 [2] : vector<2x8x8xf32> to vector<2x8xf32>
    %438 = vector.shape_cast %437 : vector<2x8xf32> to vector<2x8x1xf32>
    %439 = vector.broadcast %438 : vector<2x8x1xf32> to vector<2x8x8xf32>
    %440 = arith.subf %436, %439 : vector<2x8x8xf32>
    %441 = math.exp %440 : vector<2x8x8xf32>
    %cst_179 = arith.constant dense<0.000000e+00> : vector<2x8xf32>
    %442 = vector.multi_reduction <add>, %441, %cst_179 [2] : vector<2x8x8xf32> to vector<2x8xf32>
    %443 = vector.shape_cast %442 : vector<2x8xf32> to vector<2x8x1xf32>
    %444 = tpu.reciprocal %443 {approx = true} : vector<2x8x1xf32> -> vector<2x8x1xf32>
    %445 = vector.broadcast %444 : vector<2x8x1xf32> to vector<2x8x8xf32>
    %446 = arith.mulf %441, %445 : vector<2x8x8xf32>
    "tpu.trace_start"() <{level = 10 : i32, message = "bqk,bkd->bqd"}> : () -> ()
    %cst_180 = arith.constant dense<0.000000e+00> : vector<2x8x8xf32>
    %447 = tpu.matmul %446, %432, %cst_180 {dimension_numbers = #tpu.dot_dimension_numbers<[2], [1], [1], [2], [0, 0, 0, 1, 1, 2], [0], [0]>} : vector<2x8x8xf32>, vector<2x8x8xf32>, vector<2x8x8xf32> -> vector<2x8x8xf32>
    "tpu.trace_stop"() : () -> ()
    %448 = vector.shape_cast %447 : vector<2x8x8xf32> to vector<16x8xf32>
    %449 = vector.extract_strided_slice %400 {offsets = [8, 0], sizes = [8, 32], strides = [1, 1]} : vector<32x32xf32> to vector<8x32xf32>
    %cst_181 = arith.constant dense<0.000000e+00> : vector<16x32xf32>
    %450 = tpu.matmul %448, %449, %cst_181 {dimension_numbers = #tpu.dot_dimension_numbers<[1], [0], [0], [1], [0, 0, 1, 1], [], []>} : vector<16x8xf32>, vector<8x32xf32>, vector<16x32xf32> -> vector<16x32xf32>
    %451 = arith.addf %426, %450 : vector<16x32xf32>
    %452 = vector.extract_strided_slice %396 {offsets = [0, 16], sizes = [16, 8], strides = [1, 1]} : vector<16x32xf32> to vector<16x8xf32>
    %453 = vector.shape_cast %452 : vector<16x8xf32> to vector<2x8x8xf32>
    %454 = vector.extract_strided_slice %397 {offsets = [0, 16], sizes = [16, 8], strides = [1, 1]} : vector<16x32xf32> to vector<16x8xf32>
    %455 = vector.shape_cast %454 : vector<16x8xf32> to vector<2x8x8xf32>
    %456 = vector.extract_strided_slice %398 {offsets = [0, 16], sizes = [16, 8], strides = [1, 1]} : vector<16x32xf32> to vector<16x8xf32>
    %457 = vector.shape_cast %456 : vector<16x8xf32> to vector<2x8x8xf32>
    "tpu.trace_start"() <{level = 10 : i32, message = "bqd,bkd->bqk"}> : () -> ()
    %cst_182 = arith.constant dense<0.000000e+00> : vector<2x8x8xf32>
    %458 = tpu.matmul %453, %455, %cst_182 {dimension_numbers = #tpu.dot_dimension_numbers<[2], [2], [1], [1], [0, 0, 0, 1, 1, 1], [0], [0]>} : vector<2x8x8xf32>, vector<2x8x8xf32>, vector<2x8x8xf32> -> vector<2x8x8xf32>
    "tpu.trace_stop"() : () -> ()
    %cst_183 = arith.constant 0.353553385 : f32
    %459 = vector.broadcast %cst_183 : f32 to vector<2x8x8xf32>
    %460 = arith.mulf %458, %459 : vector<2x8x8xf32>
    %461 = arith.addf %460, %19 : vector<2x8x8xf32>
    %cst_184 = arith.constant dense<0xFF800000> : vector<2x8xf32>
    %462 = vector.multi_reduction <maximumf>, %461, %cst_184 [2] : vector<2x8x8xf32> to vector<2x8xf32>
    %463 = vector.shape_cast %462 : vector<2x8xf32> to vector<2x8x1xf32>
    %464 = vector.broadcast %463 : vector<2x8x1xf32> to vector<2x8x8xf32>
    %465 = arith.subf %461, %464 : vector<2x8x8xf32>
    %466 = math.exp %465 : vector<2x8x8xf32>
    %cst_185 = arith.constant dense<0.000000e+00> : vector<2x8xf32>
    %467 = vector.multi_reduction <add>, %466, %cst_185 [2] : vector<2x8x8xf32> to vector<2x8xf32>
    %468 = vector.shape_cast %467 : vector<2x8xf32> to vector<2x8x1xf32>
    %469 = tpu.reciprocal %468 {approx = true} : vector<2x8x1xf32> -> vector<2x8x1xf32>
    %470 = vector.broadcast %469 : vector<2x8x1xf32> to vector<2x8x8xf32>
    %471 = arith.mulf %466, %470 : vector<2x8x8xf32>
    "tpu.trace_start"() <{level = 10 : i32, message = "bqk,bkd->bqd"}> : () -> ()
    %cst_186 = arith.constant dense<0.000000e+00> : vector<2x8x8xf32>
    %472 = tpu.matmul %471, %457, %cst_186 {dimension_numbers = #tpu.dot_dimension_numbers<[2], [1], [1], [2], [0, 0, 0, 1, 1, 2], [0], [0]>} : vector<2x8x8xf32>, vector<2x8x8xf32>, vector<2x8x8xf32> -> vector<2x8x8xf32>
    "tpu.trace_stop"() : () -> ()
    %473 = vector.shape_cast %472 : vector<2x8x8xf32> to vector<16x8xf32>
    %474 = vector.extract_strided_slice %400 {offsets = [16, 0], sizes = [8, 32], strides = [1, 1]} : vector<32x32xf32> to vector<8x32xf32>
    %cst_187 = arith.constant dense<0.000000e+00> : vector<16x32xf32>
    %475 = tpu.matmul %473, %474, %cst_187 {dimension_numbers = #tpu.dot_dimension_numbers<[1], [0], [0], [1], [0, 0, 1, 1], [], []>} : vector<16x8xf32>, vector<8x32xf32>, vector<16x32xf32> -> vector<16x32xf32>
    %476 = arith.addf %451, %475 : vector<16x32xf32>
    %477 = vector.extract_strided_slice %396 {offsets = [0, 24], sizes = [16, 8], strides = [1, 1]} : vector<16x32xf32> to vector<16x8xf32>
    %478 = vector.shape_cast %477 : vector<16x8xf32> to vector<2x8x8xf32>
    %479 = vector.extract_strided_slice %397 {offsets = [0, 24], sizes = [16, 8], strides = [1, 1]} : vector<16x32xf32> to vector<16x8xf32>
    %480 = vector.shape_cast %479 : vector<16x8xf32> to vector<2x8x8xf32>
    %481 = vector.extract_strided_slice %398 {offsets = [0, 24], sizes = [16, 8], strides = [1, 1]} : vector<16x32xf32> to vector<16x8xf32>
    %482 = vector.shape_cast %481 : vector<16x8xf32> to vector<2x8x8xf32>
    "tpu.trace_start"() <{level = 10 : i32, message = "bqd,bkd->bqk"}> : () -> ()
    %cst_188 = arith.constant dense<0.000000e+00> : vector<2x8x8xf32>
    %483 = tpu.matmul %478, %480, %cst_188 {dimension_numbers = #tpu.dot_dimension_numbers<[2], [2], [1], [1], [0, 0, 0, 1, 1, 1], [0], [0]>} : vector<2x8x8xf32>, vector<2x8x8xf32>, vector<2x8x8xf32> -> vector<2x8x8xf32>
    "tpu.trace_stop"() : () -> ()
    %cst_189 = arith.constant 0.353553385 : f32
    %484 = vector.broadcast %cst_189 : f32 to vector<2x8x8xf32>
    %485 = arith.mulf %483, %484 : vector<2x8x8xf32>
    %486 = arith.addf %485, %19 : vector<2x8x8xf32>
    %cst_190 = arith.constant dense<0xFF800000> : vector<2x8xf32>
    %487 = vector.multi_reduction <maximumf>, %486, %cst_190 [2] : vector<2x8x8xf32> to vector<2x8xf32>
    %488 = vector.shape_cast %487 : vector<2x8xf32> to vector<2x8x1xf32>
    %489 = vector.broadcast %488 : vector<2x8x1xf32> to vector<2x8x8xf32>
    %490 = arith.subf %486, %489 : vector<2x8x8xf32>
    %491 = math.exp %490 : vector<2x8x8xf32>
    %cst_191 = arith.constant dense<0.000000e+00> : vector<2x8xf32>
    %492 = vector.multi_reduction <add>, %491, %cst_191 [2] : vector<2x8x8xf32> to vector<2x8xf32>
    %493 = vector.shape_cast %492 : vector<2x8xf32> to vector<2x8x1xf32>
    %494 = tpu.reciprocal %493 {approx = true} : vector<2x8x1xf32> -> vector<2x8x1xf32>
    %495 = vector.broadcast %494 : vector<2x8x1xf32> to vector<2x8x8xf32>
    %496 = arith.mulf %491, %495 : vector<2x8x8xf32>
    "tpu.trace_start"() <{level = 10 : i32, message = "bqk,bkd->bqd"}> : () -> ()
    %cst_192 = arith.constant dense<0.000000e+00> : vector<2x8x8xf32>
    %497 = tpu.matmul %496, %482, %cst_192 {dimension_numbers = #tpu.dot_dimension_numbers<[2], [1], [1], [2], [0, 0, 0, 1, 1, 2], [0], [0]>} : vector<2x8x8xf32>, vector<2x8x8xf32>, vector<2x8x8xf32> -> vector<2x8x8xf32>
    "tpu.trace_stop"() : () -> ()
    %498 = vector.shape_cast %497 : vector<2x8x8xf32> to vector<16x8xf32>
    %499 = vector.extract_strided_slice %400 {offsets = [24, 0], sizes = [8, 32], strides = [1, 1]} : vector<32x32xf32> to vector<8x32xf32>
    %cst_193 = arith.constant dense<0.000000e+00> : vector<16x32xf32>
    %500 = tpu.matmul %498, %499, %cst_193 {dimension_numbers = #tpu.dot_dimension_numbers<[1], [0], [0], [1], [0, 0, 1, 1], [], []>} : vector<16x8xf32>, vector<8x32xf32>, vector<16x32xf32> -> vector<16x32xf32>
    %501 = arith.addf %476, %500 : vector<16x32xf32>
    %502 = vector.broadcast %402 : vector<1x32xf32> to vector<16x32xf32>
    %503 = arith.addf %501, %502 : vector<16x32xf32>
    %504 = arith.addf %361, %503 : vector<16x32xf32>
    %505 = vector.extract_strided_slice %363 {offsets = [1, 0], sizes = [1, 32], strides = [1, 1]} : vector<3x32xf32> to vector<1x32xf32>
    %506 = vector.extract_strided_slice %365 {offsets = [1, 0], sizes = [1, 32], strides = [1, 1]} : vector<3x32xf32> to vector<1x32xf32>
    %cst_194 = arith.constant dense<0.000000e+00> : vector<16xf32>
    %507 = vector.multi_reduction <add>, %504, %cst_194 [1] : vector<16x32xf32> to vector<16xf32>
    %508 = vector.shape_cast %507 : vector<16xf32> to vector<16x1xf32>
    %cst_195 = arith.constant 3.200000e+01 : f32
    %509 = vector.broadcast %cst_195 : f32 to vector<16x1xf32>
    %510 = arith.divf %508, %509 : vector<16x1xf32>
    %511 = vector.broadcast %510 : vector<16x1xf32> to vector<16x32xf32>
    %512 = arith.subf %504, %511 : vector<16x32xf32>
    %513 = arith.mulf %512, %512 : vector<16x32xf32>
    %cst_196 = arith.constant dense<0.000000e+00> : vector<16xf32>
    %514 = vector.multi_reduction <add>, %513, %cst_196 [1] : vector<16x32xf32> to vector<16xf32>
    %515 = vector.shape_cast %514 : vector<16xf32> to vector<16x1xf32>
    %cst_197 = arith.constant 0.0322580636 : f32
    %516 = vector.broadcast %cst_197 : f32 to vector<16x1xf32>
    %517 = arith.mulf %515, %516 : vector<16x1xf32>
    %518 = math.sqrt %517 : vector<16x1xf32>
    %519 = vector.broadcast %505 : vector<1x32xf32> to vector<16x32xf32>
    %520 = arith.mulf %519, %512 : vector<16x32xf32>
    %cst_198 = arith.constant 9.99999997E-7 : f32
    %521 = vector.broadcast %cst_198 : f32 to vector<16x1xf32>
    %522 = arith.addf %518, %521 : vector<16x1xf32>
    %523 = tpu.reciprocal %522 {approx = true} : vector<16x1xf32> -> vector<16x1xf32>
    %524 = vector.broadcast %523 : vector<16x1xf32> to vector<16x32xf32>
    %525 = arith.mulf %520, %524 : vector<16x32xf32>
    %526 = vector.broadcast %506 : vector<1x32xf32> to vector<16x32xf32>
    %527 = arith.addf %525, %526 : vector<16x32xf32>
    %c1_199 = arith.constant 1 : index
    %c0_200 = arith.constant 0 : index
    %c0_201 = arith.constant 0 : index
    %528 = vector.load %arg19[%c1_199, %c0_200, %c0_201] : memref<2x32x32xf32, #tpu.memory_space<vmem>>, vector<1x32x32xf32>
    %529 = vector.shape_cast %528 : vector<1x32x32xf32> to vector<32x32xf32>
    %cst_202 = arith.constant dense<0.000000e+00> : vector<16x32xf32>
    %530 = tpu.matmul %527, %529, %cst_202 {dimension_numbers = #tpu.dot_dimension_numbers<[1], [0], [0], [1], [0, 0, 1, 1], [], []>} : vector<16x32xf32>, vector<32x32xf32>, vector<16x32xf32> -> vector<16x32xf32>
    %c1_203 = arith.constant 1 : index
    %c0_204 = arith.constant 0 : index
    %c0_205 = arith.constant 0 : index
    %531 = vector.load %arg20[%c1_203, %c0_204, %c0_205] : memref<2x1x32xf32, #tpu.memory_space<vmem>>, vector<1x1x32xf32>
    %532 = vector.shape_cast %531 : vector<1x1x32xf32> to vector<1x32xf32>
    %533 = vector.broadcast %532 : vector<1x32xf32> to vector<16x32xf32>
    %534 = arith.addf %530, %533 : vector<16x32xf32>
    %c1_206 = arith.constant 1 : index
    %c0_207 = arith.constant 0 : index
    %c0_208 = arith.constant 0 : index
    %535 = vector.load %arg21[%c1_206, %c0_207, %c0_208] : memref<2x32x64xf32, #tpu.memory_space<vmem>>, vector<1x32x64xf32>
    %536 = vector.shape_cast %535 : vector<1x32x64xf32> to vector<32x64xf32>
    %cst_209 = arith.constant dense<0.000000e+00> : vector<16x64xf32>
    %537 = tpu.matmul %12, %536, %cst_209 {dimension_numbers = #tpu.dot_dimension_numbers<[1], [0], [0], [1], [0, 0, 1, 1], [], []>} : vector<16x32xf32>, vector<32x64xf32>, vector<16x64xf32> -> vector<16x64xf32>
    %c1_210 = arith.constant 1 : index
    %c0_211 = arith.constant 0 : index
    %c0_212 = arith.constant 0 : index
    %538 = vector.load %arg22[%c1_210, %c0_211, %c0_212] : memref<2x1x64xf32, #tpu.memory_space<vmem>>, vector<1x1x64xf32>
    %539 = vector.shape_cast %538 : vector<1x1x64xf32> to vector<1x64xf32>
    %540 = vector.broadcast %539 : vector<1x64xf32> to vector<16x64xf32>
    %541 = arith.addf %537, %540 : vector<16x64xf32>
    %542 = vector.extract_strided_slice %541 {offsets = [0, 0], sizes = [16, 32], strides = [1, 1]} : vector<16x64xf32> to vector<16x32xf32>
    %543 = vector.extract_strided_slice %541 {offsets = [0, 32], sizes = [16, 32], strides = [1, 1]} : vector<16x64xf32> to vector<16x32xf32>
    %c1_213 = arith.constant 1 : index
    %c0_214 = arith.constant 0 : index
    %c0_215 = arith.constant 0 : index
    %544 = vector.load %arg23[%c1_213, %c0_214, %c0_215] : memref<2x32x32xf32, #tpu.memory_space<vmem>>, vector<1x32x32xf32>
    %545 = vector.shape_cast %544 : vector<1x32x32xf32> to vector<32x32xf32>
    %c1_216 = arith.constant 1 : index
    %c0_217 = arith.constant 0 : index
    %c0_218 = arith.constant 0 : index
    %546 = vector.load %arg24[%c1_216, %c0_217, %c0_218] : memref<2x1x32xf32, #tpu.memory_space<vmem>>, vector<1x1x32xf32>
    %547 = vector.shape_cast %546 : vector<1x1x32xf32> to vector<1x32xf32>
    %548 = vector.extract_strided_slice %534 {offsets = [0, 0], sizes = [16, 8], strides = [1, 1]} : vector<16x32xf32> to vector<16x8xf32>
    %549 = vector.shape_cast %548 : vector<16x8xf32> to vector<2x8x8xf32>
    %550 = vector.extract_strided_slice %542 {offsets = [0, 0], sizes = [16, 8], strides = [1, 1]} : vector<16x32xf32> to vector<16x8xf32>
    %551 = vector.shape_cast %550 : vector<16x8xf32> to vector<2x8x8xf32>
    %552 = vector.extract_strided_slice %543 {offsets = [0, 0], sizes = [16, 8], strides = [1, 1]} : vector<16x32xf32> to vector<16x8xf32>
    %553 = vector.shape_cast %552 : vector<16x8xf32> to vector<2x8x8xf32>
    "tpu.trace_start"() <{level = 10 : i32, message = "bqd,bkd->bqk"}> : () -> ()
    %cst_219 = arith.constant dense<0.000000e+00> : vector<2x8x8xf32>
    %554 = tpu.matmul %549, %551, %cst_219 {dimension_numbers = #tpu.dot_dimension_numbers<[2], [2], [1], [1], [0, 0, 0, 1, 1, 1], [0], [0]>} : vector<2x8x8xf32>, vector<2x8x8xf32>, vector<2x8x8xf32> -> vector<2x8x8xf32>
    "tpu.trace_stop"() : () -> ()
    %cst_220 = arith.constant 0.353553385 : f32
    %555 = vector.broadcast %cst_220 : f32 to vector<2x8x8xf32>
    %556 = arith.mulf %554, %555 : vector<2x8x8xf32>
    %557 = vector.broadcast %25 : vector<2x1x8xf32> to vector<2x8x8xf32>
    %558 = arith.addf %556, %557 : vector<2x8x8xf32>
    %cst_221 = arith.constant dense<0xFF800000> : vector<2x8xf32>
    %559 = vector.multi_reduction <maximumf>, %558, %cst_221 [2] : vector<2x8x8xf32> to vector<2x8xf32>
    %560 = vector.shape_cast %559 : vector<2x8xf32> to vector<2x8x1xf32>
    %561 = vector.broadcast %560 : vector<2x8x1xf32> to vector<2x8x8xf32>
    %562 = arith.subf %558, %561 : vector<2x8x8xf32>
    %563 = math.exp %562 : vector<2x8x8xf32>
    %cst_222 = arith.constant dense<0.000000e+00> : vector<2x8xf32>
    %564 = vector.multi_reduction <add>, %563, %cst_222 [2] : vector<2x8x8xf32> to vector<2x8xf32>
    %565 = vector.shape_cast %564 : vector<2x8xf32> to vector<2x8x1xf32>
    %566 = tpu.reciprocal %565 {approx = true} : vector<2x8x1xf32> -> vector<2x8x1xf32>
    %567 = vector.broadcast %566 : vector<2x8x1xf32> to vector<2x8x8xf32>
    %568 = arith.mulf %563, %567 : vector<2x8x8xf32>
    "tpu.trace_start"() <{level = 10 : i32, message = "bqk,bkd->bqd"}> : () -> ()
    %cst_223 = arith.constant dense<0.000000e+00> : vector<2x8x8xf32>
    %569 = tpu.matmul %568, %553, %cst_223 {dimension_numbers = #tpu.dot_dimension_numbers<[2], [1], [1], [2], [0, 0, 0, 1, 1, 2], [0], [0]>} : vector<2x8x8xf32>, vector<2x8x8xf32>, vector<2x8x8xf32> -> vector<2x8x8xf32>
    "tpu.trace_stop"() : () -> ()
    %570 = vector.shape_cast %569 : vector<2x8x8xf32> to vector<16x8xf32>
    %571 = vector.extract_strided_slice %545 {offsets = [0, 0], sizes = [8, 32], strides = [1, 1]} : vector<32x32xf32> to vector<8x32xf32>
    %cst_224 = arith.constant dense<0.000000e+00> : vector<16x32xf32>
    %572 = tpu.matmul %570, %571, %cst_224 {dimension_numbers = #tpu.dot_dimension_numbers<[1], [0], [0], [1], [0, 0, 1, 1], [], []>} : vector<16x8xf32>, vector<8x32xf32>, vector<16x32xf32> -> vector<16x32xf32>
    %573 = vector.extract_strided_slice %534 {offsets = [0, 8], sizes = [16, 8], strides = [1, 1]} : vector<16x32xf32> to vector<16x8xf32>
    %574 = vector.shape_cast %573 : vector<16x8xf32> to vector<2x8x8xf32>
    %575 = vector.extract_strided_slice %542 {offsets = [0, 8], sizes = [16, 8], strides = [1, 1]} : vector<16x32xf32> to vector<16x8xf32>
    %576 = vector.shape_cast %575 : vector<16x8xf32> to vector<2x8x8xf32>
    %577 = vector.extract_strided_slice %543 {offsets = [0, 8], sizes = [16, 8], strides = [1, 1]} : vector<16x32xf32> to vector<16x8xf32>
    %578 = vector.shape_cast %577 : vector<16x8xf32> to vector<2x8x8xf32>
    "tpu.trace_start"() <{level = 10 : i32, message = "bqd,bkd->bqk"}> : () -> ()
    %cst_225 = arith.constant dense<0.000000e+00> : vector<2x8x8xf32>
    %579 = tpu.matmul %574, %576, %cst_225 {dimension_numbers = #tpu.dot_dimension_numbers<[2], [2], [1], [1], [0, 0, 0, 1, 1, 1], [0], [0]>} : vector<2x8x8xf32>, vector<2x8x8xf32>, vector<2x8x8xf32> -> vector<2x8x8xf32>
    "tpu.trace_stop"() : () -> ()
    %cst_226 = arith.constant 0.353553385 : f32
    %580 = vector.broadcast %cst_226 : f32 to vector<2x8x8xf32>
    %581 = arith.mulf %579, %580 : vector<2x8x8xf32>
    %582 = vector.broadcast %25 : vector<2x1x8xf32> to vector<2x8x8xf32>
    %583 = arith.addf %581, %582 : vector<2x8x8xf32>
    %cst_227 = arith.constant dense<0xFF800000> : vector<2x8xf32>
    %584 = vector.multi_reduction <maximumf>, %583, %cst_227 [2] : vector<2x8x8xf32> to vector<2x8xf32>
    %585 = vector.shape_cast %584 : vector<2x8xf32> to vector<2x8x1xf32>
    %586 = vector.broadcast %585 : vector<2x8x1xf32> to vector<2x8x8xf32>
    %587 = arith.subf %583, %586 : vector<2x8x8xf32>
    %588 = math.exp %587 : vector<2x8x8xf32>
    %cst_228 = arith.constant dense<0.000000e+00> : vector<2x8xf32>
    %589 = vector.multi_reduction <add>, %588, %cst_228 [2] : vector<2x8x8xf32> to vector<2x8xf32>
    %590 = vector.shape_cast %589 : vector<2x8xf32> to vector<2x8x1xf32>
    %591 = tpu.reciprocal %590 {approx = true} : vector<2x8x1xf32> -> vector<2x8x1xf32>
    %592 = vector.broadcast %591 : vector<2x8x1xf32> to vector<2x8x8xf32>
    %593 = arith.mulf %588, %592 : vector<2x8x8xf32>
    "tpu.trace_start"() <{level = 10 : i32, message = "bqk,bkd->bqd"}> : () -> ()
    %cst_229 = arith.constant dense<0.000000e+00> : vector<2x8x8xf32>
    %594 = tpu.matmul %593, %578, %cst_229 {dimension_numbers = #tpu.dot_dimension_numbers<[2], [1], [1], [2], [0, 0, 0, 1, 1, 2], [0], [0]>} : vector<2x8x8xf32>, vector<2x8x8xf32>, vector<2x8x8xf32> -> vector<2x8x8xf32>
    "tpu.trace_stop"() : () -> ()
    %595 = vector.shape_cast %594 : vector<2x8x8xf32> to vector<16x8xf32>
    %596 = vector.extract_strided_slice %545 {offsets = [8, 0], sizes = [8, 32], strides = [1, 1]} : vector<32x32xf32> to vector<8x32xf32>
    %cst_230 = arith.constant dense<0.000000e+00> : vector<16x32xf32>
    %597 = tpu.matmul %595, %596, %cst_230 {dimension_numbers = #tpu.dot_dimension_numbers<[1], [0], [0], [1], [0, 0, 1, 1], [], []>} : vector<16x8xf32>, vector<8x32xf32>, vector<16x32xf32> -> vector<16x32xf32>
    %598 = arith.addf %572, %597 : vector<16x32xf32>
    %599 = vector.extract_strided_slice %534 {offsets = [0, 16], sizes = [16, 8], strides = [1, 1]} : vector<16x32xf32> to vector<16x8xf32>
    %600 = vector.shape_cast %599 : vector<16x8xf32> to vector<2x8x8xf32>
    %601 = vector.extract_strided_slice %542 {offsets = [0, 16], sizes = [16, 8], strides = [1, 1]} : vector<16x32xf32> to vector<16x8xf32>
    %602 = vector.shape_cast %601 : vector<16x8xf32> to vector<2x8x8xf32>
    %603 = vector.extract_strided_slice %543 {offsets = [0, 16], sizes = [16, 8], strides = [1, 1]} : vector<16x32xf32> to vector<16x8xf32>
    %604 = vector.shape_cast %603 : vector<16x8xf32> to vector<2x8x8xf32>
    "tpu.trace_start"() <{level = 10 : i32, message = "bqd,bkd->bqk"}> : () -> ()
    %cst_231 = arith.constant dense<0.000000e+00> : vector<2x8x8xf32>
    %605 = tpu.matmul %600, %602, %cst_231 {dimension_numbers = #tpu.dot_dimension_numbers<[2], [2], [1], [1], [0, 0, 0, 1, 1, 1], [0], [0]>} : vector<2x8x8xf32>, vector<2x8x8xf32>, vector<2x8x8xf32> -> vector<2x8x8xf32>
    "tpu.trace_stop"() : () -> ()
    %cst_232 = arith.constant 0.353553385 : f32
    %606 = vector.broadcast %cst_232 : f32 to vector<2x8x8xf32>
    %607 = arith.mulf %605, %606 : vector<2x8x8xf32>
    %608 = vector.broadcast %25 : vector<2x1x8xf32> to vector<2x8x8xf32>
    %609 = arith.addf %607, %608 : vector<2x8x8xf32>
    %cst_233 = arith.constant dense<0xFF800000> : vector<2x8xf32>
    %610 = vector.multi_reduction <maximumf>, %609, %cst_233 [2] : vector<2x8x8xf32> to vector<2x8xf32>
    %611 = vector.shape_cast %610 : vector<2x8xf32> to vector<2x8x1xf32>
    %612 = vector.broadcast %611 : vector<2x8x1xf32> to vector<2x8x8xf32>
    %613 = arith.subf %609, %612 : vector<2x8x8xf32>
    %614 = math.exp %613 : vector<2x8x8xf32>
    %cst_234 = arith.constant dense<0.000000e+00> : vector<2x8xf32>
    %615 = vector.multi_reduction <add>, %614, %cst_234 [2] : vector<2x8x8xf32> to vector<2x8xf32>
    %616 = vector.shape_cast %615 : vector<2x8xf32> to vector<2x8x1xf32>
    %617 = tpu.reciprocal %616 {approx = true} : vector<2x8x1xf32> -> vector<2x8x1xf32>
    %618 = vector.broadcast %617 : vector<2x8x1xf32> to vector<2x8x8xf32>
    %619 = arith.mulf %614, %618 : vector<2x8x8xf32>
    "tpu.trace_start"() <{level = 10 : i32, message = "bqk,bkd->bqd"}> : () -> ()
    %cst_235 = arith.constant dense<0.000000e+00> : vector<2x8x8xf32>
    %620 = tpu.matmul %619, %604, %cst_235 {dimension_numbers = #tpu.dot_dimension_numbers<[2], [1], [1], [2], [0, 0, 0, 1, 1, 2], [0], [0]>} : vector<2x8x8xf32>, vector<2x8x8xf32>, vector<2x8x8xf32> -> vector<2x8x8xf32>
    "tpu.trace_stop"() : () -> ()
    %621 = vector.shape_cast %620 : vector<2x8x8xf32> to vector<16x8xf32>
    %622 = vector.extract_strided_slice %545 {offsets = [16, 0], sizes = [8, 32], strides = [1, 1]} : vector<32x32xf32> to vector<8x32xf32>
    %cst_236 = arith.constant dense<0.000000e+00> : vector<16x32xf32>
    %623 = tpu.matmul %621, %622, %cst_236 {dimension_numbers = #tpu.dot_dimension_numbers<[1], [0], [0], [1], [0, 0, 1, 1], [], []>} : vector<16x8xf32>, vector<8x32xf32>, vector<16x32xf32> -> vector<16x32xf32>
    %624 = arith.addf %598, %623 : vector<16x32xf32>
    %625 = vector.extract_strided_slice %534 {offsets = [0, 24], sizes = [16, 8], strides = [1, 1]} : vector<16x32xf32> to vector<16x8xf32>
    %626 = vector.shape_cast %625 : vector<16x8xf32> to vector<2x8x8xf32>
    %627 = vector.extract_strided_slice %542 {offsets = [0, 24], sizes = [16, 8], strides = [1, 1]} : vector<16x32xf32> to vector<16x8xf32>
    %628 = vector.shape_cast %627 : vector<16x8xf32> to vector<2x8x8xf32>
    %629 = vector.extract_strided_slice %543 {offsets = [0, 24], sizes = [16, 8], strides = [1, 1]} : vector<16x32xf32> to vector<16x8xf32>
    %630 = vector.shape_cast %629 : vector<16x8xf32> to vector<2x8x8xf32>
    "tpu.trace_start"() <{level = 10 : i32, message = "bqd,bkd->bqk"}> : () -> ()
    %cst_237 = arith.constant dense<0.000000e+00> : vector<2x8x8xf32>
    %631 = tpu.matmul %626, %628, %cst_237 {dimension_numbers = #tpu.dot_dimension_numbers<[2], [2], [1], [1], [0, 0, 0, 1, 1, 1], [0], [0]>} : vector<2x8x8xf32>, vector<2x8x8xf32>, vector<2x8x8xf32> -> vector<2x8x8xf32>
    "tpu.trace_stop"() : () -> ()
    %cst_238 = arith.constant 0.353553385 : f32
    %632 = vector.broadcast %cst_238 : f32 to vector<2x8x8xf32>
    %633 = arith.mulf %631, %632 : vector<2x8x8xf32>
    %634 = vector.broadcast %25 : vector<2x1x8xf32> to vector<2x8x8xf32>
    %635 = arith.addf %633, %634 : vector<2x8x8xf32>
    %cst_239 = arith.constant dense<0xFF800000> : vector<2x8xf32>
    %636 = vector.multi_reduction <maximumf>, %635, %cst_239 [2] : vector<2x8x8xf32> to vector<2x8xf32>
    %637 = vector.shape_cast %636 : vector<2x8xf32> to vector<2x8x1xf32>
    %638 = vector.broadcast %637 : vector<2x8x1xf32> to vector<2x8x8xf32>
    %639 = arith.subf %635, %638 : vector<2x8x8xf32>
    %640 = math.exp %639 : vector<2x8x8xf32>
    %cst_240 = arith.constant dense<0.000000e+00> : vector<2x8xf32>
    %641 = vector.multi_reduction <add>, %640, %cst_240 [2] : vector<2x8x8xf32> to vector<2x8xf32>
    %642 = vector.shape_cast %641 : vector<2x8xf32> to vector<2x8x1xf32>
    %643 = tpu.reciprocal %642 {approx = true} : vector<2x8x1xf32> -> vector<2x8x1xf32>
    %644 = vector.broadcast %643 : vector<2x8x1xf32> to vector<2x8x8xf32>
    %645 = arith.mulf %640, %644 : vector<2x8x8xf32>
    "tpu.trace_start"() <{level = 10 : i32, message = "bqk,bkd->bqd"}> : () -> ()
    %cst_241 = arith.constant dense<0.000000e+00> : vector<2x8x8xf32>
    %646 = tpu.matmul %645, %630, %cst_241 {dimension_numbers = #tpu.dot_dimension_numbers<[2], [1], [1], [2], [0, 0, 0, 1, 1, 2], [0], [0]>} : vector<2x8x8xf32>, vector<2x8x8xf32>, vector<2x8x8xf32> -> vector<2x8x8xf32>
    "tpu.trace_stop"() : () -> ()
    %647 = vector.shape_cast %646 : vector<2x8x8xf32> to vector<16x8xf32>
    %648 = vector.extract_strided_slice %545 {offsets = [24, 0], sizes = [8, 32], strides = [1, 1]} : vector<32x32xf32> to vector<8x32xf32>
    %cst_242 = arith.constant dense<0.000000e+00> : vector<16x32xf32>
    %649 = tpu.matmul %647, %648, %cst_242 {dimension_numbers = #tpu.dot_dimension_numbers<[1], [0], [0], [1], [0, 0, 1, 1], [], []>} : vector<16x8xf32>, vector<8x32xf32>, vector<16x32xf32> -> vector<16x32xf32>
    %650 = arith.addf %624, %649 : vector<16x32xf32>
    %651 = vector.broadcast %547 : vector<1x32xf32> to vector<16x32xf32>
    %652 = arith.addf %650, %651 : vector<16x32xf32>
    %653 = arith.addf %504, %652 : vector<16x32xf32>
    %654 = vector.extract_strided_slice %363 {offsets = [2, 0], sizes = [1, 32], strides = [1, 1]} : vector<3x32xf32> to vector<1x32xf32>
    %655 = vector.extract_strided_slice %365 {offsets = [2, 0], sizes = [1, 32], strides = [1, 1]} : vector<3x32xf32> to vector<1x32xf32>
    %cst_243 = arith.constant dense<0.000000e+00> : vector<16xf32>
    %656 = vector.multi_reduction <add>, %653, %cst_243 [1] : vector<16x32xf32> to vector<16xf32>
    %657 = vector.shape_cast %656 : vector<16xf32> to vector<16x1xf32>
    %cst_244 = arith.constant 3.200000e+01 : f32
    %658 = vector.broadcast %cst_244 : f32 to vector<16x1xf32>
    %659 = arith.divf %657, %658 : vector<16x1xf32>
    %660 = vector.broadcast %659 : vector<16x1xf32> to vector<16x32xf32>
    %661 = arith.subf %653, %660 : vector<16x32xf32>
    %662 = arith.mulf %661, %661 : vector<16x32xf32>
    %cst_245 = arith.constant dense<0.000000e+00> : vector<16xf32>
    %663 = vector.multi_reduction <add>, %662, %cst_245 [1] : vector<16x32xf32> to vector<16xf32>
    %664 = vector.shape_cast %663 : vector<16xf32> to vector<16x1xf32>
    %cst_246 = arith.constant 0.0322580636 : f32
    %665 = vector.broadcast %cst_246 : f32 to vector<16x1xf32>
    %666 = arith.mulf %664, %665 : vector<16x1xf32>
    %667 = math.sqrt %666 : vector<16x1xf32>
    %668 = vector.broadcast %654 : vector<1x32xf32> to vector<16x32xf32>
    %669 = arith.mulf %668, %661 : vector<16x32xf32>
    %cst_247 = arith.constant 9.99999997E-7 : f32
    %670 = vector.broadcast %cst_247 : f32 to vector<16x1xf32>
    %671 = arith.addf %667, %670 : vector<16x1xf32>
    %672 = tpu.reciprocal %671 {approx = true} : vector<16x1xf32> -> vector<16x1xf32>
    %673 = vector.broadcast %672 : vector<16x1xf32> to vector<16x32xf32>
    %674 = arith.mulf %669, %673 : vector<16x32xf32>
    %675 = vector.broadcast %655 : vector<1x32xf32> to vector<16x32xf32>
    %676 = arith.addf %674, %675 : vector<16x32xf32>
    %c1_248 = arith.constant 1 : index
    %c0_249 = arith.constant 0 : index
    %c0_250 = arith.constant 0 : index
    %677 = vector.load %arg25[%c1_248, %c0_249, %c0_250] : memref<2x48x64xf32, #tpu.memory_space<vmem>>, vector<1x48x64xf32>
    %678 = vector.shape_cast %677 : vector<1x48x64xf32> to vector<48x64xf32>
    %679 = vector.extract_strided_slice %678 {offsets = [0, 0], sizes = [32, 64], strides = [1, 1]} : vector<48x64xf32> to vector<32x64xf32>
    %cst_251 = arith.constant dense<0.000000e+00> : vector<16x64xf32>
    %680 = tpu.matmul %676, %679, %cst_251 {dimension_numbers = #tpu.dot_dimension_numbers<[1], [0], [0], [1], [0, 0, 1, 1], [], []>} : vector<16x32xf32>, vector<32x64xf32>, vector<16x64xf32> -> vector<16x64xf32>
    %681 = vector.extract_strided_slice %678 {offsets = [32, 0], sizes = [16, 64], strides = [1, 1]} : vector<48x64xf32> to vector<16x64xf32>
    %cst_252 = arith.constant dense<0.000000e+00> : vector<16x64xf32>
    %682 = tpu.matmul %13, %681, %cst_252 {dimension_numbers = #tpu.dot_dimension_numbers<[1], [0], [0], [1], [0, 0, 1, 1], [], []>} : vector<16x16xf32>, vector<16x64xf32>, vector<16x64xf32> -> vector<16x64xf32>
    %683 = arith.addf %680, %682 : vector<16x64xf32>
    %c1_253 = arith.constant 1 : index
    %c0_254 = arith.constant 0 : index
    %c0_255 = arith.constant 0 : index
    %684 = vector.load %arg26[%c1_253, %c0_254, %c0_255] : memref<2x1x64xf32, #tpu.memory_space<vmem>>, vector<1x1x64xf32>
    %685 = vector.shape_cast %684 : vector<1x1x64xf32> to vector<1x64xf32>
    %686 = vector.broadcast %685 : vector<1x64xf32> to vector<16x64xf32>
    %687 = arith.addf %683, %686 : vector<16x64xf32>
    %cst_256 = arith.constant 0.000000e+00 : f32
    %688 = vector.broadcast %cst_256 : f32 to vector<16x64xf32>
    %689 = arith.maximumf %687, %688 : vector<16x64xf32>
    %c1_257 = arith.constant 1 : index
    %c0_258 = arith.constant 0 : index
    %c0_259 = arith.constant 0 : index
    %690 = vector.load %arg27[%c1_257, %c0_258, %c0_259] : memref<2x64x32xf32, #tpu.memory_space<vmem>>, vector<1x64x32xf32>
    %691 = vector.shape_cast %690 : vector<1x64x32xf32> to vector<64x32xf32>
    %cst_260 = arith.constant dense<0.000000e+00> : vector<16x32xf32>
    %692 = tpu.matmul %689, %691, %cst_260 {dimension_numbers = #tpu.dot_dimension_numbers<[1], [0], [0], [1], [0, 0, 1, 1], [], []>} : vector<16x64xf32>, vector<64x32xf32>, vector<16x32xf32> -> vector<16x32xf32>
    %693 = arith.addf %653, %692 : vector<16x32xf32>
    %c1_261 = arith.constant 1 : index
    %c0_262 = arith.constant 0 : index
    %c0_263 = arith.constant 0 : index
    %694 = vector.load %arg28[%c1_261, %c0_262, %c0_263] : memref<2x1x32xf32, #tpu.memory_space<vmem>>, vector<1x1x32xf32>
    %695 = vector.shape_cast %694 : vector<1x1x32xf32> to vector<1x32xf32>
    %696 = vector.broadcast %695 : vector<1x32xf32> to vector<16x32xf32>
    %697 = arith.addf %693, %696 : vector<16x32xf32>
    %c0_264 = arith.constant 0 : index
    %c0_265 = arith.constant 0 : index
    %698 = vector.load %arg11[%c0_264, %c0_265] : memref<1x32xf32, #tpu.memory_space<vmem>>, vector<1x32xf32>
    %c0_266 = arith.constant 0 : index
    %c0_267 = arith.constant 0 : index
    %699 = vector.load %arg12[%c0_266, %c0_267] : memref<1x32xf32, #tpu.memory_space<vmem>>, vector<1x32xf32>
    %cst_268 = arith.constant dense<0.000000e+00> : vector<16xf32>
    %700 = vector.multi_reduction <add>, %697, %cst_268 [1] : vector<16x32xf32> to vector<16xf32>
    %701 = vector.shape_cast %700 : vector<16xf32> to vector<16x1xf32>
    %cst_269 = arith.constant 3.200000e+01 : f32
    %702 = vector.broadcast %cst_269 : f32 to vector<16x1xf32>
    %703 = arith.divf %701, %702 : vector<16x1xf32>
    %704 = vector.broadcast %703 : vector<16x1xf32> to vector<16x32xf32>
    %705 = arith.subf %697, %704 : vector<16x32xf32>
    %706 = arith.mulf %705, %705 : vector<16x32xf32>
    %cst_270 = arith.constant dense<0.000000e+00> : vector<16xf32>
    %707 = vector.multi_reduction <add>, %706, %cst_270 [1] : vector<16x32xf32> to vector<16xf32>
    %708 = vector.shape_cast %707 : vector<16xf32> to vector<16x1xf32>
    %cst_271 = arith.constant 0.0322580636 : f32
    %709 = vector.broadcast %cst_271 : f32 to vector<16x1xf32>
    %710 = arith.mulf %708, %709 : vector<16x1xf32>
    %711 = math.sqrt %710 : vector<16x1xf32>
    %712 = vector.broadcast %698 : vector<1x32xf32> to vector<16x32xf32>
    %713 = arith.mulf %712, %705 : vector<16x32xf32>
    %cst_272 = arith.constant 9.99999997E-7 : f32
    %714 = vector.broadcast %cst_272 : f32 to vector<16x1xf32>
    %715 = arith.addf %711, %714 : vector<16x1xf32>
    %716 = tpu.reciprocal %715 {approx = true} : vector<16x1xf32> -> vector<16x1xf32>
    %717 = vector.broadcast %716 : vector<16x1xf32> to vector<16x32xf32>
    %718 = arith.mulf %713, %717 : vector<16x32xf32>
    %719 = vector.broadcast %699 : vector<1x32xf32> to vector<16x32xf32>
    %720 = arith.addf %718, %719 : vector<16x32xf32>
    %c0_273 = arith.constant 0 : index
    %c0_274 = arith.constant 0 : index
    %721 = vector.load %arg9[%c0_273, %c0_274] : memref<32x4xf32, #tpu.memory_space<vmem>>, vector<32x4xf32>
    %cst_275 = arith.constant dense<0.000000e+00> : vector<16x4xf32>
    %722 = tpu.matmul %720, %721, %cst_275 {dimension_numbers = #tpu.dot_dimension_numbers<[1], [0], [0], [1], [0, 0, 1, 1], [], []>} : vector<16x32xf32>, vector<32x4xf32>, vector<16x4xf32> -> vector<16x4xf32>
    %c0_276 = arith.constant 0 : index
    %c0_277 = arith.constant 0 : index
    %723 = vector.load %arg10[%c0_276, %c0_277] : memref<1x4xf32, #tpu.memory_space<vmem>>, vector<1x4xf32>
    %724 = vector.broadcast %723 : vector<1x4xf32> to vector<16x4xf32>
    %725 = arith.addf %722, %724 : vector<16x4xf32>
    %c0_278 = arith.constant 0 : index
    %c0_279 = arith.constant 0 : index
    %726 = vector.load %arg29[%c0_278, %c0_279] : memref<16x4xf32, #tpu.memory_space<vmem>>, vector<16x4xf32>
    tpu.vector_store %arg29[%c0_278, %c0_279], %725 {strides = array<i32>} : memref<16x4xf32, #tpu.memory_space<vmem>>, vector<16x4xf32>,
    return
  }
}

</mosaic_0001>

<llo_original>
// kernel: decoder_y_forward.1
$region0: #{decoder_y_forward.1}
  #allocation0 [shape = 'u32[]', space=smem, size = 0x4, offset = 0x4, fixed_abs, tag = 'smem constant byte address 0x4 - core index']
  #allocation1 [shape = 'u32[144,128]{1,0:T(1,128)}', space=vmem, size = 0x12000, scoped, tag = 'internal scratch']
  %s0 = inlined_call_operand.smem [shape: u32[30], index: -1, kind: input, shape index: {}]
  %s1 = sld [smem:[%s0]]
  %s2 = scalar_lea.smem %s0, 1
  %s3 = sld [smem:[%s2]]
  %s4 = scalar_lea.smem %s0, 2
  %s5 = sld [smem:[%s4]]
  %s6 = scalar_lea.smem %s0, 3
  %s7 = sld [smem:[%s6]]
  %s8 = scalar_lea.smem %s0, 4
  %s9 = sld [smem:[%s8]]
  %s10 = scalar_lea.smem %s0, 5
  %s11 = sld [smem:[%s10]]
  %s12 = scalar_lea.smem %s0, 6
  %s13 = sld [smem:[%s12]]
  %s14 = scalar_lea.smem %s0, 7
  %s15 = sld [smem:[%s14]]
  %s16 = scalar_lea.smem %s0, 8
  %s17 = sld [smem:[%s16]]
  %s18 = scalar_lea.smem %s0, 9
  %s19 = sld [smem:[%s18]]
  %s20 = scalar_lea.smem %s0, 10
  %s21 = sld [smem:[%s20]]
  %s22 = scalar_lea.smem %s0, 11
  %s23 = sld [smem:[%s22]]
  %s24 = scalar_lea.smem %s0, 12
  %s25 = sld [smem:[%s24]]
  %s26 = scalar_lea.smem %s0, 13
  %s27 = sld [smem:[%s26]]
  %s28 = scalar_lea.smem %s0, 14
  %s29 = sld [smem:[%s28]]
  %s30 = scalar_lea.smem %s0, 15
  %s31 = sld [smem:[%s30]]
  %s32 = scalar_lea.smem %s0, 16
  %s33 = sld [smem:[%s32]]
  %s34 = scalar_lea.smem %s0, 17
  %s35 = sld [smem:[%s34]]
  %s36 = scalar_lea.smem %s0, 18
  %s37 = sld [smem:[%s36]]
  %s38 = scalar_lea.smem %s0, 19
  %s39 = sld [smem:[%s38]]
  %s40 = scalar_lea.smem %s0, 20
  %s41 = sld [smem:[%s40]]
  %s42 = scalar_lea.smem %s0, 21
  %s43 = sld [smem:[%s42]]
  %s44 = scalar_lea.smem %s0, 22
  %s45 = sld [smem:[%s44]]
  %s46 = scalar_lea.smem %s0, 23
  %s47 = sld [smem:[%s46]]
  %s48 = scalar_lea.smem %s0, 24
  %s49 = sld [smem:[%s48]]
  %s50 = scalar_lea.smem %s0, 25
  %s51 = sld [smem:[%s50]]
  %s52 = scalar_lea.smem %s0, 26
  %s53 = sld [smem:[%s52]]
  %s54 = scalar_lea.smem %s0, 27
  %s55 = sld [smem:[%s54]]
  %s56 = scalar_lea.smem %s0, 28
  %s57 = sld [smem:[%s56]]
  %s58 = scalar_lea.smem %s0, 29
  %s59 = sld [smem:[%s58]]
  %s60 = sld [smem:[#allocation0]]
  $region126: #{decoder_y_forward.1} parent=0
    _
  %s62 = ssub.s32 1, %s60
  %s63 = scalar_select 0, %s62, %s60
  // Predicated region
  $region2: #{decoder_y_forward.1} parent=0 // pred_check
    _
  $region3: #{decoder_y_forward.1} parent=0 // pred_check_branch
    %65 = sbr.rel (0) target = $region5
  $region4: #{decoder_y_forward.1} parent=0 // pred_region
    _
  $region5: #{decoder_y_forward.1} parent=0 // pred_fallthru
    _
  // Predicated region
  $region6: #{decoder_y_forward.1} parent=0 // pred_check
    _
  $region7: #{decoder_y_forward.1} parent=0 // pred_check_branch
    %67 = sbr.rel (0) target = $region9
  $region8: #{decoder_y_forward.1} parent=0 // pred_region
    _
  $region9: #{decoder_y_forward.1} parent=0 // pred_fallthru
    _
  // Predicated region
  $region10: #{decoder_y_forward.1} parent=0 // pred_check
    _
  $region11: #{decoder_y_forward.1} parent=0 // pred_check_branch
    %69 = sbr.rel (0) target = $region13
  $region12: #{decoder_y_forward.1} parent=0 // pred_region
    _
  $region13: #{decoder_y_forward.1} parent=0 // pred_fallthru
    _
  // Predicated region
  $region14: #{decoder_y_forward.1} parent=0 // pred_check
    _
  $region15: #{decoder_y_forward.1} parent=0 // pred_check_branch
    %71 = sbr.rel (0) target = $region17
  $region16: #{decoder_y_forward.1} parent=0 // pred_region
    _
  $region17: #{decoder_y_forward.1} parent=0 // pred_fallthru
    _
  // Predicated region
  $region18: #{decoder_y_forward.1} parent=0 // pred_check
    _
  $region19: #{decoder_y_forward.1} parent=0 // pred_check_branch
    %73 = sbr.rel (0) target = $region21
  $region20: #{decoder_y_forward.1} parent=0 // pred_region
    _
  $region21: #{decoder_y_forward.1} parent=0 // pred_fallthru
    _
  // Predicated region
  $region22: #{decoder_y_forward.1} parent=0 // pred_check
    _
  $region23: #{decoder_y_forward.1} parent=0 // pred_check_branch
    %75 = sbr.rel (0) target = $region25
  $region24: #{decoder_y_forward.1} parent=0 // pred_region
    _
  $region25: #{decoder_y_forward.1} parent=0 // pred_fallthru
    _
  // Predicated region
  $region26: #{decoder_y_forward.1} parent=0 // pred_check
    _
  $region27: #{decoder_y_forward.1} parent=0 // pred_check_branch
    %77 = sbr.rel (0) target = $region29
  $region28: #{decoder_y_forward.1} parent=0 // pred_region
    _
  $region29: #{decoder_y_forward.1} parent=0 // pred_fallthru
    _
  // Predicated region
  $region30: #{decoder_y_forward.1} parent=0 // pred_check
    _
  $region31: #{decoder_y_forward.1} parent=0 // pred_check_branch
    %79 = sbr.rel (0) target = $region33
  $region32: #{decoder_y_forward.1} parent=0 // pred_region
    _
  $region33: #{decoder_y_forward.1} parent=0 // pred_fallthru
    _
  // Predicated region
  $region34: #{decoder_y_forward.1} parent=0 // pred_check
    _
  $region35: #{decoder_y_forward.1} parent=0 // pred_check_branch
    %81 = sbr.rel (0) target = $region37
  $region36: #{decoder_y_forward.1} parent=0 // pred_region
    _
  $region37: #{decoder_y_forward.1} parent=0 // pred_fallthru
    _
  // Predicated region
  $region38: #{decoder_y_forward.1} parent=0 // pred_check
    _
  $region39: #{decoder_y_forward.1} parent=0 // pred_check_branch
    %83 = sbr.rel (0) target = $region41
  $region40: #{decoder_y_forward.1} parent=0 // pred_region
    _
  $region41: #{decoder_y_forward.1} parent=0 // pred_fallthru
    _
  // Predicated region
  $region42: #{decoder_y_forward.1} parent=0 // pred_check
    _
  $region43: #{decoder_y_forward.1} parent=0 // pred_check_branch
    %85 = sbr.rel (0) target = $region45
  $region44: #{decoder_y_forward.1} parent=0 // pred_region
    _
  $region45: #{decoder_y_forward.1} parent=0 // pred_fallthru
    _
  // Predicated region
  $region46: #{decoder_y_forward.1} parent=0 // pred_check
    _
  $region47: #{decoder_y_forward.1} parent=0 // pred_check_branch
    %87 = sbr.rel (0) target = $region49
  $region48: #{decoder_y_forward.1} parent=0 // pred_region
    _
  $region49: #{decoder_y_forward.1} parent=0 // pred_fallthru
    _
  // Predicated region
  $region50: #{decoder_y_forward.1} parent=0 // pred_check
    _
  $region51: #{decoder_y_forward.1} parent=0 // pred_check_branch
    %89 = sbr.rel (0) target = $region53
  $region52: #{decoder_y_forward.1} parent=0 // pred_region
    _
  $region53: #{decoder_y_forward.1} parent=0 // pred_fallthru
    _
  // Predicated region
  $region54: #{decoder_y_forward.1} parent=0 // pred_check
    _
  $region55: #{decoder_y_forward.1} parent=0 // pred_check_branch
    %91 = sbr.rel (0) target = $region57
  $region56: #{decoder_y_forward.1} parent=0 // pred_region
    _
  $region57: #{decoder_y_forward.1} parent=0 // pred_fallthru
    _
  // Predicated region
  $region58: #{decoder_y_forward.1} parent=0 // pred_check
    _
  $region59: #{decoder_y_forward.1} parent=0 // pred_check_branch
    %93 = sbr.rel (0) target = $region61
  $region60: #{decoder_y_forward.1} parent=0 // pred_region
    _
  $region61: #{decoder_y_forward.1} parent=0 // pred_fallthru
    _
  // Predicated region
  $region62: #{decoder_y_forward.1} parent=0 // pred_check
    _
  $region63: #{decoder_y_forward.1} parent=0 // pred_check_branch
    %95 = sbr.rel (0) target = $region65
  $region64: #{decoder_y_forward.1} parent=0 // pred_region
    _
  $region65: #{decoder_y_forward.1} parent=0 // pred_fallthru
    _
  // Predicated region
  $region66: #{decoder_y_forward.1} parent=0 // pred_check
    _
  $region67: #{decoder_y_forward.1} parent=0 // pred_check_branch
    %97 = sbr.rel (0) target = $region69
  $region68: #{decoder_y_forward.1} parent=0 // pred_region
    _
  $region69: #{decoder_y_forward.1} parent=0 // pred_fallthru
    _
  // Predicated region
  $region70: #{decoder_y_forward.1} parent=0 // pred_check
    _
  $region71: #{decoder_y_forward.1} parent=0 // pred_check_branch
    %99 = sbr.rel (0) target = $region73
  $region72: #{decoder_y_forward.1} parent=0 // pred_region
    _
  $region73: #{decoder_y_forward.1} parent=0 // pred_fallthru
    _
  // Predicated region
  $region74: #{decoder_y_forward.1} parent=0 // pred_check
    _
  $region75: #{decoder_y_forward.1} parent=0 // pred_check_branch
    %101 = sbr.rel (0) target = $region77
  $region76: #{decoder_y_forward.1} parent=0 // pred_region
    _
  $region77: #{decoder_y_forward.1} parent=0 // pred_fallthru
    _
  // Predicated region
  $region78: #{decoder_y_forward.1} parent=0 // pred_check
    _
  $region79: #{decoder_y_forward.1} parent=0 // pred_check_branch
    %103 = sbr.rel (0) target = $region81
  $region80: #{decoder_y_forward.1} parent=0 // pred_region
    _
  $region81: #{decoder_y_forward.1} parent=0 // pred_fallthru
    _
  // Predicated region
  $region82: #{decoder_y_forward.1} parent=0 // pred_check
    _
  $region83: #{decoder_y_forward.1} parent=0 // pred_check_branch
    %105 = sbr.rel (0) target = $region85
  $region84: #{decoder_y_forward.1} parent=0 // pred_region
    _
  $region85: #{decoder_y_forward.1} parent=0 // pred_fallthru
    _
  // Predicated region
  $region86: #{decoder_y_forward.1} parent=0 // pred_check
    _
  $region87: #{decoder_y_forward.1} parent=0 // pred_check_branch
    %107 = sbr.rel (0) target = $region89
  $region88: #{decoder_y_forward.1} parent=0 // pred_region
    _
  $region89: #{decoder_y_forward.1} parent=0 // pred_fallthru
    _
  // Predicated region
  $region90: #{decoder_y_forward.1} parent=0 // pred_check
    _
  $region91: #{decoder_y_forward.1} parent=0 // pred_check_branch
    %109 = sbr.rel (0) target = $region93
  $region92: #{decoder_y_forward.1} parent=0 // pred_region
    _
  $region93: #{decoder_y_forward.1} parent=0 // pred_fallthru
    _
  // Predicated region
  $region94: #{decoder_y_forward.1} parent=0 // pred_check
    _
  $region95: #{decoder_y_forward.1} parent=0 // pred_check_branch
    %111 = sbr.rel (0) target = $region97
  $region96: #{decoder_y_forward.1} parent=0 // pred_region
    _
  $region97: #{decoder_y_forward.1} parent=0 // pred_fallthru
    _
  // Predicated region
  $region98: #{decoder_y_forward.1} parent=0 // pred_check
    _
  $region99: #{decoder_y_forward.1} parent=0 // pred_check_branch
    %113 = sbr.rel (0) target = $region101
  $region100: #{decoder_y_forward.1} parent=0 // pred_region
    _
  $region101: #{decoder_y_forward.1} parent=0 // pred_fallthru
    _
  // Predicated region
  $region102: #{decoder_y_forward.1} parent=0 // pred_check
    _
  $region103: #{decoder_y_forward.1} parent=0 // pred_check_branch
    %115 = sbr.rel (0) target = $region105
  $region104: #{decoder_y_forward.1} parent=0 // pred_region
    _
  $region105: #{decoder_y_forward.1} parent=0 // pred_fallthru
    _
  // Predicated region
  $region106: #{decoder_y_forward.1} parent=0 // pred_check
    _
  $region107: #{decoder_y_forward.1} parent=0 // pred_check_branch
    %117 = sbr.rel (0) target = $region109
  $region108: #{decoder_y_forward.1} parent=0 // pred_region
    _
  $region109: #{decoder_y_forward.1} parent=0 // pred_fallthru
    _
  // Predicated region
  $region110: #{decoder_y_forward.1} parent=0 // pred_check
    _
  $region111: #{decoder_y_forward.1} parent=0 // pred_check_branch
    %119 = sbr.rel (0) target = $region113
  $region112: #{decoder_y_forward.1} parent=0 // pred_region
    _
  $region113: #{decoder_y_forward.1} parent=0 // pred_fallthru
    _
  // Predicated region
  $region114: #{decoder_y_forward.1} parent=0 // pred_check
    _
  $region115: #{decoder_y_forward.1} parent=0 // pred_check_branch
    %121 = sbr.rel (0) target = $region117
  $region116: #{decoder_y_forward.1} parent=0 // pred_region
    _
  $region117: #{decoder_y_forward.1} parent=0 // pred_fallthru
    _
  %v122 = vld [vmem:[%s3] sm:$0x77]
  %v123 = vld [vmem:[%s3 + $0x8] sm:$0x77]
  %v124 = vld [vmem:[%s3 + $0x10] sm:$0x77]
  %v125 = vld [vmem:[%s3 + $0x18] sm:$0x77]
  %v126 = vld [vmem:[%s3 + $0x20] sm:$0x77]
  %v127 = vld [vmem:[%s3 + $0x28] sm:$0x77]
  %v128 = vld [vmem:[%s3 + $0x30] sm:$0x77]
  %v129 = vld [vmem:[%s3 + $0x38] sm:$0x77]
  %v130 = vld [vmem:[%s3 + $0x40] sm:$0x77]
  %v131 = vld [vmem:[%s3 + $0x48] sm:$0x77]
  %v132 = vld [vmem:[%s3 + $0x50] sm:$0x77]
  %v133 = vld [vmem:[%s3 + $0x58] sm:$0x77]
  %v134 = vld [vmem:[%s3 + $0x60] sm:$0x77]
  %v135 = vld [vmem:[%s3 + $0x68] sm:$0x77]
  %v136 = vld [vmem:[%s3 + $0x70] sm:$0x77]
  %v137 = vld [vmem:[%s3 + $0x78] sm:$0x77]
  %v154 = vcombine.high %v122, %v122
  %v155 = vcombine.high %v123, %v123
  %v156 = vcombine.high %v124, %v124
  %v157 = vcombine.high %v125, %v125
  %v158 = vcombine.high %v126, %v126
  %v159 = vcombine.high %v127, %v127
  %v160 = vcombine.high %v128, %v128
  %v161 = vcombine.high %v129, %v129
  %v162 = vcombine.high %v130, %v130
  %v163 = vcombine.high %v131, %v131
  %v164 = vcombine.high %v132, %v132
  %v165 = vcombine.high %v133, %v133
  %v166 = vcombine.high %v134, %v134
  %v167 = vcombine.high %v135, %v135
  %v168 = vcombine.high %v136, %v136
  %v169 = vcombine.high %v137, %v137
  %vm186 = vcmask 1042432
  %v187 = vsel %vm186, %v122, 0.0
  %v188 = vsel %vm186, %v154, 0.0
  %v189 = vadd.f32 %v187, %v188
  %190 = vadd.xlane.f32.xlu0 %v189
  %v191 = vpop.xlane.xlu0 %190
  %v192 = vsel %vm186, %v123, 0.0
  %v193 = vsel %vm186, %v155, 0.0
  %v194 = vadd.f32 %v192, %v193
  %195 = vadd.xlane.f32.xlu0 %v194
  %v196 = vpop.xlane.xlu0 %195
  %v197 = vsel %vm186, %v124, 0.0
  %v198 = vsel %vm186, %v156, 0.0
  %v199 = vadd.f32 %v197, %v198
  %200 = vadd.xlane.f32.xlu0 %v199
  %v201 = vpop.xlane.xlu0 %200
  %v202 = vsel %vm186, %v125, 0.0
  %v203 = vsel %vm186, %v157, 0.0
  %v204 = vadd.f32 %v202, %v203
  %205 = vadd.xlane.f32.xlu0 %v204
  %v206 = vpop.xlane.xlu0 %205
  %v207 = vsel %vm186, %v126, 0.0
  %v208 = vsel %vm186, %v158, 0.0
  %v209 = vadd.f32 %v207, %v208
  %210 = vadd.xlane.f32.xlu0 %v209
  %v211 = vpop.xlane.xlu0 %210
  %v212 = vsel %vm186, %v127, 0.0
  %v213 = vsel %vm186, %v159, 0.0
  %v214 = vadd.f32 %v212, %v213
  %215 = vadd.xlane.f32.xlu0 %v214
  %v216 = vpop.xlane.xlu0 %215
  %v217 = vsel %vm186, %v128, 0.0
  %v218 = vsel %vm186, %v160, 0.0
  %v219 = vadd.f32 %v217, %v218
  %220 = vadd.xlane.f32.xlu0 %v219
  %v221 = vpop.xlane.xlu0 %220
  %v222 = vsel %vm186, %v129, 0.0
  %v223 = vsel %vm186, %v161, 0.0
  %v224 = vadd.f32 %v222, %v223
  %225 = vadd.xlane.f32.xlu0 %v224
  %v226 = vpop.xlane.xlu0 %225
  %v227 = vsel %vm186, %v130, 0.0
  %v228 = vsel %vm186, %v162, 0.0
  %v229 = vadd.f32 %v227, %v228
  %230 = vadd.xlane.f32.xlu0 %v229
  %v231 = vpop.xlane.xlu0 %230
  %v232 = vsel %vm186, %v131, 0.0
  %v233 = vsel %vm186, %v163, 0.0
  %v234 = vadd.f32 %v232, %v233
  %235 = vadd.xlane.f32.xlu0 %v234
  %v236 = vpop.xlane.xlu0 %235
  %v237 = vsel %vm186, %v132, 0.0
  %v238 = vsel %vm186, %v164, 0.0
  %v239 = vadd.f32 %v237, %v238
  %240 = vadd.xlane.f32.xlu0 %v239
  %v241 = vpop.xlane.xlu0 %240
  %v242 = vsel %vm186, %v133, 0.0
  %v243 = vsel %vm186, %v165, 0.0
  %v244 = vadd.f32 %v242, %v243
  %245 = vadd.xlane.f32.xlu0 %v244
  %v246 = vpop.xlane.xlu0 %245
  %v247 = vsel %vm186, %v134, 0.0
  %v248 = vsel %vm186, %v166, 0.0
  %v249 = vadd.f32 %v247, %v248
  %250 = vadd.xlane.f32.xlu0 %v249
  %v251 = vpop.xlane.xlu0 %250
  %v252 = vsel %vm186, %v135, 0.0
  %v253 = vsel %vm186, %v167, 0.0
  %v254 = vadd.f32 %v252, %v253
  %255 = vadd.xlane.f32.xlu0 %v254
  %v256 = vpop.xlane.xlu0 %255
  %v257 = vsel %vm186, %v136, 0.0
  %v258 = vsel %vm186, %v168, 0.0
  %v259 = vadd.f32 %v257, %v258
  %260 = vadd.xlane.f32.xlu0 %v259
  %v261 = vpop.xlane.xlu0 %260
  %v262 = vsel %vm186, %v137, 0.0
  %v263 = vsel %vm186, %v169, 0.0
  %v264 = vadd.f32 %v262, %v263
  %265 = vadd.xlane.f32.xlu0 %v264
  %v266 = vpop.xlane.xlu0 %265
  %v267 = vrcp.pop 256.0
  %v268 = vmul.f32 %v191, %v267
  %v269 = vmul.f32 %v196, %v267
  %v270 = vmul.f32 %v201, %v267
  %v271 = vmul.f32 %v206, %v267
  %v272 = vmul.f32 %v211, %v267
  %v273 = vmul.f32 %v216, %v267
  %v274 = vmul.f32 %v221, %v267
  %v275 = vmul.f32 %v226, %v267
  %v276 = vmul.f32 %v231, %v267
  %v277 = vmul.f32 %v236, %v267
  %v278 = vmul.f32 %v241, %v267
  %v279 = vmul.f32 %v246, %v267
  %v280 = vmul.f32 %v251, %v267
  %v281 = vmul.f32 %v256, %v267
  %v282 = vmul.f32 %v261, %v267
  %v283 = vmul.f32 %v266, %v267
  %v284 = vld [vmem:[%s1] sm:$0xff]
  %v285 = vld [vmem:[%s1 + $0x8] sm:$0xff]
  %v286 = vld [vmem:[%s7] sm:$0x7]
  %v287 = vld [vmem:[%s9] sm:$0x7]
  %v304 = vlaneseq
  %v305 = vand.u32 %v304, 127
  %v306 = vlaneseq
  %v307 = vshrl.u32 %v306, 7
  %v308 = vsub.s32 %v305, %v307
  %v309 = vrot.slane %v268, %v308
  %v310 = vlaneseq
  %v311 = vshrl.u32 %v310, 7
  %v312 = vsub.s32 %v305, %v311
  %v313 = vrot.slane %v269, %v312
  %v314 = vlaneseq
  %v315 = vshrl.u32 %v314, 7
  %v316 = vsub.s32 %v305, %v315
  %v317 = vrot.slane %v270, %v316
  %v318 = vlaneseq
  %v319 = vshrl.u32 %v318, 7
  %v320 = vsub.s32 %v305, %v319
  %v321 = vrot.slane %v271, %v320
  %v322 = vlaneseq
  %v323 = vshrl.u32 %v322, 7
  %v324 = vsub.s32 %v305, %v323
  %v325 = vrot.slane %v272, %v324
  %v326 = vlaneseq
  %v327 = vshrl.u32 %v326, 7
  %v328 = vsub.s32 %v305, %v327
  %v329 = vrot.slane %v273, %v328
  %v330 = vlaneseq
  %v331 = vshrl.u32 %v330, 7
  %v332 = vsub.s32 %v305, %v331
  %v333 = vrot.slane %v274, %v332
  %v334 = vlaneseq
  %v335 = vshrl.u32 %v334, 7
  %v336 = vsub.s32 %v305, %v335
  %v337 = vrot.slane %v275, %v336
  %v338 = vlaneseq
  %v339 = vshrl.u32 %v338, 7
  %v340 = vsub.s32 %v305, %v339
  %v341 = vrot.slane %v276, %v340
  %v342 = vlaneseq
  %v343 = vshrl.u32 %v342, 7
  %v344 = vsub.s32 %v305, %v343
  %v345 = vrot.slane %v277, %v344
  %v346 = vlaneseq
  %v347 = vshrl.u32 %v346, 7
  %v348 = vsub.s32 %v305, %v347
  %v349 = vrot.slane %v278, %v348
  %v350 = vlaneseq
  %v351 = vshrl.u32 %v350, 7
  %v352 = vsub.s32 %v305, %v351
  %v353 = vrot.slane %v279, %v352
  %v354 = vlaneseq
  %v355 = vshrl.u32 %v354, 7
  %v356 = vsub.s32 %v305, %v355
  %v357 = vrot.slane %v280, %v356
  %v358 = vlaneseq
  %v359 = vshrl.u32 %v358, 7
  %v360 = vsub.s32 %v305, %v359
  %v361 = vrot.slane %v281, %v360
  %v362 = vlaneseq
  %v363 = vshrl.u32 %v362, 7
  %v364 = vsub.s32 %v305, %v363
  %v365 = vrot.slane %v282, %v364
  %v366 = vlaneseq
  %v367 = vshrl.u32 %v366, 7
  %v368 = vsub.s32 %v305, %v367
  %v369 = vrot.slane %v283, %v368
  %vm370 = vcmask 1041409
  %v371 = vsel %vm370, %v313, %v309
  %vm372 = vcmask 1042434
  %v373 = vsel %vm372, %v317, %v371
  %vm374 = vcmask 1043459
  %v375 = vsel %vm374, %v321, %v373
  %vm376 = vcmask 1044484
  %v377 = vsel %vm376, %v325, %v375
  %vm378 = vcmask 1045509
  %v379 = vsel %vm378, %v329, %v377
  %vm380 = vcmask 1046534
  %v381 = vsel %vm380, %v333, %v379
  %vm382 = vcmask 1047559
  %v383 = vsel %vm382, %v337, %v381
  %v384 = vsel %vm370, %v345, %v341
  %v385 = vsel %vm372, %v349, %v384
  %v386 = vsel %vm374, %v353, %v385
  %v387 = vsel %vm376, %v357, %v386
  %v388 = vsel %vm378, %v361, %v387
  %v389 = vsel %vm380, %v365, %v388
  %v390 = vsel %vm382, %v369, %v389
  %vm391 = vcmask 23552
  %v392 = vsel %vm391, %v383, 0
  %v394 = vsel %vm391, %v390, 0
  %v397 = vsel %vm186, %v287, 0
  %399 = vmatprep.subr.mxu0 0.0
  %400 = vmatpush1.msra.mxu0 %v397
  %401 = vmatprep.subr.mxu0 0.0
  %402 = vmatpush1.msra.mxu0 0.0
  %403 = vmatprep.subr.mxu0 0.0
  %404 = vmatpush1.msra.mxu0 0.0
  %405 = vmatprep.subr.mxu0 0.0
  %406 = vmatpush1.msra.mxu0 0.0
  %407 = vmatprep.subr.mxu0 0.0
  %408 = vmatpush1.msra.mxu0 0.0
  %409 = vmatprep.subr.mxu0 0.0
  %410 = vmatpush1.msra.mxu0 0.0
  %411 = vmatprep.subr.mxu0 0.0
  %412 = vmatpush1.msra.mxu0 0.0
  %413 = vmatprep.subr.mxu0 0.0
  %414 = vmatpush1.msra.mxu0 0.0
  %415 = vmatprep.subr.mxu0 0.0
  %416 = vmatpush1.msra.mxu0 0.0
  %417 = vmatprep.subr.mxu0 0.0
  %418 = vmatpush1.msra.mxu0 0.0
  %419 = vmatprep.subr.mxu0 0.0
  %420 = vmatpush1.msra.mxu0 0.0
  %421 = vmatprep.subr.mxu0 0.0
  %422 = vmatpush1.msra.mxu0 0.0
  %423 = vmatprep.subr.mxu0 0.0
  %424 = vmatpush1.msra.mxu0 0.0
  %425 = vmatprep.subr.mxu0 0.0
  %426 = vmatpush1.msra.mxu0 0.0
  %427 = vmatprep.subr.mxu0 0.0
  %428 = vmatpush1.msra.mxu0 0.0
  %429 = vmatprep.subr.mxu0 0.0
  %430 = vmatpush1.msra.mxu0 0.0
  %431 = vmatprep.subr.mxu0 0.0
  %432 = vmatpush1.msra.mxu0 0.0
  %433 = vmatprep.subr.mxu0 0.0
  %434 = vmatpush1.msra.mxu0 0.0
  %435 = vmatprep.subr.mxu0 0.0
  %436 = vmatpush1.msra.mxu0 0.0
  %437 = vmatprep.subr.mxu0 0.0
  %438 = vmatpush1.msra.mxu0 0.0
  %439 = vmatprep.subr.mxu0 0.0
  %440 = vmatpush1.msra.mxu0 0.0
  %441 = vmatprep.subr.mxu0 0.0
  %442 = vmatpush1.msra.mxu0 0.0
  %443 = vmatprep.subr.mxu0 0.0
  %444 = vmatpush1.msra.mxu0 0.0
  %445 = vmatprep.subr.mxu0 0.0
  %446 = vmatpush1.msra.mxu0 0.0
  %447 = vmatprep.subr.mxu0 0.0
  %448 = vmatpush1.msra.mxu0 0.0
  %449 = vmatprep.subr.mxu0 0.0
  %450 = vmatpush1.msra.mxu0 0.0
  %451 = vmatprep.subr.mxu0 0.0
  %452 = vmatpush1.msra.mxu0 0.0
  %453 = vmatprep.subr.mxu0 0.0
  %454 = vmatpush1.msra.mxu0 0.0
  %455 = vmatprep.subr.mxu0 0.0
  %456 = vmatpush1.msra.mxu0 0.0
  %457 = vmatprep.subr.mxu0 0.0
  %458 = vmatpush1.msra.mxu0 0.0
  %459 = vmatprep.subr.mxu0 0.0
  %460 = vmatpush1.msra.mxu0 0.0
  %461 = vmatprep.subr.mxu0 0.0
  %462 = vmatpush1.msra.mxu0 0.0
  %463 = vmatprep.mubr.f32.mxu0 0.0
  %464 = vmatmul.mubr.f32.gmra.mrb[0].mxu0 %v392
  %v465 = vpop.f32.mrb[0].mxu0
  %v466 = vadd.f32 0.0, %v465
  %v467 = vpop.f32.mrb[0].mxu0
  %468 = vmatprep.mubr.f32.mxu0 0.0
  %469 = vmatmul.mubr.f32.gmra.mrb[0].mxu0 %v394
  %v470 = vpop.f32.mrb[0].mxu0
  %v471 = vadd.f32 0.0, %v470
  %v472 = vpop.f32.mrb[0].mxu0
  %473 = vdwg.mxu0
  %v475 = vsel %vm391, %v284, 0
  %v478 = vsel %vm391, %v285, 0
  %v481 = vsel %vm186, %v286, 0
  %483 = vmatprep.subr.mxu0 0.0
  %484 = vmatpush1.msra.mxu0 %v481
  %485 = vmatprep.subr.mxu0 0.0
  %486 = vmatpush1.msra.mxu0 0.0
  %487 = vmatprep.subr.mxu0 0.0
  %488 = vmatpush1.msra.mxu0 0.0
  %489 = vmatprep.subr.mxu0 0.0
  %490 = vmatpush1.msra.mxu0 0.0
  %491 = vmatprep.subr.mxu0 0.0
  %492 = vmatpush1.msra.mxu0 0.0
  %493 = vmatprep.subr.mxu0 0.0
  %494 = vmatpush1.msra.mxu0 0.0
  %495 = vmatprep.subr.mxu0 0.0
  %496 = vmatpush1.msra.mxu0 0.0
  %497 = vmatprep.subr.mxu0 0.0
  %498 = vmatpush1.msra.mxu0 0.0
  %499 = vmatprep.subr.mxu0 0.0
  %500 = vmatpush1.msra.mxu0 0.0
  %501 = vmatprep.subr.mxu0 0.0
  %502 = vmatpush1.msra.mxu0 0.0
  %503 = vmatprep.subr.mxu0 0.0
  %504 = vmatpush1.msra.mxu0 0.0
  %505 = vmatprep.subr.mxu0 0.0
  %506 = vmatpush1.msra.mxu0 0.0
  %507 = vmatprep.subr.mxu0 0.0
  %508 = vmatpush1.msra.mxu0 0.0
  %509 = vmatprep.subr.mxu0 0.0
  %510 = vmatpush1.msra.mxu0 0.0
  %511 = vmatprep.subr.mxu0 0.0
  %512 = vmatpush1.msra.mxu0 0.0
  %513 = vmatprep.subr.mxu0 0.0
  %514 = vmatpush1.msra.mxu0 0.0
  %515 = vmatprep.subr.mxu0 0.0
  %516 = vmatpush1.msra.mxu0 0.0
  %517 = vmatprep.subr.mxu0 0.0
  %518 = vmatpush1.msra.mxu0 0.0
  %519 = vmatprep.subr.mxu0 0.0
  %520 = vmatpush1.msra.mxu0 0.0
  %521 = vmatprep.subr.mxu0 0.0
  %522 = vmatpush1.msra.mxu0 0.0
  %523 = vmatprep.subr.mxu0 0.0
  %524 = vmatpush1.msra.mxu0 0.0
  %525 = vmatprep.subr.mxu0 0.0
  %526 = vmatpush1.msra.mxu0 0.0
  %527 = vmatprep.subr.mxu0 0.0
  %528 = vmatpush1.msra.mxu0 0.0
  %529 = vmatprep.subr.mxu0 0.0
  %530 = vmatpush1.msra.mxu0 0.0
  %531 = vmatprep.subr.mxu0 0.0
  %532 = vmatpush1.msra.mxu0 0.0
  %533 = vmatprep.subr.mxu0 0.0
  %534 = vmatpush1.msra.mxu0 0.0
  %535 = vmatprep.subr.mxu0 0.0
  %536 = vmatpush1.msra.mxu0 0.0
  %537 = vmatprep.subr.mxu0 0.0
  %538 = vmatpush1.msra.mxu0 0.0
  %539 = vmatprep.subr.mxu0 0.0
  %540 = vmatpush1.msra.mxu0 0.0
  %541 = vmatprep.subr.mxu0 0.0
  %542 = vmatpush1.msra.mxu0 0.0
  %543 = vmatprep.subr.mxu0 0.0
  %544 = vmatpush1.msra.mxu0 0.0
  %545 = vmatprep.subr.mxu0 0.0
  %546 = vmatpush1.msra.mxu0 0.0
  %547 = vmatprep.mubr.f32.mxu0 0.0
  %548 = vmatmul.mubr.f32.gmra.mrb[0].mxu0 %v475
  %v549 = vpop.f32.mrb[0].mxu0
  %v550 = vadd.f32 %v466, %v549
  %v551 = vpop.f32.mrb[0].mxu0
  %552 = vmatprep.mubr.f32.mxu0 0.0
  %553 = vmatmul.mubr.f32.gmra.mrb[0].mxu0 %v478
  %v554 = vpop.f32.mrb[0].mxu0
  %v555 = vadd.f32 %v471, %v554
  %v556 = vpop.f32.mrb[0].mxu0
  %557 = vdwg.mxu0
  %v558 = vld [vmem:[%s5] sm:$0xff]
  %v559 = vld [vmem:[%s5 + $0x8] sm:$0xff]
  %v560 = vadd.f32 %v550, %v558
  %v561 = vadd.f32 %v555, %v559
  %v562 = vld [vmem:[%s11] sm:$0xff]
  %v563 = vld [vmem:[%s11 + $0x8] sm:$0xff]
  %v564 = vld [vmem:[%s13] sm:$0xff]
  %v565 = vld [vmem:[%s13 + $0x8] sm:$0xff]
  %v566 = vld [vmem:[%s17] sm:$0xff]
  %v567 = vld [vmem:[%s17 + $0x8] sm:$0xff]
  %vm568 = vcmp.gt.f32.partialorder %v566, 0.0
  %vm569 = vcmp.gt.f32.partialorder %v567, 0.0
  %v570 = vsel %vm568, 0.0, -1e+09
  %v571 = vsel %vm569, 0.0, -1e+09
  %v572 = vld [vmem:[%s15] sm:$0x1]
  %v573 = vld [vmem:[%s15 + $0x1] sm:$0x1]
  %vm574 = vcmp.gt.f32.partialorder %v572, 0.0
  %vm575 = vcmp.gt.f32.partialorder %v573, 0.0
  %v576 = vsel %vm574, 0.0, -1e+09
  %v577 = vsel %vm575, 0.0, -1e+09
  %v578 = vld [vmem:[%s27] sm:$0x7]
  %v579 = vld [vmem:[%s29] sm:$0x7]
  %vm580 = vcmask 261120
  %v581 = vsel %vm580, %v560, 0.0
  %582 = vadd.xlane.f32.xlu0 %v581
  %v583 = vpop.xlane.xlu0 %582
  %v584 = vsel %vm580, %v561, 0.0
  %585 = vadd.xlane.f32.xlu0 %v584
  %v586 = vpop.xlane.xlu0 %585
  %v587 = vrcp.pop 32.0
  %v588 = vmul.f32 %v583, %v587
  %v589 = vmul.f32 %v586, %v587
  %v590 = vsub.f32 %v560, %v588
  %v591 = vsub.f32 %v561, %v589
  %v592 = vmul.f32 %v590, %v590
  %v593 = vmul.f32 %v591, %v591
  %v594 = vsel %vm580, %v592, 0.0
  %595 = vadd.xlane.f32.xlu0 %v594
  %v596 = vpop.xlane.xlu0 %595
  %v597 = vsel %vm580, %v593, 0.0
  %598 = vadd.xlane.f32.xlu0 %v597
  %v599 = vpop.xlane.xlu0 %598
  %v600 = vmul.f32 %v596, 0.032258064
  %v601 = vmul.f32 %v599, 0.032258064
  %v602 = vrsqrt.pop %v600
  %v603 = vmul.f32 %v600, %v602
  %vm604 = vcmp.eq.f32.partialorder %v600, inf
  %v605 = vsel %vm604, %v600, %v603
  %vm606 = vcmp.eq.f32.partialorder %v600, 0.0
  %v607 = vand.u32 %v600, 2147483648
  %v608 = vsel %vm606, %v607, %v605
  %v609 = vrsqrt.pop %v601
  %v610 = vmul.f32 %v601, %v609
  %vm611 = vcmp.eq.f32.partialorder %v601, inf
  %v612 = vsel %vm611, %v601, %v610
  %vm613 = vcmp.eq.f32.partialorder %v601, 0.0
  %v614 = vand.u32 %v601, 2147483648
  %v615 = vsel %vm613, %v614, %v612
  %v616 = vlaneseq
  %v617 = vshrl.u32 %v616, 7
  %v618 = vsub.s32 0, %v617
  %v619 = vrot.slane %v578, %v618
  %v620 = vmul.f32 %v619, %v590
  %v621 = vmul.f32 %v619, %v591
  %v622 = vadd.f32 %v608, 1e-06
  %v623 = vadd.f32 %v615, 1e-06
  %v624 = vrcp.pop %v622
  %v625 = vrcp.pop %v623
  %v626 = vmul.f32 %v620, %v624
  %v627 = vmul.f32 %v621, %v625
  %v628 = vlaneseq
  %v629 = vshrl.u32 %v628, 7
  %v630 = vsub.s32 0, %v629
  %v631 = vrot.slane %v579, %v630
  %v632 = vadd.f32 %v626, %v631
  %v633 = vadd.f32 %v627, %v631
  %v634 = vld [vmem:[%s31] sm:$0xff]
  %v635 = vld [vmem:[%s31 + $0x8] sm:$0xff]
  %v636 = vld [vmem:[%s31 + $0x10] sm:$0xff]
  %v637 = vld [vmem:[%s31 + $0x18] sm:$0xff]
  %v638 = vld [vmem:[%s33] sm:$0x1]
  %v640 = vlaneseq
  %v641 = vshrl.u32 %v640, 7
  %v642 = vsub.s32 0, %v641
  %v643 = vrot.slane %v638, %v642
  %v646 = vsel %vm580, %v632, 0
  %v649 = vsel %vm580, %v633, 0
  %651 = vmatprep.subr.mxu0 0.0
  %652 = vmatpush1.msra.mxu0 %v634
  %653 = vmatprep.subr.mxu0 0.0
  %654 = vmatpush1.msra.mxu0 %v635
  %655 = vmatprep.subr.mxu0 0.0
  %656 = vmatpush1.msra.mxu0 %v636
  %657 = vmatprep.subr.mxu0 0.0
  %658 = vmatpush1.msra.mxu0 %v637
  %659 = vmatprep.subr.mxu0 0.0
  %660 = vmatpush1.msra.mxu0 0.0
  %661 = vmatprep.subr.mxu0 0.0
  %662 = vmatpush1.msra.mxu0 0.0
  %663 = vmatprep.subr.mxu0 0.0
  %664 = vmatpush1.msra.mxu0 0.0
  %665 = vmatprep.subr.mxu0 0.0
  %666 = vmatpush1.msra.mxu0 0.0
  %667 = vmatprep.subr.mxu0 0.0
  %668 = vmatpush1.msra.mxu0 0.0
  %669 = vmatprep.subr.mxu0 0.0
  %670 = vmatpush1.msra.mxu0 0.0
  %671 = vmatprep.subr.mxu0 0.0
  %672 = vmatpush1.msra.mxu0 0.0
  %673 = vmatprep.subr.mxu0 0.0
  %674 = vmatpush1.msra.mxu0 0.0
  %675 = vmatprep.subr.mxu0 0.0
  %676 = vmatpush1.msra.mxu0 0.0
  %677 = vmatprep.subr.mxu0 0.0
  %678 = vmatpush1.msra.mxu0 0.0
  %679 = vmatprep.subr.mxu0 0.0
  %680 = vmatpush1.msra.mxu0 0.0
  %681 = vmatprep.subr.mxu0 0.0
  %682 = vmatpush1.msra.mxu0 0.0
  %683 = vmatprep.subr.mxu0 0.0
  %684 = vmatpush1.msra.mxu0 0.0
  %685 = vmatprep.subr.mxu0 0.0
  %686 = vmatpush1.msra.mxu0 0.0
  %687 = vmatprep.subr.mxu0 0.0
  %688 = vmatpush1.msra.mxu0 0.0
  %689 = vmatprep.subr.mxu0 0.0
  %690 = vmatpush1.msra.mxu0 0.0
  %691 = vmatprep.subr.mxu0 0.0
  %692 = vmatpush1.msra.mxu0 0.0
  %693 = vmatprep.subr.mxu0 0.0
  %694 = vmatpush1.msra.mxu0 0.0
  %695 = vmatprep.subr.mxu0 0.0
  %696 = vmatpush1.msra.mxu0 0.0
  %697 = vmatprep.subr.mxu0 0.0
  %698 = vmatpush1.msra.mxu0 0.0
  %699 = vmatprep.subr.mxu0 0.0
  %700 = vmatpush1.msra.mxu0 0.0
  %701 = vmatprep.subr.mxu0 0.0
  %702 = vmatpush1.msra.mxu0 0.0
  %703 = vmatprep.subr.mxu0 0.0
  %704 = vmatpush1.msra.mxu0 0.0
  %705 = vmatprep.subr.mxu0 0.0
  %706 = vmatpush1.msra.mxu0 0.0
  %707 = vmatprep.subr.mxu0 0.0
  %708 = vmatpush1.msra.mxu0 0.0
  %709 = vmatprep.subr.mxu0 0.0
  %710 = vmatpush1.msra.mxu0 0.0
  %711 = vmatprep.subr.mxu0 0.0
  %712 = vmatpush1.msra.mxu0 0.0
  %713 = vmatprep.subr.mxu0 0.0
  %714 = vmatpush1.msra.mxu0 0.0
  %715 = vmatprep.mubr.f32.mxu0 0.0
  %716 = vmatmul.mubr.f32.gmra.mrb[0].mxu0 %v646
  %v717 = vpop.f32.mrb[0].mxu0
  %v718 = vadd.f32 %v643, %v717
  %v719 = vpop.f32.mrb[0].mxu0
  %720 = vmatprep.mubr.f32.mxu0 0.0
  %721 = vmatmul.mubr.f32.gmra.mrb[0].mxu0 %v649
  %v722 = vpop.f32.mrb[0].mxu0
  %v723 = vadd.f32 %v643, %v722
  %v724 = vpop.f32.mrb[0].mxu0
  %725 = vdwg.mxu0
  %v726 = vld [vmem:[%s35] sm:$0xff]
  %v727 = vld [vmem:[%s35 + $0x8] sm:$0xff]
  %v728 = vld [vmem:[%s35 + $0x10] sm:$0xff]
  %v729 = vld [vmem:[%s35 + $0x18] sm:$0xff]
  %v730 = vld [vmem:[%s37] sm:$0x1]
  %732 = vrot.lane.b32.xlu0 %v718, 96
  %v733 = vpop.permute.xlu0 %732
  %vm734 = vcmask 64512
  %v735 = vsel %vm734, %v718, 0
  %v737 = vsel %vm734, %v733, 0
  %739 = vmatprep.subr.mxu0 0.0
  %740 = vmatpush1.xpose.msra.mxu0 %v737
  %741 = vmatprep.subr.mxu0 0.0
  %742 = vmatpush1.xpose.msra.mxu0 0.0
  %743 = vmatprep.subr.mxu0 0.0
  %744 = vmatpush1.xpose.msra.mxu0 0.0
  %745 = vmatprep.subr.mxu0 0.0
  %746 = vmatpush1.xpose.msra.mxu0 0.0
  %747 = vmatprep.subr.mxu0 0.0
  %748 = vmatpush1.xpose.msra.mxu0 0.0
  %749 = vmatprep.subr.mxu0 0.0
  %750 = vmatpush1.xpose.msra.mxu0 0.0
  %751 = vmatprep.subr.mxu0 0.0
  %752 = vmatpush1.xpose.msra.mxu0 0.0
  %753 = vmatprep.subr.mxu0 0.0
  %754 = vmatpush1.xpose.msra.mxu0 0.0
  %755 = vmatprep.subr.mxu0 0.0
  %756 = vmatpush1.xpose.msra.mxu0 0.0
  %757 = vmatprep.subr.mxu0 0.0
  %758 = vmatpush1.xpose.msra.mxu0 0.0
  %759 = vmatprep.subr.mxu0 0.0
  %760 = vmatpush1.xpose.msra.mxu0 0.0
  %761 = vmatprep.subr.mxu0 0.0
  %762 = vmatpush1.xpose.msra.mxu0 0.0
  %763 = vmatprep.subr.mxu0 0.0
  %764 = vmatpush1.xpose.msra.mxu0 0.0
  %765 = vmatprep.subr.mxu0 0.0
  %766 = vmatpush1.xpose.msra.mxu0 0.0
  %767 = vmatprep.subr.mxu0 0.0
  %768 = vmatpush1.xpose.msra.mxu0 0.0
  %769 = vmatprep.subr.mxu0 0.0
  %770 = vmatpush1.xpose.msra.mxu0 0.0
  %771 = vmatprep.subr.mxu0 0.0
  %772 = vmatpush1.xpose.msra.mxu0 0.0
  %773 = vmatprep.subr.mxu0 0.0
  %774 = vmatpush1.xpose.msra.mxu0 0.0
  %775 = vmatprep.subr.mxu0 0.0
  %776 = vmatpush1.xpose.msra.mxu0 0.0
  %777 = vmatprep.subr.mxu0 0.0
  %778 = vmatpush1.xpose.msra.mxu0 0.0
  %779 = vmatprep.subr.mxu0 0.0
  %780 = vmatpush1.xpose.msra.mxu0 0.0
  %781 = vmatprep.subr.mxu0 0.0
  %782 = vmatpush1.xpose.msra.mxu0 0.0
  %783 = vmatprep.subr.mxu0 0.0
  %784 = vmatpush1.xpose.msra.mxu0 0.0
  %785 = vmatprep.subr.mxu0 0.0
  %786 = vmatpush1.xpose.msra.mxu0 0.0
  %787 = vmatprep.subr.mxu0 0.0
  %788 = vmatpush1.xpose.msra.mxu0 0.0
  %789 = vmatprep.subr.mxu0 0.0
  %790 = vmatpush1.xpose.msra.mxu0 0.0
  %791 = vmatprep.subr.mxu0 0.0
  %792 = vmatpush1.xpose.msra.mxu0 0.0
  %793 = vmatprep.subr.mxu0 0.0
  %794 = vmatpush1.xpose.msra.mxu0 0.0
  %795 = vmatprep.subr.mxu0 0.0
  %796 = vmatpush1.xpose.msra.mxu0 0.0
  %797 = vmatprep.subr.mxu0 0.0
  %798 = vmatpush1.xpose.msra.mxu0 0.0
  %799 = vmatprep.subr.mxu0 0.0
  %800 = vmatpush1.xpose.msra.mxu0 0.0
  %801 = vmatprep.subr.mxu0 0.0
  %802 = vmatpush1.xpose.msra.mxu0 0.0
  %803 = vmatprep.mubr.f32.mxu0 0.0
  %804 = vmatmul.mubr.f32.gmra.mrb[0].mxu0 %v735
  %v805 = vpop.f32.mrb[0].mxu0
  %v806 = vadd.f32 0.0, %v805
  %v807 = vpop.f32.mrb[0].mxu0
  %808 = vdwg.mxu0
  %810 = vrot.lane.b32.xlu0 %v723, 96
  %v811 = vpop.permute.xlu0 %810
  %v812 = vsel %vm734, %v723, 0
  %v814 = vsel %vm734, %v811, 0
  %816 = vmatprep.subr.mxu0 0.0
  %817 = vmatpush1.xpose.msra.mxu0 %v814
  %818 = vmatprep.subr.mxu0 0.0
  %819 = vmatpush1.xpose.msra.mxu0 0.0
  %820 = vmatprep.subr.mxu0 0.0
  %821 = vmatpush1.xpose.msra.mxu0 0.0
  %822 = vmatprep.subr.mxu0 0.0
  %823 = vmatpush1.xpose.msra.mxu0 0.0
  %824 = vmatprep.subr.mxu0 0.0
  %825 = vmatpush1.xpose.msra.mxu0 0.0
  %826 = vmatprep.subr.mxu0 0.0
  %827 = vmatpush1.xpose.msra.mxu0 0.0
  %828 = vmatprep.subr.mxu0 0.0
  %829 = vmatpush1.xpose.msra.mxu0 0.0
  %830 = vmatprep.subr.mxu0 0.0
  %831 = vmatpush1.xpose.msra.mxu0 0.0
  %832 = vmatprep.subr.mxu0 0.0
  %833 = vmatpush1.xpose.msra.mxu0 0.0
  %834 = vmatprep.subr.mxu0 0.0
  %835 = vmatpush1.xpose.msra.mxu0 0.0
  %836 = vmatprep.subr.mxu0 0.0
  %837 = vmatpush1.xpose.msra.mxu0 0.0
  %838 = vmatprep.subr.mxu0 0.0
  %839 = vmatpush1.xpose.msra.mxu0 0.0
  %840 = vmatprep.subr.mxu0 0.0
  %841 = vmatpush1.xpose.msra.mxu0 0.0
  %842 = vmatprep.subr.mxu0 0.0
  %843 = vmatpush1.xpose.msra.mxu0 0.0
  %844 = vmatprep.subr.mxu0 0.0
  %845 = vmatpush1.xpose.msra.mxu0 0.0
  %846 = vmatprep.subr.mxu0 0.0
  %847 = vmatpush1.xpose.msra.mxu0 0.0
  %848 = vmatprep.subr.mxu0 0.0
  %849 = vmatpush1.xpose.msra.mxu0 0.0
  %850 = vmatprep.subr.mxu0 0.0
  %851 = vmatpush1.xpose.msra.mxu0 0.0
  %852 = vmatprep.subr.mxu0 0.0
  %853 = vmatpush1.xpose.msra.mxu0 0.0
  %854 = vmatprep.subr.mxu0 0.0
  %855 = vmatpush1.xpose.msra.mxu0 0.0
  %856 = vmatprep.subr.mxu0 0.0
  %857 = vmatpush1.xpose.msra.mxu0 0.0
  %858 = vmatprep.subr.mxu0 0.0
  %859 = vmatpush1.xpose.msra.mxu0 0.0
  %860 = vmatprep.subr.mxu0 0.0
  %861 = vmatpush1.xpose.msra.mxu0 0.0
  %862 = vmatprep.subr.mxu0 0.0
  %863 = vmatpush1.xpose.msra.mxu0 0.0
  %864 = vmatprep.subr.mxu0 0.0
  %865 = vmatpush1.xpose.msra.mxu0 0.0
  %866 = vmatprep.subr.mxu0 0.0
  %867 = vmatpush1.xpose.msra.mxu0 0.0
  %868 = vmatprep.subr.mxu0 0.0
  %869 = vmatpush1.xpose.msra.mxu0 0.0
  %870 = vmatprep.subr.mxu0 0.0
  %871 = vmatpush1.xpose.msra.mxu0 0.0
  %872 = vmatprep.subr.mxu0 0.0
  %873 = vmatpush1.xpose.msra.mxu0 0.0
  %874 = vmatprep.subr.mxu0 0.0
  %875 = vmatpush1.xpose.msra.mxu0 0.0
  %876 = vmatprep.subr.mxu0 0.0
  %877 = vmatpush1.xpose.msra.mxu0 0.0
  %878 = vmatprep.subr.mxu0 0.0
  %879 = vmatpush1.xpose.msra.mxu0 0.0
  %880 = vmatprep.mubr.f32.mxu0 0.0
  %881 = vmatmul.mubr.f32.gmra.mrb[0].mxu0 %v812
  %v882 = vpop.f32.mrb[0].mxu0
  %v883 = vadd.f32 0.0, %v882
  %v884 = vpop.f32.mrb[0].mxu0
  %885 = vdwg.mxu0
  %v886 = vmul.f32 %v806, 0.35355338
  %v887 = vmul.f32 %v883, 0.35355338
  %v888 = vadd.f32 %v886, %v570
  %v889 = vadd.f32 %v887, %v571
  %v890 = vsel %vm734, %v888, -inf
  %891 = vmax.xlane.f32.xlu0 %v890
  %v892 = vpop.xlane.xlu0 %891
  %v893 = vsel %vm734, %v889, -inf
  %894 = vmax.xlane.f32.xlu0 %v893
  %v895 = vpop.xlane.xlu0 %894
  %v896 = vsub.f32 %v888, %v892
  %v897 = vsub.f32 %v889, %v895
  %v898 = vmul.f32 %v896, 1.442695
  %v899 = vpow.pop %v898
  %v900 = vmul.f32 %v897, 1.442695
  %v901 = vpow.pop %v900
  %v902 = vsel %vm734, %v899, 0.0
  %903 = vadd.xlane.f32.xlu0 %v902
  %v904 = vpop.xlane.xlu0 %903
  %v905 = vsel %vm734, %v901, 0.0
  %906 = vadd.xlane.f32.xlu0 %v905
  %v907 = vpop.xlane.xlu0 %906
  %v908 = vrcp.pop %v904
  %v909 = vrcp.pop %v907
  %v910 = vmul.f32 %v899, %v908
  %v911 = vmul.f32 %v901, %v909
  %912 = vrot.lane.b32.xlu0 %v718, 64
  %v913 = vpop.permute.xlu0 %912
  %v916 = vsel %vm734, %v910, 0
  %918 = vmatprep.subr.mxu0 0.0
  %919 = vmatpush1.msra.mxu0 %v913
  %920 = vmatprep.subr.mxu0 0.0
  %921 = vmatpush1.msra.mxu0 0.0
  %922 = vmatprep.subr.mxu0 0.0
  %923 = vmatpush1.msra.mxu0 0.0
  %924 = vmatprep.subr.mxu0 0.0
  %925 = vmatpush1.msra.mxu0 0.0
  %926 = vmatprep.subr.mxu0 0.0
  %927 = vmatpush1.msra.mxu0 0.0
  %928 = vmatprep.subr.mxu0 0.0
  %929 = vmatpush1.msra.mxu0 0.0
  %930 = vmatprep.subr.mxu0 0.0
  %931 = vmatpush1.msra.mxu0 0.0
  %932 = vmatprep.subr.mxu0 0.0
  %933 = vmatpush1.msra.mxu0 0.0
  %934 = vmatprep.subr.mxu0 0.0
  %935 = vmatpush1.msra.mxu0 0.0
  %936 = vmatprep.subr.mxu0 0.0
  %937 = vmatpush1.msra.mxu0 0.0
  %938 = vmatprep.subr.mxu0 0.0
  %939 = vmatpush1.msra.mxu0 0.0
  %940 = vmatprep.subr.mxu0 0.0
  %941 = vmatpush1.msra.mxu0 0.0
  %942 = vmatprep.subr.mxu0 0.0
  %943 = vmatpush1.msra.mxu0 0.0
  %944 = vmatprep.subr.mxu0 0.0
  %945 = vmatpush1.msra.mxu0 0.0
  %946 = vmatprep.subr.mxu0 0.0
  %947 = vmatpush1.msra.mxu0 0.0
  %948 = vmatprep.subr.mxu0 0.0
  %949 = vmatpush1.msra.mxu0 0.0
  %950 = vmatprep.subr.mxu0 0.0
  %951 = vmatpush1.msra.mxu0 0.0
  %952 = vmatprep.subr.mxu0 0.0
  %953 = vmatpush1.msra.mxu0 0.0
  %954 = vmatprep.subr.mxu0 0.0
  %955 = vmatpush1.msra.mxu0 0.0
  %956 = vmatprep.subr.mxu0 0.0
  %957 = vmatpush1.msra.mxu0 0.0
  %958 = vmatprep.subr.mxu0 0.0
  %959 = vmatpush1.msra.mxu0 0.0
  %960 = vmatprep.subr.mxu0 0.0
  %961 = vmatpush1.msra.mxu0 0.0
  %962 = vmatprep.subr.mxu0 0.0
  %963 = vmatpush1.msra.mxu0 0.0
  %964 = vmatprep.subr.mxu0 0.0
  %965 = vmatpush1.msra.mxu0 0.0
  %966 = vmatprep.subr.mxu0 0.0
  %967 = vmatpush1.msra.mxu0 0.0
  %968 = vmatprep.subr.mxu0 0.0
  %969 = vmatpush1.msra.mxu0 0.0
  %970 = vmatprep.subr.mxu0 0.0
  %971 = vmatpush1.msra.mxu0 0.0
  %972 = vmatprep.subr.mxu0 0.0
  %973 = vmatpush1.msra.mxu0 0.0
  %974 = vmatprep.subr.mxu0 0.0
  %975 = vmatpush1.msra.mxu0 0.0
  %976 = vmatprep.subr.mxu0 0.0
  %977 = vmatpush1.msra.mxu0 0.0
  %978 = vmatprep.subr.mxu0 0.0
  %979 = vmatpush1.msra.mxu0 0.0
  %980 = vmatprep.subr.mxu0 0.0
  %981 = vmatpush1.msra.mxu0 0.0
  %982 = vmatprep.mubr.f32.mxu0 0.0
  %983 = vmatmul.mubr.f32.gmra.mrb[0].mxu0 %v916
  %v984 = vpop.f32.mrb[0].mxu0
  %v985 = vadd.f32 0.0, %v984
  %v986 = vpop.f32.mrb[0].mxu0
  %987 = vdwg.mxu0
  %988 = vrot.lane.b32.xlu0 %v723, 64
  %v989 = vpop.permute.xlu0 %988
  %v992 = vsel %vm734, %v911, 0
  %994 = vmatprep.subr.mxu0 0.0
  %995 = vmatpush1.msra.mxu0 %v989
  %996 = vmatprep.subr.mxu0 0.0
  %997 = vmatpush1.msra.mxu0 0.0
  %998 = vmatprep.subr.mxu0 0.0
  %999 = vmatpush1.msra.mxu0 0.0
  %1000 = vmatprep.subr.mxu0 0.0
  %1001 = vmatpush1.msra.mxu0 0.0
  %1002 = vmatprep.subr.mxu0 0.0
  %1003 = vmatpush1.msra.mxu0 0.0
  %1004 = vmatprep.subr.mxu0 0.0
  %1005 = vmatpush1.msra.mxu0 0.0
  %1006 = vmatprep.subr.mxu0 0.0
  %1007 = vmatpush1.msra.mxu0 0.0
  %1008 = vmatprep.subr.mxu0 0.0
  %1009 = vmatpush1.msra.mxu0 0.0
  %1010 = vmatprep.subr.mxu0 0.0
  %1011 = vmatpush1.msra.mxu0 0.0
  %1012 = vmatprep.subr.mxu0 0.0
  %1013 = vmatpush1.msra.mxu0 0.0
  %1014 = vmatprep.subr.mxu0 0.0
  %1015 = vmatpush1.msra.mxu0 0.0
  %1016 = vmatprep.subr.mxu0 0.0
  %1017 = vmatpush1.msra.mxu0 0.0
  %1018 = vmatprep.subr.mxu0 0.0
  %1019 = vmatpush1.msra.mxu0 0.0
  %1020 = vmatprep.subr.mxu0 0.0
  %1021 = vmatpush1.msra.mxu0 0.0
  %1022 = vmatprep.subr.mxu0 0.0
  %1023 = vmatpush1.msra.mxu0 0.0
  %1024 = vmatprep.subr.mxu0 0.0
  %1025 = vmatpush1.msra.mxu0 0.0
  %1026 = vmatprep.subr.mxu0 0.0
  %1027 = vmatpush1.msra.mxu0 0.0
  %1028 = vmatprep.subr.mxu0 0.0
  %1029 = vmatpush1.msra.mxu0 0.0
  %1030 = vmatprep.subr.mxu0 0.0
  %1031 = vmatpush1.msra.mxu0 0.0
  %1032 = vmatprep.subr.mxu0 0.0
  %1033 = vmatpush1.msra.mxu0 0.0
  %1034 = vmatprep.subr.mxu0 0.0
  %1035 = vmatpush1.msra.mxu0 0.0
  %1036 = vmatprep.subr.mxu0 0.0
  %1037 = vmatpush1.msra.mxu0 0.0
  %1038 = vmatprep.subr.mxu0 0.0
  %1039 = vmatpush1.msra.mxu0 0.0
  %1040 = vmatprep.subr.mxu0 0.0
  %1041 = vmatpush1.msra.mxu0 0.0
  %1042 = vmatprep.subr.mxu0 0.0
  %1043 = vmatpush1.msra.mxu0 0.0
  %1044 = vmatprep.subr.mxu0 0.0
  %1045 = vmatpush1.msra.mxu0 0.0
  %1046 = vmatprep.subr.mxu0 0.0
  %1047 = vmatpush1.msra.mxu0 0.0
  %1048 = vmatprep.subr.mxu0 0.0
  %1049 = vmatpush1.msra.mxu0 0.0
  %1050 = vmatprep.subr.mxu0 0.0
  %1051 = vmatpush1.msra.mxu0 0.0
  %1052 = vmatprep.subr.mxu0 0.0
  %1053 = vmatpush1.msra.mxu0 0.0
  %1054 = vmatprep.subr.mxu0 0.0
  %1055 = vmatpush1.msra.mxu0 0.0
  %1056 = vmatprep.subr.mxu0 0.0
  %1057 = vmatpush1.msra.mxu0 0.0
  %1058 = vmatprep.mubr.f32.mxu0 0.0
  %1059 = vmatmul.mubr.f32.gmra.mrb[0].mxu0 %v992
  %v1060 = vpop.f32.mrb[0].mxu0
  %v1061 = vadd.f32 0.0, %v1060
  %v1062 = vpop.f32.mrb[0].mxu0
  %1063 = vdwg.mxu0
  %1064 = vrot.lane.b32.xlu0 %v718, 120
  %v1065 = vpop.permute.xlu0 %1064
  %1066 = vrot.lane.b32.xlu0 %v718, 88
  %v1067 = vpop.permute.xlu0 %1066
  %v1068 = vsel %vm734, %v1065, 0
  %v1070 = vsel %vm734, %v1067, 0
  %1072 = vmatprep.subr.mxu0 0.0
  %1073 = vmatpush1.xpose.msra.mxu0 %v1070
  %1074 = vmatprep.subr.mxu0 0.0
  %1075 = vmatpush1.xpose.msra.mxu0 0.0
  %1076 = vmatprep.subr.mxu0 0.0
  %1077 = vmatpush1.xpose.msra.mxu0 0.0
  %1078 = vmatprep.subr.mxu0 0.0
  %1079 = vmatpush1.xpose.msra.mxu0 0.0
  %1080 = vmatprep.subr.mxu0 0.0
  %1081 = vmatpush1.xpose.msra.mxu0 0.0
  %1082 = vmatprep.subr.mxu0 0.0
  %1083 = vmatpush1.xpose.msra.mxu0 0.0
  %1084 = vmatprep.subr.mxu0 0.0
  %1085 = vmatpush1.xpose.msra.mxu0 0.0
  %1086 = vmatprep.subr.mxu0 0.0
  %1087 = vmatpush1.xpose.msra.mxu0 0.0
  %1088 = vmatprep.subr.mxu0 0.0
  %1089 = vmatpush1.xpose.msra.mxu0 0.0
  %1090 = vmatprep.subr.mxu0 0.0
  %1091 = vmatpush1.xpose.msra.mxu0 0.0
  %1092 = vmatprep.subr.mxu0 0.0
  %1093 = vmatpush1.xpose.msra.mxu0 0.0
  %1094 = vmatprep.subr.mxu0 0.0
  %1095 = vmatpush1.xpose.msra.mxu0 0.0
  %1096 = vmatprep.subr.mxu0 0.0
  %1097 = vmatpush1.xpose.msra.mxu0 0.0
  %1098 = vmatprep.subr.mxu0 0.0
  %1099 = vmatpush1.xpose.msra.mxu0 0.0
  %1100 = vmatprep.subr.mxu0 0.0
  %1101 = vmatpush1.xpose.msra.mxu0 0.0
  %1102 = vmatprep.subr.mxu0 0.0
  %1103 = vmatpush1.xpose.msra.mxu0 0.0
  %1104 = vmatprep.subr.mxu0 0.0
  %1105 = vmatpush1.xpose.msra.mxu0 0.0
  %1106 = vmatprep.subr.mxu0 0.0
  %1107 = vmatpush1.xpose.msra.mxu0 0.0
  %1108 = vmatprep.subr.mxu0 0.0
  %1109 = vmatpush1.xpose.msra.mxu0 0.0
  %1110 = vmatprep.subr.mxu0 0.0
  %1111 = vmatpush1.xpose.msra.mxu0 0.0
  %1112 = vmatprep.subr.mxu0 0.0
  %1113 = vmatpush1.xpose.msra.mxu0 0.0
  %1114 = vmatprep.subr.mxu0 0.0
  %1115 = vmatpush1.xpose.msra.mxu0 0.0
  %1116 = vmatprep.subr.mxu0 0.0
  %1117 = vmatpush1.xpose.msra.mxu0 0.0
  %1118 = vmatprep.subr.mxu0 0.0
  %1119 = vmatpush1.xpose.msra.mxu0 0.0
  %1120 = vmatprep.subr.mxu0 0.0
  %1121 = vmatpush1.xpose.msra.mxu0 0.0
  %1122 = vmatprep.subr.mxu0 0.0
  %1123 = vmatpush1.xpose.msra.mxu0 0.0
  %1124 = vmatprep.subr.mxu0 0.0
  %1125 = vmatpush1.xpose.msra.mxu0 0.0
  %1126 = vmatprep.subr.mxu0 0.0
  %1127 = vmatpush1.xpose.msra.mxu0 0.0
  %1128 = vmatprep.subr.mxu0 0.0
  %1129 = vmatpush1.xpose.msra.mxu0 0.0
  %1130 = vmatprep.subr.mxu0 0.0
  %1131 = vmatpush1.xpose.msra.mxu0 0.0
  %1132 = vmatprep.subr.mxu0 0.0
  %1133 = vmatpush1.xpose.msra.mxu0 0.0
  %1134 = vmatprep.subr.mxu0 0.0
  %1135 = vmatpush1.xpose.msra.mxu0 0.0
  %1136 = vmatprep.mubr.f32.mxu0 0.0
  %1137 = vmatmul.mubr.f32.gmra.mrb[0].mxu0 %v1068
  %v1138 = vpop.f32.mrb[0].mxu0
  %v1139 = vadd.f32 0.0, %v1138
  %v1140 = vpop.f32.mrb[0].mxu0
  %1141 = vdwg.mxu0
  %1142 = vrot.lane.b32.xlu0 %v723, 120
  %v1143 = vpop.permute.xlu0 %1142
  %1144 = vrot.lane.b32.xlu0 %v723, 88
  %v1145 = vpop.permute.xlu0 %1144
  %v1146 = vsel %vm734, %v1143, 0
  %v1148 = vsel %vm734, %v1145, 0
  %1150 = vmatprep.subr.mxu0 0.0
  %1151 = vmatpush1.xpose.msra.mxu0 %v1148
  %1152 = vmatprep.subr.mxu0 0.0
  %1153 = vmatpush1.xpose.msra.mxu0 0.0
  %1154 = vmatprep.subr.mxu0 0.0
  %1155 = vmatpush1.xpose.msra.mxu0 0.0
  %1156 = vmatprep.subr.mxu0 0.0
  %1157 = vmatpush1.xpose.msra.mxu0 0.0
  %1158 = vmatprep.subr.mxu0 0.0
  %1159 = vmatpush1.xpose.msra.mxu0 0.0
  %1160 = vmatprep.subr.mxu0 0.0
  %1161 = vmatpush1.xpose.msra.mxu0 0.0
  %1162 = vmatprep.subr.mxu0 0.0
  %1163 = vmatpush1.xpose.msra.mxu0 0.0
  %1164 = vmatprep.subr.mxu0 0.0
  %1165 = vmatpush1.xpose.msra.mxu0 0.0
  %1166 = vmatprep.subr.mxu0 0.0
  %1167 = vmatpush1.xpose.msra.mxu0 0.0
  %1168 = vmatprep.subr.mxu0 0.0
  %1169 = vmatpush1.xpose.msra.mxu0 0.0
  %1170 = vmatprep.subr.mxu0 0.0
  %1171 = vmatpush1.xpose.msra.mxu0 0.0
  %1172 = vmatprep.subr.mxu0 0.0
  %1173 = vmatpush1.xpose.msra.mxu0 0.0
  %1174 = vmatprep.subr.mxu0 0.0
  %1175 = vmatpush1.xpose.msra.mxu0 0.0
  %1176 = vmatprep.subr.mxu0 0.0
  %1177 = vmatpush1.xpose.msra.mxu0 0.0
  %1178 = vmatprep.subr.mxu0 0.0
  %1179 = vmatpush1.xpose.msra.mxu0 0.0
  %1180 = vmatprep.subr.mxu0 0.0
  %1181 = vmatpush1.xpose.msra.mxu0 0.0
  %1182 = vmatprep.subr.mxu0 0.0
  %1183 = vmatpush1.xpose.msra.mxu0 0.0
  %1184 = vmatprep.subr.mxu0 0.0
  %1185 = vmatpush1.xpose.msra.mxu0 0.0
  %1186 = vmatprep.subr.mxu0 0.0
  %1187 = vmatpush1.xpose.msra.mxu0 0.0
  %1188 = vmatprep.subr.mxu0 0.0
  %1189 = vmatpush1.xpose.msra.mxu0 0.0
  %1190 = vmatprep.subr.mxu0 0.0
  %1191 = vmatpush1.xpose.msra.mxu0 0.0
  %1192 = vmatprep.subr.mxu0 0.0
  %1193 = vmatpush1.xpose.msra.mxu0 0.0
  %1194 = vmatprep.subr.mxu0 0.0
  %1195 = vmatpush1.xpose.msra.mxu0 0.0
  %1196 = vmatprep.subr.mxu0 0.0
  %1197 = vmatpush1.xpose.msra.mxu0 0.0
  %1198 = vmatprep.subr.mxu0 0.0
  %1199 = vmatpush1.xpose.msra.mxu0 0.0
  %1200 = vmatprep.subr.mxu0 0.0
  %1201 = vmatpush1.xpose.msra.mxu0 0.0
  %1202 = vmatprep.subr.mxu0 0.0
  %1203 = vmatpush1.xpose.msra.mxu0 0.0
  %1204 = vmatprep.subr.mxu0 0.0
  %1205 = vmatpush1.xpose.msra.mxu0 0.0
  %1206 = vmatprep.subr.mxu0 0.0
  %1207 = vmatpush1.xpose.msra.mxu0 0.0
  %1208 = vmatprep.subr.mxu0 0.0
  %1209 = vmatpush1.xpose.msra.mxu0 0.0
  %1210 = vmatprep.subr.mxu0 0.0
  %1211 = vmatpush1.xpose.msra.mxu0 0.0
  %1212 = vmatprep.subr.mxu0 0.0
  %1213 = vmatpush1.xpose.msra.mxu0 0.0
  %1214 = vmatprep.mubr.f32.mxu0 0.0
  %1215 = vmatmul.mubr.f32.gmra.mrb[0].mxu0 %v1146
  %v1216 = vpop.f32.mrb[0].mxu0
  %v1217 = vadd.f32 0.0, %v1216
  %v1218 = vpop.f32.mrb[0].mxu0
  %1219 = vdwg.mxu0
  %v1220 = vmul.f32 %v1139, 0.35355338
  %v1221 = vmul.f32 %v1217, 0.35355338
  %v1222 = vadd.f32 %v1220, %v570
  %v1223 = vadd.f32 %v1221, %v571
  %v1224 = vsel %vm734, %v1222, -inf
  %1225 = vmax.xlane.f32.xlu0 %v1224
  %v1226 = vpop.xlane.xlu0 %1225
  %v1227 = vsel %vm734, %v1223, -inf
  %1228 = vmax.xlane.f32.xlu0 %v1227
  %v1229 = vpop.xlane.xlu0 %1228
  %v1230 = vsub.f32 %v1222, %v1226
  %v1231 = vsub.f32 %v1223, %v1229
  %v1232 = vmul.f32 %v1230, 1.442695
  %v1233 = vpow.pop %v1232
  %v1234 = vmul.f32 %v1231, 1.442695
  %v1235 = vpow.pop %v1234
  %v1236 = vsel %vm734, %v1233, 0.0
  %1237 = vadd.xlane.f32.xlu0 %v1236
  %v1238 = vpop.xlane.xlu0 %1237
  %v1239 = vsel %vm734, %v1235, 0.0
  %1240 = vadd.xlane.f32.xlu0 %v1239
  %v1241 = vpop.xlane.xlu0 %1240
  %v1242 = vrcp.pop %v1238
  %v1243 = vrcp.pop %v1241
  %v1244 = vmul.f32 %v1233, %v1242
  %v1245 = vmul.f32 %v1235, %v1243
  %1246 = vrot.lane.b32.xlu0 %v718, 56
  %v1247 = vpop.permute.xlu0 %1246
  %v1250 = vsel %vm734, %v1244, 0
  %1252 = vmatprep.subr.mxu0 0.0
  %1253 = vmatpush1.msra.mxu0 %v1247
  %1254 = vmatprep.subr.mxu0 0.0
  %1255 = vmatpush1.msra.mxu0 0.0
  %1256 = vmatprep.subr.mxu0 0.0
  %1257 = vmatpush1.msra.mxu0 0.0
  %1258 = vmatprep.subr.mxu0 0.0
  %1259 = vmatpush1.msra.mxu0 0.0
  %1260 = vmatprep.subr.mxu0 0.0
  %1261 = vmatpush1.msra.mxu0 0.0
  %1262 = vmatprep.subr.mxu0 0.0
  %1263 = vmatpush1.msra.mxu0 0.0
  %1264 = vmatprep.subr.mxu0 0.0
  %1265 = vmatpush1.msra.mxu0 0.0
  %1266 = vmatprep.subr.mxu0 0.0
  %1267 = vmatpush1.msra.mxu0 0.0
  %1268 = vmatprep.subr.mxu0 0.0
  %1269 = vmatpush1.msra.mxu0 0.0
  %1270 = vmatprep.subr.mxu0 0.0
  %1271 = vmatpush1.msra.mxu0 0.0
  %1272 = vmatprep.subr.mxu0 0.0
  %1273 = vmatpush1.msra.mxu0 0.0
  %1274 = vmatprep.subr.mxu0 0.0
  %1275 = vmatpush1.msra.mxu0 0.0
  %1276 = vmatprep.subr.mxu0 0.0
  %1277 = vmatpush1.msra.mxu0 0.0
  %1278 = vmatprep.subr.mxu0 0.0
  %1279 = vmatpush1.msra.mxu0 0.0
  %1280 = vmatprep.subr.mxu0 0.0
  %1281 = vmatpush1.msra.mxu0 0.0
  %1282 = vmatprep.subr.mxu0 0.0
  %1283 = vmatpush1.msra.mxu0 0.0
  %1284 = vmatprep.subr.mxu0 0.0
  %1285 = vmatpush1.msra.mxu0 0.0
  %1286 = vmatprep.subr.mxu0 0.0
  %1287 = vmatpush1.msra.mxu0 0.0
  %1288 = vmatprep.subr.mxu0 0.0
  %1289 = vmatpush1.msra.mxu0 0.0
  %1290 = vmatprep.subr.mxu0 0.0
  %1291 = vmatpush1.msra.mxu0 0.0
  %1292 = vmatprep.subr.mxu0 0.0
  %1293 = vmatpush1.msra.mxu0 0.0
  %1294 = vmatprep.subr.mxu0 0.0
  %1295 = vmatpush1.msra.mxu0 0.0
  %1296 = vmatprep.subr.mxu0 0.0
  %1297 = vmatpush1.msra.mxu0 0.0
  %1298 = vmatprep.subr.mxu0 0.0
  %1299 = vmatpush1.msra.mxu0 0.0
  %1300 = vmatprep.subr.mxu0 0.0
  %1301 = vmatpush1.msra.mxu0 0.0
  %1302 = vmatprep.subr.mxu0 0.0
  %1303 = vmatpush1.msra.mxu0 0.0
  %1304 = vmatprep.subr.mxu0 0.0
  %1305 = vmatpush1.msra.mxu0 0.0
  %1306 = vmatprep.subr.mxu0 0.0
  %1307 = vmatpush1.msra.mxu0 0.0
  %1308 = vmatprep.subr.mxu0 0.0
  %1309 = vmatpush1.msra.mxu0 0.0
  %1310 = vmatprep.subr.mxu0 0.0
  %1311 = vmatpush1.msra.mxu0 0.0
  %1312 = vmatprep.subr.mxu0 0.0
  %1313 = vmatpush1.msra.mxu0 0.0
  %1314 = vmatprep.subr.mxu0 0.0
  %1315 = vmatpush1.msra.mxu0 0.0
  %1316 = vmatprep.mubr.f32.mxu0 0.0
  %1317 = vmatmul.mubr.f32.gmra.mrb[0].mxu0 %v1250
  %v1318 = vpop.f32.mrb[0].mxu0
  %v1319 = vadd.f32 0.0, %v1318
  %v1320 = vpop.f32.mrb[0].mxu0
  %1321 = vdwg.mxu0
  %1322 = vrot.lane.b32.xlu0 %v723, 56
  %v1323 = vpop.permute.xlu0 %1322
  %v1326 = vsel %vm734, %v1245, 0
  %1328 = vmatprep.subr.mxu0 0.0
  %1329 = vmatpush1.msra.mxu0 %v1323
  %1330 = vmatprep.subr.mxu0 0.0
  %1331 = vmatpush1.msra.mxu0 0.0
  %1332 = vmatprep.subr.mxu0 0.0
  %1333 = vmatpush1.msra.mxu0 0.0
  %1334 = vmatprep.subr.mxu0 0.0
  %1335 = vmatpush1.msra.mxu0 0.0
  %1336 = vmatprep.subr.mxu0 0.0
  %1337 = vmatpush1.msra.mxu0 0.0
  %1338 = vmatprep.subr.mxu0 0.0
  %1339 = vmatpush1.msra.mxu0 0.0
  %1340 = vmatprep.subr.mxu0 0.0
  %1341 = vmatpush1.msra.mxu0 0.0
  %1342 = vmatprep.subr.mxu0 0.0
  %1343 = vmatpush1.msra.mxu0 0.0
  %1344 = vmatprep.subr.mxu0 0.0
  %1345 = vmatpush1.msra.mxu0 0.0
  %1346 = vmatprep.subr.mxu0 0.0
  %1347 = vmatpush1.msra.mxu0 0.0
  %1348 = vmatprep.subr.mxu0 0.0
  %1349 = vmatpush1.msra.mxu0 0.0
  %1350 = vmatprep.subr.mxu0 0.0
  %1351 = vmatpush1.msra.mxu0 0.0
  %1352 = vmatprep.subr.mxu0 0.0
  %1353 = vmatpush1.msra.mxu0 0.0
  %1354 = vmatprep.subr.mxu0 0.0
  %1355 = vmatpush1.msra.mxu0 0.0
  %1356 = vmatprep.subr.mxu0 0.0
  %1357 = vmatpush1.msra.mxu0 0.0
  %1358 = vmatprep.subr.mxu0 0.0
  %1359 = vmatpush1.msra.mxu0 0.0
  %1360 = vmatprep.subr.mxu0 0.0
  %1361 = vmatpush1.msra.mxu0 0.0
  %1362 = vmatprep.subr.mxu0 0.0
  %1363 = vmatpush1.msra.mxu0 0.0
  %1364 = vmatprep.subr.mxu0 0.0
  %1365 = vmatpush1.msra.mxu0 0.0
  %1366 = vmatprep.subr.mxu0 0.0
  %1367 = vmatpush1.msra.mxu0 0.0
  %1368 = vmatprep.subr.mxu0 0.0
  %1369 = vmatpush1.msra.mxu0 0.0
  %1370 = vmatprep.subr.mxu0 0.0
  %1371 = vmatpush1.msra.mxu0 0.0
  %1372 = vmatprep.subr.mxu0 0.0
  %1373 = vmatpush1.msra.mxu0 0.0
  %1374 = vmatprep.subr.mxu0 0.0
  %1375 = vmatpush1.msra.mxu0 0.0
  %1376 = vmatprep.subr.mxu0 0.0
  %1377 = vmatpush1.msra.mxu0 0.0
  %1378 = vmatprep.subr.mxu0 0.0
  %1379 = vmatpush1.msra.mxu0 0.0
  %1380 = vmatprep.subr.mxu0 0.0
  %1381 = vmatpush1.msra.mxu0 0.0
  %1382 = vmatprep.subr.mxu0 0.0
  %1383 = vmatpush1.msra.mxu0 0.0
  %1384 = vmatprep.subr.mxu0 0.0
  %1385 = vmatpush1.msra.mxu0 0.0
  %1386 = vmatprep.subr.mxu0 0.0
  %1387 = vmatpush1.msra.mxu0 0.0
  %1388 = vmatprep.subr.mxu0 0.0
  %1389 = vmatpush1.msra.mxu0 0.0
  %1390 = vmatprep.subr.mxu0 0.0
  %1391 = vmatpush1.msra.mxu0 0.0
  %1392 = vmatprep.mubr.f32.mxu0 0.0
  %1393 = vmatmul.mubr.f32.gmra.mrb[0].mxu0 %v1326
  %v1394 = vpop.f32.mrb[0].mxu0
  %v1395 = vadd.f32 0.0, %v1394
  %v1396 = vpop.f32.mrb[0].mxu0
  %1397 = vdwg.mxu0
  %v1399 = vsel %vm734, %v1319, 0
  %v1402 = vsel %vm734, %v1395, 0
  %1404 = vmatprep.subr.mxu0 0.0
  %1405 = vmatpush1.msra.mxu0 %v727
  %1406 = vmatprep.subr.mxu0 0.0
  %1407 = vmatpush1.msra.mxu0 0.0
  %1408 = vmatprep.subr.mxu0 0.0
  %1409 = vmatpush1.msra.mxu0 0.0
  %1410 = vmatprep.subr.mxu0 0.0
  %1411 = vmatpush1.msra.mxu0 0.0
  %1412 = vmatprep.subr.mxu0 0.0
  %1413 = vmatpush1.msra.mxu0 0.0
  %1414 = vmatprep.subr.mxu0 0.0
  %1415 = vmatpush1.msra.mxu0 0.0
  %1416 = vmatprep.subr.mxu0 0.0
  %1417 = vmatpush1.msra.mxu0 0.0
  %1418 = vmatprep.subr.mxu0 0.0
  %1419 = vmatpush1.msra.mxu0 0.0
  %1420 = vmatprep.subr.mxu0 0.0
  %1421 = vmatpush1.msra.mxu0 0.0
  %1422 = vmatprep.subr.mxu0 0.0
  %1423 = vmatpush1.msra.mxu0 0.0
  %1424 = vmatprep.subr.mxu0 0.0
  %1425 = vmatpush1.msra.mxu0 0.0
  %1426 = vmatprep.subr.mxu0 0.0
  %1427 = vmatpush1.msra.mxu0 0.0
  %1428 = vmatprep.subr.mxu0 0.0
  %1429 = vmatpush1.msra.mxu0 0.0
  %1430 = vmatprep.subr.mxu0 0.0
  %1431 = vmatpush1.msra.mxu0 0.0
  %1432 = vmatprep.subr.mxu0 0.0
  %1433 = vmatpush1.msra.mxu0 0.0
  %1434 = vmatprep.subr.mxu0 0.0
  %1435 = vmatpush1.msra.mxu0 0.0
  %1436 = vmatprep.subr.mxu0 0.0
  %1437 = vmatpush1.msra.mxu0 0.0
  %1438 = vmatprep.subr.mxu0 0.0
  %1439 = vmatpush1.msra.mxu0 0.0
  %1440 = vmatprep.subr.mxu0 0.0
  %1441 = vmatpush1.msra.mxu0 0.0
  %1442 = vmatprep.subr.mxu0 0.0
  %1443 = vmatpush1.msra.mxu0 0.0
  %1444 = vmatprep.subr.mxu0 0.0
  %1445 = vmatpush1.msra.mxu0 0.0
  %1446 = vmatprep.subr.mxu0 0.0
  %1447 = vmatpush1.msra.mxu0 0.0
  %1448 = vmatprep.subr.mxu0 0.0
  %1449 = vmatpush1.msra.mxu0 0.0
  %1450 = vmatprep.subr.mxu0 0.0
  %1451 = vmatpush1.msra.mxu0 0.0
  %1452 = vmatprep.subr.mxu0 0.0
  %1453 = vmatpush1.msra.mxu0 0.0
  %1454 = vmatprep.subr.mxu0 0.0
  %1455 = vmatpush1.msra.mxu0 0.0
  %1456 = vmatprep.subr.mxu0 0.0
  %1457 = vmatpush1.msra.mxu0 0.0
  %1458 = vmatprep.subr.mxu0 0.0
  %1459 = vmatpush1.msra.mxu0 0.0
  %1460 = vmatprep.subr.mxu0 0.0
  %1461 = vmatpush1.msra.mxu0 0.0
  %1462 = vmatprep.subr.mxu0 0.0
  %1463 = vmatpush1.msra.mxu0 0.0
  %1464 = vmatprep.subr.mxu0 0.0
  %1465 = vmatpush1.msra.mxu0 0.0
  %1466 = vmatprep.subr.mxu0 0.0
  %1467 = vmatpush1.msra.mxu0 0.0
  %1468 = vmatprep.mubr.f32.mxu0 0.0
  %1469 = vmatmul.mubr.f32.gmra.mrb[0].mxu0 %v1399
  %v1470 = vpop.f32.mrb[0].mxu0
  %v1471 = vadd.f32 0.0, %v1470
  %v1472 = vpop.f32.mrb[0].mxu0
  %1473 = vmatprep.mubr.f32.mxu0 0.0
  %1474 = vmatmul.mubr.f32.gmra.mrb[0].mxu0 %v1402
  %v1475 = vpop.f32.mrb[0].mxu0
  %v1476 = vadd.f32 0.0, %v1475
  %v1477 = vpop.f32.mrb[0].mxu0
  %1478 = vdwg.mxu0
  %v1480 = vsel %vm734, %v985, 0
  %v1483 = vsel %vm734, %v1061, 0
  %1485 = vmatprep.subr.mxu0 0.0
  %1486 = vmatpush1.msra.mxu0 %v726
  %1487 = vmatprep.subr.mxu0 0.0
  %1488 = vmatpush1.msra.mxu0 0.0
  %1489 = vmatprep.subr.mxu0 0.0
  %1490 = vmatpush1.msra.mxu0 0.0
  %1491 = vmatprep.subr.mxu0 0.0
  %1492 = vmatpush1.msra.mxu0 0.0
  %1493 = vmatprep.subr.mxu0 0.0
  %1494 = vmatpush1.msra.mxu0 0.0
  %1495 = vmatprep.subr.mxu0 0.0
  %1496 = vmatpush1.msra.mxu0 0.0
  %1497 = vmatprep.subr.mxu0 0.0
  %1498 = vmatpush1.msra.mxu0 0.0
  %1499 = vmatprep.subr.mxu0 0.0
  %1500 = vmatpush1.msra.mxu0 0.0
  %1501 = vmatprep.subr.mxu0 0.0
  %1502 = vmatpush1.msra.mxu0 0.0
  %1503 = vmatprep.subr.mxu0 0.0
  %1504 = vmatpush1.msra.mxu0 0.0
  %1505 = vmatprep.subr.mxu0 0.0
  %1506 = vmatpush1.msra.mxu0 0.0
  %1507 = vmatprep.subr.mxu0 0.0
  %1508 = vmatpush1.msra.mxu0 0.0
  %1509 = vmatprep.subr.mxu0 0.0
  %1510 = vmatpush1.msra.mxu0 0.0
  %1511 = vmatprep.subr.mxu0 0.0
  %1512 = vmatpush1.msra.mxu0 0.0
  %1513 = vmatprep.subr.mxu0 0.0
  %1514 = vmatpush1.msra.mxu0 0.0
  %1515 = vmatprep.subr.mxu0 0.0
  %1516 = vmatpush1.msra.mxu0 0.0
  %1517 = vmatprep.subr.mxu0 0.0
  %1518 = vmatpush1.msra.mxu0 0.0
  %1519 = vmatprep.subr.mxu0 0.0
  %1520 = vmatpush1.msra.mxu0 0.0
  %1521 = vmatprep.subr.mxu0 0.0
  %1522 = vmatpush1.msra.mxu0 0.0
  %1523 = vmatprep.subr.mxu0 0.0
  %1524 = vmatpush1.msra.mxu0 0.0
  %1525 = vmatprep.subr.mxu0 0.0
  %1526 = vmatpush1.msra.mxu0 0.0
  %1527 = vmatprep.subr.mxu0 0.0
  %1528 = vmatpush1.msra.mxu0 0.0
  %1529 = vmatprep.subr.mxu0 0.0
  %1530 = vmatpush1.msra.mxu0 0.0
  %1531 = vmatprep.subr.mxu0 0.0
  %1532 = vmatpush1.msra.mxu0 0.0
  %1533 = vmatprep.subr.mxu0 0.0
  %1534 = vmatpush1.msra.mxu0 0.0
  %1535 = vmatprep.subr.mxu0 0.0
  %1536 = vmatpush1.msra.mxu0 0.0
  %1537 = vmatprep.subr.mxu0 0.0
  %1538 = vmatpush1.msra.mxu0 0.0
  %1539 = vmatprep.subr.mxu0 0.0
  %1540 = vmatpush1.msra.mxu0 0.0
  %1541 = vmatprep.subr.mxu0 0.0
  %1542 = vmatpush1.msra.mxu0 0.0
  %1543 = vmatprep.subr.mxu0 0.0
  %1544 = vmatpush1.msra.mxu0 0.0
  %1545 = vmatprep.subr.mxu0 0.0
  %1546 = vmatpush1.msra.mxu0 0.0
  %1547 = vmatprep.subr.mxu0 0.0
  %1548 = vmatpush1.msra.mxu0 0.0
  %1549 = vmatprep.mubr.f32.mxu0 0.0
  %1550 = vmatmul.mubr.f32.gmra.mrb[0].mxu0 %v1480
  %v1551 = vpop.f32.mrb[0].mxu0
  %v1552 = vadd.f32 %v1471, %v1551
  %v1553 = vpop.f32.mrb[0].mxu0
  %1554 = vmatprep.mubr.f32.mxu0 0.0
  %1555 = vmatmul.mubr.f32.gmra.mrb[0].mxu0 %v1483
  %v1556 = vpop.f32.mrb[0].mxu0
  %v1557 = vadd.f32 %v1476, %v1556
  %v1558 = vpop.f32.mrb[0].mxu0
  %1559 = vdwg.mxu0
  %1560 = vrot.lane.b32.xlu0 %v718, 112
  %v1561 = vpop.permute.xlu0 %1560
  %1562 = vrot.lane.b32.xlu0 %v718, 80
  %v1563 = vpop.permute.xlu0 %1562
  %v1564 = vsel %vm734, %v1561, 0
  %v1566 = vsel %vm734, %v1563, 0
  %1568 = vmatprep.subr.mxu0 0.0
  %1569 = vmatpush1.xpose.msra.mxu0 %v1566
  %1570 = vmatprep.subr.mxu0 0.0
  %1571 = vmatpush1.xpose.msra.mxu0 0.0
  %1572 = vmatprep.subr.mxu0 0.0
  %1573 = vmatpush1.xpose.msra.mxu0 0.0
  %1574 = vmatprep.subr.mxu0 0.0
  %1575 = vmatpush1.xpose.msra.mxu0 0.0
  %1576 = vmatprep.subr.mxu0 0.0
  %1577 = vmatpush1.xpose.msra.mxu0 0.0
  %1578 = vmatprep.subr.mxu0 0.0
  %1579 = vmatpush1.xpose.msra.mxu0 0.0
  %1580 = vmatprep.subr.mxu0 0.0
  %1581 = vmatpush1.xpose.msra.mxu0 0.0
  %1582 = vmatprep.subr.mxu0 0.0
  %1583 = vmatpush1.xpose.msra.mxu0 0.0
  %1584 = vmatprep.subr.mxu0 0.0
  %1585 = vmatpush1.xpose.msra.mxu0 0.0
  %1586 = vmatprep.subr.mxu0 0.0
  %1587 = vmatpush1.xpose.msra.mxu0 0.0
  %1588 = vmatprep.subr.mxu0 0.0
  %1589 = vmatpush1.xpose.msra.mxu0 0.0
  %1590 = vmatprep.subr.mxu0 0.0
  %1591 = vmatpush1.xpose.msra.mxu0 0.0
  %1592 = vmatprep.subr.mxu0 0.0
  %1593 = vmatpush1.xpose.msra.mxu0 0.0
  %1594 = vmatprep.subr.mxu0 0.0
  %1595 = vmatpush1.xpose.msra.mxu0 0.0
  %1596 = vmatprep.subr.mxu0 0.0
  %1597 = vmatpush1.xpose.msra.mxu0 0.0
  %1598 = vmatprep.subr.mxu0 0.0
  %1599 = vmatpush1.xpose.msra.mxu0 0.0
  %1600 = vmatprep.subr.mxu0 0.0
  %1601 = vmatpush1.xpose.msra.mxu0 0.0
  %1602 = vmatprep.subr.mxu0 0.0
  %1603 = vmatpush1.xpose.msra.mxu0 0.0
  %1604 = vmatprep.subr.mxu0 0.0
  %1605 = vmatpush1.xpose.msra.mxu0 0.0
  %1606 = vmatprep.subr.mxu0 0.0
  %1607 = vmatpush1.xpose.msra.mxu0 0.0
  %1608 = vmatprep.subr.mxu0 0.0
  %1609 = vmatpush1.xpose.msra.mxu0 0.0
  %1610 = vmatprep.subr.mxu0 0.0
  %1611 = vmatpush1.xpose.msra.mxu0 0.0
  %1612 = vmatprep.subr.mxu0 0.0
  %1613 = vmatpush1.xpose.msra.mxu0 0.0
  %1614 = vmatprep.subr.mxu0 0.0
  %1615 = vmatpush1.xpose.msra.mxu0 0.0
  %1616 = vmatprep.subr.mxu0 0.0
  %1617 = vmatpush1.xpose.msra.mxu0 0.0
  %1618 = vmatprep.subr.mxu0 0.0
  %1619 = vmatpush1.xpose.msra.mxu0 0.0
  %1620 = vmatprep.subr.mxu0 0.0
  %1621 = vmatpush1.xpose.msra.mxu0 0.0
  %1622 = vmatprep.subr.mxu0 0.0
  %1623 = vmatpush1.xpose.msra.mxu0 0.0
  %1624 = vmatprep.subr.mxu0 0.0
  %1625 = vmatpush1.xpose.msra.mxu0 0.0
  %1626 = vmatprep.subr.mxu0 0.0
  %1627 = vmatpush1.xpose.msra.mxu0 0.0
  %1628 = vmatprep.subr.mxu0 0.0
  %1629 = vmatpush1.xpose.msra.mxu0 0.0
  %1630 = vmatprep.subr.mxu0 0.0
  %1631 = vmatpush1.xpose.msra.mxu0 0.0
  %1632 = vmatprep.mubr.f32.mxu0 0.0
  %1633 = vmatmul.mubr.f32.gmra.mrb[0].mxu0 %v1564
  %v1634 = vpop.f32.mrb[0].mxu0
  %v1635 = vadd.f32 0.0, %v1634
  %v1636 = vpop.f32.mrb[0].mxu0
  %1637 = vdwg.mxu0
  %1638 = vrot.lane.b32.xlu0 %v723, 112
  %v1639 = vpop.permute.xlu0 %1638
  %1640 = vrot.lane.b32.xlu0 %v723, 80
  %v1641 = vpop.permute.xlu0 %1640
  %v1642 = vsel %vm734, %v1639, 0
  %v1644 = vsel %vm734, %v1641, 0
  %1646 = vmatprep.subr.mxu0 0.0
  %1647 = vmatpush1.xpose.msra.mxu0 %v1644
  %1648 = vmatprep.subr.mxu0 0.0
  %1649 = vmatpush1.xpose.msra.mxu0 0.0
  %1650 = vmatprep.subr.mxu0 0.0
  %1651 = vmatpush1.xpose.msra.mxu0 0.0
  %1652 = vmatprep.subr.mxu0 0.0
  %1653 = vmatpush1.xpose.msra.mxu0 0.0
  %1654 = vmatprep.subr.mxu0 0.0
  %1655 = vmatpush1.xpose.msra.mxu0 0.0
  %1656 = vmatprep.subr.mxu0 0.0
  %1657 = vmatpush1.xpose.msra.mxu0 0.0
  %1658 = vmatprep.subr.mxu0 0.0
  %1659 = vmatpush1.xpose.msra.mxu0 0.0
  %1660 = vmatprep.subr.mxu0 0.0
  %1661 = vmatpush1.xpose.msra.mxu0 0.0
  %1662 = vmatprep.subr.mxu0 0.0
  %1663 = vmatpush1.xpose.msra.mxu0 0.0
  %1664 = vmatprep.subr.mxu0 0.0
  %1665 = vmatpush1.xpose.msra.mxu0 0.0
  %1666 = vmatprep.subr.mxu0 0.0
  %1667 = vmatpush1.xpose.msra.mxu0 0.0
  %1668 = vmatprep.subr.mxu0 0.0
  %1669 = vmatpush1.xpose.msra.mxu0 0.0
  %1670 = vmatprep.subr.mxu0 0.0
  %1671 = vmatpush1.xpose.msra.mxu0 0.0
  %1672 = vmatprep.subr.mxu0 0.0
  %1673 = vmatpush1.xpose.msra.mxu0 0.0
  %1674 = vmatprep.subr.mxu0 0.0
  %1675 = vmatpush1.xpose.msra.mxu0 0.0
  %1676 = vmatprep.subr.mxu0 0.0
  %1677 = vmatpush1.xpose.msra.mxu0 0.0
  %1678 = vmatprep.subr.mxu0 0.0
  %1679 = vmatpush1.xpose.msra.mxu0 0.0
  %1680 = vmatprep.subr.mxu0 0.0
  %1681 = vmatpush1.xpose.msra.mxu0 0.0
  %1682 = vmatprep.subr.mxu0 0.0
  %1683 = vmatpush1.xpose.msra.mxu0 0.0
  %1684 = vmatprep.subr.mxu0 0.0
  %1685 = vmatpush1.xpose.msra.mxu0 0.0
  %1686 = vmatprep.subr.mxu0 0.0
  %1687 = vmatpush1.xpose.msra.mxu0 0.0
  %1688 = vmatprep.subr.mxu0 0.0
  %1689 = vmatpush1.xpose.msra.mxu0 0.0
  %1690 = vmatprep.subr.mxu0 0.0
  %1691 = vmatpush1.xpose.msra.mxu0 0.0
  %1692 = vmatprep.subr.mxu0 0.0
  %1693 = vmatpush1.xpose.msra.mxu0 0.0
  %1694 = vmatprep.subr.mxu0 0.0
  %1695 = vmatpush1.xpose.msra.mxu0 0.0
  %1696 = vmatprep.subr.mxu0 0.0
  %1697 = vmatpush1.xpose.msra.mxu0 0.0
  %1698 = vmatprep.subr.mxu0 0.0
  %1699 = vmatpush1.xpose.msra.mxu0 0.0
  %1700 = vmatprep.subr.mxu0 0.0
  %1701 = vmatpush1.xpose.msra.mxu0 0.0
  %1702 = vmatprep.subr.mxu0 0.0
  %1703 = vmatpush1.xpose.msra.mxu0 0.0
  %1704 = vmatprep.subr.mxu0 0.0
  %1705 = vmatpush1.xpose.msra.mxu0 0.0
  %1706 = vmatprep.subr.mxu0 0.0
  %1707 = vmatpush1.xpose.msra.mxu0 0.0
  %1708 = vmatprep.subr.mxu0 0.0
  %1709 = vmatpush1.xpose.msra.mxu0 0.0
  %1710 = vmatprep.mubr.f32.mxu0 0.0
  %1711 = vmatmul.mubr.f32.gmra.mrb[0].mxu0 %v1642
  %v1712 = vpop.f32.mrb[0].mxu0
  %v1713 = vadd.f32 0.0, %v1712
  %v1714 = vpop.f32.mrb[0].mxu0
  %1715 = vdwg.mxu0
  %v1716 = vmul.f32 %v1635, 0.35355338
  %v1717 = vmul.f32 %v1713, 0.35355338
  %v1718 = vadd.f32 %v1716, %v570
  %v1719 = vadd.f32 %v1717, %v571
  %v1720 = vsel %vm734, %v1718, -inf
  %1721 = vmax.xlane.f32.xlu0 %v1720
  %v1722 = vpop.xlane.xlu0 %1721
  %v1723 = vsel %vm734, %v1719, -inf
  %1724 = vmax.xlane.f32.xlu0 %v1723
  %v1725 = vpop.xlane.xlu0 %1724
  %v1726 = vsub.f32 %v1718, %v1722
  %v1727 = vsub.f32 %v1719, %v1725
  %v1728 = vmul.f32 %v1726, 1.442695
  %v1729 = vpow.pop %v1728
  %v1730 = vmul.f32 %v1727, 1.442695
  %v1731 = vpow.pop %v1730
  %v1732 = vsel %vm734, %v1729, 0.0
  %1733 = vadd.xlane.f32.xlu0 %v1732
  %v1734 = vpop.xlane.xlu0 %1733
  %v1735 = vsel %vm734, %v1731, 0.0
  %1736 = vadd.xlane.f32.xlu0 %v1735
  %v1737 = vpop.xlane.xlu0 %1736
  %v1738 = vrcp.pop %v1734
  %v1739 = vrcp.pop %v1737
  %v1740 = vmul.f32 %v1729, %v1738
  %v1741 = vmul.f32 %v1731, %v1739
  %1742 = vrot.lane.b32.xlu0 %v718, 48
  %v1743 = vpop.permute.xlu0 %1742
  %v1746 = vsel %vm734, %v1740, 0
  %1748 = vmatprep.subr.mxu0 0.0
  %1749 = vmatpush1.msra.mxu0 %v1743
  %1750 = vmatprep.subr.mxu0 0.0
  %1751 = vmatpush1.msra.mxu0 0.0
  %1752 = vmatprep.subr.mxu0 0.0
  %1753 = vmatpush1.msra.mxu0 0.0
  %1754 = vmatprep.subr.mxu0 0.0
  %1755 = vmatpush1.msra.mxu0 0.0
  %1756 = vmatprep.subr.mxu0 0.0
  %1757 = vmatpush1.msra.mxu0 0.0
  %1758 = vmatprep.subr.mxu0 0.0
  %1759 = vmatpush1.msra.mxu0 0.0
  %1760 = vmatprep.subr.mxu0 0.0
  %1761 = vmatpush1.msra.mxu0 0.0
  %1762 = vmatprep.subr.mxu0 0.0
  %1763 = vmatpush1.msra.mxu0 0.0
  %1764 = vmatprep.subr.mxu0 0.0
  %1765 = vmatpush1.msra.mxu0 0.0
  %1766 = vmatprep.subr.mxu0 0.0
  %1767 = vmatpush1.msra.mxu0 0.0
  %1768 = vmatprep.subr.mxu0 0.0
  %1769 = vmatpush1.msra.mxu0 0.0
  %1770 = vmatprep.subr.mxu0 0.0
  %1771 = vmatpush1.msra.mxu0 0.0
  %1772 = vmatprep.subr.mxu0 0.0
  %1773 = vmatpush1.msra.mxu0 0.0
  %1774 = vmatprep.subr.mxu0 0.0
  %1775 = vmatpush1.msra.mxu0 0.0
  %1776 = vmatprep.subr.mxu0 0.0
  %1777 = vmatpush1.msra.mxu0 0.0
  %1778 = vmatprep.subr.mxu0 0.0
  %1779 = vmatpush1.msra.mxu0 0.0
  %1780 = vmatprep.subr.mxu0 0.0
  %1781 = vmatpush1.msra.mxu0 0.0
  %1782 = vmatprep.subr.mxu0 0.0
  %1783 = vmatpush1.msra.mxu0 0.0
  %1784 = vmatprep.subr.mxu0 0.0
  %1785 = vmatpush1.msra.mxu0 0.0
  %1786 = vmatprep.subr.mxu0 0.0
  %1787 = vmatpush1.msra.mxu0 0.0
  %1788 = vmatprep.subr.mxu0 0.0
  %1789 = vmatpush1.msra.mxu0 0.0
  %1790 = vmatprep.subr.mxu0 0.0
  %1791 = vmatpush1.msra.mxu0 0.0
  %1792 = vmatprep.subr.mxu0 0.0
  %1793 = vmatpush1.msra.mxu0 0.0
  %1794 = vmatprep.subr.mxu0 0.0
  %1795 = vmatpush1.msra.mxu0 0.0
  %1796 = vmatprep.subr.mxu0 0.0
  %1797 = vmatpush1.msra.mxu0 0.0
  %1798 = vmatprep.subr.mxu0 0.0
  %1799 = vmatpush1.msra.mxu0 0.0
  %1800 = vmatprep.subr.mxu0 0.0
  %1801 = vmatpush1.msra.mxu0 0.0
  %1802 = vmatprep.subr.mxu0 0.0
  %1803 = vmatpush1.msra.mxu0 0.0
  %1804 = vmatprep.subr.mxu0 0.0
  %1805 = vmatpush1.msra.mxu0 0.0
  %1806 = vmatprep.subr.mxu0 0.0
  %1807 = vmatpush1.msra.mxu0 0.0
  %1808 = vmatprep.subr.mxu0 0.0
  %1809 = vmatpush1.msra.mxu0 0.0
  %1810 = vmatprep.subr.mxu0 0.0
  %1811 = vmatpush1.msra.mxu0 0.0
  %1812 = vmatprep.mubr.f32.mxu0 0.0
  %1813 = vmatmul.mubr.f32.gmra.mrb[0].mxu0 %v1746
  %v1814 = vpop.f32.mrb[0].mxu0
  %v1815 = vadd.f32 0.0, %v1814
  %v1816 = vpop.f32.mrb[0].mxu0
  %1817 = vdwg.mxu0
  %1818 = vrot.lane.b32.xlu0 %v723, 48
  %v1819 = vpop.permute.xlu0 %1818
  %v1822 = vsel %vm734, %v1741, 0
  %1824 = vmatprep.subr.mxu0 0.0
  %1825 = vmatpush1.msra.mxu0 %v1819
  %1826 = vmatprep.subr.mxu0 0.0
  %1827 = vmatpush1.msra.mxu0 0.0
  %1828 = vmatprep.subr.mxu0 0.0
  %1829 = vmatpush1.msra.mxu0 0.0
  %1830 = vmatprep.subr.mxu0 0.0
  %1831 = vmatpush1.msra.mxu0 0.0
  %1832 = vmatprep.subr.mxu0 0.0
  %1833 = vmatpush1.msra.mxu0 0.0
  %1834 = vmatprep.subr.mxu0 0.0
  %1835 = vmatpush1.msra.mxu0 0.0
  %1836 = vmatprep.subr.mxu0 0.0
  %1837 = vmatpush1.msra.mxu0 0.0
  %1838 = vmatprep.subr.mxu0 0.0
  %1839 = vmatpush1.msra.mxu0 0.0
  %1840 = vmatprep.subr.mxu0 0.0
  %1841 = vmatpush1.msra.mxu0 0.0
  %1842 = vmatprep.subr.mxu0 0.0
  %1843 = vmatpush1.msra.mxu0 0.0
  %1844 = vmatprep.subr.mxu0 0.0
  %1845 = vmatpush1.msra.mxu0 0.0
  %1846 = vmatprep.subr.mxu0 0.0
  %1847 = vmatpush1.msra.mxu0 0.0
  %1848 = vmatprep.subr.mxu0 0.0
  %1849 = vmatpush1.msra.mxu0 0.0
  %1850 = vmatprep.subr.mxu0 0.0
  %1851 = vmatpush1.msra.mxu0 0.0
  %1852 = vmatprep.subr.mxu0 0.0
  %1853 = vmatpush1.msra.mxu0 0.0
  %1854 = vmatprep.subr.mxu0 0.0
  %1855 = vmatpush1.msra.mxu0 0.0
  %1856 = vmatprep.subr.mxu0 0.0
  %1857 = vmatpush1.msra.mxu0 0.0
  %1858 = vmatprep.subr.mxu0 0.0
  %1859 = vmatpush1.msra.mxu0 0.0
  %1860 = vmatprep.subr.mxu0 0.0
  %1861 = vmatpush1.msra.mxu0 0.0
  %1862 = vmatprep.subr.mxu0 0.0
  %1863 = vmatpush1.msra.mxu0 0.0
  %1864 = vmatprep.subr.mxu0 0.0
  %1865 = vmatpush1.msra.mxu0 0.0
  %1866 = vmatprep.subr.mxu0 0.0
  %1867 = vmatpush1.msra.mxu0 0.0
  %1868 = vmatprep.subr.mxu0 0.0
  %1869 = vmatpush1.msra.mxu0 0.0
  %1870 = vmatprep.subr.mxu0 0.0
  %1871 = vmatpush1.msra.mxu0 0.0
  %1872 = vmatprep.subr.mxu0 0.0
  %1873 = vmatpush1.msra.mxu0 0.0
  %1874 = vmatprep.subr.mxu0 0.0
  %1875 = vmatpush1.msra.mxu0 0.0
  %1876 = vmatprep.subr.mxu0 0.0
  %1877 = vmatpush1.msra.mxu0 0.0
  %1878 = vmatprep.subr.mxu0 0.0
  %1879 = vmatpush1.msra.mxu0 0.0
  %1880 = vmatprep.subr.mxu0 0.0
  %1881 = vmatpush1.msra.mxu0 0.0
  %1882 = vmatprep.subr.mxu0 0.0
  %1883 = vmatpush1.msra.mxu0 0.0
  %1884 = vmatprep.subr.mxu0 0.0
  %1885 = vmatpush1.msra.mxu0 0.0
  %1886 = vmatprep.subr.mxu0 0.0
  %1887 = vmatpush1.msra.mxu0 0.0
  %1888 = vmatprep.mubr.f32.mxu0 0.0
  %1889 = vmatmul.mubr.f32.gmra.mrb[0].mxu0 %v1822
  %v1890 = vpop.f32.mrb[0].mxu0
  %v1891 = vadd.f32 0.0, %v1890
  %v1892 = vpop.f32.mrb[0].mxu0
  %1893 = vdwg.mxu0
  %v1895 = vsel %vm734, %v1815, 0
  %v1898 = vsel %vm734, %v1891, 0
  %1900 = vmatprep.subr.mxu0 0.0
  %1901 = vmatpush1.msra.mxu0 %v728
  %1902 = vmatprep.subr.mxu0 0.0
  %1903 = vmatpush1.msra.mxu0 0.0
  %1904 = vmatprep.subr.mxu0 0.0
  %1905 = vmatpush1.msra.mxu0 0.0
  %1906 = vmatprep.subr.mxu0 0.0
  %1907 = vmatpush1.msra.mxu0 0.0
  %1908 = vmatprep.subr.mxu0 0.0
  %1909 = vmatpush1.msra.mxu0 0.0
  %1910 = vmatprep.subr.mxu0 0.0
  %1911 = vmatpush1.msra.mxu0 0.0
  %1912 = vmatprep.subr.mxu0 0.0
  %1913 = vmatpush1.msra.mxu0 0.0
  %1914 = vmatprep.subr.mxu0 0.0
  %1915 = vmatpush1.msra.mxu0 0.0
  %1916 = vmatprep.subr.mxu0 0.0
  %1917 = vmatpush1.msra.mxu0 0.0
  %1918 = vmatprep.subr.mxu0 0.0
  %1919 = vmatpush1.msra.mxu0 0.0
  %1920 = vmatprep.subr.mxu0 0.0
  %1921 = vmatpush1.msra.mxu0 0.0
  %1922 = vmatprep.subr.mxu0 0.0
  %1923 = vmatpush1.msra.mxu0 0.0
  %1924 = vmatprep.subr.mxu0 0.0
  %1925 = vmatpush1.msra.mxu0 0.0
  %1926 = vmatprep.subr.mxu0 0.0
  %1927 = vmatpush1.msra.mxu0 0.0
  %1928 = vmatprep.subr.mxu0 0.0
  %1929 = vmatpush1.msra.mxu0 0.0
  %1930 = vmatprep.subr.mxu0 0.0
  %1931 = vmatpush1.msra.mxu0 0.0
  %1932 = vmatprep.subr.mxu0 0.0
  %1933 = vmatpush1.msra.mxu0 0.0
  %1934 = vmatprep.subr.mxu0 0.0
  %1935 = vmatpush1.msra.mxu0 0.0
  %1936 = vmatprep.subr.mxu0 0.0
  %1937 = vmatpush1.msra.mxu0 0.0
  %1938 = vmatprep.subr.mxu0 0.0
  %1939 = vmatpush1.msra.mxu0 0.0
  %1940 = vmatprep.subr.mxu0 0.0
  %1941 = vmatpush1.msra.mxu0 0.0
  %1942 = vmatprep.subr.mxu0 0.0
  %1943 = vmatpush1.msra.mxu0 0.0
  %1944 = vmatprep.subr.mxu0 0.0
  %1945 = vmatpush1.msra.mxu0 0.0
  %1946 = vmatprep.subr.mxu0 0.0
  %1947 = vmatpush1.msra.mxu0 0.0
  %1948 = vmatprep.subr.mxu0 0.0
  %1949 = vmatpush1.msra.mxu0 0.0
  %1950 = vmatprep.subr.mxu0 0.0
  %1951 = vmatpush1.msra.mxu0 0.0
  %1952 = vmatprep.subr.mxu0 0.0
  %1953 = vmatpush1.msra.mxu0 0.0
  %1954 = vmatprep.subr.mxu0 0.0
  %1955 = vmatpush1.msra.mxu0 0.0
  %1956 = vmatprep.subr.mxu0 0.0
  %1957 = vmatpush1.msra.mxu0 0.0
  %1958 = vmatprep.subr.mxu0 0.0
  %1959 = vmatpush1.msra.mxu0 0.0
  %1960 = vmatprep.subr.mxu0 0.0
  %1961 = vmatpush1.msra.mxu0 0.0
  %1962 = vmatprep.subr.mxu0 0.0
  %1963 = vmatpush1.msra.mxu0 0.0
  %1964 = vmatprep.mubr.f32.mxu0 0.0
  %1965 = vmatmul.mubr.f32.gmra.mrb[0].mxu0 %v1895
  %v1966 = vpop.f32.mrb[0].mxu0
  %v1967 = vadd.f32 0.0, %v1966
  %v1968 = vpop.f32.mrb[0].mxu0
  %1969 = vmatprep.mubr.f32.mxu0 0.0
  %1970 = vmatmul.mubr.f32.gmra.mrb[0].mxu0 %v1898
  %v1971 = vpop.f32.mrb[0].mxu0
  %v1972 = vadd.f32 0.0, %v1971
  %v1973 = vpop.f32.mrb[0].mxu0
  %1974 = vdwg.mxu0
  %v1975 = vadd.f32 %v1552, %v1967
  %v1976 = vadd.f32 %v1557, %v1972
  %1977 = vrot.lane.b32.xlu0 %v718, 104
  %v1978 = vpop.permute.xlu0 %1977
  %1979 = vrot.lane.b32.xlu0 %v718, 72
  %v1980 = vpop.permute.xlu0 %1979
  %v1981 = vsel %vm734, %v1978, 0
  %v1983 = vsel %vm734, %v1980, 0
  %1985 = vmatprep.subr.mxu0 0.0
  %1986 = vmatpush1.xpose.msra.mxu0 %v1983
  %1987 = vmatprep.subr.mxu0 0.0
  %1988 = vmatpush1.xpose.msra.mxu0 0.0
  %1989 = vmatprep.subr.mxu0 0.0
  %1990 = vmatpush1.xpose.msra.mxu0 0.0
  %1991 = vmatprep.subr.mxu0 0.0
  %1992 = vmatpush1.xpose.msra.mxu0 0.0
  %1993 = vmatprep.subr.mxu0 0.0
  %1994 = vmatpush1.xpose.msra.mxu0 0.0
  %1995 = vmatprep.subr.mxu0 0.0
  %1996 = vmatpush1.xpose.msra.mxu0 0.0
  %1997 = vmatprep.subr.mxu0 0.0
  %1998 = vmatpush1.xpose.msra.mxu0 0.0
  %1999 = vmatprep.subr.mxu0 0.0
  %2000 = vmatpush1.xpose.msra.mxu0 0.0
  %2001 = vmatprep.subr.mxu0 0.0
  %2002 = vmatpush1.xpose.msra.mxu0 0.0
  %2003 = vmatprep.subr.mxu0 0.0
  %2004 = vmatpush1.xpose.msra.mxu0 0.0
  %2005 = vmatprep.subr.mxu0 0.0
  %2006 = vmatpush1.xpose.msra.mxu0 0.0
  %2007 = vmatprep.subr.mxu0 0.0
  %2008 = vmatpush1.xpose.msra.mxu0 0.0
  %2009 = vmatprep.subr.mxu0 0.0
  %2010 = vmatpush1.xpose.msra.mxu0 0.0
  %2011 = vmatprep.subr.mxu0 0.0
  %2012 = vmatpush1.xpose.msra.mxu0 0.0
  %2013 = vmatprep.subr.mxu0 0.0
  %2014 = vmatpush1.xpose.msra.mxu0 0.0
  %2015 = vmatprep.subr.mxu0 0.0
  %2016 = vmatpush1.xpose.msra.mxu0 0.0
  %2017 = vmatprep.subr.mxu0 0.0
  %2018 = vmatpush1.xpose.msra.mxu0 0.0
  %2019 = vmatprep.subr.mxu0 0.0
  %2020 = vmatpush1.xpose.msra.mxu0 0.0
  %2021 = vmatprep.subr.mxu0 0.0
  %2022 = vmatpush1.xpose.msra.mxu0 0.0
  %2023 = vmatprep.subr.mxu0 0.0
  %2024 = vmatpush1.xpose.msra.mxu0 0.0
  %2025 = vmatprep.subr.mxu0 0.0
  %2026 = vmatpush1.xpose.msra.mxu0 0.0
  %2027 = vmatprep.subr.mxu0 0.0
  %2028 = vmatpush1.xpose.msra.mxu0 0.0
  %2029 = vmatprep.subr.mxu0 0.0
  %2030 = vmatpush1.xpose.msra.mxu0 0.0
  %2031 = vmatprep.subr.mxu0 0.0
  %2032 = vmatpush1.xpose.msra.mxu0 0.0
  %2033 = vmatprep.subr.mxu0 0.0
  %2034 = vmatpush1.xpose.msra.mxu0 0.0
  %2035 = vmatprep.subr.mxu0 0.0
  %2036 = vmatpush1.xpose.msra.mxu0 0.0
  %2037 = vmatprep.subr.mxu0 0.0
  %2038 = vmatpush1.xpose.msra.mxu0 0.0
  %2039 = vmatprep.subr.mxu0 0.0
  %2040 = vmatpush1.xpose.msra.mxu0 0.0
  %2041 = vmatprep.subr.mxu0 0.0
  %2042 = vmatpush1.xpose.msra.mxu0 0.0
  %2043 = vmatprep.subr.mxu0 0.0
  %2044 = vmatpush1.xpose.msra.mxu0 0.0
  %2045 = vmatprep.subr.mxu0 0.0
  %2046 = vmatpush1.xpose.msra.mxu0 0.0
  %2047 = vmatprep.subr.mxu0 0.0
  %2048 = vmatpush1.xpose.msra.mxu0 0.0
  %2049 = vmatprep.mubr.f32.mxu0 0.0
  %2050 = vmatmul.mubr.f32.gmra.mrb[0].mxu0 %v1981
  %v2051 = vpop.f32.mrb[0].mxu0
  %v2052 = vadd.f32 0.0, %v2051
  %v2053 = vpop.f32.mrb[0].mxu0
  %2054 = vdwg.mxu0
  %2055 = vrot.lane.b32.xlu0 %v723, 104
  %v2056 = vpop.permute.xlu0 %2055
  %2057 = vrot.lane.b32.xlu0 %v723, 72
  %v2058 = vpop.permute.xlu0 %2057
  %v2059 = vsel %vm734, %v2056, 0
  %v2061 = vsel %vm734, %v2058, 0
  %2063 = vmatprep.subr.mxu0 0.0
  %2064 = vmatpush1.xpose.msra.mxu0 %v2061
  %2065 = vmatprep.subr.mxu0 0.0
  %2066 = vmatpush1.xpose.msra.mxu0 0.0
  %2067 = vmatprep.subr.mxu0 0.0
  %2068 = vmatpush1.xpose.msra.mxu0 0.0
  %2069 = vmatprep.subr.mxu0 0.0
  %2070 = vmatpush1.xpose.msra.mxu0 0.0
  %2071 = vmatprep.subr.mxu0 0.0
  %2072 = vmatpush1.xpose.msra.mxu0 0.0
  %2073 = vmatprep.subr.mxu0 0.0
  %2074 = vmatpush1.xpose.msra.mxu0 0.0
  %2075 = vmatprep.subr.mxu0 0.0
  %2076 = vmatpush1.xpose.msra.mxu0 0.0
  %2077 = vmatprep.subr.mxu0 0.0
  %2078 = vmatpush1.xpose.msra.mxu0 0.0
  %2079 = vmatprep.subr.mxu0 0.0
  %2080 = vmatpush1.xpose.msra.mxu0 0.0
  %2081 = vmatprep.subr.mxu0 0.0
  %2082 = vmatpush1.xpose.msra.mxu0 0.0
  %2083 = vmatprep.subr.mxu0 0.0
  %2084 = vmatpush1.xpose.msra.mxu0 0.0
  %2085 = vmatprep.subr.mxu0 0.0
  %2086 = vmatpush1.xpose.msra.mxu0 0.0
  %2087 = vmatprep.subr.mxu0 0.0
  %2088 = vmatpush1.xpose.msra.mxu0 0.0
  %2089 = vmatprep.subr.mxu0 0.0
  %2090 = vmatpush1.xpose.msra.mxu0 0.0
  %2091 = vmatprep.subr.mxu0 0.0
  %2092 = vmatpush1.xpose.msra.mxu0 0.0
  %2093 = vmatprep.subr.mxu0 0.0
  %2094 = vmatpush1.xpose.msra.mxu0 0.0
  %2095 = vmatprep.subr.mxu0 0.0
  %2096 = vmatpush1.xpose.msra.mxu0 0.0
  %2097 = vmatprep.subr.mxu0 0.0
  %2098 = vmatpush1.xpose.msra.mxu0 0.0
  %2099 = vmatprep.subr.mxu0 0.0
  %2100 = vmatpush1.xpose.msra.mxu0 0.0
  %2101 = vmatprep.subr.mxu0 0.0
  %2102 = vmatpush1.xpose.msra.mxu0 0.0
  %2103 = vmatprep.subr.mxu0 0.0
  %2104 = vmatpush1.xpose.msra.mxu0 0.0
  %2105 = vmatprep.subr.mxu0 0.0
  %2106 = vmatpush1.xpose.msra.mxu0 0.0
  %2107 = vmatprep.subr.mxu0 0.0
  %2108 = vmatpush1.xpose.msra.mxu0 0.0
  %2109 = vmatprep.subr.mxu0 0.0
  %2110 = vmatpush1.xpose.msra.mxu0 0.0
  %2111 = vmatprep.subr.mxu0 0.0
  %2112 = vmatpush1.xpose.msra.mxu0 0.0
  %2113 = vmatprep.subr.mxu0 0.0
  %2114 = vmatpush1.xpose.msra.mxu0 0.0
  %2115 = vmatprep.subr.mxu0 0.0
  %2116 = vmatpush1.xpose.msra.mxu0 0.0
  %2117 = vmatprep.subr.mxu0 0.0
  %2118 = vmatpush1.xpose.msra.mxu0 0.0
  %2119 = vmatprep.subr.mxu0 0.0
  %2120 = vmatpush1.xpose.msra.mxu0 0.0
  %2121 = vmatprep.subr.mxu0 0.0
  %2122 = vmatpush1.xpose.msra.mxu0 0.0
  %2123 = vmatprep.subr.mxu0 0.0
  %2124 = vmatpush1.xpose.msra.mxu0 0.0
  %2125 = vmatprep.subr.mxu0 0.0
  %2126 = vmatpush1.xpose.msra.mxu0 0.0
  %2127 = vmatprep.mubr.f32.mxu0 0.0
  %2128 = vmatmul.mubr.f32.gmra.mrb[0].mxu0 %v2059
  %v2129 = vpop.f32.mrb[0].mxu0
  %v2130 = vadd.f32 0.0, %v2129
  %v2131 = vpop.f32.mrb[0].mxu0
  %2132 = vdwg.mxu0
  %v2133 = vmul.f32 %v2052, 0.35355338
  %v2134 = vmul.f32 %v2130, 0.35355338
  %v2135 = vadd.f32 %v2133, %v570
  %v2136 = vadd.f32 %v2134, %v571
  %v2137 = vsel %vm734, %v2135, -inf
  %2138 = vmax.xlane.f32.xlu0 %v2137
  %v2139 = vpop.xlane.xlu0 %2138
  %v2140 = vsel %vm734, %v2136, -inf
  %2141 = vmax.xlane.f32.xlu0 %v2140
  %v2142 = vpop.xlane.xlu0 %2141
  %v2143 = vsub.f32 %v2135, %v2139
  %v2144 = vsub.f32 %v2136, %v2142
  %v2145 = vmul.f32 %v2143, 1.442695
  %v2146 = vpow.pop %v2145
  %v2147 = vmul.f32 %v2144, 1.442695
  %v2148 = vpow.pop %v2147
  %v2149 = vsel %vm734, %v2146, 0.0
  %2150 = vadd.xlane.f32.xlu0 %v2149
  %v2151 = vpop.xlane.xlu0 %2150
  %v2152 = vsel %vm734, %v2148, 0.0
  %2153 = vadd.xlane.f32.xlu0 %v2152
  %v2154 = vpop.xlane.xlu0 %2153
  %v2155 = vrcp.pop %v2151
  %v2156 = vrcp.pop %v2154
  %v2157 = vmul.f32 %v2146, %v2155
  %v2158 = vmul.f32 %v2148, %v2156
  %2159 = vrot.lane.b32.xlu0 %v718, 40
  %v2160 = vpop.permute.xlu0 %2159
  %v2163 = vsel %vm734, %v2157, 0
  %2165 = vmatprep.subr.mxu0 0.0
  %2166 = vmatpush1.msra.mxu0 %v2160
  %2167 = vmatprep.subr.mxu0 0.0
  %2168 = vmatpush1.msra.mxu0 0.0
  %2169 = vmatprep.subr.mxu0 0.0
  %2170 = vmatpush1.msra.mxu0 0.0
  %2171 = vmatprep.subr.mxu0 0.0
  %2172 = vmatpush1.msra.mxu0 0.0
  %2173 = vmatprep.subr.mxu0 0.0
  %2174 = vmatpush1.msra.mxu0 0.0
  %2175 = vmatprep.subr.mxu0 0.0
  %2176 = vmatpush1.msra.mxu0 0.0
  %2177 = vmatprep.subr.mxu0 0.0
  %2178 = vmatpush1.msra.mxu0 0.0
  %2179 = vmatprep.subr.mxu0 0.0
  %2180 = vmatpush1.msra.mxu0 0.0
  %2181 = vmatprep.subr.mxu0 0.0
  %2182 = vmatpush1.msra.mxu0 0.0
  %2183 = vmatprep.subr.mxu0 0.0
  %2184 = vmatpush1.msra.mxu0 0.0
  %2185 = vmatprep.subr.mxu0 0.0
  %2186 = vmatpush1.msra.mxu0 0.0
  %2187 = vmatprep.subr.mxu0 0.0
  %2188 = vmatpush1.msra.mxu0 0.0
  %2189 = vmatprep.subr.mxu0 0.0
  %2190 = vmatpush1.msra.mxu0 0.0
  %2191 = vmatprep.subr.mxu0 0.0
  %2192 = vmatpush1.msra.mxu0 0.0
  %2193 = vmatprep.subr.mxu0 0.0
  %2194 = vmatpush1.msra.mxu0 0.0
  %2195 = vmatprep.subr.mxu0 0.0
  %2196 = vmatpush1.msra.mxu0 0.0
  %2197 = vmatprep.subr.mxu0 0.0
  %2198 = vmatpush1.msra.mxu0 0.0
  %2199 = vmatprep.subr.mxu0 0.0
  %2200 = vmatpush1.msra.mxu0 0.0
  %2201 = vmatprep.subr.mxu0 0.0
  %2202 = vmatpush1.msra.mxu0 0.0
  %2203 = vmatprep.subr.mxu0 0.0
  %2204 = vmatpush1.msra.mxu0 0.0
  %2205 = vmatprep.subr.mxu0 0.0
  %2206 = vmatpush1.msra.mxu0 0.0
  %2207 = vmatprep.subr.mxu0 0.0
  %2208 = vmatpush1.msra.mxu0 0.0
  %2209 = vmatprep.subr.mxu0 0.0
  %2210 = vmatpush1.msra.mxu0 0.0
  %2211 = vmatprep.subr.mxu0 0.0
  %2212 = vmatpush1.msra.mxu0 0.0
  %2213 = vmatprep.subr.mxu0 0.0
  %2214 = vmatpush1.msra.mxu0 0.0
  %2215 = vmatprep.subr.mxu0 0.0
  %2216 = vmatpush1.msra.mxu0 0.0
  %2217 = vmatprep.subr.mxu0 0.0
  %2218 = vmatpush1.msra.mxu0 0.0
  %2219 = vmatprep.subr.mxu0 0.0
  %2220 = vmatpush1.msra.mxu0 0.0
  %2221 = vmatprep.subr.mxu0 0.0
  %2222 = vmatpush1.msra.mxu0 0.0
  %2223 = vmatprep.subr.mxu0 0.0
  %2224 = vmatpush1.msra.mxu0 0.0
  %2225 = vmatprep.subr.mxu0 0.0
  %2226 = vmatpush1.msra.mxu0 0.0
  %2227 = vmatprep.subr.mxu0 0.0
  %2228 = vmatpush1.msra.mxu0 0.0
  %2229 = vmatprep.mubr.f32.mxu0 0.0
  %2230 = vmatmul.mubr.f32.gmra.mrb[0].mxu0 %v2163
  %v2231 = vpop.f32.mrb[0].mxu0
  %v2232 = vadd.f32 0.0, %v2231
  %v2233 = vpop.f32.mrb[0].mxu0
  %2234 = vdwg.mxu0
  %2235 = vrot.lane.b32.xlu0 %v723, 40
  %v2236 = vpop.permute.xlu0 %2235
  %v2239 = vsel %vm734, %v2158, 0
  %2241 = vmatprep.subr.mxu0 0.0
  %2242 = vmatpush1.msra.mxu0 %v2236
  %2243 = vmatprep.subr.mxu0 0.0
  %2244 = vmatpush1.msra.mxu0 0.0
  %2245 = vmatprep.subr.mxu0 0.0
  %2246 = vmatpush1.msra.mxu0 0.0
  %2247 = vmatprep.subr.mxu0 0.0
  %2248 = vmatpush1.msra.mxu0 0.0
  %2249 = vmatprep.subr.mxu0 0.0
  %2250 = vmatpush1.msra.mxu0 0.0
  %2251 = vmatprep.subr.mxu0 0.0
  %2252 = vmatpush1.msra.mxu0 0.0
  %2253 = vmatprep.subr.mxu0 0.0
  %2254 = vmatpush1.msra.mxu0 0.0
  %2255 = vmatprep.subr.mxu0 0.0
  %2256 = vmatpush1.msra.mxu0 0.0
  %2257 = vmatprep.subr.mxu0 0.0
  %2258 = vmatpush1.msra.mxu0 0.0
  %2259 = vmatprep.subr.mxu0 0.0
  %2260 = vmatpush1.msra.mxu0 0.0
  %2261 = vmatprep.subr.mxu0 0.0
  %2262 = vmatpush1.msra.mxu0 0.0
  %2263 = vmatprep.subr.mxu0 0.0
  %2264 = vmatpush1.msra.mxu0 0.0
  %2265 = vmatprep.subr.mxu0 0.0
  %2266 = vmatpush1.msra.mxu0 0.0
  %2267 = vmatprep.subr.mxu0 0.0
  %2268 = vmatpush1.msra.mxu0 0.0
  %2269 = vmatprep.subr.mxu0 0.0
  %2270 = vmatpush1.msra.mxu0 0.0
  %2271 = vmatprep.subr.mxu0 0.0
  %2272 = vmatpush1.msra.mxu0 0.0
  %2273 = vmatprep.subr.mxu0 0.0
  %2274 = vmatpush1.msra.mxu0 0.0
  %2275 = vmatprep.subr.mxu0 0.0
  %2276 = vmatpush1.msra.mxu0 0.0
  %2277 = vmatprep.subr.mxu0 0.0
  %2278 = vmatpush1.msra.mxu0 0.0
  %2279 = vmatprep.subr.mxu0 0.0
  %2280 = vmatpush1.msra.mxu0 0.0
  %2281 = vmatprep.subr.mxu0 0.0
  %2282 = vmatpush1.msra.mxu0 0.0
  %2283 = vmatprep.subr.mxu0 0.0
  %2284 = vmatpush1.msra.mxu0 0.0
  %2285 = vmatprep.subr.mxu0 0.0
  %2286 = vmatpush1.msra.mxu0 0.0
  %2287 = vmatprep.subr.mxu0 0.0
  %2288 = vmatpush1.msra.mxu0 0.0
  %2289 = vmatprep.subr.mxu0 0.0
  %2290 = vmatpush1.msra.mxu0 0.0
  %2291 = vmatprep.subr.mxu0 0.0
  %2292 = vmatpush1.msra.mxu0 0.0
  %2293 = vmatprep.subr.mxu0 0.0
  %2294 = vmatpush1.msra.mxu0 0.0
  %2295 = vmatprep.subr.mxu0 0.0
  %2296 = vmatpush1.msra.mxu0 0.0
  %2297 = vmatprep.subr.mxu0 0.0
  %2298 = vmatpush1.msra.mxu0 0.0
  %2299 = vmatprep.subr.mxu0 0.0
  %2300 = vmatpush1.msra.mxu0 0.0
  %2301 = vmatprep.subr.mxu0 0.0
  %2302 = vmatpush1.msra.mxu0 0.0
  %2303 = vmatprep.subr.mxu0 0.0
  %2304 = vmatpush1.msra.mxu0 0.0
  %2305 = vmatprep.mubr.f32.mxu0 0.0
  %2306 = vmatmul.mubr.f32.gmra.mrb[0].mxu0 %v2239
  %v2307 = vpop.f32.mrb[0].mxu0
  %v2308 = vadd.f32 0.0, %v2307
  %v2309 = vpop.f32.mrb[0].mxu0
  %2310 = vdwg.mxu0
  %v2312 = vsel %vm734, %v2232, 0
  %v2315 = vsel %vm734, %v2308, 0
  %2317 = vmatprep.subr.mxu0 0.0
  %2318 = vmatpush1.msra.mxu0 %v729
  %2319 = vmatprep.subr.mxu0 0.0
  %2320 = vmatpush1.msra.mxu0 0.0
  %2321 = vmatprep.subr.mxu0 0.0
  %2322 = vmatpush1.msra.mxu0 0.0
  %2323 = vmatprep.subr.mxu0 0.0
  %2324 = vmatpush1.msra.mxu0 0.0
  %2325 = vmatprep.subr.mxu0 0.0
  %2326 = vmatpush1.msra.mxu0 0.0
  %2327 = vmatprep.subr.mxu0 0.0
  %2328 = vmatpush1.msra.mxu0 0.0
  %2329 = vmatprep.subr.mxu0 0.0
  %2330 = vmatpush1.msra.mxu0 0.0
  %2331 = vmatprep.subr.mxu0 0.0
  %2332 = vmatpush1.msra.mxu0 0.0
  %2333 = vmatprep.subr.mxu0 0.0
  %2334 = vmatpush1.msra.mxu0 0.0
  %2335 = vmatprep.subr.mxu0 0.0
  %2336 = vmatpush1.msra.mxu0 0.0
  %2337 = vmatprep.subr.mxu0 0.0
  %2338 = vmatpush1.msra.mxu0 0.0
  %2339 = vmatprep.subr.mxu0 0.0
  %2340 = vmatpush1.msra.mxu0 0.0
  %2341 = vmatprep.subr.mxu0 0.0
  %2342 = vmatpush1.msra.mxu0 0.0
  %2343 = vmatprep.subr.mxu0 0.0
  %2344 = vmatpush1.msra.mxu0 0.0
  %2345 = vmatprep.subr.mxu0 0.0
  %2346 = vmatpush1.msra.mxu0 0.0
  %2347 = vmatprep.subr.mxu0 0.0
  %2348 = vmatpush1.msra.mxu0 0.0
  %2349 = vmatprep.subr.mxu0 0.0
  %2350 = vmatpush1.msra.mxu0 0.0
  %2351 = vmatprep.subr.mxu0 0.0
  %2352 = vmatpush1.msra.mxu0 0.0
  %2353 = vmatprep.subr.mxu0 0.0
  %2354 = vmatpush1.msra.mxu0 0.0
  %2355 = vmatprep.subr.mxu0 0.0
  %2356 = vmatpush1.msra.mxu0 0.0
  %2357 = vmatprep.subr.mxu0 0.0
  %2358 = vmatpush1.msra.mxu0 0.0
  %2359 = vmatprep.subr.mxu0 0.0
  %2360 = vmatpush1.msra.mxu0 0.0
  %2361 = vmatprep.subr.mxu0 0.0
  %2362 = vmatpush1.msra.mxu0 0.0
  %2363 = vmatprep.subr.mxu0 0.0
  %2364 = vmatpush1.msra.mxu0 0.0
  %2365 = vmatprep.subr.mxu0 0.0
  %2366 = vmatpush1.msra.mxu0 0.0
  %2367 = vmatprep.subr.mxu0 0.0
  %2368 = vmatpush1.msra.mxu0 0.0
  %2369 = vmatprep.subr.mxu0 0.0
  %2370 = vmatpush1.msra.mxu0 0.0
  %2371 = vmatprep.subr.mxu0 0.0
  %2372 = vmatpush1.msra.mxu0 0.0
  %2373 = vmatprep.subr.mxu0 0.0
  %2374 = vmatpush1.msra.mxu0 0.0
  %2375 = vmatprep.subr.mxu0 0.0
  %2376 = vmatpush1.msra.mxu0 0.0
  %2377 = vmatprep.subr.mxu0 0.0
  %2378 = vmatpush1.msra.mxu0 0.0
  %2379 = vmatprep.subr.mxu0 0.0
  %2380 = vmatpush1.msra.mxu0 0.0
  %2381 = vmatprep.mubr.f32.mxu0 0.0
  %2382 = vmatmul.mubr.f32.gmra.mrb[0].mxu0 %v2312
  %v2383 = vpop.f32.mrb[0].mxu0
  %v2384 = vadd.f32 0.0, %v2383
  %v2385 = vpop.f32.mrb[0].mxu0
  %2386 = vmatprep.mubr.f32.mxu0 0.0
  %2387 = vmatmul.mubr.f32.gmra.mrb[0].mxu0 %v2315
  %v2388 = vpop.f32.mrb[0].mxu0
  %v2389 = vadd.f32 0.0, %v2388
  %v2390 = vpop.f32.mrb[0].mxu0
  %2391 = vdwg.mxu0
  %v2392 = vadd.f32 %v1975, %v2384
  %v2393 = vadd.f32 %v1976, %v2389
  %v2395 = vlaneseq
  %v2396 = vshrl.u32 %v2395, 7
  %v2397 = vsub.s32 0, %v2396
  %v2398 = vrot.slane %v730, %v2397
  %v2400 = vadd.f32 %v2392, %v2398
  %v2401 = vadd.f32 %v2393, %v2398
  %v2402 = vadd.f32 %v560, %v2400
  %v2403 = vadd.f32 %v561, %v2401
  %v2404 = vsel %vm580, %v2402, 0.0
  %2405 = vadd.xlane.f32.xlu0 %v2404
  %v2406 = vpop.xlane.xlu0 %2405
  %v2407 = vsel %vm580, %v2403, 0.0
  %2408 = vadd.xlane.f32.xlu0 %v2407
  %v2409 = vpop.xlane.xlu0 %2408
  %v2410 = vmul.f32 %v2406, %v587
  %v2411 = vmul.f32 %v2409, %v587
  %v2412 = vsub.f32 %v2402, %v2410
  %v2413 = vsub.f32 %v2403, %v2411
  %v2414 = vmul.f32 %v2412, %v2412
  %v2415 = vmul.f32 %v2413, %v2413
  %v2416 = vsel %vm580, %v2414, 0.0
  %2417 = vadd.xlane.f32.xlu0 %v2416
  %v2418 = vpop.xlane.xlu0 %2417
  %v2419 = vsel %vm580, %v2415, 0.0
  %2420 = vadd.xlane.f32.xlu0 %v2419
  %v2421 = vpop.xlane.xlu0 %2420
  %v2422 = vmul.f32 %v2418, 0.032258064
  %v2423 = vmul.f32 %v2421, 0.032258064
  %v2424 = vrsqrt.pop %v2422
  %v2425 = vmul.f32 %v2422, %v2424
  %vm2426 = vcmp.eq.f32.partialorder %v2422, inf
  %v2427 = vsel %vm2426, %v2422, %v2425
  %vm2428 = vcmp.eq.f32.partialorder %v2422, 0.0
  %v2429 = vand.u32 %v2422, 2147483648
  %v2430 = vsel %vm2428, %v2429, %v2427
  %v2431 = vrsqrt.pop %v2423
  %v2432 = vmul.f32 %v2423, %v2431
  %vm2433 = vcmp.eq.f32.partialorder %v2423, inf
  %v2434 = vsel %vm2433, %v2423, %v2432
  %vm2435 = vcmp.eq.f32.partialorder %v2423, 0.0
  %v2436 = vand.u32 %v2423, 2147483648
  %v2437 = vsel %vm2435, %v2436, %v2434
  %v2438 = vlaneseq
  %v2439 = vshrl.u32 %v2438, 7
  %v2440 = vsub.s32 1, %v2439
  %v2441 = vrot.slane %v578, %v2440
  %v2442 = vmul.f32 %v2441, %v2412
  %v2443 = vmul.f32 %v2441, %v2413
  %v2444 = vadd.f32 %v2430, 1e-06
  %v2445 = vadd.f32 %v2437, 1e-06
  %v2446 = vrcp.pop %v2444
  %v2447 = vrcp.pop %v2445
  %v2448 = vmul.f32 %v2442, %v2446
  %v2449 = vmul.f32 %v2443, %v2447
  %v2450 = vlaneseq
  %v2451 = vshrl.u32 %v2450, 7
  %v2452 = vsub.s32 1, %v2451
  %v2453 = vrot.slane %v579, %v2452
  %v2454 = vadd.f32 %v2448, %v2453
  %v2455 = vadd.f32 %v2449, %v2453
  %v2456 = vld [vmem:[%s39] sm:$0xff]
  %v2457 = vld [vmem:[%s39 + $0x8] sm:$0xff]
  %v2458 = vld [vmem:[%s39 + $0x10] sm:$0xff]
  %v2459 = vld [vmem:[%s39 + $0x18] sm:$0xff]
  %v2460 = vld [vmem:[%s41] sm:$0x1]
  %v2462 = vlaneseq
  %v2463 = vshrl.u32 %v2462, 7
  %v2464 = vsub.s32 0, %v2463
  %v2465 = vrot.slane %v2460, %v2464
  %v2468 = vsel %vm580, %v2454, 0
  %v2471 = vsel %vm580, %v2455, 0
  %2473 = vmatprep.subr.mxu0 0.0
  %2474 = vmatpush1.msra.mxu0 %v2456
  %2475 = vmatprep.subr.mxu0 0.0
  %2476 = vmatpush1.msra.mxu0 %v2457
  %2477 = vmatprep.subr.mxu0 0.0
  %2478 = vmatpush1.msra.mxu0 %v2458
  %2479 = vmatprep.subr.mxu0 0.0
  %2480 = vmatpush1.msra.mxu0 %v2459
  %2481 = vmatprep.subr.mxu0 0.0
  %2482 = vmatpush1.msra.mxu0 0.0
  %2483 = vmatprep.subr.mxu0 0.0
  %2484 = vmatpush1.msra.mxu0 0.0
  %2485 = vmatprep.subr.mxu0 0.0
  %2486 = vmatpush1.msra.mxu0 0.0
  %2487 = vmatprep.subr.mxu0 0.0
  %2488 = vmatpush1.msra.mxu0 0.0
  %2489 = vmatprep.subr.mxu0 0.0
  %2490 = vmatpush1.msra.mxu0 0.0
  %2491 = vmatprep.subr.mxu0 0.0
  %2492 = vmatpush1.msra.mxu0 0.0
  %2493 = vmatprep.subr.mxu0 0.0
  %2494 = vmatpush1.msra.mxu0 0.0
  %2495 = vmatprep.subr.mxu0 0.0
  %2496 = vmatpush1.msra.mxu0 0.0
  %2497 = vmatprep.subr.mxu0 0.0
  %2498 = vmatpush1.msra.mxu0 0.0
  %2499 = vmatprep.subr.mxu0 0.0
  %2500 = vmatpush1.msra.mxu0 0.0
  %2501 = vmatprep.subr.mxu0 0.0
  %2502 = vmatpush1.msra.mxu0 0.0
  %2503 = vmatprep.subr.mxu0 0.0
  %2504 = vmatpush1.msra.mxu0 0.0
  %2505 = vmatprep.subr.mxu0 0.0
  %2506 = vmatpush1.msra.mxu0 0.0
  %2507 = vmatprep.subr.mxu0 0.0
  %2508 = vmatpush1.msra.mxu0 0.0
  %2509 = vmatprep.subr.mxu0 0.0
  %2510 = vmatpush1.msra.mxu0 0.0
  %2511 = vmatprep.subr.mxu0 0.0
  %2512 = vmatpush1.msra.mxu0 0.0
  %2513 = vmatprep.subr.mxu0 0.0
  %2514 = vmatpush1.msra.mxu0 0.0
  %2515 = vmatprep.subr.mxu0 0.0
  %2516 = vmatpush1.msra.mxu0 0.0
  %2517 = vmatprep.subr.mxu0 0.0
  %2518 = vmatpush1.msra.mxu0 0.0
  %2519 = vmatprep.subr.mxu0 0.0
  %2520 = vmatpush1.msra.mxu0 0.0
  %2521 = vmatprep.subr.mxu0 0.0
  %2522 = vmatpush1.msra.mxu0 0.0
  %2523 = vmatprep.subr.mxu0 0.0
  %2524 = vmatpush1.msra.mxu0 0.0
  %2525 = vmatprep.subr.mxu0 0.0
  %2526 = vmatpush1.msra.mxu0 0.0
  %2527 = vmatprep.subr.mxu0 0.0
  %2528 = vmatpush1.msra.mxu0 0.0
  %2529 = vmatprep.subr.mxu0 0.0
  %2530 = vmatpush1.msra.mxu0 0.0
  %2531 = vmatprep.subr.mxu0 0.0
  %2532 = vmatpush1.msra.mxu0 0.0
  %2533 = vmatprep.subr.mxu0 0.0
  %2534 = vmatpush1.msra.mxu0 0.0
  %2535 = vmatprep.subr.mxu0 0.0
  %2536 = vmatpush1.msra.mxu0 0.0
  %2537 = vmatprep.mubr.f32.mxu0 0.0
  %2538 = vmatmul.mubr.f32.gmra.mrb[0].mxu0 %v2468
  %v2539 = vpop.f32.mrb[0].mxu0
  %v2540 = vadd.f32 %v2465, %v2539
  %v2541 = vpop.f32.mrb[0].mxu0
  %2542 = vmatprep.mubr.f32.mxu0 0.0
  %2543 = vmatmul.mubr.f32.gmra.mrb[0].mxu0 %v2471
  %v2544 = vpop.f32.mrb[0].mxu0
  %v2545 = vadd.f32 %v2465, %v2544
  %v2546 = vpop.f32.mrb[0].mxu0
  %2547 = vdwg.mxu0
  %v2548 = vld [vmem:[%s43] sm:$0xff]
  %v2549 = vld [vmem:[%s43 + $0x8] sm:$0xff]
  %v2550 = vld [vmem:[%s43 + $0x10] sm:$0xff]
  %v2551 = vld [vmem:[%s43 + $0x18] sm:$0xff]
  %v2552 = vld [vmem:[%s45] sm:$0x1]
  %v2554 = vlaneseq
  %v2555 = vshrl.u32 %v2554, 7
  %v2556 = vsub.s32 0, %v2555
  %v2557 = vrot.slane %v2552, %v2556
  %v2560 = vsel %vm580, %v562, 0
  %v2563 = vsel %vm580, %v563, 0
  %2565 = vmatprep.subr.mxu0 0.0
  %2566 = vmatpush1.msra.mxu0 %v2548
  %2567 = vmatprep.subr.mxu0 0.0
  %2568 = vmatpush1.msra.mxu0 %v2549
  %2569 = vmatprep.subr.mxu0 0.0
  %2570 = vmatpush1.msra.mxu0 %v2550
  %2571 = vmatprep.subr.mxu0 0.0
  %2572 = vmatpush1.msra.mxu0 %v2551
  %2573 = vmatprep.subr.mxu0 0.0
  %2574 = vmatpush1.msra.mxu0 0.0
  %2575 = vmatprep.subr.mxu0 0.0
  %2576 = vmatpush1.msra.mxu0 0.0
  %2577 = vmatprep.subr.mxu0 0.0
  %2578 = vmatpush1.msra.mxu0 0.0
  %2579 = vmatprep.subr.mxu0 0.0
  %2580 = vmatpush1.msra.mxu0 0.0
  %2581 = vmatprep.subr.mxu0 0.0
  %2582 = vmatpush1.msra.mxu0 0.0
  %2583 = vmatprep.subr.mxu0 0.0
  %2584 = vmatpush1.msra.mxu0 0.0
  %2585 = vmatprep.subr.mxu0 0.0
  %2586 = vmatpush1.msra.mxu0 0.0
  %2587 = vmatprep.subr.mxu0 0.0
  %2588 = vmatpush1.msra.mxu0 0.0
  %2589 = vmatprep.subr.mxu0 0.0
  %2590 = vmatpush1.msra.mxu0 0.0
  %2591 = vmatprep.subr.mxu0 0.0
  %2592 = vmatpush1.msra.mxu0 0.0
  %2593 = vmatprep.subr.mxu0 0.0
  %2594 = vmatpush1.msra.mxu0 0.0
  %2595 = vmatprep.subr.mxu0 0.0
  %2596 = vmatpush1.msra.mxu0 0.0
  %2597 = vmatprep.subr.mxu0 0.0
  %2598 = vmatpush1.msra.mxu0 0.0
  %2599 = vmatprep.subr.mxu0 0.0
  %2600 = vmatpush1.msra.mxu0 0.0
  %2601 = vmatprep.subr.mxu0 0.0
  %2602 = vmatpush1.msra.mxu0 0.0
  %2603 = vmatprep.subr.mxu0 0.0
  %2604 = vmatpush1.msra.mxu0 0.0
  %2605 = vmatprep.subr.mxu0 0.0
  %2606 = vmatpush1.msra.mxu0 0.0
  %2607 = vmatprep.subr.mxu0 0.0
  %2608 = vmatpush1.msra.mxu0 0.0
  %2609 = vmatprep.subr.mxu0 0.0
  %2610 = vmatpush1.msra.mxu0 0.0
  %2611 = vmatprep.subr.mxu0 0.0
  %2612 = vmatpush1.msra.mxu0 0.0
  %2613 = vmatprep.subr.mxu0 0.0
  %2614 = vmatpush1.msra.mxu0 0.0
  %2615 = vmatprep.subr.mxu0 0.0
  %2616 = vmatpush1.msra.mxu0 0.0
  %2617 = vmatprep.subr.mxu0 0.0
  %2618 = vmatpush1.msra.mxu0 0.0
  %2619 = vmatprep.subr.mxu0 0.0
  %2620 = vmatpush1.msra.mxu0 0.0
  %2621 = vmatprep.subr.mxu0 0.0
  %2622 = vmatpush1.msra.mxu0 0.0
  %2623 = vmatprep.subr.mxu0 0.0
  %2624 = vmatpush1.msra.mxu0 0.0
  %2625 = vmatprep.subr.mxu0 0.0
  %2626 = vmatpush1.msra.mxu0 0.0
  %2627 = vmatprep.subr.mxu0 0.0
  %2628 = vmatpush1.msra.mxu0 0.0
  %2629 = vmatprep.mubr.f32.mxu0 0.0
  %2630 = vmatmul.mubr.f32.gmra.mrb[0].mxu0 %v2560
  %v2631 = vpop.f32.mrb[0].mxu0
  %v2632 = vadd.f32 %v2557, %v2631
  %v2633 = vpop.f32.mrb[0].mxu0
  %2634 = vmatprep.mubr.f32.mxu0 0.0
  %2635 = vmatmul.mubr.f32.gmra.mrb[0].mxu0 %v2563
  %v2636 = vpop.f32.mrb[0].mxu0
  %v2637 = vadd.f32 %v2557, %v2636
  %v2638 = vpop.f32.mrb[0].mxu0
  %2639 = vdwg.mxu0
  %v2640 = vld [vmem:[%s47] sm:$0xff]
  %v2641 = vld [vmem:[%s47 + $0x8] sm:$0xff]
  %v2642 = vld [vmem:[%s47 + $0x10] sm:$0xff]
  %v2643 = vld [vmem:[%s47 + $0x18] sm:$0xff]
  %v2644 = vld [vmem:[%s49] sm:$0x1]
  %v2646 = vsel %vm734, %v2540, 0
  %v2649 = vsel %vm734, %v2632, 0
  %2651 = vmatprep.subr.mxu0 0.0
  %2652 = vmatpush1.xpose.msra.mxu0 %v2649
  %2653 = vmatprep.subr.mxu0 0.0
  %2654 = vmatpush1.xpose.msra.mxu0 0.0
  %2655 = vmatprep.subr.mxu0 0.0
  %2656 = vmatpush1.xpose.msra.mxu0 0.0
  %2657 = vmatprep.subr.mxu0 0.0
  %2658 = vmatpush1.xpose.msra.mxu0 0.0
  %2659 = vmatprep.subr.mxu0 0.0
  %2660 = vmatpush1.xpose.msra.mxu0 0.0
  %2661 = vmatprep.subr.mxu0 0.0
  %2662 = vmatpush1.xpose.msra.mxu0 0.0
  %2663 = vmatprep.subr.mxu0 0.0
  %2664 = vmatpush1.xpose.msra.mxu0 0.0
  %2665 = vmatprep.subr.mxu0 0.0
  %2666 = vmatpush1.xpose.msra.mxu0 0.0
  %2667 = vmatprep.subr.mxu0 0.0
  %2668 = vmatpush1.xpose.msra.mxu0 0.0
  %2669 = vmatprep.subr.mxu0 0.0
  %2670 = vmatpush1.xpose.msra.mxu0 0.0
  %2671 = vmatprep.subr.mxu0 0.0
  %2672 = vmatpush1.xpose.msra.mxu0 0.0
  %2673 = vmatprep.subr.mxu0 0.0
  %2674 = vmatpush1.xpose.msra.mxu0 0.0
  %2675 = vmatprep.subr.mxu0 0.0
  %2676 = vmatpush1.xpose.msra.mxu0 0.0
  %2677 = vmatprep.subr.mxu0 0.0
  %2678 = vmatpush1.xpose.msra.mxu0 0.0
  %2679 = vmatprep.subr.mxu0 0.0
  %2680 = vmatpush1.xpose.msra.mxu0 0.0
  %2681 = vmatprep.subr.mxu0 0.0
  %2682 = vmatpush1.xpose.msra.mxu0 0.0
  %2683 = vmatprep.subr.mxu0 0.0
  %2684 = vmatpush1.xpose.msra.mxu0 0.0
  %2685 = vmatprep.subr.mxu0 0.0
  %2686 = vmatpush1.xpose.msra.mxu0 0.0
  %2687 = vmatprep.subr.mxu0 0.0
  %2688 = vmatpush1.xpose.msra.mxu0 0.0
  %2689 = vmatprep.subr.mxu0 0.0
  %2690 = vmatpush1.xpose.msra.mxu0 0.0
  %2691 = vmatprep.subr.mxu0 0.0
  %2692 = vmatpush1.xpose.msra.mxu0 0.0
  %2693 = vmatprep.subr.mxu0 0.0
  %2694 = vmatpush1.xpose.msra.mxu0 0.0
  %2695 = vmatprep.subr.mxu0 0.0
  %2696 = vmatpush1.xpose.msra.mxu0 0.0
  %2697 = vmatprep.subr.mxu0 0.0
  %2698 = vmatpush1.xpose.msra.mxu0 0.0
  %2699 = vmatprep.subr.mxu0 0.0
  %2700 = vmatpush1.xpose.msra.mxu0 0.0
  %2701 = vmatprep.subr.mxu0 0.0
  %2702 = vmatpush1.xpose.msra.mxu0 0.0
  %2703 = vmatprep.subr.mxu0 0.0
  %2704 = vmatpush1.xpose.msra.mxu0 0.0
  %2705 = vmatprep.subr.mxu0 0.0
  %2706 = vmatpush1.xpose.msra.mxu0 0.0
  %2707 = vmatprep.subr.mxu0 0.0
  %2708 = vmatpush1.xpose.msra.mxu0 0.0
  %2709 = vmatprep.subr.mxu0 0.0
  %2710 = vmatpush1.xpose.msra.mxu0 0.0
  %2711 = vmatprep.subr.mxu0 0.0
  %2712 = vmatpush1.xpose.msra.mxu0 0.0
  %2713 = vmatprep.subr.mxu0 0.0
  %2714 = vmatpush1.xpose.msra.mxu0 0.0
  %2715 = vmatprep.mubr.f32.mxu0 0.0
  %2716 = vmatmul.mubr.f32.gmra.mrb[0].mxu0 %v2646
  %v2717 = vpop.f32.mrb[0].mxu0
  %v2718 = vadd.f32 0.0, %v2717
  %v2719 = vpop.f32.mrb[0].mxu0
  %2720 = vdwg.mxu0
  %v2722 = vsel %vm734, %v2545, 0
  %v2725 = vsel %vm734, %v2637, 0
  %2727 = vmatprep.subr.mxu0 0.0
  %2728 = vmatpush1.xpose.msra.mxu0 %v2725
  %2729 = vmatprep.subr.mxu0 0.0
  %2730 = vmatpush1.xpose.msra.mxu0 0.0
  %2731 = vmatprep.subr.mxu0 0.0
  %2732 = vmatpush1.xpose.msra.mxu0 0.0
  %2733 = vmatprep.subr.mxu0 0.0
  %2734 = vmatpush1.xpose.msra.mxu0 0.0
  %2735 = vmatprep.subr.mxu0 0.0
  %2736 = vmatpush1.xpose.msra.mxu0 0.0
  %2737 = vmatprep.subr.mxu0 0.0
  %2738 = vmatpush1.xpose.msra.mxu0 0.0
  %2739 = vmatprep.subr.mxu0 0.0
  %2740 = vmatpush1.xpose.msra.mxu0 0.0
  %2741 = vmatprep.subr.mxu0 0.0
  %2742 = vmatpush1.xpose.msra.mxu0 0.0
  %2743 = vmatprep.subr.mxu0 0.0
  %2744 = vmatpush1.xpose.msra.mxu0 0.0
  %2745 = vmatprep.subr.mxu0 0.0
  %2746 = vmatpush1.xpose.msra.mxu0 0.0
  %2747 = vmatprep.subr.mxu0 0.0
  %2748 = vmatpush1.xpose.msra.mxu0 0.0
  %2749 = vmatprep.subr.mxu0 0.0
  %2750 = vmatpush1.xpose.msra.mxu0 0.0
  %2751 = vmatprep.subr.mxu0 0.0
  %2752 = vmatpush1.xpose.msra.mxu0 0.0
  %2753 = vmatprep.subr.mxu0 0.0
  %2754 = vmatpush1.xpose.msra.mxu0 0.0
  %2755 = vmatprep.subr.mxu0 0.0
  %2756 = vmatpush1.xpose.msra.mxu0 0.0
  %2757 = vmatprep.subr.mxu0 0.0
  %2758 = vmatpush1.xpose.msra.mxu0 0.0
  %2759 = vmatprep.subr.mxu0 0.0
  %2760 = vmatpush1.xpose.msra.mxu0 0.0
  %2761 = vmatprep.subr.mxu0 0.0
  %2762 = vmatpush1.xpose.msra.mxu0 0.0
  %2763 = vmatprep.subr.mxu0 0.0
  %2764 = vmatpush1.xpose.msra.mxu0 0.0
  %2765 = vmatprep.subr.mxu0 0.0
  %2766 = vmatpush1.xpose.msra.mxu0 0.0
  %2767 = vmatprep.subr.mxu0 0.0
  %2768 = vmatpush1.xpose.msra.mxu0 0.0
  %2769 = vmatprep.subr.mxu0 0.0
  %2770 = vmatpush1.xpose.msra.mxu0 0.0
  %2771 = vmatprep.subr.mxu0 0.0
  %2772 = vmatpush1.xpose.msra.mxu0 0.0
  %2773 = vmatprep.subr.mxu0 0.0
  %2774 = vmatpush1.xpose.msra.mxu0 0.0
  %2775 = vmatprep.subr.mxu0 0.0
  %2776 = vmatpush1.xpose.msra.mxu0 0.0
  %2777 = vmatprep.subr.mxu0 0.0
  %2778 = vmatpush1.xpose.msra.mxu0 0.0
  %2779 = vmatprep.subr.mxu0 0.0
  %2780 = vmatpush1.xpose.msra.mxu0 0.0
  %2781 = vmatprep.subr.mxu0 0.0
  %2782 = vmatpush1.xpose.msra.mxu0 0.0
  %2783 = vmatprep.subr.mxu0 0.0
  %2784 = vmatpush1.xpose.msra.mxu0 0.0
  %2785 = vmatprep.subr.mxu0 0.0
  %2786 = vmatpush1.xpose.msra.mxu0 0.0
  %2787 = vmatprep.subr.mxu0 0.0
  %2788 = vmatpush1.xpose.msra.mxu0 0.0
  %2789 = vmatprep.subr.mxu0 0.0
  %2790 = vmatpush1.xpose.msra.mxu0 0.0
  %2791 = vmatprep.mubr.f32.mxu0 0.0
  %2792 = vmatmul.mubr.f32.gmra.mrb[0].mxu0 %v2722
  %v2793 = vpop.f32.mrb[0].mxu0
  %v2794 = vadd.f32 0.0, %v2793
  %v2795 = vpop.f32.mrb[0].mxu0
  %2796 = vdwg.mxu0
  %v2797 = vmul.f32 %v2718, 0.35355338
  %v2798 = vmul.f32 %v2794, 0.35355338
  %v2801 = vlaneseq
  %v2802 = vshrl.u32 %v2801, 7
  %v2803 = vsub.s32 0, %v2802
  %v2804 = vrot.slane %v576, %v2803
  %v2805 = vlaneseq
  %v2806 = vshrl.u32 %v2805, 7
  %v2807 = vsub.s32 0, %v2806
  %v2808 = vrot.slane %v577, %v2807
  %v2811 = vadd.f32 %v2797, %v2804
  %v2812 = vadd.f32 %v2798, %v2808
  %v2813 = vsel %vm734, %v2811, -inf
  %2814 = vmax.xlane.f32.xlu0 %v2813
  %v2815 = vpop.xlane.xlu0 %2814
  %v2816 = vsel %vm734, %v2812, -inf
  %2817 = vmax.xlane.f32.xlu0 %v2816
  %v2818 = vpop.xlane.xlu0 %2817
  %v2819 = vsub.f32 %v2811, %v2815
  %v2820 = vsub.f32 %v2812, %v2818
  %v2821 = vmul.f32 %v2819, 1.442695
  %v2822 = vpow.pop %v2821
  %v2823 = vmul.f32 %v2820, 1.442695
  %v2824 = vpow.pop %v2823
  %v2825 = vsel %vm734, %v2822, 0.0
  %2826 = vadd.xlane.f32.xlu0 %v2825
  %v2827 = vpop.xlane.xlu0 %2826
  %v2828 = vsel %vm734, %v2824, 0.0
  %2829 = vadd.xlane.f32.xlu0 %v2828
  %v2830 = vpop.xlane.xlu0 %2829
  %v2831 = vrcp.pop %v2827
  %v2832 = vrcp.pop %v2830
  %v2833 = vmul.f32 %v2822, %v2831
  %v2834 = vmul.f32 %v2824, %v2832
  %2835 = vrot.lane.b32.xlu0 %v2632, 96
  %v2836 = vpop.permute.xlu0 %2835
  %v2839 = vsel %vm734, %v2833, 0
  %2841 = vmatprep.subr.mxu0 0.0
  %2842 = vmatpush1.msra.mxu0 %v2836
  %2843 = vmatprep.subr.mxu0 0.0
  %2844 = vmatpush1.msra.mxu0 0.0
  %2845 = vmatprep.subr.mxu0 0.0
  %2846 = vmatpush1.msra.mxu0 0.0
  %2847 = vmatprep.subr.mxu0 0.0
  %2848 = vmatpush1.msra.mxu0 0.0
  %2849 = vmatprep.subr.mxu0 0.0
  %2850 = vmatpush1.msra.mxu0 0.0
  %2851 = vmatprep.subr.mxu0 0.0
  %2852 = vmatpush1.msra.mxu0 0.0
  %2853 = vmatprep.subr.mxu0 0.0
  %2854 = vmatpush1.msra.mxu0 0.0
  %2855 = vmatprep.subr.mxu0 0.0
  %2856 = vmatpush1.msra.mxu0 0.0
  %2857 = vmatprep.subr.mxu0 0.0
  %2858 = vmatpush1.msra.mxu0 0.0
  %2859 = vmatprep.subr.mxu0 0.0
  %2860 = vmatpush1.msra.mxu0 0.0
  %2861 = vmatprep.subr.mxu0 0.0
  %2862 = vmatpush1.msra.mxu0 0.0
  %2863 = vmatprep.subr.mxu0 0.0
  %2864 = vmatpush1.msra.mxu0 0.0
  %2865 = vmatprep.subr.mxu0 0.0
  %2866 = vmatpush1.msra.mxu0 0.0
  %2867 = vmatprep.subr.mxu0 0.0
  %2868 = vmatpush1.msra.mxu0 0.0
  %2869 = vmatprep.subr.mxu0 0.0
  %2870 = vmatpush1.msra.mxu0 0.0
  %2871 = vmatprep.subr.mxu0 0.0
  %2872 = vmatpush1.msra.mxu0 0.0
  %2873 = vmatprep.subr.mxu0 0.0
  %2874 = vmatpush1.msra.mxu0 0.0
  %2875 = vmatprep.subr.mxu0 0.0
  %2876 = vmatpush1.msra.mxu0 0.0
  %2877 = vmatprep.subr.mxu0 0.0
  %2878 = vmatpush1.msra.mxu0 0.0
  %2879 = vmatprep.subr.mxu0 0.0
  %2880 = vmatpush1.msra.mxu0 0.0
  %2881 = vmatprep.subr.mxu0 0.0
  %2882 = vmatpush1.msra.mxu0 0.0
  %2883 = vmatprep.subr.mxu0 0.0
  %2884 = vmatpush1.msra.mxu0 0.0
  %2885 = vmatprep.subr.mxu0 0.0
  %2886 = vmatpush1.msra.mxu0 0.0
  %2887 = vmatprep.subr.mxu0 0.0
  %2888 = vmatpush1.msra.mxu0 0.0
  %2889 = vmatprep.subr.mxu0 0.0
  %2890 = vmatpush1.msra.mxu0 0.0
  %2891 = vmatprep.subr.mxu0 0.0
  %2892 = vmatpush1.msra.mxu0 0.0
  %2893 = vmatprep.subr.mxu0 0.0
  %2894 = vmatpush1.msra.mxu0 0.0
  %2895 = vmatprep.subr.mxu0 0.0
  %2896 = vmatpush1.msra.mxu0 0.0
  %2897 = vmatprep.subr.mxu0 0.0
  %2898 = vmatpush1.msra.mxu0 0.0
  %2899 = vmatprep.subr.mxu0 0.0
  %2900 = vmatpush1.msra.mxu0 0.0
  %2901 = vmatprep.subr.mxu0 0.0
  %2902 = vmatpush1.msra.mxu0 0.0
  %2903 = vmatprep.subr.mxu0 0.0
  %2904 = vmatpush1.msra.mxu0 0.0
  %2905 = vmatprep.mubr.f32.mxu0 0.0
  %2906 = vmatmul.mubr.f32.gmra.mrb[0].mxu0 %v2839
  %v2907 = vpop.f32.mrb[0].mxu0
  %v2908 = vadd.f32 0.0, %v2907
  %v2909 = vpop.f32.mrb[0].mxu0
  %2910 = vdwg.mxu0
  %2911 = vrot.lane.b32.xlu0 %v2637, 96
  %v2912 = vpop.permute.xlu0 %2911
  %v2915 = vsel %vm734, %v2834, 0
  %2917 = vmatprep.subr.mxu0 0.0
  %2918 = vmatpush1.msra.mxu0 %v2912
  %2919 = vmatprep.subr.mxu0 0.0
  %2920 = vmatpush1.msra.mxu0 0.0
  %2921 = vmatprep.subr.mxu0 0.0
  %2922 = vmatpush1.msra.mxu0 0.0
  %2923 = vmatprep.subr.mxu0 0.0
  %2924 = vmatpush1.msra.mxu0 0.0
  %2925 = vmatprep.subr.mxu0 0.0
  %2926 = vmatpush1.msra.mxu0 0.0
  %2927 = vmatprep.subr.mxu0 0.0
  %2928 = vmatpush1.msra.mxu0 0.0
  %2929 = vmatprep.subr.mxu0 0.0
  %2930 = vmatpush1.msra.mxu0 0.0
  %2931 = vmatprep.subr.mxu0 0.0
  %2932 = vmatpush1.msra.mxu0 0.0
  %2933 = vmatprep.subr.mxu0 0.0
  %2934 = vmatpush1.msra.mxu0 0.0
  %2935 = vmatprep.subr.mxu0 0.0
  %2936 = vmatpush1.msra.mxu0 0.0
  %2937 = vmatprep.subr.mxu0 0.0
  %2938 = vmatpush1.msra.mxu0 0.0
  %2939 = vmatprep.subr.mxu0 0.0
  %2940 = vmatpush1.msra.mxu0 0.0
  %2941 = vmatprep.subr.mxu0 0.0
  %2942 = vmatpush1.msra.mxu0 0.0
  %2943 = vmatprep.subr.mxu0 0.0
  %2944 = vmatpush1.msra.mxu0 0.0
  %2945 = vmatprep.subr.mxu0 0.0
  %2946 = vmatpush1.msra.mxu0 0.0
  %2947 = vmatprep.subr.mxu0 0.0
  %2948 = vmatpush1.msra.mxu0 0.0
  %2949 = vmatprep.subr.mxu0 0.0
  %2950 = vmatpush1.msra.mxu0 0.0
  %2951 = vmatprep.subr.mxu0 0.0
  %2952 = vmatpush1.msra.mxu0 0.0
  %2953 = vmatprep.subr.mxu0 0.0
  %2954 = vmatpush1.msra.mxu0 0.0
  %2955 = vmatprep.subr.mxu0 0.0
  %2956 = vmatpush1.msra.mxu0 0.0
  %2957 = vmatprep.subr.mxu0 0.0
  %2958 = vmatpush1.msra.mxu0 0.0
  %2959 = vmatprep.subr.mxu0 0.0
  %2960 = vmatpush1.msra.mxu0 0.0
  %2961 = vmatprep.subr.mxu0 0.0
  %2962 = vmatpush1.msra.mxu0 0.0
  %2963 = vmatprep.subr.mxu0 0.0
  %2964 = vmatpush1.msra.mxu0 0.0
  %2965 = vmatprep.subr.mxu0 0.0
  %2966 = vmatpush1.msra.mxu0 0.0
  %2967 = vmatprep.subr.mxu0 0.0
  %2968 = vmatpush1.msra.mxu0 0.0
  %2969 = vmatprep.subr.mxu0 0.0
  %2970 = vmatpush1.msra.mxu0 0.0
  %2971 = vmatprep.subr.mxu0 0.0
  %2972 = vmatpush1.msra.mxu0 0.0
  %2973 = vmatprep.subr.mxu0 0.0
  %2974 = vmatpush1.msra.mxu0 0.0
  %2975 = vmatprep.subr.mxu0 0.0
  %2976 = vmatpush1.msra.mxu0 0.0
  %2977 = vmatprep.subr.mxu0 0.0
  %2978 = vmatpush1.msra.mxu0 0.0
  %2979 = vmatprep.subr.mxu0 0.0
  %2980 = vmatpush1.msra.mxu0 0.0
  %2981 = vmatprep.mubr.f32.mxu0 0.0
  %2982 = vmatmul.mubr.f32.gmra.mrb[0].mxu0 %v2915
  %v2983 = vpop.f32.mrb[0].mxu0
  %v2984 = vadd.f32 0.0, %v2983
  %v2985 = vpop.f32.mrb[0].mxu0
  %2986 = vdwg.mxu0
  %2987 = vrot.lane.b32.xlu0 %v2540, 120
  %v2988 = vpop.permute.xlu0 %2987
  %2989 = vrot.lane.b32.xlu0 %v2632, 120
  %v2990 = vpop.permute.xlu0 %2989
  %v2991 = vsel %vm734, %v2988, 0
  %v2993 = vsel %vm734, %v2990, 0
  %2995 = vmatprep.subr.mxu0 0.0
  %2996 = vmatpush1.xpose.msra.mxu0 %v2993
  %2997 = vmatprep.subr.mxu0 0.0
  %2998 = vmatpush1.xpose.msra.mxu0 0.0
  %2999 = vmatprep.subr.mxu0 0.0
  %3000 = vmatpush1.xpose.msra.mxu0 0.0
  %3001 = vmatprep.subr.mxu0 0.0
  %3002 = vmatpush1.xpose.msra.mxu0 0.0
  %3003 = vmatprep.subr.mxu0 0.0
  %3004 = vmatpush1.xpose.msra.mxu0 0.0
  %3005 = vmatprep.subr.mxu0 0.0
  %3006 = vmatpush1.xpose.msra.mxu0 0.0
  %3007 = vmatprep.subr.mxu0 0.0
  %3008 = vmatpush1.xpose.msra.mxu0 0.0
  %3009 = vmatprep.subr.mxu0 0.0
  %3010 = vmatpush1.xpose.msra.mxu0 0.0
  %3011 = vmatprep.subr.mxu0 0.0
  %3012 = vmatpush1.xpose.msra.mxu0 0.0
  %3013 = vmatprep.subr.mxu0 0.0
  %3014 = vmatpush1.xpose.msra.mxu0 0.0
  %3015 = vmatprep.subr.mxu0 0.0
  %3016 = vmatpush1.xpose.msra.mxu0 0.0
  %3017 = vmatprep.subr.mxu0 0.0
  %3018 = vmatpush1.xpose.msra.mxu0 0.0
  %3019 = vmatprep.subr.mxu0 0.0
  %3020 = vmatpush1.xpose.msra.mxu0 0.0
  %3021 = vmatprep.subr.mxu0 0.0
  %3022 = vmatpush1.xpose.msra.mxu0 0.0
  %3023 = vmatprep.subr.mxu0 0.0
  %3024 = vmatpush1.xpose.msra.mxu0 0.0
  %3025 = vmatprep.subr.mxu0 0.0
  %3026 = vmatpush1.xpose.msra.mxu0 0.0
  %3027 = vmatprep.subr.mxu0 0.0
  %3028 = vmatpush1.xpose.msra.mxu0 0.0
  %3029 = vmatprep.subr.mxu0 0.0
  %3030 = vmatpush1.xpose.msra.mxu0 0.0
  %3031 = vmatprep.subr.mxu0 0.0
  %3032 = vmatpush1.xpose.msra.mxu0 0.0
  %3033 = vmatprep.subr.mxu0 0.0
  %3034 = vmatpush1.xpose.msra.mxu0 0.0
  %3035 = vmatprep.subr.mxu0 0.0
  %3036 = vmatpush1.xpose.msra.mxu0 0.0
  %3037 = vmatprep.subr.mxu0 0.0
  %3038 = vmatpush1.xpose.msra.mxu0 0.0
  %3039 = vmatprep.subr.mxu0 0.0
  %3040 = vmatpush1.xpose.msra.mxu0 0.0
  %3041 = vmatprep.subr.mxu0 0.0
  %3042 = vmatpush1.xpose.msra.mxu0 0.0
  %3043 = vmatprep.subr.mxu0 0.0
  %3044 = vmatpush1.xpose.msra.mxu0 0.0
  %3045 = vmatprep.subr.mxu0 0.0
  %3046 = vmatpush1.xpose.msra.mxu0 0.0
  %3047 = vmatprep.subr.mxu0 0.0
  %3048 = vmatpush1.xpose.msra.mxu0 0.0
  %3049 = vmatprep.subr.mxu0 0.0
  %3050 = vmatpush1.xpose.msra.mxu0 0.0
  %3051 = vmatprep.subr.mxu0 0.0
  %3052 = vmatpush1.xpose.msra.mxu0 0.0
  %3053 = vmatprep.subr.mxu0 0.0
  %3054 = vmatpush1.xpose.msra.mxu0 0.0
  %3055 = vmatprep.subr.mxu0 0.0
  %3056 = vmatpush1.xpose.msra.mxu0 0.0
  %3057 = vmatprep.subr.mxu0 0.0
  %3058 = vmatpush1.xpose.msra.mxu0 0.0
  %3059 = vmatprep.mubr.f32.mxu0 0.0
  %3060 = vmatmul.mubr.f32.gmra.mrb[0].mxu0 %v2991
  %v3061 = vpop.f32.mrb[0].mxu0
  %v3062 = vadd.f32 0.0, %v3061
  %v3063 = vpop.f32.mrb[0].mxu0
  %3064 = vdwg.mxu0
  %3065 = vrot.lane.b32.xlu0 %v2545, 120
  %v3066 = vpop.permute.xlu0 %3065
  %3067 = vrot.lane.b32.xlu0 %v2637, 120
  %v3068 = vpop.permute.xlu0 %3067
  %v3069 = vsel %vm734, %v3066, 0
  %v3071 = vsel %vm734, %v3068, 0
  %3073 = vmatprep.subr.mxu0 0.0
  %3074 = vmatpush1.xpose.msra.mxu0 %v3071
  %3075 = vmatprep.subr.mxu0 0.0
  %3076 = vmatpush1.xpose.msra.mxu0 0.0
  %3077 = vmatprep.subr.mxu0 0.0
  %3078 = vmatpush1.xpose.msra.mxu0 0.0
  %3079 = vmatprep.subr.mxu0 0.0
  %3080 = vmatpush1.xpose.msra.mxu0 0.0
  %3081 = vmatprep.subr.mxu0 0.0
  %3082 = vmatpush1.xpose.msra.mxu0 0.0
  %3083 = vmatprep.subr.mxu0 0.0
  %3084 = vmatpush1.xpose.msra.mxu0 0.0
  %3085 = vmatprep.subr.mxu0 0.0
  %3086 = vmatpush1.xpose.msra.mxu0 0.0
  %3087 = vmatprep.subr.mxu0 0.0
  %3088 = vmatpush1.xpose.msra.mxu0 0.0
  %3089 = vmatprep.subr.mxu0 0.0
  %3090 = vmatpush1.xpose.msra.mxu0 0.0
  %3091 = vmatprep.subr.mxu0 0.0
  %3092 = vmatpush1.xpose.msra.mxu0 0.0
  %3093 = vmatprep.subr.mxu0 0.0
  %3094 = vmatpush1.xpose.msra.mxu0 0.0
  %3095 = vmatprep.subr.mxu0 0.0
  %3096 = vmatpush1.xpose.msra.mxu0 0.0
  %3097 = vmatprep.subr.mxu0 0.0
  %3098 = vmatpush1.xpose.msra.mxu0 0.0
  %3099 = vmatprep.subr.mxu0 0.0
  %3100 = vmatpush1.xpose.msra.mxu0 0.0
  %3101 = vmatprep.subr.mxu0 0.0
  %3102 = vmatpush1.xpose.msra.mxu0 0.0
  %3103 = vmatprep.subr.mxu0 0.0
  %3104 = vmatpush1.xpose.msra.mxu0 0.0
  %3105 = vmatprep.subr.mxu0 0.0
  %3106 = vmatpush1.xpose.msra.mxu0 0.0
  %3107 = vmatprep.subr.mxu0 0.0
  %3108 = vmatpush1.xpose.msra.mxu0 0.0
  %3109 = vmatprep.subr.mxu0 0.0
  %3110 = vmatpush1.xpose.msra.mxu0 0.0
  %3111 = vmatprep.subr.mxu0 0.0
  %3112 = vmatpush1.xpose.msra.mxu0 0.0
  %3113 = vmatprep.subr.mxu0 0.0
  %3114 = vmatpush1.xpose.msra.mxu0 0.0
  %3115 = vmatprep.subr.mxu0 0.0
  %3116 = vmatpush1.xpose.msra.mxu0 0.0
  %3117 = vmatprep.subr.mxu0 0.0
  %3118 = vmatpush1.xpose.msra.mxu0 0.0
  %3119 = vmatprep.subr.mxu0 0.0
  %3120 = vmatpush1.xpose.msra.mxu0 0.0
  %3121 = vmatprep.subr.mxu0 0.0
  %3122 = vmatpush1.xpose.msra.mxu0 0.0
  %3123 = vmatprep.subr.mxu0 0.0
  %3124 = vmatpush1.xpose.msra.mxu0 0.0
  %3125 = vmatprep.subr.mxu0 0.0
  %3126 = vmatpush1.xpose.msra.mxu0 0.0
  %3127 = vmatprep.subr.mxu0 0.0
  %3128 = vmatpush1.xpose.msra.mxu0 0.0
  %3129 = vmatprep.subr.mxu0 0.0
  %3130 = vmatpush1.xpose.msra.mxu0 0.0
  %3131 = vmatprep.subr.mxu0 0.0
  %3132 = vmatpush1.xpose.msra.mxu0 0.0
  %3133 = vmatprep.subr.mxu0 0.0
  %3134 = vmatpush1.xpose.msra.mxu0 0.0
  %3135 = vmatprep.subr.mxu0 0.0
  %3136 = vmatpush1.xpose.msra.mxu0 0.0
  %3137 = vmatprep.mubr.f32.mxu0 0.0
  %3138 = vmatmul.mubr.f32.gmra.mrb[0].mxu0 %v3069
  %v3139 = vpop.f32.mrb[0].mxu0
  %v3140 = vadd.f32 0.0, %v3139
  %v3141 = vpop.f32.mrb[0].mxu0
  %3142 = vdwg.mxu0
  %v3143 = vmul.f32 %v3062, 0.35355338
  %v3144 = vmul.f32 %v3140, 0.35355338
  %v3145 = vadd.f32 %v3143, %v2804
  %v3146 = vadd.f32 %v3144, %v2808
  %v3147 = vsel %vm734, %v3145, -inf
  %3148 = vmax.xlane.f32.xlu0 %v3147
  %v3149 = vpop.xlane.xlu0 %3148
  %v3150 = vsel %vm734, %v3146, -inf
  %3151 = vmax.xlane.f32.xlu0 %v3150
  %v3152 = vpop.xlane.xlu0 %3151
  %v3153 = vsub.f32 %v3145, %v3149
  %v3154 = vsub.f32 %v3146, %v3152
  %v3155 = vmul.f32 %v3153, 1.442695
  %v3156 = vpow.pop %v3155
  %v3157 = vmul.f32 %v3154, 1.442695
  %v3158 = vpow.pop %v3157
  %v3159 = vsel %vm734, %v3156, 0.0
  %3160 = vadd.xlane.f32.xlu0 %v3159
  %v3161 = vpop.xlane.xlu0 %3160
  %v3162 = vsel %vm734, %v3158, 0.0
  %3163 = vadd.xlane.f32.xlu0 %v3162
  %v3164 = vpop.xlane.xlu0 %3163
  %v3165 = vrcp.pop %v3161
  %v3166 = vrcp.pop %v3164
  %v3167 = vmul.f32 %v3156, %v3165
  %v3168 = vmul.f32 %v3158, %v3166
  %3169 = vrot.lane.b32.xlu0 %v2632, 88
  %v3170 = vpop.permute.xlu0 %3169
  %v3173 = vsel %vm734, %v3167, 0
  %3175 = vmatprep.subr.mxu0 0.0
  %3176 = vmatpush1.msra.mxu0 %v3170
  %3177 = vmatprep.subr.mxu0 0.0
  %3178 = vmatpush1.msra.mxu0 0.0
  %3179 = vmatprep.subr.mxu0 0.0
  %3180 = vmatpush1.msra.mxu0 0.0
  %3181 = vmatprep.subr.mxu0 0.0
  %3182 = vmatpush1.msra.mxu0 0.0
  %3183 = vmatprep.subr.mxu0 0.0
  %3184 = vmatpush1.msra.mxu0 0.0
  %3185 = vmatprep.subr.mxu0 0.0
  %3186 = vmatpush1.msra.mxu0 0.0
  %3187 = vmatprep.subr.mxu0 0.0
  %3188 = vmatpush1.msra.mxu0 0.0
  %3189 = vmatprep.subr.mxu0 0.0
  %3190 = vmatpush1.msra.mxu0 0.0
  %3191 = vmatprep.subr.mxu0 0.0
  %3192 = vmatpush1.msra.mxu0 0.0
  %3193 = vmatprep.subr.mxu0 0.0
  %3194 = vmatpush1.msra.mxu0 0.0
  %3195 = vmatprep.subr.mxu0 0.0
  %3196 = vmatpush1.msra.mxu0 0.0
  %3197 = vmatprep.subr.mxu0 0.0
  %3198 = vmatpush1.msra.mxu0 0.0
  %3199 = vmatprep.subr.mxu0 0.0
  %3200 = vmatpush1.msra.mxu0 0.0
  %3201 = vmatprep.subr.mxu0 0.0
  %3202 = vmatpush1.msra.mxu0 0.0
  %3203 = vmatprep.subr.mxu0 0.0
  %3204 = vmatpush1.msra.mxu0 0.0
  %3205 = vmatprep.subr.mxu0 0.0
  %3206 = vmatpush1.msra.mxu0 0.0
  %3207 = vmatprep.subr.mxu0 0.0
  %3208 = vmatpush1.msra.mxu0 0.0
  %3209 = vmatprep.subr.mxu0 0.0
  %3210 = vmatpush1.msra.mxu0 0.0
  %3211 = vmatprep.subr.mxu0 0.0
  %3212 = vmatpush1.msra.mxu0 0.0
  %3213 = vmatprep.subr.mxu0 0.0
  %3214 = vmatpush1.msra.mxu0 0.0
  %3215 = vmatprep.subr.mxu0 0.0
  %3216 = vmatpush1.msra.mxu0 0.0
  %3217 = vmatprep.subr.mxu0 0.0
  %3218 = vmatpush1.msra.mxu0 0.0
  %3219 = vmatprep.subr.mxu0 0.0
  %3220 = vmatpush1.msra.mxu0 0.0
  %3221 = vmatprep.subr.mxu0 0.0
  %3222 = vmatpush1.msra.mxu0 0.0
  %3223 = vmatprep.subr.mxu0 0.0
  %3224 = vmatpush1.msra.mxu0 0.0
  %3225 = vmatprep.subr.mxu0 0.0
  %3226 = vmatpush1.msra.mxu0 0.0
  %3227 = vmatprep.subr.mxu0 0.0
  %3228 = vmatpush1.msra.mxu0 0.0
  %3229 = vmatprep.subr.mxu0 0.0
  %3230 = vmatpush1.msra.mxu0 0.0
  %3231 = vmatprep.subr.mxu0 0.0
  %3232 = vmatpush1.msra.mxu0 0.0
  %3233 = vmatprep.subr.mxu0 0.0
  %3234 = vmatpush1.msra.mxu0 0.0
  %3235 = vmatprep.subr.mxu0 0.0
  %3236 = vmatpush1.msra.mxu0 0.0
  %3237 = vmatprep.subr.mxu0 0.0
  %3238 = vmatpush1.msra.mxu0 0.0
  %3239 = vmatprep.mubr.f32.mxu0 0.0
  %3240 = vmatmul.mubr.f32.gmra.mrb[0].mxu0 %v3173
  %v3241 = vpop.f32.mrb[0].mxu0
  %v3242 = vadd.f32 0.0, %v3241
  %v3243 = vpop.f32.mrb[0].mxu0
  %3244 = vdwg.mxu0
  %3245 = vrot.lane.b32.xlu0 %v2637, 88
  %v3246 = vpop.permute.xlu0 %3245
  %v3249 = vsel %vm734, %v3168, 0
  %3251 = vmatprep.subr.mxu0 0.0
  %3252 = vmatpush1.msra.mxu0 %v3246
  %3253 = vmatprep.subr.mxu0 0.0
  %3254 = vmatpush1.msra.mxu0 0.0
  %3255 = vmatprep.subr.mxu0 0.0
  %3256 = vmatpush1.msra.mxu0 0.0
  %3257 = vmatprep.subr.mxu0 0.0
  %3258 = vmatpush1.msra.mxu0 0.0
  %3259 = vmatprep.subr.mxu0 0.0
  %3260 = vmatpush1.msra.mxu0 0.0
  %3261 = vmatprep.subr.mxu0 0.0
  %3262 = vmatpush1.msra.mxu0 0.0
  %3263 = vmatprep.subr.mxu0 0.0
  %3264 = vmatpush1.msra.mxu0 0.0
  %3265 = vmatprep.subr.mxu0 0.0
  %3266 = vmatpush1.msra.mxu0 0.0
  %3267 = vmatprep.subr.mxu0 0.0
  %3268 = vmatpush1.msra.mxu0 0.0
  %3269 = vmatprep.subr.mxu0 0.0
  %3270 = vmatpush1.msra.mxu0 0.0
  %3271 = vmatprep.subr.mxu0 0.0
  %3272 = vmatpush1.msra.mxu0 0.0
  %3273 = vmatprep.subr.mxu0 0.0
  %3274 = vmatpush1.msra.mxu0 0.0
  %3275 = vmatprep.subr.mxu0 0.0
  %3276 = vmatpush1.msra.mxu0 0.0
  %3277 = vmatprep.subr.mxu0 0.0
  %3278 = vmatpush1.msra.mxu0 0.0
  %3279 = vmatprep.subr.mxu0 0.0
  %3280 = vmatpush1.msra.mxu0 0.0
  %3281 = vmatprep.subr.mxu0 0.0
  %3282 = vmatpush1.msra.mxu0 0.0
  %3283 = vmatprep.subr.mxu0 0.0
  %3284 = vmatpush1.msra.mxu0 0.0
  %3285 = vmatprep.subr.mxu0 0.0
  %3286 = vmatpush1.msra.mxu0 0.0
  %3287 = vmatprep.subr.mxu0 0.0
  %3288 = vmatpush1.msra.mxu0 0.0
  %3289 = vmatprep.subr.mxu0 0.0
  %3290 = vmatpush1.msra.mxu0 0.0
  %3291 = vmatprep.subr.mxu0 0.0
  %3292 = vmatpush1.msra.mxu0 0.0
  %3293 = vmatprep.subr.mxu0 0.0
  %3294 = vmatpush1.msra.mxu0 0.0
  %3295 = vmatprep.subr.mxu0 0.0
  %3296 = vmatpush1.msra.mxu0 0.0
  %3297 = vmatprep.subr.mxu0 0.0
  %3298 = vmatpush1.msra.mxu0 0.0
  %3299 = vmatprep.subr.mxu0 0.0
  %3300 = vmatpush1.msra.mxu0 0.0
  %3301 = vmatprep.subr.mxu0 0.0
  %3302 = vmatpush1.msra.mxu0 0.0
  %3303 = vmatprep.subr.mxu0 0.0
  %3304 = vmatpush1.msra.mxu0 0.0
  %3305 = vmatprep.subr.mxu0 0.0
  %3306 = vmatpush1.msra.mxu0 0.0
  %3307 = vmatprep.subr.mxu0 0.0
  %3308 = vmatpush1.msra.mxu0 0.0
  %3309 = vmatprep.subr.mxu0 0.0
  %3310 = vmatpush1.msra.mxu0 0.0
  %3311 = vmatprep.subr.mxu0 0.0
  %3312 = vmatpush1.msra.mxu0 0.0
  %3313 = vmatprep.subr.mxu0 0.0
  %3314 = vmatpush1.msra.mxu0 0.0
  %3315 = vmatprep.mubr.f32.mxu0 0.0
  %3316 = vmatmul.mubr.f32.gmra.mrb[0].mxu0 %v3249
  %v3317 = vpop.f32.mrb[0].mxu0
  %v3318 = vadd.f32 0.0, %v3317
  %v3319 = vpop.f32.mrb[0].mxu0
  %3320 = vdwg.mxu0
  %v3322 = vsel %vm734, %v3242, 0
  %v3325 = vsel %vm734, %v3318, 0
  %3327 = vmatprep.subr.mxu0 0.0
  %3328 = vmatpush1.msra.mxu0 %v2641
  %3329 = vmatprep.subr.mxu0 0.0
  %3330 = vmatpush1.msra.mxu0 0.0
  %3331 = vmatprep.subr.mxu0 0.0
  %3332 = vmatpush1.msra.mxu0 0.0
  %3333 = vmatprep.subr.mxu0 0.0
  %3334 = vmatpush1.msra.mxu0 0.0
  %3335 = vmatprep.subr.mxu0 0.0
  %3336 = vmatpush1.msra.mxu0 0.0
  %3337 = vmatprep.subr.mxu0 0.0
  %3338 = vmatpush1.msra.mxu0 0.0
  %3339 = vmatprep.subr.mxu0 0.0
  %3340 = vmatpush1.msra.mxu0 0.0
  %3341 = vmatprep.subr.mxu0 0.0
  %3342 = vmatpush1.msra.mxu0 0.0
  %3343 = vmatprep.subr.mxu0 0.0
  %3344 = vmatpush1.msra.mxu0 0.0
  %3345 = vmatprep.subr.mxu0 0.0
  %3346 = vmatpush1.msra.mxu0 0.0
  %3347 = vmatprep.subr.mxu0 0.0
  %3348 = vmatpush1.msra.mxu0 0.0
  %3349 = vmatprep.subr.mxu0 0.0
  %3350 = vmatpush1.msra.mxu0 0.0
  %3351 = vmatprep.subr.mxu0 0.0
  %3352 = vmatpush1.msra.mxu0 0.0
  %3353 = vmatprep.subr.mxu0 0.0
  %3354 = vmatpush1.msra.mxu0 0.0
  %3355 = vmatprep.subr.mxu0 0.0
  %3356 = vmatpush1.msra.mxu0 0.0
  %3357 = vmatprep.subr.mxu0 0.0
  %3358 = vmatpush1.msra.mxu0 0.0
  %3359 = vmatprep.subr.mxu0 0.0
  %3360 = vmatpush1.msra.mxu0 0.0
  %3361 = vmatprep.subr.mxu0 0.0
  %3362 = vmatpush1.msra.mxu0 0.0
  %3363 = vmatprep.subr.mxu0 0.0
  %3364 = vmatpush1.msra.mxu0 0.0
  %3365 = vmatprep.subr.mxu0 0.0
  %3366 = vmatpush1.msra.mxu0 0.0
  %3367 = vmatprep.subr.mxu0 0.0
  %3368 = vmatpush1.msra.mxu0 0.0
  %3369 = vmatprep.subr.mxu0 0.0
  %3370 = vmatpush1.msra.mxu0 0.0
  %3371 = vmatprep.subr.mxu0 0.0
  %3372 = vmatpush1.msra.mxu0 0.0
  %3373 = vmatprep.subr.mxu0 0.0
  %3374 = vmatpush1.msra.mxu0 0.0
  %3375 = vmatprep.subr.mxu0 0.0
  %3376 = vmatpush1.msra.mxu0 0.0
  %3377 = vmatprep.subr.mxu0 0.0
  %3378 = vmatpush1.msra.mxu0 0.0
  %3379 = vmatprep.subr.mxu0 0.0
  %3380 = vmatpush1.msra.mxu0 0.0
  %3381 = vmatprep.subr.mxu0 0.0
  %3382 = vmatpush1.msra.mxu0 0.0
  %3383 = vmatprep.subr.mxu0 0.0
  %3384 = vmatpush1.msra.mxu0 0.0
  %3385 = vmatprep.subr.mxu0 0.0
  %3386 = vmatpush1.msra.mxu0 0.0
  %3387 = vmatprep.subr.mxu0 0.0
  %3388 = vmatpush1.msra.mxu0 0.0
  %3389 = vmatprep.subr.mxu0 0.0
  %3390 = vmatpush1.msra.mxu0 0.0
  %3391 = vmatprep.mubr.f32.mxu0 0.0
  %3392 = vmatmul.mubr.f32.gmra.mrb[0].mxu0 %v3322
  %v3393 = vpop.f32.mrb[0].mxu0
  %v3394 = vadd.f32 0.0, %v3393
  %v3395 = vpop.f32.mrb[0].mxu0
  %3396 = vmatprep.mubr.f32.mxu0 0.0
  %3397 = vmatmul.mubr.f32.gmra.mrb[0].mxu0 %v3325
  %v3398 = vpop.f32.mrb[0].mxu0
  %v3399 = vadd.f32 0.0, %v3398
  %v3400 = vpop.f32.mrb[0].mxu0
  %3401 = vdwg.mxu0
  %v3403 = vsel %vm734, %v2908, 0
  %v3406 = vsel %vm734, %v2984, 0
  %3408 = vmatprep.subr.mxu0 0.0
  %3409 = vmatpush1.msra.mxu0 %v2640
  %3410 = vmatprep.subr.mxu0 0.0
  %3411 = vmatpush1.msra.mxu0 0.0
  %3412 = vmatprep.subr.mxu0 0.0
  %3413 = vmatpush1.msra.mxu0 0.0
  %3414 = vmatprep.subr.mxu0 0.0
  %3415 = vmatpush1.msra.mxu0 0.0
  %3416 = vmatprep.subr.mxu0 0.0
  %3417 = vmatpush1.msra.mxu0 0.0
  %3418 = vmatprep.subr.mxu0 0.0
  %3419 = vmatpush1.msra.mxu0 0.0
  %3420 = vmatprep.subr.mxu0 0.0
  %3421 = vmatpush1.msra.mxu0 0.0
  %3422 = vmatprep.subr.mxu0 0.0
  %3423 = vmatpush1.msra.mxu0 0.0
  %3424 = vmatprep.subr.mxu0 0.0
  %3425 = vmatpush1.msra.mxu0 0.0
  %3426 = vmatprep.subr.mxu0 0.0
  %3427 = vmatpush1.msra.mxu0 0.0
  %3428 = vmatprep.subr.mxu0 0.0
  %3429 = vmatpush1.msra.mxu0 0.0
  %3430 = vmatprep.subr.mxu0 0.0
  %3431 = vmatpush1.msra.mxu0 0.0
  %3432 = vmatprep.subr.mxu0 0.0
  %3433 = vmatpush1.msra.mxu0 0.0
  %3434 = vmatprep.subr.mxu0 0.0
  %3435 = vmatpush1.msra.mxu0 0.0
  %3436 = vmatprep.subr.mxu0 0.0
  %3437 = vmatpush1.msra.mxu0 0.0
  %3438 = vmatprep.subr.mxu0 0.0
  %3439 = vmatpush1.msra.mxu0 0.0
  %3440 = vmatprep.subr.mxu0 0.0
  %3441 = vmatpush1.msra.mxu0 0.0
  %3442 = vmatprep.subr.mxu0 0.0
  %3443 = vmatpush1.msra.mxu0 0.0
  %3444 = vmatprep.subr.mxu0 0.0
  %3445 = vmatpush1.msra.mxu0 0.0
  %3446 = vmatprep.subr.mxu0 0.0
  %3447 = vmatpush1.msra.mxu0 0.0
  %3448 = vmatprep.subr.mxu0 0.0
  %3449 = vmatpush1.msra.mxu0 0.0
  %3450 = vmatprep.subr.mxu0 0.0
  %3451 = vmatpush1.msra.mxu0 0.0
  %3452 = vmatprep.subr.mxu0 0.0
  %3453 = vmatpush1.msra.mxu0 0.0
  %3454 = vmatprep.subr.mxu0 0.0
  %3455 = vmatpush1.msra.mxu0 0.0
  %3456 = vmatprep.subr.mxu0 0.0
  %3457 = vmatpush1.msra.mxu0 0.0
  %3458 = vmatprep.subr.mxu0 0.0
  %3459 = vmatpush1.msra.mxu0 0.0
  %3460 = vmatprep.subr.mxu0 0.0
  %3461 = vmatpush1.msra.mxu0 0.0
  %3462 = vmatprep.subr.mxu0 0.0
  %3463 = vmatpush1.msra.mxu0 0.0
  %3464 = vmatprep.subr.mxu0 0.0
  %3465 = vmatpush1.msra.mxu0 0.0
  %3466 = vmatprep.subr.mxu0 0.0
  %3467 = vmatpush1.msra.mxu0 0.0
  %3468 = vmatprep.subr.mxu0 0.0
  %3469 = vmatpush1.msra.mxu0 0.0
  %3470 = vmatprep.subr.mxu0 0.0
  %3471 = vmatpush1.msra.mxu0 0.0
  %3472 = vmatprep.mubr.f32.mxu0 0.0
  %3473 = vmatmul.mubr.f32.gmra.mrb[0].mxu0 %v3403
  %v3474 = vpop.f32.mrb[0].mxu0
  %v3475 = vadd.f32 %v3394, %v3474
  %v3476 = vpop.f32.mrb[0].mxu0
  %3477 = vmatprep.mubr.f32.mxu0 0.0
  %3478 = vmatmul.mubr.f32.gmra.mrb[0].mxu0 %v3406
  %v3479 = vpop.f32.mrb[0].mxu0
  %v3480 = vadd.f32 %v3399, %v3479
  %v3481 = vpop.f32.mrb[0].mxu0
  %3482 = vdwg.mxu0
  %3483 = vrot.lane.b32.xlu0 %v2540, 112
  %v3484 = vpop.permute.xlu0 %3483
  %3485 = vrot.lane.b32.xlu0 %v2632, 112
  %v3486 = vpop.permute.xlu0 %3485
  %v3487 = vsel %vm734, %v3484, 0
  %v3489 = vsel %vm734, %v3486, 0
  %3491 = vmatprep.subr.mxu0 0.0
  %3492 = vmatpush1.xpose.msra.mxu0 %v3489
  %3493 = vmatprep.subr.mxu0 0.0
  %3494 = vmatpush1.xpose.msra.mxu0 0.0
  %3495 = vmatprep.subr.mxu0 0.0
  %3496 = vmatpush1.xpose.msra.mxu0 0.0
  %3497 = vmatprep.subr.mxu0 0.0
  %3498 = vmatpush1.xpose.msra.mxu0 0.0
  %3499 = vmatprep.subr.mxu0 0.0
  %3500 = vmatpush1.xpose.msra.mxu0 0.0
  %3501 = vmatprep.subr.mxu0 0.0
  %3502 = vmatpush1.xpose.msra.mxu0 0.0
  %3503 = vmatprep.subr.mxu0 0.0
  %3504 = vmatpush1.xpose.msra.mxu0 0.0
  %3505 = vmatprep.subr.mxu0 0.0
  %3506 = vmatpush1.xpose.msra.mxu0 0.0
  %3507 = vmatprep.subr.mxu0 0.0
  %3508 = vmatpush1.xpose.msra.mxu0 0.0
  %3509 = vmatprep.subr.mxu0 0.0
  %3510 = vmatpush1.xpose.msra.mxu0 0.0
  %3511 = vmatprep.subr.mxu0 0.0
  %3512 = vmatpush1.xpose.msra.mxu0 0.0
  %3513 = vmatprep.subr.mxu0 0.0
  %3514 = vmatpush1.xpose.msra.mxu0 0.0
  %3515 = vmatprep.subr.mxu0 0.0
  %3516 = vmatpush1.xpose.msra.mxu0 0.0
  %3517 = vmatprep.subr.mxu0 0.0
  %3518 = vmatpush1.xpose.msra.mxu0 0.0
  %3519 = vmatprep.subr.mxu0 0.0
  %3520 = vmatpush1.xpose.msra.mxu0 0.0
  %3521 = vmatprep.subr.mxu0 0.0
  %3522 = vmatpush1.xpose.msra.mxu0 0.0
  %3523 = vmatprep.subr.mxu0 0.0
  %3524 = vmatpush1.xpose.msra.mxu0 0.0
  %3525 = vmatprep.subr.mxu0 0.0
  %3526 = vmatpush1.xpose.msra.mxu0 0.0
  %3527 = vmatprep.subr.mxu0 0.0
  %3528 = vmatpush1.xpose.msra.mxu0 0.0
  %3529 = vmatprep.subr.mxu0 0.0
  %3530 = vmatpush1.xpose.msra.mxu0 0.0
  %3531 = vmatprep.subr.mxu0 0.0
  %3532 = vmatpush1.xpose.msra.mxu0 0.0
  %3533 = vmatprep.subr.mxu0 0.0
  %3534 = vmatpush1.xpose.msra.mxu0 0.0
  %3535 = vmatprep.subr.mxu0 0.0
  %3536 = vmatpush1.xpose.msra.mxu0 0.0
  %3537 = vmatprep.subr.mxu0 0.0
  %3538 = vmatpush1.xpose.msra.mxu0 0.0
  %3539 = vmatprep.subr.mxu0 0.0
  %3540 = vmatpush1.xpose.msra.mxu0 0.0
  %3541 = vmatprep.subr.mxu0 0.0
  %3542 = vmatpush1.xpose.msra.mxu0 0.0
  %3543 = vmatprep.subr.mxu0 0.0
  %3544 = vmatpush1.xpose.msra.mxu0 0.0
  %3545 = vmatprep.subr.mxu0 0.0
  %3546 = vmatpush1.xpose.msra.mxu0 0.0
  %3547 = vmatprep.subr.mxu0 0.0
  %3548 = vmatpush1.xpose.msra.mxu0 0.0
  %3549 = vmatprep.subr.mxu0 0.0
  %3550 = vmatpush1.xpose.msra.mxu0 0.0
  %3551 = vmatprep.subr.mxu0 0.0
  %3552 = vmatpush1.xpose.msra.mxu0 0.0
  %3553 = vmatprep.subr.mxu0 0.0
  %3554 = vmatpush1.xpose.msra.mxu0 0.0
  %3555 = vmatprep.mubr.f32.mxu0 0.0
  %3556 = vmatmul.mubr.f32.gmra.mrb[0].mxu0 %v3487
  %v3557 = vpop.f32.mrb[0].mxu0
  %v3558 = vadd.f32 0.0, %v3557
  %v3559 = vpop.f32.mrb[0].mxu0
  %3560 = vdwg.mxu0
  %3561 = vrot.lane.b32.xlu0 %v2545, 112
  %v3562 = vpop.permute.xlu0 %3561
  %3563 = vrot.lane.b32.xlu0 %v2637, 112
  %v3564 = vpop.permute.xlu0 %3563
  %v3565 = vsel %vm734, %v3562, 0
  %v3567 = vsel %vm734, %v3564, 0
  %3569 = vmatprep.subr.mxu0 0.0
  %3570 = vmatpush1.xpose.msra.mxu0 %v3567
  %3571 = vmatprep.subr.mxu0 0.0
  %3572 = vmatpush1.xpose.msra.mxu0 0.0
  %3573 = vmatprep.subr.mxu0 0.0
  %3574 = vmatpush1.xpose.msra.mxu0 0.0
  %3575 = vmatprep.subr.mxu0 0.0
  %3576 = vmatpush1.xpose.msra.mxu0 0.0
  %3577 = vmatprep.subr.mxu0 0.0
  %3578 = vmatpush1.xpose.msra.mxu0 0.0
  %3579 = vmatprep.subr.mxu0 0.0
  %3580 = vmatpush1.xpose.msra.mxu0 0.0
  %3581 = vmatprep.subr.mxu0 0.0
  %3582 = vmatpush1.xpose.msra.mxu0 0.0
  %3583 = vmatprep.subr.mxu0 0.0
  %3584 = vmatpush1.xpose.msra.mxu0 0.0
  %3585 = vmatprep.subr.mxu0 0.0
  %3586 = vmatpush1.xpose.msra.mxu0 0.0
  %3587 = vmatprep.subr.mxu0 0.0
  %3588 = vmatpush1.xpose.msra.mxu0 0.0
  %3589 = vmatprep.subr.mxu0 0.0
  %3590 = vmatpush1.xpose.msra.mxu0 0.0
  %3591 = vmatprep.subr.mxu0 0.0
  %3592 = vmatpush1.xpose.msra.mxu0 0.0
  %3593 = vmatprep.subr.mxu0 0.0
  %3594 = vmatpush1.xpose.msra.mxu0 0.0
  %3595 = vmatprep.subr.mxu0 0.0
  %3596 = vmatpush1.xpose.msra.mxu0 0.0
  %3597 = vmatprep.subr.mxu0 0.0
  %3598 = vmatpush1.xpose.msra.mxu0 0.0
  %3599 = vmatprep.subr.mxu0 0.0
  %3600 = vmatpush1.xpose.msra.mxu0 0.0
  %3601 = vmatprep.subr.mxu0 0.0
  %3602 = vmatpush1.xpose.msra.mxu0 0.0
  %3603 = vmatprep.subr.mxu0 0.0
  %3604 = vmatpush1.xpose.msra.mxu0 0.0
  %3605 = vmatprep.subr.mxu0 0.0
  %3606 = vmatpush1.xpose.msra.mxu0 0.0
  %3607 = vmatprep.subr.mxu0 0.0
  %3608 = vmatpush1.xpose.msra.mxu0 0.0
  %3609 = vmatprep.subr.mxu0 0.0
  %3610 = vmatpush1.xpose.msra.mxu0 0.0
  %3611 = vmatprep.subr.mxu0 0.0
  %3612 = vmatpush1.xpose.msra.mxu0 0.0
  %3613 = vmatprep.subr.mxu0 0.0
  %3614 = vmatpush1.xpose.msra.mxu0 0.0
  %3615 = vmatprep.subr.mxu0 0.0
  %3616 = vmatpush1.xpose.msra.mxu0 0.0
  %3617 = vmatprep.subr.mxu0 0.0
  %3618 = vmatpush1.xpose.msra.mxu0 0.0
  %3619 = vmatprep.subr.mxu0 0.0
  %3620 = vmatpush1.xpose.msra.mxu0 0.0
  %3621 = vmatprep.subr.mxu0 0.0
  %3622 = vmatpush1.xpose.msra.mxu0 0.0
  %3623 = vmatprep.subr.mxu0 0.0
  %3624 = vmatpush1.xpose.msra.mxu0 0.0
  %3625 = vmatprep.subr.mxu0 0.0
  %3626 = vmatpush1.xpose.msra.mxu0 0.0
  %3627 = vmatprep.subr.mxu0 0.0
  %3628 = vmatpush1.xpose.msra.mxu0 0.0
  %3629 = vmatprep.subr.mxu0 0.0
  %3630 = vmatpush1.xpose.msra.mxu0 0.0
  %3631 = vmatprep.subr.mxu0 0.0
  %3632 = vmatpush1.xpose.msra.mxu0 0.0
  %3633 = vmatprep.mubr.f32.mxu0 0.0
  %3634 = vmatmul.mubr.f32.gmra.mrb[0].mxu0 %v3565
  %v3635 = vpop.f32.mrb[0].mxu0
  %v3636 = vadd.f32 0.0, %v3635
  %v3637 = vpop.f32.mrb[0].mxu0
  %3638 = vdwg.mxu0
  %v3639 = vmul.f32 %v3558, 0.35355338
  %v3640 = vmul.f32 %v3636, 0.35355338
  %v3641 = vadd.f32 %v3639, %v2804
  %v3642 = vadd.f32 %v3640, %v2808
  %v3643 = vsel %vm734, %v3641, -inf
  %3644 = vmax.xlane.f32.xlu0 %v3643
  %v3645 = vpop.xlane.xlu0 %3644
  %v3646 = vsel %vm734, %v3642, -inf
  %3647 = vmax.xlane.f32.xlu0 %v3646
  %v3648 = vpop.xlane.xlu0 %3647
  %v3649 = vsub.f32 %v3641, %v3645
  %v3650 = vsub.f32 %v3642, %v3648
  %v3651 = vmul.f32 %v3649, 1.442695
  %v3652 = vpow.pop %v3651
  %v3653 = vmul.f32 %v3650, 1.442695
  %v3654 = vpow.pop %v3653
  %v3655 = vsel %vm734, %v3652, 0.0
  %3656 = vadd.xlane.f32.xlu0 %v3655
  %v3657 = vpop.xlane.xlu0 %3656
  %v3658 = vsel %vm734, %v3654, 0.0
  %3659 = vadd.xlane.f32.xlu0 %v3658
  %v3660 = vpop.xlane.xlu0 %3659
  %v3661 = vrcp.pop %v3657
  %v3662 = vrcp.pop %v3660
  %v3663 = vmul.f32 %v3652, %v3661
  %v3664 = vmul.f32 %v3654, %v3662
  %3665 = vrot.lane.b32.xlu0 %v2632, 80
  %v3666 = vpop.permute.xlu0 %3665
  %v3669 = vsel %vm734, %v3663, 0
  %3671 = vmatprep.subr.mxu0 0.0
  %3672 = vmatpush1.msra.mxu0 %v3666
  %3673 = vmatprep.subr.mxu0 0.0
  %3674 = vmatpush1.msra.mxu0 0.0
  %3675 = vmatprep.subr.mxu0 0.0
  %3676 = vmatpush1.msra.mxu0 0.0
  %3677 = vmatprep.subr.mxu0 0.0
  %3678 = vmatpush1.msra.mxu0 0.0
  %3679 = vmatprep.subr.mxu0 0.0
  %3680 = vmatpush1.msra.mxu0 0.0
  %3681 = vmatprep.subr.mxu0 0.0
  %3682 = vmatpush1.msra.mxu0 0.0
  %3683 = vmatprep.subr.mxu0 0.0
  %3684 = vmatpush1.msra.mxu0 0.0
  %3685 = vmatprep.subr.mxu0 0.0
  %3686 = vmatpush1.msra.mxu0 0.0
  %3687 = vmatprep.subr.mxu0 0.0
  %3688 = vmatpush1.msra.mxu0 0.0
  %3689 = vmatprep.subr.mxu0 0.0
  %3690 = vmatpush1.msra.mxu0 0.0
  %3691 = vmatprep.subr.mxu0 0.0
  %3692 = vmatpush1.msra.mxu0 0.0
  %3693 = vmatprep.subr.mxu0 0.0
  %3694 = vmatpush1.msra.mxu0 0.0
  %3695 = vmatprep.subr.mxu0 0.0
  %3696 = vmatpush1.msra.mxu0 0.0
  %3697 = vmatprep.subr.mxu0 0.0
  %3698 = vmatpush1.msra.mxu0 0.0
  %3699 = vmatprep.subr.mxu0 0.0
  %3700 = vmatpush1.msra.mxu0 0.0
  %3701 = vmatprep.subr.mxu0 0.0
  %3702 = vmatpush1.msra.mxu0 0.0
  %3703 = vmatprep.subr.mxu0 0.0
  %3704 = vmatpush1.msra.mxu0 0.0
  %3705 = vmatprep.subr.mxu0 0.0
  %3706 = vmatpush1.msra.mxu0 0.0
  %3707 = vmatprep.subr.mxu0 0.0
  %3708 = vmatpush1.msra.mxu0 0.0
  %3709 = vmatprep.subr.mxu0 0.0
  %3710 = vmatpush1.msra.mxu0 0.0
  %3711 = vmatprep.subr.mxu0 0.0
  %3712 = vmatpush1.msra.mxu0 0.0
  %3713 = vmatprep.subr.mxu0 0.0
  %3714 = vmatpush1.msra.mxu0 0.0
  %3715 = vmatprep.subr.mxu0 0.0
  %3716 = vmatpush1.msra.mxu0 0.0
  %3717 = vmatprep.subr.mxu0 0.0
  %3718 = vmatpush1.msra.mxu0 0.0
  %3719 = vmatprep.subr.mxu0 0.0
  %3720 = vmatpush1.msra.mxu0 0.0
  %3721 = vmatprep.subr.mxu0 0.0
  %3722 = vmatpush1.msra.mxu0 0.0
  %3723 = vmatprep.subr.mxu0 0.0
  %3724 = vmatpush1.msra.mxu0 0.0
  %3725 = vmatprep.subr.mxu0 0.0
  %3726 = vmatpush1.msra.mxu0 0.0
  %3727 = vmatprep.subr.mxu0 0.0
  %3728 = vmatpush1.msra.mxu0 0.0
  %3729 = vmatprep.subr.mxu0 0.0
  %3730 = vmatpush1.msra.mxu0 0.0
  %3731 = vmatprep.subr.mxu0 0.0
  %3732 = vmatpush1.msra.mxu0 0.0
  %3733 = vmatprep.subr.mxu0 0.0
  %3734 = vmatpush1.msra.mxu0 0.0
  %3735 = vmatprep.mubr.f32.mxu0 0.0
  %3736 = vmatmul.mubr.f32.gmra.mrb[0].mxu0 %v3669
  %v3737 = vpop.f32.mrb[0].mxu0
  %v3738 = vadd.f32 0.0, %v3737
  %v3739 = vpop.f32.mrb[0].mxu0
  %3740 = vdwg.mxu0
  %3741 = vrot.lane.b32.xlu0 %v2637, 80
  %v3742 = vpop.permute.xlu0 %3741
  %v3745 = vsel %vm734, %v3664, 0
  %3747 = vmatprep.subr.mxu0 0.0
  %3748 = vmatpush1.msra.mxu0 %v3742
  %3749 = vmatprep.subr.mxu0 0.0
  %3750 = vmatpush1.msra.mxu0 0.0
  %3751 = vmatprep.subr.mxu0 0.0
  %3752 = vmatpush1.msra.mxu0 0.0
  %3753 = vmatprep.subr.mxu0 0.0
  %3754 = vmatpush1.msra.mxu0 0.0
  %3755 = vmatprep.subr.mxu0 0.0
  %3756 = vmatpush1.msra.mxu0 0.0
  %3757 = vmatprep.subr.mxu0 0.0
  %3758 = vmatpush1.msra.mxu0 0.0
  %3759 = vmatprep.subr.mxu0 0.0
  %3760 = vmatpush1.msra.mxu0 0.0
  %3761 = vmatprep.subr.mxu0 0.0
  %3762 = vmatpush1.msra.mxu0 0.0
  %3763 = vmatprep.subr.mxu0 0.0
  %3764 = vmatpush1.msra.mxu0 0.0
  %3765 = vmatprep.subr.mxu0 0.0
  %3766 = vmatpush1.msra.mxu0 0.0
  %3767 = vmatprep.subr.mxu0 0.0
  %3768 = vmatpush1.msra.mxu0 0.0
  %3769 = vmatprep.subr.mxu0 0.0
  %3770 = vmatpush1.msra.mxu0 0.0
  %3771 = vmatprep.subr.mxu0 0.0
  %3772 = vmatpush1.msra.mxu0 0.0
  %3773 = vmatprep.subr.mxu0 0.0
  %3774 = vmatpush1.msra.mxu0 0.0
  %3775 = vmatprep.subr.mxu0 0.0
  %3776 = vmatpush1.msra.mxu0 0.0
  %3777 = vmatprep.subr.mxu0 0.0
  %3778 = vmatpush1.msra.mxu0 0.0
  %3779 = vmatprep.subr.mxu0 0.0
  %3780 = vmatpush1.msra.mxu0 0.0
  %3781 = vmatprep.subr.mxu0 0.0
  %3782 = vmatpush1.msra.mxu0 0.0
  %3783 = vmatprep.subr.mxu0 0.0
  %3784 = vmatpush1.msra.mxu0 0.0
  %3785 = vmatprep.subr.mxu0 0.0
  %3786 = vmatpush1.msra.mxu0 0.0
  %3787 = vmatprep.subr.mxu0 0.0
  %3788 = vmatpush1.msra.mxu0 0.0
  %3789 = vmatprep.subr.mxu0 0.0
  %3790 = vmatpush1.msra.mxu0 0.0
  %3791 = vmatprep.subr.mxu0 0.0
  %3792 = vmatpush1.msra.mxu0 0.0
  %3793 = vmatprep.subr.mxu0 0.0
  %3794 = vmatpush1.msra.mxu0 0.0
  %3795 = vmatprep.subr.mxu0 0.0
  %3796 = vmatpush1.msra.mxu0 0.0
  %3797 = vmatprep.subr.mxu0 0.0
  %3798 = vmatpush1.msra.mxu0 0.0
  %3799 = vmatprep.subr.mxu0 0.0
  %3800 = vmatpush1.msra.mxu0 0.0
  %3801 = vmatprep.subr.mxu0 0.0
  %3802 = vmatpush1.msra.mxu0 0.0
  %3803 = vmatprep.subr.mxu0 0.0
  %3804 = vmatpush1.msra.mxu0 0.0
  %3805 = vmatprep.subr.mxu0 0.0
  %3806 = vmatpush1.msra.mxu0 0.0
  %3807 = vmatprep.subr.mxu0 0.0
  %3808 = vmatpush1.msra.mxu0 0.0
  %3809 = vmatprep.subr.mxu0 0.0
  %3810 = vmatpush1.msra.mxu0 0.0
  %3811 = vmatprep.mubr.f32.mxu0 0.0
  %3812 = vmatmul.mubr.f32.gmra.mrb[0].mxu0 %v3745
  %v3813 = vpop.f32.mrb[0].mxu0
  %v3814 = vadd.f32 0.0, %v3813
  %v3815 = vpop.f32.mrb[0].mxu0
  %3816 = vdwg.mxu0
  %v3818 = vsel %vm734, %v3738, 0
  %v3821 = vsel %vm734, %v3814, 0
  %3823 = vmatprep.subr.mxu0 0.0
  %3824 = vmatpush1.msra.mxu0 %v2642
  %3825 = vmatprep.subr.mxu0 0.0
  %3826 = vmatpush1.msra.mxu0 0.0
  %3827 = vmatprep.subr.mxu0 0.0
  %3828 = vmatpush1.msra.mxu0 0.0
  %3829 = vmatprep.subr.mxu0 0.0
  %3830 = vmatpush1.msra.mxu0 0.0
  %3831 = vmatprep.subr.mxu0 0.0
  %3832 = vmatpush1.msra.mxu0 0.0
  %3833 = vmatprep.subr.mxu0 0.0
  %3834 = vmatpush1.msra.mxu0 0.0
  %3835 = vmatprep.subr.mxu0 0.0
  %3836 = vmatpush1.msra.mxu0 0.0
  %3837 = vmatprep.subr.mxu0 0.0
  %3838 = vmatpush1.msra.mxu0 0.0
  %3839 = vmatprep.subr.mxu0 0.0
  %3840 = vmatpush1.msra.mxu0 0.0
  %3841 = vmatprep.subr.mxu0 0.0
  %3842 = vmatpush1.msra.mxu0 0.0
  %3843 = vmatprep.subr.mxu0 0.0
  %3844 = vmatpush1.msra.mxu0 0.0
  %3845 = vmatprep.subr.mxu0 0.0
  %3846 = vmatpush1.msra.mxu0 0.0
  %3847 = vmatprep.subr.mxu0 0.0
  %3848 = vmatpush1.msra.mxu0 0.0
  %3849 = vmatprep.subr.mxu0 0.0
  %3850 = vmatpush1.msra.mxu0 0.0
  %3851 = vmatprep.subr.mxu0 0.0
  %3852 = vmatpush1.msra.mxu0 0.0
  %3853 = vmatprep.subr.mxu0 0.0
  %3854 = vmatpush1.msra.mxu0 0.0
  %3855 = vmatprep.subr.mxu0 0.0
  %3856 = vmatpush1.msra.mxu0 0.0
  %3857 = vmatprep.subr.mxu0 0.0
  %3858 = vmatpush1.msra.mxu0 0.0
  %3859 = vmatprep.subr.mxu0 0.0
  %3860 = vmatpush1.msra.mxu0 0.0
  %3861 = vmatprep.subr.mxu0 0.0
  %3862 = vmatpush1.msra.mxu0 0.0
  %3863 = vmatprep.subr.mxu0 0.0
  %3864 = vmatpush1.msra.mxu0 0.0
  %3865 = vmatprep.subr.mxu0 0.0
  %3866 = vmatpush1.msra.mxu0 0.0
  %3867 = vmatprep.subr.mxu0 0.0
  %3868 = vmatpush1.msra.mxu0 0.0
  %3869 = vmatprep.subr.mxu0 0.0
  %3870 = vmatpush1.msra.mxu0 0.0
  %3871 = vmatprep.subr.mxu0 0.0
  %3872 = vmatpush1.msra.mxu0 0.0
  %3873 = vmatprep.subr.mxu0 0.0
  %3874 = vmatpush1.msra.mxu0 0.0
  %3875 = vmatprep.subr.mxu0 0.0
  %3876 = vmatpush1.msra.mxu0 0.0
  %3877 = vmatprep.subr.mxu0 0.0
  %3878 = vmatpush1.msra.mxu0 0.0
  %3879 = vmatprep.subr.mxu0 0.0
  %3880 = vmatpush1.msra.mxu0 0.0
  %3881 = vmatprep.subr.mxu0 0.0
  %3882 = vmatpush1.msra.mxu0 0.0
  %3883 = vmatprep.subr.mxu0 0.0
  %3884 = vmatpush1.msra.mxu0 0.0
  %3885 = vmatprep.subr.mxu0 0.0
  %3886 = vmatpush1.msra.mxu0 0.0
  %3887 = vmatprep.mubr.f32.mxu0 0.0
  %3888 = vmatmul.mubr.f32.gmra.mrb[0].mxu0 %v3818
  %v3889 = vpop.f32.mrb[0].mxu0
  %v3890 = vadd.f32 0.0, %v3889
  %v3891 = vpop.f32.mrb[0].mxu0
  %3892 = vmatprep.mubr.f32.mxu0 0.0
  %3893 = vmatmul.mubr.f32.gmra.mrb[0].mxu0 %v3821
  %v3894 = vpop.f32.mrb[0].mxu0
  %v3895 = vadd.f32 0.0, %v3894
  %v3896 = vpop.f32.mrb[0].mxu0
  %3897 = vdwg.mxu0
  %v3898 = vadd.f32 %v3475, %v3890
  %v3899 = vadd.f32 %v3480, %v3895
  %3900 = vrot.lane.b32.xlu0 %v2540, 104
  %v3901 = vpop.permute.xlu0 %3900
  %3902 = vrot.lane.b32.xlu0 %v2632, 104
  %v3903 = vpop.permute.xlu0 %3902
  %v3904 = vsel %vm734, %v3901, 0
  %v3906 = vsel %vm734, %v3903, 0
  %3908 = vmatprep.subr.mxu0 0.0
  %3909 = vmatpush1.xpose.msra.mxu0 %v3906
  %3910 = vmatprep.subr.mxu0 0.0
  %3911 = vmatpush1.xpose.msra.mxu0 0.0
  %3912 = vmatprep.subr.mxu0 0.0
  %3913 = vmatpush1.xpose.msra.mxu0 0.0
  %3914 = vmatprep.subr.mxu0 0.0
  %3915 = vmatpush1.xpose.msra.mxu0 0.0
  %3916 = vmatprep.subr.mxu0 0.0
  %3917 = vmatpush1.xpose.msra.mxu0 0.0
  %3918 = vmatprep.subr.mxu0 0.0
  %3919 = vmatpush1.xpose.msra.mxu0 0.0
  %3920 = vmatprep.subr.mxu0 0.0
  %3921 = vmatpush1.xpose.msra.mxu0 0.0
  %3922 = vmatprep.subr.mxu0 0.0
  %3923 = vmatpush1.xpose.msra.mxu0 0.0
  %3924 = vmatprep.subr.mxu0 0.0
  %3925 = vmatpush1.xpose.msra.mxu0 0.0
  %3926 = vmatprep.subr.mxu0 0.0
  %3927 = vmatpush1.xpose.msra.mxu0 0.0
  %3928 = vmatprep.subr.mxu0 0.0
  %3929 = vmatpush1.xpose.msra.mxu0 0.0
  %3930 = vmatprep.subr.mxu0 0.0
  %3931 = vmatpush1.xpose.msra.mxu0 0.0
  %3932 = vmatprep.subr.mxu0 0.0
  %3933 = vmatpush1.xpose.msra.mxu0 0.0
  %3934 = vmatprep.subr.mxu0 0.0
  %3935 = vmatpush1.xpose.msra.mxu0 0.0
  %3936 = vmatprep.subr.mxu0 0.0
  %3937 = vmatpush1.xpose.msra.mxu0 0.0
  %3938 = vmatprep.subr.mxu0 0.0
  %3939 = vmatpush1.xpose.msra.mxu0 0.0
  %3940 = vmatprep.subr.mxu0 0.0
  %3941 = vmatpush1.xpose.msra.mxu0 0.0
  %3942 = vmatprep.subr.mxu0 0.0
  %3943 = vmatpush1.xpose.msra.mxu0 0.0
  %3944 = vmatprep.subr.mxu0 0.0
  %3945 = vmatpush1.xpose.msra.mxu0 0.0
  %3946 = vmatprep.subr.mxu0 0.0
  %3947 = vmatpush1.xpose.msra.mxu0 0.0
  %3948 = vmatprep.subr.mxu0 0.0
  %3949 = vmatpush1.xpose.msra.mxu0 0.0
  %3950 = vmatprep.subr.mxu0 0.0
  %3951 = vmatpush1.xpose.msra.mxu0 0.0
  %3952 = vmatprep.subr.mxu0 0.0
  %3953 = vmatpush1.xpose.msra.mxu0 0.0
  %3954 = vmatprep.subr.mxu0 0.0
  %3955 = vmatpush1.xpose.msra.mxu0 0.0
  %3956 = vmatprep.subr.mxu0 0.0
  %3957 = vmatpush1.xpose.msra.mxu0 0.0
  %3958 = vmatprep.subr.mxu0 0.0
  %3959 = vmatpush1.xpose.msra.mxu0 0.0
  %3960 = vmatprep.subr.mxu0 0.0
  %3961 = vmatpush1.xpose.msra.mxu0 0.0
  %3962 = vmatprep.subr.mxu0 0.0
  %3963 = vmatpush1.xpose.msra.mxu0 0.0
  %3964 = vmatprep.subr.mxu0 0.0
  %3965 = vmatpush1.xpose.msra.mxu0 0.0
  %3966 = vmatprep.subr.mxu0 0.0
  %3967 = vmatpush1.xpose.msra.mxu0 0.0
  %3968 = vmatprep.subr.mxu0 0.0
  %3969 = vmatpush1.xpose.msra.mxu0 0.0
  %3970 = vmatprep.subr.mxu0 0.0
  %3971 = vmatpush1.xpose.msra.mxu0 0.0
  %3972 = vmatprep.mubr.f32.mxu0 0.0
  %3973 = vmatmul.mubr.f32.gmra.mrb[0].mxu0 %v3904
  %v3974 = vpop.f32.mrb[0].mxu0
  %v3975 = vadd.f32 0.0, %v3974
  %v3976 = vpop.f32.mrb[0].mxu0
  %3977 = vdwg.mxu0
  %3978 = vrot.lane.b32.xlu0 %v2545, 104
  %v3979 = vpop.permute.xlu0 %3978
  %3980 = vrot.lane.b32.xlu0 %v2637, 104
  %v3981 = vpop.permute.xlu0 %3980
  %v3982 = vsel %vm734, %v3979, 0
  %v3984 = vsel %vm734, %v3981, 0
  %3986 = vmatprep.subr.mxu0 0.0
  %3987 = vmatpush1.xpose.msra.mxu0 %v3984
  %3988 = vmatprep.subr.mxu0 0.0
  %3989 = vmatpush1.xpose.msra.mxu0 0.0
  %3990 = vmatprep.subr.mxu0 0.0
  %3991 = vmatpush1.xpose.msra.mxu0 0.0
  %3992 = vmatprep.subr.mxu0 0.0
  %3993 = vmatpush1.xpose.msra.mxu0 0.0
  %3994 = vmatprep.subr.mxu0 0.0
  %3995 = vmatpush1.xpose.msra.mxu0 0.0
  %3996 = vmatprep.subr.mxu0 0.0
  %3997 = vmatpush1.xpose.msra.mxu0 0.0
  %3998 = vmatprep.subr.mxu0 0.0
  %3999 = vmatpush1.xpose.msra.mxu0 0.0
  %4000 = vmatprep.subr.mxu0 0.0
  %4001 = vmatpush1.xpose.msra.mxu0 0.0
  %4002 = vmatprep.subr.mxu0 0.0
  %4003 = vmatpush1.xpose.msra.mxu0 0.0
  %4004 = vmatprep.subr.mxu0 0.0
  %4005 = vmatpush1.xpose.msra.mxu0 0.0
  %4006 = vmatprep.subr.mxu0 0.0
  %4007 = vmatpush1.xpose.msra.mxu0 0.0
  %4008 = vmatprep.subr.mxu0 0.0
  %4009 = vmatpush1.xpose.msra.mxu0 0.0
  %4010 = vmatprep.subr.mxu0 0.0
  %4011 = vmatpush1.xpose.msra.mxu0 0.0
  %4012 = vmatprep.subr.mxu0 0.0
  %4013 = vmatpush1.xpose.msra.mxu0 0.0
  %4014 = vmatprep.subr.mxu0 0.0
  %4015 = vmatpush1.xpose.msra.mxu0 0.0
  %4016 = vmatprep.subr.mxu0 0.0
  %4017 = vmatpush1.xpose.msra.mxu0 0.0
  %4018 = vmatprep.subr.mxu0 0.0
  %4019 = vmatpush1.xpose.msra.mxu0 0.0
  %4020 = vmatprep.subr.mxu0 0.0
  %4021 = vmatpush1.xpose.msra.mxu0 0.0
  %4022 = vmatprep.subr.mxu0 0.0
  %4023 = vmatpush1.xpose.msra.mxu0 0.0
  %4024 = vmatprep.subr.mxu0 0.0
  %4025 = vmatpush1.xpose.msra.mxu0 0.0
  %4026 = vmatprep.subr.mxu0 0.0
  %4027 = vmatpush1.xpose.msra.mxu0 0.0
  %4028 = vmatprep.subr.mxu0 0.0
  %4029 = vmatpush1.xpose.msra.mxu0 0.0
  %4030 = vmatprep.subr.mxu0 0.0
  %4031 = vmatpush1.xpose.msra.mxu0 0.0
  %4032 = vmatprep.subr.mxu0 0.0
  %4033 = vmatpush1.xpose.msra.mxu0 0.0
  %4034 = vmatprep.subr.mxu0 0.0
  %4035 = vmatpush1.xpose.msra.mxu0 0.0
  %4036 = vmatprep.subr.mxu0 0.0
  %4037 = vmatpush1.xpose.msra.mxu0 0.0
  %4038 = vmatprep.subr.mxu0 0.0
  %4039 = vmatpush1.xpose.msra.mxu0 0.0
  %4040 = vmatprep.subr.mxu0 0.0
  %4041 = vmatpush1.xpose.msra.mxu0 0.0
  %4042 = vmatprep.subr.mxu0 0.0
  %4043 = vmatpush1.xpose.msra.mxu0 0.0
  %4044 = vmatprep.subr.mxu0 0.0
  %4045 = vmatpush1.xpose.msra.mxu0 0.0
  %4046 = vmatprep.subr.mxu0 0.0
  %4047 = vmatpush1.xpose.msra.mxu0 0.0
  %4048 = vmatprep.subr.mxu0 0.0
  %4049 = vmatpush1.xpose.msra.mxu0 0.0
  %4050 = vmatprep.mubr.f32.mxu0 0.0
  %4051 = vmatmul.mubr.f32.gmra.mrb[0].mxu0 %v3982
  %v4052 = vpop.f32.mrb[0].mxu0
  %v4053 = vadd.f32 0.0, %v4052
  %v4054 = vpop.f32.mrb[0].mxu0
  %4055 = vdwg.mxu0
  %v4056 = vmul.f32 %v3975, 0.35355338
  %v4057 = vmul.f32 %v4053, 0.35355338
  %v4058 = vadd.f32 %v4056, %v2804
  %v4059 = vadd.f32 %v4057, %v2808
  %v4060 = vsel %vm734, %v4058, -inf
  %4061 = vmax.xlane.f32.xlu0 %v4060
  %v4062 = vpop.xlane.xlu0 %4061
  %v4063 = vsel %vm734, %v4059, -inf
  %4064 = vmax.xlane.f32.xlu0 %v4063
  %v4065 = vpop.xlane.xlu0 %4064
  %v4066 = vsub.f32 %v4058, %v4062
  %v4067 = vsub.f32 %v4059, %v4065
  %v4068 = vmul.f32 %v4066, 1.442695
  %v4069 = vpow.pop %v4068
  %v4070 = vmul.f32 %v4067, 1.442695
  %v4071 = vpow.pop %v4070
  %v4072 = vsel %vm734, %v4069, 0.0
  %4073 = vadd.xlane.f32.xlu0 %v4072
  %v4074 = vpop.xlane.xlu0 %4073
  %v4075 = vsel %vm734, %v4071, 0.0
  %4076 = vadd.xlane.f32.xlu0 %v4075
  %v4077 = vpop.xlane.xlu0 %4076
  %v4078 = vrcp.pop %v4074
  %v4079 = vrcp.pop %v4077
  %v4080 = vmul.f32 %v4069, %v4078
  %v4081 = vmul.f32 %v4071, %v4079
  %4082 = vrot.lane.b32.xlu0 %v2632, 72
  %v4083 = vpop.permute.xlu0 %4082
  %v4086 = vsel %vm734, %v4080, 0
  %4088 = vmatprep.subr.mxu0 0.0
  %4089 = vmatpush1.msra.mxu0 %v4083
  %4090 = vmatprep.subr.mxu0 0.0
  %4091 = vmatpush1.msra.mxu0 0.0
  %4092 = vmatprep.subr.mxu0 0.0
  %4093 = vmatpush1.msra.mxu0 0.0
  %4094 = vmatprep.subr.mxu0 0.0
  %4095 = vmatpush1.msra.mxu0 0.0
  %4096 = vmatprep.subr.mxu0 0.0
  %4097 = vmatpush1.msra.mxu0 0.0
  %4098 = vmatprep.subr.mxu0 0.0
  %4099 = vmatpush1.msra.mxu0 0.0
  %4100 = vmatprep.subr.mxu0 0.0
  %4101 = vmatpush1.msra.mxu0 0.0
  %4102 = vmatprep.subr.mxu0 0.0
  %4103 = vmatpush1.msra.mxu0 0.0
  %4104 = vmatprep.subr.mxu0 0.0
  %4105 = vmatpush1.msra.mxu0 0.0
  %4106 = vmatprep.subr.mxu0 0.0
  %4107 = vmatpush1.msra.mxu0 0.0
  %4108 = vmatprep.subr.mxu0 0.0
  %4109 = vmatpush1.msra.mxu0 0.0
  %4110 = vmatprep.subr.mxu0 0.0
  %4111 = vmatpush1.msra.mxu0 0.0
  %4112 = vmatprep.subr.mxu0 0.0
  %4113 = vmatpush1.msra.mxu0 0.0
  %4114 = vmatprep.subr.mxu0 0.0
  %4115 = vmatpush1.msra.mxu0 0.0
  %4116 = vmatprep.subr.mxu0 0.0
  %4117 = vmatpush1.msra.mxu0 0.0
  %4118 = vmatprep.subr.mxu0 0.0
  %4119 = vmatpush1.msra.mxu0 0.0
  %4120 = vmatprep.subr.mxu0 0.0
  %4121 = vmatpush1.msra.mxu0 0.0
  %4122 = vmatprep.subr.mxu0 0.0
  %4123 = vmatpush1.msra.mxu0 0.0
  %4124 = vmatprep.subr.mxu0 0.0
  %4125 = vmatpush1.msra.mxu0 0.0
  %4126 = vmatprep.subr.mxu0 0.0
  %4127 = vmatpush1.msra.mxu0 0.0
  %4128 = vmatprep.subr.mxu0 0.0
  %4129 = vmatpush1.msra.mxu0 0.0
  %4130 = vmatprep.subr.mxu0 0.0
  %4131 = vmatpush1.msra.mxu0 0.0
  %4132 = vmatprep.subr.mxu0 0.0
  %4133 = vmatpush1.msra.mxu0 0.0
  %4134 = vmatprep.subr.mxu0 0.0
  %4135 = vmatpush1.msra.mxu0 0.0
  %4136 = vmatprep.subr.mxu0 0.0
  %4137 = vmatpush1.msra.mxu0 0.0
  %4138 = vmatprep.subr.mxu0 0.0
  %4139 = vmatpush1.msra.mxu0 0.0
  %4140 = vmatprep.subr.mxu0 0.0
  %4141 = vmatpush1.msra.mxu0 0.0
  %4142 = vmatprep.subr.mxu0 0.0
  %4143 = vmatpush1.msra.mxu0 0.0
  %4144 = vmatprep.subr.mxu0 0.0
  %4145 = vmatpush1.msra.mxu0 0.0
  %4146 = vmatprep.subr.mxu0 0.0
  %4147 = vmatpush1.msra.mxu0 0.0
  %4148 = vmatprep.subr.mxu0 0.0
  %4149 = vmatpush1.msra.mxu0 0.0
  %4150 = vmatprep.subr.mxu0 0.0
  %4151 = vmatpush1.msra.mxu0 0.0
  %4152 = vmatprep.mubr.f32.mxu0 0.0
  %4153 = vmatmul.mubr.f32.gmra.mrb[0].mxu0 %v4086
  %v4154 = vpop.f32.mrb[0].mxu0
  %v4155 = vadd.f32 0.0, %v4154
  %v4156 = vpop.f32.mrb[0].mxu0
  %4157 = vdwg.mxu0
  %4158 = vrot.lane.b32.xlu0 %v2637, 72
  %v4159 = vpop.permute.xlu0 %4158
  %v4162 = vsel %vm734, %v4081, 0
  %4164 = vmatprep.subr.mxu0 0.0
  %4165 = vmatpush1.msra.mxu0 %v4159
  %4166 = vmatprep.subr.mxu0 0.0
  %4167 = vmatpush1.msra.mxu0 0.0
  %4168 = vmatprep.subr.mxu0 0.0
  %4169 = vmatpush1.msra.mxu0 0.0
  %4170 = vmatprep.subr.mxu0 0.0
  %4171 = vmatpush1.msra.mxu0 0.0
  %4172 = vmatprep.subr.mxu0 0.0
  %4173 = vmatpush1.msra.mxu0 0.0
  %4174 = vmatprep.subr.mxu0 0.0
  %4175 = vmatpush1.msra.mxu0 0.0
  %4176 = vmatprep.subr.mxu0 0.0
  %4177 = vmatpush1.msra.mxu0 0.0
  %4178 = vmatprep.subr.mxu0 0.0
  %4179 = vmatpush1.msra.mxu0 0.0
  %4180 = vmatprep.subr.mxu0 0.0
  %4181 = vmatpush1.msra.mxu0 0.0
  %4182 = vmatprep.subr.mxu0 0.0
  %4183 = vmatpush1.msra.mxu0 0.0
  %4184 = vmatprep.subr.mxu0 0.0
  %4185 = vmatpush1.msra.mxu0 0.0
  %4186 = vmatprep.subr.mxu0 0.0
  %4187 = vmatpush1.msra.mxu0 0.0
  %4188 = vmatprep.subr.mxu0 0.0
  %4189 = vmatpush1.msra.mxu0 0.0
  %4190 = vmatprep.subr.mxu0 0.0
  %4191 = vmatpush1.msra.mxu0 0.0
  %4192 = vmatprep.subr.mxu0 0.0
  %4193 = vmatpush1.msra.mxu0 0.0
  %4194 = vmatprep.subr.mxu0 0.0
  %4195 = vmatpush1.msra.mxu0 0.0
  %4196 = vmatprep.subr.mxu0 0.0
  %4197 = vmatpush1.msra.mxu0 0.0
  %4198 = vmatprep.subr.mxu0 0.0
  %4199 = vmatpush1.msra.mxu0 0.0
  %4200 = vmatprep.subr.mxu0 0.0
  %4201 = vmatpush1.msra.mxu0 0.0
  %4202 = vmatprep.subr.mxu0 0.0
  %4203 = vmatpush1.msra.mxu0 0.0
  %4204 = vmatprep.subr.mxu0 0.0
  %4205 = vmatpush1.msra.mxu0 0.0
  %4206 = vmatprep.subr.mxu0 0.0
  %4207 = vmatpush1.msra.mxu0 0.0
  %4208 = vmatprep.subr.mxu0 0.0
  %4209 = vmatpush1.msra.mxu0 0.0
  %4210 = vmatprep.subr.mxu0 0.0
  %4211 = vmatpush1.msra.mxu0 0.0
  %4212 = vmatprep.subr.mxu0 0.0
  %4213 = vmatpush1.msra.mxu0 0.0
  %4214 = vmatprep.subr.mxu0 0.0
  %4215 = vmatpush1.msra.mxu0 0.0
  %4216 = vmatprep.subr.mxu0 0.0
  %4217 = vmatpush1.msra.mxu0 0.0
  %4218 = vmatprep.subr.mxu0 0.0
  %4219 = vmatpush1.msra.mxu0 0.0
  %4220 = vmatprep.subr.mxu0 0.0
  %4221 = vmatpush1.msra.mxu0 0.0
  %4222 = vmatprep.subr.mxu0 0.0
  %4223 = vmatpush1.msra.mxu0 0.0
  %4224 = vmatprep.subr.mxu0 0.0
  %4225 = vmatpush1.msra.mxu0 0.0
  %4226 = vmatprep.subr.mxu0 0.0
  %4227 = vmatpush1.msra.mxu0 0.0
  %4228 = vmatprep.mubr.f32.mxu0 0.0
  %4229 = vmatmul.mubr.f32.gmra.mrb[0].mxu0 %v4162
  %v4230 = vpop.f32.mrb[0].mxu0
  %v4231 = vadd.f32 0.0, %v4230
  %v4232 = vpop.f32.mrb[0].mxu0
  %4233 = vdwg.mxu0
  %v4235 = vsel %vm734, %v4155, 0
  %v4238 = vsel %vm734, %v4231, 0
  %4240 = vmatprep.subr.mxu0 0.0
  %4241 = vmatpush1.msra.mxu0 %v2643
  %4242 = vmatprep.subr.mxu0 0.0
  %4243 = vmatpush1.msra.mxu0 0.0
  %4244 = vmatprep.subr.mxu0 0.0
  %4245 = vmatpush1.msra.mxu0 0.0
  %4246 = vmatprep.subr.mxu0 0.0
  %4247 = vmatpush1.msra.mxu0 0.0
  %4248 = vmatprep.subr.mxu0 0.0
  %4249 = vmatpush1.msra.mxu0 0.0
  %4250 = vmatprep.subr.mxu0 0.0
  %4251 = vmatpush1.msra.mxu0 0.0
  %4252 = vmatprep.subr.mxu0 0.0
  %4253 = vmatpush1.msra.mxu0 0.0
  %4254 = vmatprep.subr.mxu0 0.0
  %4255 = vmatpush1.msra.mxu0 0.0
  %4256 = vmatprep.subr.mxu0 0.0
  %4257 = vmatpush1.msra.mxu0 0.0
  %4258 = vmatprep.subr.mxu0 0.0
  %4259 = vmatpush1.msra.mxu0 0.0
  %4260 = vmatprep.subr.mxu0 0.0
  %4261 = vmatpush1.msra.mxu0 0.0
  %4262 = vmatprep.subr.mxu0 0.0
  %4263 = vmatpush1.msra.mxu0 0.0
  %4264 = vmatprep.subr.mxu0 0.0
  %4265 = vmatpush1.msra.mxu0 0.0
  %4266 = vmatprep.subr.mxu0 0.0
  %4267 = vmatpush1.msra.mxu0 0.0
  %4268 = vmatprep.subr.mxu0 0.0
  %4269 = vmatpush1.msra.mxu0 0.0
  %4270 = vmatprep.subr.mxu0 0.0
  %4271 = vmatpush1.msra.mxu0 0.0
  %4272 = vmatprep.subr.mxu0 0.0
  %4273 = vmatpush1.msra.mxu0 0.0
  %4274 = vmatprep.subr.mxu0 0.0
  %4275 = vmatpush1.msra.mxu0 0.0
  %4276 = vmatprep.subr.mxu0 0.0
  %4277 = vmatpush1.msra.mxu0 0.0
  %4278 = vmatprep.subr.mxu0 0.0
  %4279 = vmatpush1.msra.mxu0 0.0
  %4280 = vmatprep.subr.mxu0 0.0
  %4281 = vmatpush1.msra.mxu0 0.0
  %4282 = vmatprep.subr.mxu0 0.0
  %4283 = vmatpush1.msra.mxu0 0.0
  %4284 = vmatprep.subr.mxu0 0.0
  %4285 = vmatpush1.msra.mxu0 0.0
  %4286 = vmatprep.subr.mxu0 0.0
  %4287 = vmatpush1.msra.mxu0 0.0
  %4288 = vmatprep.subr.mxu0 0.0
  %4289 = vmatpush1.msra.mxu0 0.0
  %4290 = vmatprep.subr.mxu0 0.0
  %4291 = vmatpush1.msra.mxu0 0.0
  %4292 = vmatprep.subr.mxu0 0.0
  %4293 = vmatpush1.msra.mxu0 0.0
  %4294 = vmatprep.subr.mxu0 0.0
  %4295 = vmatpush1.msra.mxu0 0.0
  %4296 = vmatprep.subr.mxu0 0.0
  %4297 = vmatpush1.msra.mxu0 0.0
  %4298 = vmatprep.subr.mxu0 0.0
  %4299 = vmatpush1.msra.mxu0 0.0
  %4300 = vmatprep.subr.mxu0 0.0
  %4301 = vmatpush1.msra.mxu0 0.0
  %4302 = vmatprep.subr.mxu0 0.0
  %4303 = vmatpush1.msra.mxu0 0.0
  %4304 = vmatprep.mubr.f32.mxu0 0.0
  %4305 = vmatmul.mubr.f32.gmra.mrb[0].mxu0 %v4235
  %v4306 = vpop.f32.mrb[0].mxu0
  %v4307 = vadd.f32 0.0, %v4306
  %v4308 = vpop.f32.mrb[0].mxu0
  %4309 = vmatprep.mubr.f32.mxu0 0.0
  %4310 = vmatmul.mubr.f32.gmra.mrb[0].mxu0 %v4238
  %v4311 = vpop.f32.mrb[0].mxu0
  %v4312 = vadd.f32 0.0, %v4311
  %v4313 = vpop.f32.mrb[0].mxu0
  %4314 = vdwg.mxu0
  %v4315 = vadd.f32 %v3898, %v4307
  %v4316 = vadd.f32 %v3899, %v4312
  %v4318 = vlaneseq
  %v4319 = vshrl.u32 %v4318, 7
  %v4320 = vsub.s32 0, %v4319
  %v4321 = vrot.slane %v2644, %v4320
  %v4323 = vadd.f32 %v4315, %v4321
  %v4324 = vadd.f32 %v4316, %v4321
  %v4325 = vadd.f32 %v2402, %v4323
  %v4326 = vadd.f32 %v2403, %v4324
  %v4327 = vsel %vm580, %v4325, 0.0
  %4328 = vadd.xlane.f32.xlu0 %v4327
  %v4329 = vpop.xlane.xlu0 %4328
  %v4330 = vsel %vm580, %v4326, 0.0
  %4331 = vadd.xlane.f32.xlu0 %v4330
  %v4332 = vpop.xlane.xlu0 %4331
  %v4333 = vmul.f32 %v4329, %v587
  %v4334 = vmul.f32 %v4332, %v587
  %v4335 = vsub.f32 %v4325, %v4333
  %v4336 = vsub.f32 %v4326, %v4334
  %v4337 = vmul.f32 %v4335, %v4335
  %v4338 = vmul.f32 %v4336, %v4336
  %v4339 = vsel %vm580, %v4337, 0.0
  %4340 = vadd.xlane.f32.xlu0 %v4339
  %v4341 = vpop.xlane.xlu0 %4340
  %v4342 = vsel %vm580, %v4338, 0.0
  %4343 = vadd.xlane.f32.xlu0 %v4342
  %v4344 = vpop.xlane.xlu0 %4343
  %v4345 = vmul.f32 %v4341, 0.032258064
  %v4346 = vmul.f32 %v4344, 0.032258064
  %v4347 = vrsqrt.pop %v4345
  %v4348 = vmul.f32 %v4345, %v4347
  %vm4349 = vcmp.eq.f32.partialorder %v4345, inf
  %v4350 = vsel %vm4349, %v4345, %v4348
  %vm4351 = vcmp.eq.f32.partialorder %v4345, 0.0
  %v4352 = vand.u32 %v4345, 2147483648
  %v4353 = vsel %vm4351, %v4352, %v4350
  %v4354 = vrsqrt.pop %v4346
  %v4355 = vmul.f32 %v4346, %v4354
  %vm4356 = vcmp.eq.f32.partialorder %v4346, inf
  %v4357 = vsel %vm4356, %v4346, %v4355
  %vm4358 = vcmp.eq.f32.partialorder %v4346, 0.0
  %v4359 = vand.u32 %v4346, 2147483648
  %v4360 = vsel %vm4358, %v4359, %v4357
  %v4361 = vlaneseq
  %v4362 = vshrl.u32 %v4361, 7
  %v4363 = vsub.s32 2, %v4362
  %v4364 = vrot.slane %v578, %v4363
  %v4365 = vmul.f32 %v4364, %v4335
  %v4366 = vmul.f32 %v4364, %v4336
  %v4367 = vadd.f32 %v4353, 1e-06
  %v4368 = vadd.f32 %v4360, 1e-06
  %v4369 = vrcp.pop %v4367
  %v4370 = vrcp.pop %v4368
  %v4371 = vmul.f32 %v4365, %v4369
  %v4372 = vmul.f32 %v4366, %v4370
  %v4373 = vlaneseq
  %v4374 = vshrl.u32 %v4373, 7
  %v4375 = vsub.s32 2, %v4374
  %v4376 = vrot.slane %v579, %v4375
  %v4377 = vadd.f32 %v4371, %v4376
  %v4378 = vadd.f32 %v4372, %v4376
  %v4379 = vld [vmem:[%s51] sm:$0xff]
  %v4380 = vld [vmem:[%s51 + $0x8] sm:$0xff]
  %v4381 = vld [vmem:[%s51 + $0x10] sm:$0xff]
  %v4382 = vld [vmem:[%s51 + $0x18] sm:$0xff]
  %v4383 = vld [vmem:[%s51 + $0x20] sm:$0xff]
  %v4384 = vld [vmem:[%s51 + $0x28] sm:$0xff]
  %vm4385 = vcmask 130048
  %v4387 = vsel %vm4385, %v564, 0
  %v4390 = vsel %vm4385, %v565, 0
  %4392 = vmatprep.subr.mxu0 0.0
  %4393 = vmatpush1.msra.mxu0 %v4383
  %4394 = vmatprep.subr.mxu0 0.0
  %4395 = vmatpush1.msra.mxu0 %v4384
  %4396 = vmatprep.subr.mxu0 0.0
  %4397 = vmatpush1.msra.mxu0 0.0
  %4398 = vmatprep.subr.mxu0 0.0
  %4399 = vmatpush1.msra.mxu0 0.0
  %4400 = vmatprep.subr.mxu0 0.0
  %4401 = vmatpush1.msra.mxu0 0.0
  %4402 = vmatprep.subr.mxu0 0.0
  %4403 = vmatpush1.msra.mxu0 0.0
  %4404 = vmatprep.subr.mxu0 0.0
  %4405 = vmatpush1.msra.mxu0 0.0
  %4406 = vmatprep.subr.mxu0 0.0
  %4407 = vmatpush1.msra.mxu0 0.0
  %4408 = vmatprep.subr.mxu0 0.0
  %4409 = vmatpush1.msra.mxu0 0.0
  %4410 = vmatprep.subr.mxu0 0.0
  %4411 = vmatpush1.msra.mxu0 0.0
  %4412 = vmatprep.subr.mxu0 0.0
  %4413 = vmatpush1.msra.mxu0 0.0
  %4414 = vmatprep.subr.mxu0 0.0
  %4415 = vmatpush1.msra.mxu0 0.0
  %4416 = vmatprep.subr.mxu0 0.0
  %4417 = vmatpush1.msra.mxu0 0.0
  %4418 = vmatprep.subr.mxu0 0.0
  %4419 = vmatpush1.msra.mxu0 0.0
  %4420 = vmatprep.subr.mxu0 0.0
  %4421 = vmatpush1.msra.mxu0 0.0
  %4422 = vmatprep.subr.mxu0 0.0
  %4423 = vmatpush1.msra.mxu0 0.0
  %4424 = vmatprep.subr.mxu0 0.0
  %4425 = vmatpush1.msra.mxu0 0.0
  %4426 = vmatprep.subr.mxu0 0.0
  %4427 = vmatpush1.msra.mxu0 0.0
  %4428 = vmatprep.subr.mxu0 0.0
  %4429 = vmatpush1.msra.mxu0 0.0
  %4430 = vmatprep.subr.mxu0 0.0
  %4431 = vmatpush1.msra.mxu0 0.0
  %4432 = vmatprep.subr.mxu0 0.0
  %4433 = vmatpush1.msra.mxu0 0.0
  %4434 = vmatprep.subr.mxu0 0.0
  %4435 = vmatpush1.msra.mxu0 0.0
  %4436 = vmatprep.subr.mxu0 0.0
  %4437 = vmatpush1.msra.mxu0 0.0
  %4438 = vmatprep.subr.mxu0 0.0
  %4439 = vmatpush1.msra.mxu0 0.0
  %4440 = vmatprep.subr.mxu0 0.0
  %4441 = vmatpush1.msra.mxu0 0.0
  %4442 = vmatprep.subr.mxu0 0.0
  %4443 = vmatpush1.msra.mxu0 0.0
  %4444 = vmatprep.subr.mxu0 0.0
  %4445 = vmatpush1.msra.mxu0 0.0
  %4446 = vmatprep.subr.mxu0 0.0
  %4447 = vmatpush1.msra.mxu0 0.0
  %4448 = vmatprep.subr.mxu0 0.0
  %4449 = vmatpush1.msra.mxu0 0.0
  %4450 = vmatprep.subr.mxu0 0.0
  %4451 = vmatpush1.msra.mxu0 0.0
  %4452 = vmatprep.subr.mxu0 0.0
  %4453 = vmatpush1.msra.mxu0 0.0
  %4454 = vmatprep.subr.mxu0 0.0
  %4455 = vmatpush1.msra.mxu0 0.0
  %4456 = vmatprep.mubr.f32.mxu0 0.0
  %4457 = vmatmul.mubr.f32.gmra.mrb[0].mxu0 %v4387
  %v4458 = vpop.f32.mrb[0].mxu0
  %v4459 = vadd.f32 0.0, %v4458
  %v4460 = vpop.f32.mrb[0].mxu0
  %4461 = vmatprep.mubr.f32.mxu0 0.0
  %4462 = vmatmul.mubr.f32.gmra.mrb[0].mxu0 %v4390
  %v4463 = vpop.f32.mrb[0].mxu0
  %v4464 = vadd.f32 0.0, %v4463
  %v4465 = vpop.f32.mrb[0].mxu0
  %4466 = vdwg.mxu0
  %v4468 = vsel %vm580, %v4377, 0
  %v4471 = vsel %vm580, %v4378, 0
  %4473 = vmatprep.subr.mxu0 0.0
  %4474 = vmatpush1.msra.mxu0 %v4379
  %4475 = vmatprep.subr.mxu0 0.0
  %4476 = vmatpush1.msra.mxu0 %v4380
  %4477 = vmatprep.subr.mxu0 0.0
  %4478 = vmatpush1.msra.mxu0 %v4381
  %4479 = vmatprep.subr.mxu0 0.0
  %4480 = vmatpush1.msra.mxu0 %v4382
  %4481 = vmatprep.subr.mxu0 0.0
  %4482 = vmatpush1.msra.mxu0 0.0
  %4483 = vmatprep.subr.mxu0 0.0
  %4484 = vmatpush1.msra.mxu0 0.0
  %4485 = vmatprep.subr.mxu0 0.0
  %4486 = vmatpush1.msra.mxu0 0.0
  %4487 = vmatprep.subr.mxu0 0.0
  %4488 = vmatpush1.msra.mxu0 0.0
  %4489 = vmatprep.subr.mxu0 0.0
  %4490 = vmatpush1.msra.mxu0 0.0
  %4491 = vmatprep.subr.mxu0 0.0
  %4492 = vmatpush1.msra.mxu0 0.0
  %4493 = vmatprep.subr.mxu0 0.0
  %4494 = vmatpush1.msra.mxu0 0.0
  %4495 = vmatprep.subr.mxu0 0.0
  %4496 = vmatpush1.msra.mxu0 0.0
  %4497 = vmatprep.subr.mxu0 0.0
  %4498 = vmatpush1.msra.mxu0 0.0
  %4499 = vmatprep.subr.mxu0 0.0
  %4500 = vmatpush1.msra.mxu0 0.0
  %4501 = vmatprep.subr.mxu0 0.0
  %4502 = vmatpush1.msra.mxu0 0.0
  %4503 = vmatprep.subr.mxu0 0.0
  %4504 = vmatpush1.msra.mxu0 0.0
  %4505 = vmatprep.subr.mxu0 0.0
  %4506 = vmatpush1.msra.mxu0 0.0
  %4507 = vmatprep.subr.mxu0 0.0
  %4508 = vmatpush1.msra.mxu0 0.0
  %4509 = vmatprep.subr.mxu0 0.0
  %4510 = vmatpush1.msra.mxu0 0.0
  %4511 = vmatprep.subr.mxu0 0.0
  %4512 = vmatpush1.msra.mxu0 0.0
  %4513 = vmatprep.subr.mxu0 0.0
  %4514 = vmatpush1.msra.mxu0 0.0
  %4515 = vmatprep.subr.mxu0 0.0
  %4516 = vmatpush1.msra.mxu0 0.0
  %4517 = vmatprep.subr.mxu0 0.0
  %4518 = vmatpush1.msra.mxu0 0.0
  %4519 = vmatprep.subr.mxu0 0.0
  %4520 = vmatpush1.msra.mxu0 0.0
  %4521 = vmatprep.subr.mxu0 0.0
  %4522 = vmatpush1.msra.mxu0 0.0
  %4523 = vmatprep.subr.mxu0 0.0
  %4524 = vmatpush1.msra.mxu0 0.0
  %4525 = vmatprep.subr.mxu0 0.0
  %4526 = vmatpush1.msra.mxu0 0.0
  %4527 = vmatprep.subr.mxu0 0.0
  %4528 = vmatpush1.msra.mxu0 0.0
  %4529 = vmatprep.subr.mxu0 0.0
  %4530 = vmatpush1.msra.mxu0 0.0
  %4531 = vmatprep.subr.mxu0 0.0
  %4532 = vmatpush1.msra.mxu0 0.0
  %4533 = vmatprep.subr.mxu0 0.0
  %4534 = vmatpush1.msra.mxu0 0.0
  %4535 = vmatprep.subr.mxu0 0.0
  %4536 = vmatpush1.msra.mxu0 0.0
  %4537 = vmatprep.mubr.f32.mxu0 0.0
  %4538 = vmatmul.mubr.f32.gmra.mrb[0].mxu0 %v4468
  %v4539 = vpop.f32.mrb[0].mxu0
  %v4540 = vadd.f32 %v4459, %v4539
  %v4541 = vpop.f32.mrb[0].mxu0
  %4542 = vmatprep.mubr.f32.mxu0 0.0
  %4543 = vmatmul.mubr.f32.gmra.mrb[0].mxu0 %v4471
  %v4544 = vpop.f32.mrb[0].mxu0
  %v4545 = vadd.f32 %v4464, %v4544
  %v4546 = vpop.f32.mrb[0].mxu0
  %4547 = vdwg.mxu0
  %v4548 = vld [vmem:[%s53] sm:$0x1]
  %v4550 = vlaneseq
  %v4551 = vshrl.u32 %v4550, 7
  %v4552 = vsub.s32 0, %v4551
  %v4553 = vrot.slane %v4548, %v4552
  %v4555 = vadd.f32 %v4540, %v4553
  %v4556 = vadd.f32 %v4545, %v4553
  %v4557 = vmax.f32 %v4555, 0.0
  %v4558 = vmax.f32 %v4556, 0.0
  %v4559 = vld [vmem:[%s55] sm:$0xff]
  %v4560 = vld [vmem:[%s55 + $0x8] sm:$0xff]
  %v4561 = vld [vmem:[%s55 + $0x10] sm:$0xff]
  %v4562 = vld [vmem:[%s55 + $0x18] sm:$0xff]
  %v4563 = vld [vmem:[%s55 + $0x20] sm:$0xff]
  %v4564 = vld [vmem:[%s55 + $0x28] sm:$0xff]
  %v4565 = vld [vmem:[%s55 + $0x30] sm:$0xff]
  %v4566 = vld [vmem:[%s55 + $0x38] sm:$0xff]
  %vm4567 = vcmask 523264
  %v4569 = vsel %vm4567, %v4557, 0
  %v4572 = vsel %vm4567, %v4558, 0
  %4574 = vmatprep.subr.mxu0 0.0
  %4575 = vmatpush1.msra.mxu0 %v4559
  %4576 = vmatprep.subr.mxu0 0.0
  %4577 = vmatpush1.msra.mxu0 %v4560
  %4578 = vmatprep.subr.mxu0 0.0
  %4579 = vmatpush1.msra.mxu0 %v4561
  %4580 = vmatprep.subr.mxu0 0.0
  %4581 = vmatpush1.msra.mxu0 %v4562
  %4582 = vmatprep.subr.mxu0 0.0
  %4583 = vmatpush1.msra.mxu0 %v4563
  %4584 = vmatprep.subr.mxu0 0.0
  %4585 = vmatpush1.msra.mxu0 %v4564
  %4586 = vmatprep.subr.mxu0 0.0
  %4587 = vmatpush1.msra.mxu0 %v4565
  %4588 = vmatprep.subr.mxu0 0.0
  %4589 = vmatpush1.msra.mxu0 %v4566
  %4590 = vmatprep.subr.mxu0 0.0
  %4591 = vmatpush1.msra.mxu0 0.0
  %4592 = vmatprep.subr.mxu0 0.0
  %4593 = vmatpush1.msra.mxu0 0.0
  %4594 = vmatprep.subr.mxu0 0.0
  %4595 = vmatpush1.msra.mxu0 0.0
  %4596 = vmatprep.subr.mxu0 0.0
  %4597 = vmatpush1.msra.mxu0 0.0
  %4598 = vmatprep.subr.mxu0 0.0
  %4599 = vmatpush1.msra.mxu0 0.0
  %4600 = vmatprep.subr.mxu0 0.0
  %4601 = vmatpush1.msra.mxu0 0.0
  %4602 = vmatprep.subr.mxu0 0.0
  %4603 = vmatpush1.msra.mxu0 0.0
  %4604 = vmatprep.subr.mxu0 0.0
  %4605 = vmatpush1.msra.mxu0 0.0
  %4606 = vmatprep.subr.mxu0 0.0
  %4607 = vmatpush1.msra.mxu0 0.0
  %4608 = vmatprep.subr.mxu0 0.0
  %4609 = vmatpush1.msra.mxu0 0.0
  %4610 = vmatprep.subr.mxu0 0.0
  %4611 = vmatpush1.msra.mxu0 0.0
  %4612 = vmatprep.subr.mxu0 0.0
  %4613 = vmatpush1.msra.mxu0 0.0
  %4614 = vmatprep.subr.mxu0 0.0
  %4615 = vmatpush1.msra.mxu0 0.0
  %4616 = vmatprep.subr.mxu0 0.0
  %4617 = vmatpush1.msra.mxu0 0.0
  %4618 = vmatprep.subr.mxu0 0.0
  %4619 = vmatpush1.msra.mxu0 0.0
  %4620 = vmatprep.subr.mxu0 0.0
  %4621 = vmatpush1.msra.mxu0 0.0
  %4622 = vmatprep.subr.mxu0 0.0
  %4623 = vmatpush1.msra.mxu0 0.0
  %4624 = vmatprep.subr.mxu0 0.0
  %4625 = vmatpush1.msra.mxu0 0.0
  %4626 = vmatprep.subr.mxu0 0.0
  %4627 = vmatpush1.msra.mxu0 0.0
  %4628 = vmatprep.subr.mxu0 0.0
  %4629 = vmatpush1.msra.mxu0 0.0
  %4630 = vmatprep.subr.mxu0 0.0
  %4631 = vmatpush1.msra.mxu0 0.0
  %4632 = vmatprep.subr.mxu0 0.0
  %4633 = vmatpush1.msra.mxu0 0.0
  %4634 = vmatprep.subr.mxu0 0.0
  %4635 = vmatpush1.msra.mxu0 0.0
  %4636 = vmatprep.subr.mxu0 0.0
  %4637 = vmatpush1.msra.mxu0 0.0
  %4638 = vmatprep.mubr.f32.mxu0 0.0
  %4639 = vmatmul.mubr.f32.gmra.mrb[0].mxu0 %v4569
  %v4640 = vpop.f32.mrb[0].mxu0
  %v4641 = vadd.f32 0.0, %v4640
  %v4642 = vpop.f32.mrb[0].mxu0
  %4643 = vmatprep.mubr.f32.mxu0 0.0
  %4644 = vmatmul.mubr.f32.gmra.mrb[0].mxu0 %v4572
  %v4645 = vpop.f32.mrb[0].mxu0
  %v4646 = vadd.f32 0.0, %v4645
  %v4647 = vpop.f32.mrb[0].mxu0
  %4648 = vdwg.mxu0
  %v4649 = vadd.f32 %v4325, %v4641
  %v4650 = vadd.f32 %v4326, %v4646
  %v4651 = vld [vmem:[%s57] sm:$0x1]
  %v4653 = vlaneseq
  %v4654 = vshrl.u32 %v4653, 7
  %v4655 = vsub.s32 0, %v4654
  %v4656 = vrot.slane %v4651, %v4655
  %v4658 = vadd.f32 %v4649, %v4656
  %v4659 = vadd.f32 %v4650, %v4656
  %s4660 = scalar_lea.vmem %s27, 4
  %v4661 = vld [vmem:[%s4660] sm:$0x7]
  %s4662 = scalar_lea.vmem %s29, 4
  %v4663 = vld [vmem:[%s4662] sm:$0x7]
  %v4664 = vsel %vm580, %v4658, 0.0
  %4665 = vadd.xlane.f32.xlu0 %v4664
  %v4666 = vpop.xlane.xlu0 %4665
  %v4667 = vsel %vm580, %v4659, 0.0
  %4668 = vadd.xlane.f32.xlu0 %v4667
  %v4669 = vpop.xlane.xlu0 %4668
  %v4670 = vmul.f32 %v4666, %v587
  %v4671 = vmul.f32 %v4669, %v587
  %v4672 = vsub.f32 %v4658, %v4670
  %v4673 = vsub.f32 %v4659, %v4671
  %v4674 = vmul.f32 %v4672, %v4672
  %v4675 = vmul.f32 %v4673, %v4673
  %v4676 = vsel %vm580, %v4674, 0.0
  %4677 = vadd.xlane.f32.xlu0 %v4676
  %v4678 = vpop.xlane.xlu0 %4677
  %v4679 = vsel %vm580, %v4675, 0.0
  %4680 = vadd.xlane.f32.xlu0 %v4679
  %v4681 = vpop.xlane.xlu0 %4680
  %v4682 = vmul.f32 %v4678, 0.032258064
  %v4683 = vmul.f32 %v4681, 0.032258064
  %v4684 = vrsqrt.pop %v4682
  %v4685 = vmul.f32 %v4682, %v4684
  %vm4686 = vcmp.eq.f32.partialorder %v4682, inf
  %v4687 = vsel %vm4686, %v4682, %v4685
  %vm4688 = vcmp.eq.f32.partialorder %v4682, 0.0
  %v4689 = vand.u32 %v4682, 2147483648
  %v4690 = vsel %vm4688, %v4689, %v4687
  %v4691 = vrsqrt.pop %v4683
  %v4692 = vmul.f32 %v4683, %v4691
  %vm4693 = vcmp.eq.f32.partialorder %v4683, inf
  %v4694 = vsel %vm4693, %v4683, %v4692
  %vm4695 = vcmp.eq.f32.partialorder %v4683, 0.0
  %v4696 = vand.u32 %v4683, 2147483648
  %v4697 = vsel %vm4695, %v4696, %v4694
  %v4698 = vlaneseq
  %v4699 = vshrl.u32 %v4698, 7
  %v4700 = vsub.s32 0, %v4699
  %v4701 = vrot.slane %v4661, %v4700
  %v4702 = vmul.f32 %v4701, %v4672
  %v4703 = vmul.f32 %v4701, %v4673
  %v4704 = vadd.f32 %v4690, 1e-06
  %v4705 = vadd.f32 %v4697, 1e-06
  %v4706 = vrcp.pop %v4704
  %v4707 = vrcp.pop %v4705
  %v4708 = vmul.f32 %v4702, %v4706
  %v4709 = vmul.f32 %v4703, %v4707
  %v4710 = vlaneseq
  %v4711 = vshrl.u32 %v4710, 7
  %v4712 = vsub.s32 0, %v4711
  %v4713 = vrot.slane %v4663, %v4712
  %v4714 = vadd.f32 %v4708, %v4713
  %v4715 = vadd.f32 %v4709, %v4713
  %s4716 = scalar_lea.vmem %s31, 32
  %v4717 = vld [vmem:[%s4716] sm:$0xff]
  %v4718 = vld [vmem:[%s4716 + $0x8] sm:$0xff]
  %v4719 = vld [vmem:[%s4716 + $0x10] sm:$0xff]
  %v4720 = vld [vmem:[%s4716 + $0x18] sm:$0xff]
  %s4721 = scalar_lea.vmem %s33, 1
  %v4722 = vld [vmem:[%s4721] sm:$0x1]
  %v4724 = vlaneseq
  %v4725 = vshrl.u32 %v4724, 7
  %v4726 = vsub.s32 0, %v4725
  %v4727 = vrot.slane %v4722, %v4726
  %v4730 = vsel %vm580, %v4714, 0
  %v4733 = vsel %vm580, %v4715, 0
  %4735 = vmatprep.subr.mxu0 0.0
  %4736 = vmatpush1.msra.mxu0 %v4717
  %4737 = vmatprep.subr.mxu0 0.0
  %4738 = vmatpush1.msra.mxu0 %v4718
  %4739 = vmatprep.subr.mxu0 0.0
  %4740 = vmatpush1.msra.mxu0 %v4719
  %4741 = vmatprep.subr.mxu0 0.0
  %4742 = vmatpush1.msra.mxu0 %v4720
  %4743 = vmatprep.subr.mxu0 0.0
  %4744 = vmatpush1.msra.mxu0 0.0
  %4745 = vmatprep.subr.mxu0 0.0
  %4746 = vmatpush1.msra.mxu0 0.0
  %4747 = vmatprep.subr.mxu0 0.0
  %4748 = vmatpush1.msra.mxu0 0.0
  %4749 = vmatprep.subr.mxu0 0.0
  %4750 = vmatpush1.msra.mxu0 0.0
  %4751 = vmatprep.subr.mxu0 0.0
  %4752 = vmatpush1.msra.mxu0 0.0
  %4753 = vmatprep.subr.mxu0 0.0
  %4754 = vmatpush1.msra.mxu0 0.0
  %4755 = vmatprep.subr.mxu0 0.0
  %4756 = vmatpush1.msra.mxu0 0.0
  %4757 = vmatprep.subr.mxu0 0.0
  %4758 = vmatpush1.msra.mxu0 0.0
  %4759 = vmatprep.subr.mxu0 0.0
  %4760 = vmatpush1.msra.mxu0 0.0
  %4761 = vmatprep.subr.mxu0 0.0
  %4762 = vmatpush1.msra.mxu0 0.0
  %4763 = vmatprep.subr.mxu0 0.0
  %4764 = vmatpush1.msra.mxu0 0.0
  %4765 = vmatprep.subr.mxu0 0.0
  %4766 = vmatpush1.msra.mxu0 0.0
  %4767 = vmatprep.subr.mxu0 0.0
  %4768 = vmatpush1.msra.mxu0 0.0
  %4769 = vmatprep.subr.mxu0 0.0
  %4770 = vmatpush1.msra.mxu0 0.0
  %4771 = vmatprep.subr.mxu0 0.0
  %4772 = vmatpush1.msra.mxu0 0.0
  %4773 = vmatprep.subr.mxu0 0.0
  %4774 = vmatpush1.msra.mxu0 0.0
  %4775 = vmatprep.subr.mxu0 0.0
  %4776 = vmatpush1.msra.mxu0 0.0
  %4777 = vmatprep.subr.mxu0 0.0
  %4778 = vmatpush1.msra.mxu0 0.0
  %4779 = vmatprep.subr.mxu0 0.0
  %4780 = vmatpush1.msra.mxu0 0.0
  %4781 = vmatprep.subr.mxu0 0.0
  %4782 = vmatpush1.msra.mxu0 0.0
  %4783 = vmatprep.subr.mxu0 0.0
  %4784 = vmatpush1.msra.mxu0 0.0
  %4785 = vmatprep.subr.mxu0 0.0
  %4786 = vmatpush1.msra.mxu0 0.0
  %4787 = vmatprep.subr.mxu0 0.0
  %4788 = vmatpush1.msra.mxu0 0.0
  %4789 = vmatprep.subr.mxu0 0.0
  %4790 = vmatpush1.msra.mxu0 0.0
  %4791 = vmatprep.subr.mxu0 0.0
  %4792 = vmatpush1.msra.mxu0 0.0
  %4793 = vmatprep.subr.mxu0 0.0
  %4794 = vmatpush1.msra.mxu0 0.0
  %4795 = vmatprep.subr.mxu0 0.0
  %4796 = vmatpush1.msra.mxu0 0.0
  %4797 = vmatprep.subr.mxu0 0.0
  %4798 = vmatpush1.msra.mxu0 0.0
  %4799 = vmatprep.mubr.f32.mxu0 0.0
  %4800 = vmatmul.mubr.f32.gmra.mrb[0].mxu0 %v4730
  %v4801 = vpop.f32.mrb[0].mxu0
  %v4802 = vadd.f32 %v4727, %v4801
  %v4803 = vpop.f32.mrb[0].mxu0
  %4804 = vmatprep.mubr.f32.mxu0 0.0
  %4805 = vmatmul.mubr.f32.gmra.mrb[0].mxu0 %v4733
  %v4806 = vpop.f32.mrb[0].mxu0
  %v4807 = vadd.f32 %v4727, %v4806
  %v4808 = vpop.f32.mrb[0].mxu0
  %4809 = vdwg.mxu0
  %s4810 = scalar_lea.vmem %s35, 32
  %v4811 = vld [vmem:[%s4810] sm:$0xff]
  %v4812 = vld [vmem:[%s4810 + $0x8] sm:$0xff]
  %v4813 = vld [vmem:[%s4810 + $0x10] sm:$0xff]
  %v4814 = vld [vmem:[%s4810 + $0x18] sm:$0xff]
  %s4815 = scalar_lea.vmem %s37, 1
  %v4816 = vld [vmem:[%s4815] sm:$0x1]
  %4818 = vrot.lane.b32.xlu0 %v4802, 96
  %v4819 = vpop.permute.xlu0 %4818
  %v4820 = vsel %vm734, %v4802, 0
  %v4822 = vsel %vm734, %v4819, 0
  %4824 = vmatprep.subr.mxu0 0.0
  %4825 = vmatpush1.xpose.msra.mxu0 %v4822
  %4826 = vmatprep.subr.mxu0 0.0
  %4827 = vmatpush1.xpose.msra.mxu0 0.0
  %4828 = vmatprep.subr.mxu0 0.0
  %4829 = vmatpush1.xpose.msra.mxu0 0.0
  %4830 = vmatprep.subr.mxu0 0.0
  %4831 = vmatpush1.xpose.msra.mxu0 0.0
  %4832 = vmatprep.subr.mxu0 0.0
  %4833 = vmatpush1.xpose.msra.mxu0 0.0
  %4834 = vmatprep.subr.mxu0 0.0
  %4835 = vmatpush1.xpose.msra.mxu0 0.0
  %4836 = vmatprep.subr.mxu0 0.0
  %4837 = vmatpush1.xpose.msra.mxu0 0.0
  %4838 = vmatprep.subr.mxu0 0.0
  %4839 = vmatpush1.xpose.msra.mxu0 0.0
  %4840 = vmatprep.subr.mxu0 0.0
  %4841 = vmatpush1.xpose.msra.mxu0 0.0
  %4842 = vmatprep.subr.mxu0 0.0
  %4843 = vmatpush1.xpose.msra.mxu0 0.0
  %4844 = vmatprep.subr.mxu0 0.0
  %4845 = vmatpush1.xpose.msra.mxu0 0.0
  %4846 = vmatprep.subr.mxu0 0.0
  %4847 = vmatpush1.xpose.msra.mxu0 0.0
  %4848 = vmatprep.subr.mxu0 0.0
  %4849 = vmatpush1.xpose.msra.mxu0 0.0
  %4850 = vmatprep.subr.mxu0 0.0
  %4851 = vmatpush1.xpose.msra.mxu0 0.0
  %4852 = vmatprep.subr.mxu0 0.0
  %4853 = vmatpush1.xpose.msra.mxu0 0.0
  %4854 = vmatprep.subr.mxu0 0.0
  %4855 = vmatpush1.xpose.msra.mxu0 0.0
  %4856 = vmatprep.subr.mxu0 0.0
  %4857 = vmatpush1.xpose.msra.mxu0 0.0
  %4858 = vmatprep.subr.mxu0 0.0
  %4859 = vmatpush1.xpose.msra.mxu0 0.0
  %4860 = vmatprep.subr.mxu0 0.0
  %4861 = vmatpush1.xpose.msra.mxu0 0.0
  %4862 = vmatprep.subr.mxu0 0.0
  %4863 = vmatpush1.xpose.msra.mxu0 0.0
  %4864 = vmatprep.subr.mxu0 0.0
  %4865 = vmatpush1.xpose.msra.mxu0 0.0
  %4866 = vmatprep.subr.mxu0 0.0
  %4867 = vmatpush1.xpose.msra.mxu0 0.0
  %4868 = vmatprep.subr.mxu0 0.0
  %4869 = vmatpush1.xpose.msra.mxu0 0.0
  %4870 = vmatprep.subr.mxu0 0.0
  %4871 = vmatpush1.xpose.msra.mxu0 0.0
  %4872 = vmatprep.subr.mxu0 0.0
  %4873 = vmatpush1.xpose.msra.mxu0 0.0
  %4874 = vmatprep.subr.mxu0 0.0
  %4875 = vmatpush1.xpose.msra.mxu0 0.0
  %4876 = vmatprep.subr.mxu0 0.0
  %4877 = vmatpush1.xpose.msra.mxu0 0.0
  %4878 = vmatprep.subr.mxu0 0.0
  %4879 = vmatpush1.xpose.msra.mxu0 0.0
  %4880 = vmatprep.subr.mxu0 0.0
  %4881 = vmatpush1.xpose.msra.mxu0 0.0
  %4882 = vmatprep.subr.mxu0 0.0
  %4883 = vmatpush1.xpose.msra.mxu0 0.0
  %4884 = vmatprep.subr.mxu0 0.0
  %4885 = vmatpush1.xpose.msra.mxu0 0.0
  %4886 = vmatprep.subr.mxu0 0.0
  %4887 = vmatpush1.xpose.msra.mxu0 0.0
  %4888 = vmatprep.mubr.f32.mxu0 0.0
  %4889 = vmatmul.mubr.f32.gmra.mrb[0].mxu0 %v4820
  %v4890 = vpop.f32.mrb[0].mxu0
  %v4891 = vadd.f32 0.0, %v4890
  %v4892 = vpop.f32.mrb[0].mxu0
  %4893 = vdwg.mxu0
  %4895 = vrot.lane.b32.xlu0 %v4807, 96
  %v4896 = vpop.permute.xlu0 %4895
  %v4897 = vsel %vm734, %v4807, 0
  %v4899 = vsel %vm734, %v4896, 0
  %4901 = vmatprep.subr.mxu0 0.0
  %4902 = vmatpush1.xpose.msra.mxu0 %v4899
  %4903 = vmatprep.subr.mxu0 0.0
  %4904 = vmatpush1.xpose.msra.mxu0 0.0
  %4905 = vmatprep.subr.mxu0 0.0
  %4906 = vmatpush1.xpose.msra.mxu0 0.0
  %4907 = vmatprep.subr.mxu0 0.0
  %4908 = vmatpush1.xpose.msra.mxu0 0.0
  %4909 = vmatprep.subr.mxu0 0.0
  %4910 = vmatpush1.xpose.msra.mxu0 0.0
  %4911 = vmatprep.subr.mxu0 0.0
  %4912 = vmatpush1.xpose.msra.mxu0 0.0
  %4913 = vmatprep.subr.mxu0 0.0
  %4914 = vmatpush1.xpose.msra.mxu0 0.0
  %4915 = vmatprep.subr.mxu0 0.0
  %4916 = vmatpush1.xpose.msra.mxu0 0.0
  %4917 = vmatprep.subr.mxu0 0.0
  %4918 = vmatpush1.xpose.msra.mxu0 0.0
  %4919 = vmatprep.subr.mxu0 0.0
  %4920 = vmatpush1.xpose.msra.mxu0 0.0
  %4921 = vmatprep.subr.mxu0 0.0
  %4922 = vmatpush1.xpose.msra.mxu0 0.0
  %4923 = vmatprep.subr.mxu0 0.0
  %4924 = vmatpush1.xpose.msra.mxu0 0.0
  %4925 = vmatprep.subr.mxu0 0.0
  %4926 = vmatpush1.xpose.msra.mxu0 0.0
  %4927 = vmatprep.subr.mxu0 0.0
  %4928 = vmatpush1.xpose.msra.mxu0 0.0
  %4929 = vmatprep.subr.mxu0 0.0
  %4930 = vmatpush1.xpose.msra.mxu0 0.0
  %4931 = vmatprep.subr.mxu0 0.0
  %4932 = vmatpush1.xpose.msra.mxu0 0.0
  %4933 = vmatprep.subr.mxu0 0.0
  %4934 = vmatpush1.xpose.msra.mxu0 0.0
  %4935 = vmatprep.subr.mxu0 0.0
  %4936 = vmatpush1.xpose.msra.mxu0 0.0
  %4937 = vmatprep.subr.mxu0 0.0
  %4938 = vmatpush1.xpose.msra.mxu0 0.0
  %4939 = vmatprep.subr.mxu0 0.0
  %4940 = vmatpush1.xpose.msra.mxu0 0.0
  %4941 = vmatprep.subr.mxu0 0.0
  %4942 = vmatpush1.xpose.msra.mxu0 0.0
  %4943 = vmatprep.subr.mxu0 0.0
  %4944 = vmatpush1.xpose.msra.mxu0 0.0
  %4945 = vmatprep.subr.mxu0 0.0
  %4946 = vmatpush1.xpose.msra.mxu0 0.0
  %4947 = vmatprep.subr.mxu0 0.0
  %4948 = vmatpush1.xpose.msra.mxu0 0.0
  %4949 = vmatprep.subr.mxu0 0.0
  %4950 = vmatpush1.xpose.msra.mxu0 0.0
  %4951 = vmatprep.subr.mxu0 0.0
  %4952 = vmatpush1.xpose.msra.mxu0 0.0
  %4953 = vmatprep.subr.mxu0 0.0
  %4954 = vmatpush1.xpose.msra.mxu0 0.0
  %4955 = vmatprep.subr.mxu0 0.0
  %4956 = vmatpush1.xpose.msra.mxu0 0.0
  %4957 = vmatprep.subr.mxu0 0.0
  %4958 = vmatpush1.xpose.msra.mxu0 0.0
  %4959 = vmatprep.subr.mxu0 0.0
  %4960 = vmatpush1.xpose.msra.mxu0 0.0
  %4961 = vmatprep.subr.mxu0 0.0
  %4962 = vmatpush1.xpose.msra.mxu0 0.0
  %4963 = vmatprep.subr.mxu0 0.0
  %4964 = vmatpush1.xpose.msra.mxu0 0.0
  %4965 = vmatprep.mubr.f32.mxu0 0.0
  %4966 = vmatmul.mubr.f32.gmra.mrb[0].mxu0 %v4897
  %v4967 = vpop.f32.mrb[0].mxu0
  %v4968 = vadd.f32 0.0, %v4967
  %v4969 = vpop.f32.mrb[0].mxu0
  %4970 = vdwg.mxu0
  %v4971 = vmul.f32 %v4891, 0.35355338
  %v4972 = vmul.f32 %v4968, 0.35355338
  %v4973 = vadd.f32 %v4971, %v570
  %v4974 = vadd.f32 %v4972, %v571
  %v4975 = vsel %vm734, %v4973, -inf
  %4976 = vmax.xlane.f32.xlu0 %v4975
  %v4977 = vpop.xlane.xlu0 %4976
  %v4978 = vsel %vm734, %v4974, -inf
  %4979 = vmax.xlane.f32.xlu0 %v4978
  %v4980 = vpop.xlane.xlu0 %4979
  %v4981 = vsub.f32 %v4973, %v4977
  %v4982 = vsub.f32 %v4974, %v4980
  %v4983 = vmul.f32 %v4981, 1.442695
  %v4984 = vpow.pop %v4983
  %v4985 = vmul.f32 %v4982, 1.442695
  %v4986 = vpow.pop %v4985
  %v4987 = vsel %vm734, %v4984, 0.0
  %4988 = vadd.xlane.f32.xlu0 %v4987
  %v4989 = vpop.xlane.xlu0 %4988
  %v4990 = vsel %vm734, %v4986, 0.0
  %4991 = vadd.xlane.f32.xlu0 %v4990
  %v4992 = vpop.xlane.xlu0 %4991
  %v4993 = vrcp.pop %v4989
  %v4994 = vrcp.pop %v4992
  %v4995 = vmul.f32 %v4984, %v4993
  %v4996 = vmul.f32 %v4986, %v4994
  %4997 = vrot.lane.b32.xlu0 %v4802, 64
  %v4998 = vpop.permute.xlu0 %4997
  %v5001 = vsel %vm734, %v4995, 0
  %5003 = vmatprep.subr.mxu0 0.0
  %5004 = vmatpush1.msra.mxu0 %v4998
  %5005 = vmatprep.subr.mxu0 0.0
  %5006 = vmatpush1.msra.mxu0 0.0
  %5007 = vmatprep.subr.mxu0 0.0
  %5008 = vmatpush1.msra.mxu0 0.0
  %5009 = vmatprep.subr.mxu0 0.0
  %5010 = vmatpush1.msra.mxu0 0.0
  %5011 = vmatprep.subr.mxu0 0.0
  %5012 = vmatpush1.msra.mxu0 0.0
  %5013 = vmatprep.subr.mxu0 0.0
  %5014 = vmatpush1.msra.mxu0 0.0
  %5015 = vmatprep.subr.mxu0 0.0
  %5016 = vmatpush1.msra.mxu0 0.0
  %5017 = vmatprep.subr.mxu0 0.0
  %5018 = vmatpush1.msra.mxu0 0.0
  %5019 = vmatprep.subr.mxu0 0.0
  %5020 = vmatpush1.msra.mxu0 0.0
  %5021 = vmatprep.subr.mxu0 0.0
  %5022 = vmatpush1.msra.mxu0 0.0
  %5023 = vmatprep.subr.mxu0 0.0
  %5024 = vmatpush1.msra.mxu0 0.0
  %5025 = vmatprep.subr.mxu0 0.0
  %5026 = vmatpush1.msra.mxu0 0.0
  %5027 = vmatprep.subr.mxu0 0.0
  %5028 = vmatpush1.msra.mxu0 0.0
  %5029 = vmatprep.subr.mxu0 0.0
  %5030 = vmatpush1.msra.mxu0 0.0
  %5031 = vmatprep.subr.mxu0 0.0
  %5032 = vmatpush1.msra.mxu0 0.0
  %5033 = vmatprep.subr.mxu0 0.0
  %5034 = vmatpush1.msra.mxu0 0.0
  %5035 = vmatprep.subr.mxu0 0.0
  %5036 = vmatpush1.msra.mxu0 0.0
  %5037 = vmatprep.subr.mxu0 0.0
  %5038 = vmatpush1.msra.mxu0 0.0
  %5039 = vmatprep.subr.mxu0 0.0
  %5040 = vmatpush1.msra.mxu0 0.0
  %5041 = vmatprep.subr.mxu0 0.0
  %5042 = vmatpush1.msra.mxu0 0.0
  %5043 = vmatprep.subr.mxu0 0.0
  %5044 = vmatpush1.msra.mxu0 0.0
  %5045 = vmatprep.subr.mxu0 0.0
  %5046 = vmatpush1.msra.mxu0 0.0
  %5047 = vmatprep.subr.mxu0 0.0
  %5048 = vmatpush1.msra.mxu0 0.0
  %5049 = vmatprep.subr.mxu0 0.0
  %5050 = vmatpush1.msra.mxu0 0.0
  %5051 = vmatprep.subr.mxu0 0.0
  %5052 = vmatpush1.msra.mxu0 0.0
  %5053 = vmatprep.subr.mxu0 0.0
  %5054 = vmatpush1.msra.mxu0 0.0
  %5055 = vmatprep.subr.mxu0 0.0
  %5056 = vmatpush1.msra.mxu0 0.0
  %5057 = vmatprep.subr.mxu0 0.0
  %5058 = vmatpush1.msra.mxu0 0.0
  %5059 = vmatprep.subr.mxu0 0.0
  %5060 = vmatpush1.msra.mxu0 0.0
  %5061 = vmatprep.subr.mxu0 0.0
  %5062 = vmatpush1.msra.mxu0 0.0
  %5063 = vmatprep.subr.mxu0 0.0
  %5064 = vmatpush1.msra.mxu0 0.0
  %5065 = vmatprep.subr.mxu0 0.0
  %5066 = vmatpush1.msra.mxu0 0.0
  %5067 = vmatprep.mubr.f32.mxu0 0.0
  %5068 = vmatmul.mubr.f32.gmra.mrb[0].mxu0 %v5001
  %v5069 = vpop.f32.mrb[0].mxu0
  %v5070 = vadd.f32 0.0, %v5069
  %v5071 = vpop.f32.mrb[0].mxu0
  %5072 = vdwg.mxu0
  %5073 = vrot.lane.b32.xlu0 %v4807, 64
  %v5074 = vpop.permute.xlu0 %5073
  %v5077 = vsel %vm734, %v4996, 0
  %5079 = vmatprep.subr.mxu0 0.0
  %5080 = vmatpush1.msra.mxu0 %v5074
  %5081 = vmatprep.subr.mxu0 0.0
  %5082 = vmatpush1.msra.mxu0 0.0
  %5083 = vmatprep.subr.mxu0 0.0
  %5084 = vmatpush1.msra.mxu0 0.0
  %5085 = vmatprep.subr.mxu0 0.0
  %5086 = vmatpush1.msra.mxu0 0.0
  %5087 = vmatprep.subr.mxu0 0.0
  %5088 = vmatpush1.msra.mxu0 0.0
  %5089 = vmatprep.subr.mxu0 0.0
  %5090 = vmatpush1.msra.mxu0 0.0
  %5091 = vmatprep.subr.mxu0 0.0
  %5092 = vmatpush1.msra.mxu0 0.0
  %5093 = vmatprep.subr.mxu0 0.0
  %5094 = vmatpush1.msra.mxu0 0.0
  %5095 = vmatprep.subr.mxu0 0.0
  %5096 = vmatpush1.msra.mxu0 0.0
  %5097 = vmatprep.subr.mxu0 0.0
  %5098 = vmatpush1.msra.mxu0 0.0
  %5099 = vmatprep.subr.mxu0 0.0
  %5100 = vmatpush1.msra.mxu0 0.0
  %5101 = vmatprep.subr.mxu0 0.0
  %5102 = vmatpush1.msra.mxu0 0.0
  %5103 = vmatprep.subr.mxu0 0.0
  %5104 = vmatpush1.msra.mxu0 0.0
  %5105 = vmatprep.subr.mxu0 0.0
  %5106 = vmatpush1.msra.mxu0 0.0
  %5107 = vmatprep.subr.mxu0 0.0
  %5108 = vmatpush1.msra.mxu0 0.0
  %5109 = vmatprep.subr.mxu0 0.0
  %5110 = vmatpush1.msra.mxu0 0.0
  %5111 = vmatprep.subr.mxu0 0.0
  %5112 = vmatpush1.msra.mxu0 0.0
  %5113 = vmatprep.subr.mxu0 0.0
  %5114 = vmatpush1.msra.mxu0 0.0
  %5115 = vmatprep.subr.mxu0 0.0
  %5116 = vmatpush1.msra.mxu0 0.0
  %5117 = vmatprep.subr.mxu0 0.0
  %5118 = vmatpush1.msra.mxu0 0.0
  %5119 = vmatprep.subr.mxu0 0.0
  %5120 = vmatpush1.msra.mxu0 0.0
  %5121 = vmatprep.subr.mxu0 0.0
  %5122 = vmatpush1.msra.mxu0 0.0
  %5123 = vmatprep.subr.mxu0 0.0
  %5124 = vmatpush1.msra.mxu0 0.0
  %5125 = vmatprep.subr.mxu0 0.0
  %5126 = vmatpush1.msra.mxu0 0.0
  %5127 = vmatprep.subr.mxu0 0.0
  %5128 = vmatpush1.msra.mxu0 0.0
  %5129 = vmatprep.subr.mxu0 0.0
  %5130 = vmatpush1.msra.mxu0 0.0
  %5131 = vmatprep.subr.mxu0 0.0
  %5132 = vmatpush1.msra.mxu0 0.0
  %5133 = vmatprep.subr.mxu0 0.0
  %5134 = vmatpush1.msra.mxu0 0.0
  %5135 = vmatprep.subr.mxu0 0.0
  %5136 = vmatpush1.msra.mxu0 0.0
  %5137 = vmatprep.subr.mxu0 0.0
  %5138 = vmatpush1.msra.mxu0 0.0
  %5139 = vmatprep.subr.mxu0 0.0
  %5140 = vmatpush1.msra.mxu0 0.0
  %5141 = vmatprep.subr.mxu0 0.0
  %5142 = vmatpush1.msra.mxu0 0.0
  %5143 = vmatprep.mubr.f32.mxu0 0.0
  %5144 = vmatmul.mubr.f32.gmra.mrb[0].mxu0 %v5077
  %v5145 = vpop.f32.mrb[0].mxu0
  %v5146 = vadd.f32 0.0, %v5145
  %v5147 = vpop.f32.mrb[0].mxu0
  %5148 = vdwg.mxu0
  %5149 = vrot.lane.b32.xlu0 %v4802, 120
  %v5150 = vpop.permute.xlu0 %5149
  %5151 = vrot.lane.b32.xlu0 %v4802, 88
  %v5152 = vpop.permute.xlu0 %5151
  %v5153 = vsel %vm734, %v5150, 0
  %v5155 = vsel %vm734, %v5152, 0
  %5157 = vmatprep.subr.mxu0 0.0
  %5158 = vmatpush1.xpose.msra.mxu0 %v5155
  %5159 = vmatprep.subr.mxu0 0.0
  %5160 = vmatpush1.xpose.msra.mxu0 0.0
  %5161 = vmatprep.subr.mxu0 0.0
  %5162 = vmatpush1.xpose.msra.mxu0 0.0
  %5163 = vmatprep.subr.mxu0 0.0
  %5164 = vmatpush1.xpose.msra.mxu0 0.0
  %5165 = vmatprep.subr.mxu0 0.0
  %5166 = vmatpush1.xpose.msra.mxu0 0.0
  %5167 = vmatprep.subr.mxu0 0.0
  %5168 = vmatpush1.xpose.msra.mxu0 0.0
  %5169 = vmatprep.subr.mxu0 0.0
  %5170 = vmatpush1.xpose.msra.mxu0 0.0
  %5171 = vmatprep.subr.mxu0 0.0
  %5172 = vmatpush1.xpose.msra.mxu0 0.0
  %5173 = vmatprep.subr.mxu0 0.0
  %5174 = vmatpush1.xpose.msra.mxu0 0.0
  %5175 = vmatprep.subr.mxu0 0.0
  %5176 = vmatpush1.xpose.msra.mxu0 0.0
  %5177 = vmatprep.subr.mxu0 0.0
  %5178 = vmatpush1.xpose.msra.mxu0 0.0
  %5179 = vmatprep.subr.mxu0 0.0
  %5180 = vmatpush1.xpose.msra.mxu0 0.0
  %5181 = vmatprep.subr.mxu0 0.0
  %5182 = vmatpush1.xpose.msra.mxu0 0.0
  %5183 = vmatprep.subr.mxu0 0.0
  %5184 = vmatpush1.xpose.msra.mxu0 0.0
  %5185 = vmatprep.subr.mxu0 0.0
  %5186 = vmatpush1.xpose.msra.mxu0 0.0
  %5187 = vmatprep.subr.mxu0 0.0
  %5188 = vmatpush1.xpose.msra.mxu0 0.0
  %5189 = vmatprep.subr.mxu0 0.0
  %5190 = vmatpush1.xpose.msra.mxu0 0.0
  %5191 = vmatprep.subr.mxu0 0.0
  %5192 = vmatpush1.xpose.msra.mxu0 0.0
  %5193 = vmatprep.subr.mxu0 0.0
  %5194 = vmatpush1.xpose.msra.mxu0 0.0
  %5195 = vmatprep.subr.mxu0 0.0
  %5196 = vmatpush1.xpose.msra.mxu0 0.0
  %5197 = vmatprep.subr.mxu0 0.0
  %5198 = vmatpush1.xpose.msra.mxu0 0.0
  %5199 = vmatprep.subr.mxu0 0.0
  %5200 = vmatpush1.xpose.msra.mxu0 0.0
  %5201 = vmatprep.subr.mxu0 0.0
  %5202 = vmatpush1.xpose.msra.mxu0 0.0
  %5203 = vmatprep.subr.mxu0 0.0
  %5204 = vmatpush1.xpose.msra.mxu0 0.0
  %5205 = vmatprep.subr.mxu0 0.0
  %5206 = vmatpush1.xpose.msra.mxu0 0.0
  %5207 = vmatprep.subr.mxu0 0.0
  %5208 = vmatpush1.xpose.msra.mxu0 0.0
  %5209 = vmatprep.subr.mxu0 0.0
  %5210 = vmatpush1.xpose.msra.mxu0 0.0
  %5211 = vmatprep.subr.mxu0 0.0
  %5212 = vmatpush1.xpose.msra.mxu0 0.0
  %5213 = vmatprep.subr.mxu0 0.0
  %5214 = vmatpush1.xpose.msra.mxu0 0.0
  %5215 = vmatprep.subr.mxu0 0.0
  %5216 = vmatpush1.xpose.msra.mxu0 0.0
  %5217 = vmatprep.subr.mxu0 0.0
  %5218 = vmatpush1.xpose.msra.mxu0 0.0
  %5219 = vmatprep.subr.mxu0 0.0
  %5220 = vmatpush1.xpose.msra.mxu0 0.0
  %5221 = vmatprep.mubr.f32.mxu0 0.0
  %5222 = vmatmul.mubr.f32.gmra.mrb[0].mxu0 %v5153
  %v5223 = vpop.f32.mrb[0].mxu0
  %v5224 = vadd.f32 0.0, %v5223
  %v5225 = vpop.f32.mrb[0].mxu0
  %5226 = vdwg.mxu0
  %5227 = vrot.lane.b32.xlu0 %v4807, 120
  %v5228 = vpop.permute.xlu0 %5227
  %5229 = vrot.lane.b32.xlu0 %v4807, 88
  %v5230 = vpop.permute.xlu0 %5229
  %v5231 = vsel %vm734, %v5228, 0
  %v5233 = vsel %vm734, %v5230, 0
  %5235 = vmatprep.subr.mxu0 0.0
  %5236 = vmatpush1.xpose.msra.mxu0 %v5233
  %5237 = vmatprep.subr.mxu0 0.0
  %5238 = vmatpush1.xpose.msra.mxu0 0.0
  %5239 = vmatprep.subr.mxu0 0.0
  %5240 = vmatpush1.xpose.msra.mxu0 0.0
  %5241 = vmatprep.subr.mxu0 0.0
  %5242 = vmatpush1.xpose.msra.mxu0 0.0
  %5243 = vmatprep.subr.mxu0 0.0
  %5244 = vmatpush1.xpose.msra.mxu0 0.0
  %5245 = vmatprep.subr.mxu0 0.0
  %5246 = vmatpush1.xpose.msra.mxu0 0.0
  %5247 = vmatprep.subr.mxu0 0.0
  %5248 = vmatpush1.xpose.msra.mxu0 0.0
  %5249 = vmatprep.subr.mxu0 0.0
  %5250 = vmatpush1.xpose.msra.mxu0 0.0
  %5251 = vmatprep.subr.mxu0 0.0
  %5252 = vmatpush1.xpose.msra.mxu0 0.0
  %5253 = vmatprep.subr.mxu0 0.0
  %5254 = vmatpush1.xpose.msra.mxu0 0.0
  %5255 = vmatprep.subr.mxu0 0.0
  %5256 = vmatpush1.xpose.msra.mxu0 0.0
  %5257 = vmatprep.subr.mxu0 0.0
  %5258 = vmatpush1.xpose.msra.mxu0 0.0
  %5259 = vmatprep.subr.mxu0 0.0
  %5260 = vmatpush1.xpose.msra.mxu0 0.0
  %5261 = vmatprep.subr.mxu0 0.0
  %5262 = vmatpush1.xpose.msra.mxu0 0.0
  %5263 = vmatprep.subr.mxu0 0.0
  %5264 = vmatpush1.xpose.msra.mxu0 0.0
  %5265 = vmatprep.subr.mxu0 0.0
  %5266 = vmatpush1.xpose.msra.mxu0 0.0
  %5267 = vmatprep.subr.mxu0 0.0
  %5268 = vmatpush1.xpose.msra.mxu0 0.0
  %5269 = vmatprep.subr.mxu0 0.0
  %5270 = vmatpush1.xpose.msra.mxu0 0.0
  %5271 = vmatprep.subr.mxu0 0.0
  %5272 = vmatpush1.xpose.msra.mxu0 0.0
  %5273 = vmatprep.subr.mxu0 0.0
  %5274 = vmatpush1.xpose.msra.mxu0 0.0
  %5275 = vmatprep.subr.mxu0 0.0
  %5276 = vmatpush1.xpose.msra.mxu0 0.0
  %5277 = vmatprep.subr.mxu0 0.0
  %5278 = vmatpush1.xpose.msra.mxu0 0.0
  %5279 = vmatprep.subr.mxu0 0.0
  %5280 = vmatpush1.xpose.msra.mxu0 0.0
  %5281 = vmatprep.subr.mxu0 0.0
  %5282 = vmatpush1.xpose.msra.mxu0 0.0
  %5283 = vmatprep.subr.mxu0 0.0
  %5284 = vmatpush1.xpose.msra.mxu0 0.0
  %5285 = vmatprep.subr.mxu0 0.0
  %5286 = vmatpush1.xpose.msra.mxu0 0.0
  %5287 = vmatprep.subr.mxu0 0.0
  %5288 = vmatpush1.xpose.msra.mxu0 0.0
  %5289 = vmatprep.subr.mxu0 0.0
  %5290 = vmatpush1.xpose.msra.mxu0 0.0
  %5291 = vmatprep.subr.mxu0 0.0
  %5292 = vmatpush1.xpose.msra.mxu0 0.0
  %5293 = vmatprep.subr.mxu0 0.0
  %5294 = vmatpush1.xpose.msra.mxu0 0.0
  %5295 = vmatprep.subr.mxu0 0.0
  %5296 = vmatpush1.xpose.msra.mxu0 0.0
  %5297 = vmatprep.subr.mxu0 0.0
  %5298 = vmatpush1.xpose.msra.mxu0 0.0
  %5299 = vmatprep.mubr.f32.mxu0 0.0
  %5300 = vmatmul.mubr.f32.gmra.mrb[0].mxu0 %v5231
  %v5301 = vpop.f32.mrb[0].mxu0
  %v5302 = vadd.f32 0.0, %v5301
  %v5303 = vpop.f32.mrb[0].mxu0
  %5304 = vdwg.mxu0
  %v5305 = vmul.f32 %v5224, 0.35355338
  %v5306 = vmul.f32 %v5302, 0.35355338
  %v5307 = vadd.f32 %v5305, %v570
  %v5308 = vadd.f32 %v5306, %v571
  %v5309 = vsel %vm734, %v5307, -inf
  %5310 = vmax.xlane.f32.xlu0 %v5309
  %v5311 = vpop.xlane.xlu0 %5310
  %v5312 = vsel %vm734, %v5308, -inf
  %5313 = vmax.xlane.f32.xlu0 %v5312
  %v5314 = vpop.xlane.xlu0 %5313
  %v5315 = vsub.f32 %v5307, %v5311
  %v5316 = vsub.f32 %v5308, %v5314
  %v5317 = vmul.f32 %v5315, 1.442695
  %v5318 = vpow.pop %v5317
  %v5319 = vmul.f32 %v5316, 1.442695
  %v5320 = vpow.pop %v5319
  %v5321 = vsel %vm734, %v5318, 0.0
  %5322 = vadd.xlane.f32.xlu0 %v5321
  %v5323 = vpop.xlane.xlu0 %5322
  %v5324 = vsel %vm734, %v5320, 0.0
  %5325 = vadd.xlane.f32.xlu0 %v5324
  %v5326 = vpop.xlane.xlu0 %5325
  %v5327 = vrcp.pop %v5323
  %v5328 = vrcp.pop %v5326
  %v5329 = vmul.f32 %v5318, %v5327
  %v5330 = vmul.f32 %v5320, %v5328
  %5331 = vrot.lane.b32.xlu0 %v4802, 56
  %v5332 = vpop.permute.xlu0 %5331
  %v5335 = vsel %vm734, %v5329, 0
  %5337 = vmatprep.subr.mxu0 0.0
  %5338 = vmatpush1.msra.mxu0 %v5332
  %5339 = vmatprep.subr.mxu0 0.0
  %5340 = vmatpush1.msra.mxu0 0.0
  %5341 = vmatprep.subr.mxu0 0.0
  %5342 = vmatpush1.msra.mxu0 0.0
  %5343 = vmatprep.subr.mxu0 0.0
  %5344 = vmatpush1.msra.mxu0 0.0
  %5345 = vmatprep.subr.mxu0 0.0
  %5346 = vmatpush1.msra.mxu0 0.0
  %5347 = vmatprep.subr.mxu0 0.0
  %5348 = vmatpush1.msra.mxu0 0.0
  %5349 = vmatprep.subr.mxu0 0.0
  %5350 = vmatpush1.msra.mxu0 0.0
  %5351 = vmatprep.subr.mxu0 0.0
  %5352 = vmatpush1.msra.mxu0 0.0
  %5353 = vmatprep.subr.mxu0 0.0
  %5354 = vmatpush1.msra.mxu0 0.0
  %5355 = vmatprep.subr.mxu0 0.0
  %5356 = vmatpush1.msra.mxu0 0.0
  %5357 = vmatprep.subr.mxu0 0.0
  %5358 = vmatpush1.msra.mxu0 0.0
  %5359 = vmatprep.subr.mxu0 0.0
  %5360 = vmatpush1.msra.mxu0 0.0
  %5361 = vmatprep.subr.mxu0 0.0
  %5362 = vmatpush1.msra.mxu0 0.0
  %5363 = vmatprep.subr.mxu0 0.0
  %5364 = vmatpush1.msra.mxu0 0.0
  %5365 = vmatprep.subr.mxu0 0.0
  %5366 = vmatpush1.msra.mxu0 0.0
  %5367 = vmatprep.subr.mxu0 0.0
  %5368 = vmatpush1.msra.mxu0 0.0
  %5369 = vmatprep.subr.mxu0 0.0
  %5370 = vmatpush1.msra.mxu0 0.0
  %5371 = vmatprep.subr.mxu0 0.0
  %5372 = vmatpush1.msra.mxu0 0.0
  %5373 = vmatprep.subr.mxu0 0.0
  %5374 = vmatpush1.msra.mxu0 0.0
  %5375 = vmatprep.subr.mxu0 0.0
  %5376 = vmatpush1.msra.mxu0 0.0
  %5377 = vmatprep.subr.mxu0 0.0
  %5378 = vmatpush1.msra.mxu0 0.0
  %5379 = vmatprep.subr.mxu0 0.0
  %5380 = vmatpush1.msra.mxu0 0.0
  %5381 = vmatprep.subr.mxu0 0.0
  %5382 = vmatpush1.msra.mxu0 0.0
  %5383 = vmatprep.subr.mxu0 0.0
  %5384 = vmatpush1.msra.mxu0 0.0
  %5385 = vmatprep.subr.mxu0 0.0
  %5386 = vmatpush1.msra.mxu0 0.0
  %5387 = vmatprep.subr.mxu0 0.0
  %5388 = vmatpush1.msra.mxu0 0.0
  %5389 = vmatprep.subr.mxu0 0.0
  %5390 = vmatpush1.msra.mxu0 0.0
  %5391 = vmatprep.subr.mxu0 0.0
  %5392 = vmatpush1.msra.mxu0 0.0
  %5393 = vmatprep.subr.mxu0 0.0
  %5394 = vmatpush1.msra.mxu0 0.0
  %5395 = vmatprep.subr.mxu0 0.0
  %5396 = vmatpush1.msra.mxu0 0.0
  %5397 = vmatprep.subr.mxu0 0.0
  %5398 = vmatpush1.msra.mxu0 0.0
  %5399 = vmatprep.subr.mxu0 0.0
  %5400 = vmatpush1.msra.mxu0 0.0
  %5401 = vmatprep.mubr.f32.mxu0 0.0
  %5402 = vmatmul.mubr.f32.gmra.mrb[0].mxu0 %v5335
  %v5403 = vpop.f32.mrb[0].mxu0
  %v5404 = vadd.f32 0.0, %v5403
  %v5405 = vpop.f32.mrb[0].mxu0
  %5406 = vdwg.mxu0
  %5407 = vrot.lane.b32.xlu0 %v4807, 56
  %v5408 = vpop.permute.xlu0 %5407
  %v5411 = vsel %vm734, %v5330, 0
  %5413 = vmatprep.subr.mxu0 0.0
  %5414 = vmatpush1.msra.mxu0 %v5408
  %5415 = vmatprep.subr.mxu0 0.0
  %5416 = vmatpush1.msra.mxu0 0.0
  %5417 = vmatprep.subr.mxu0 0.0
  %5418 = vmatpush1.msra.mxu0 0.0
  %5419 = vmatprep.subr.mxu0 0.0
  %5420 = vmatpush1.msra.mxu0 0.0
  %5421 = vmatprep.subr.mxu0 0.0
  %5422 = vmatpush1.msra.mxu0 0.0
  %5423 = vmatprep.subr.mxu0 0.0
  %5424 = vmatpush1.msra.mxu0 0.0
  %5425 = vmatprep.subr.mxu0 0.0
  %5426 = vmatpush1.msra.mxu0 0.0
  %5427 = vmatprep.subr.mxu0 0.0
  %5428 = vmatpush1.msra.mxu0 0.0
  %5429 = vmatprep.subr.mxu0 0.0
  %5430 = vmatpush1.msra.mxu0 0.0
  %5431 = vmatprep.subr.mxu0 0.0
  %5432 = vmatpush1.msra.mxu0 0.0
  %5433 = vmatprep.subr.mxu0 0.0
  %5434 = vmatpush1.msra.mxu0 0.0
  %5435 = vmatprep.subr.mxu0 0.0
  %5436 = vmatpush1.msra.mxu0 0.0
  %5437 = vmatprep.subr.mxu0 0.0
  %5438 = vmatpush1.msra.mxu0 0.0
  %5439 = vmatprep.subr.mxu0 0.0
  %5440 = vmatpush1.msra.mxu0 0.0
  %5441 = vmatprep.subr.mxu0 0.0
  %5442 = vmatpush1.msra.mxu0 0.0
  %5443 = vmatprep.subr.mxu0 0.0
  %5444 = vmatpush1.msra.mxu0 0.0
  %5445 = vmatprep.subr.mxu0 0.0
  %5446 = vmatpush1.msra.mxu0 0.0
  %5447 = vmatprep.subr.mxu0 0.0
  %5448 = vmatpush1.msra.mxu0 0.0
  %5449 = vmatprep.subr.mxu0 0.0
  %5450 = vmatpush1.msra.mxu0 0.0
  %5451 = vmatprep.subr.mxu0 0.0
  %5452 = vmatpush1.msra.mxu0 0.0
  %5453 = vmatprep.subr.mxu0 0.0
  %5454 = vmatpush1.msra.mxu0 0.0
  %5455 = vmatprep.subr.mxu0 0.0
  %5456 = vmatpush1.msra.mxu0 0.0
  %5457 = vmatprep.subr.mxu0 0.0
  %5458 = vmatpush1.msra.mxu0 0.0
  %5459 = vmatprep.subr.mxu0 0.0
  %5460 = vmatpush1.msra.mxu0 0.0
  %5461 = vmatprep.subr.mxu0 0.0
  %5462 = vmatpush1.msra.mxu0 0.0
  %5463 = vmatprep.subr.mxu0 0.0
  %5464 = vmatpush1.msra.mxu0 0.0
  %5465 = vmatprep.subr.mxu0 0.0
  %5466 = vmatpush1.msra.mxu0 0.0
  %5467 = vmatprep.subr.mxu0 0.0
  %5468 = vmatpush1.msra.mxu0 0.0
  %5469 = vmatprep.subr.mxu0 0.0
  %5470 = vmatpush1.msra.mxu0 0.0
  %5471 = vmatprep.subr.mxu0 0.0
  %5472 = vmatpush1.msra.mxu0 0.0
  %5473 = vmatprep.subr.mxu0 0.0
  %5474 = vmatpush1.msra.mxu0 0.0
  %5475 = vmatprep.subr.mxu0 0.0
  %5476 = vmatpush1.msra.mxu0 0.0
  %5477 = vmatprep.mubr.f32.mxu0 0.0
  %5478 = vmatmul.mubr.f32.gmra.mrb[0].mxu0 %v5411
  %v5479 = vpop.f32.mrb[0].mxu0
  %v5480 = vadd.f32 0.0, %v5479
  %v5481 = vpop.f32.mrb[0].mxu0
  %5482 = vdwg.mxu0
  %v5484 = vsel %vm734, %v5404, 0
  %v5487 = vsel %vm734, %v5480, 0
  %5489 = vmatprep.subr.mxu0 0.0
  %5490 = vmatpush1.msra.mxu0 %v4812
  %5491 = vmatprep.subr.mxu0 0.0
  %5492 = vmatpush1.msra.mxu0 0.0
  %5493 = vmatprep.subr.mxu0 0.0
  %5494 = vmatpush1.msra.mxu0 0.0
  %5495 = vmatprep.subr.mxu0 0.0
  %5496 = vmatpush1.msra.mxu0 0.0
  %5497 = vmatprep.subr.mxu0 0.0
  %5498 = vmatpush1.msra.mxu0 0.0
  %5499 = vmatprep.subr.mxu0 0.0
  %5500 = vmatpush1.msra.mxu0 0.0
  %5501 = vmatprep.subr.mxu0 0.0
  %5502 = vmatpush1.msra.mxu0 0.0
  %5503 = vmatprep.subr.mxu0 0.0
  %5504 = vmatpush1.msra.mxu0 0.0
  %5505 = vmatprep.subr.mxu0 0.0
  %5506 = vmatpush1.msra.mxu0 0.0
  %5507 = vmatprep.subr.mxu0 0.0
  %5508 = vmatpush1.msra.mxu0 0.0
  %5509 = vmatprep.subr.mxu0 0.0
  %5510 = vmatpush1.msra.mxu0 0.0
  %5511 = vmatprep.subr.mxu0 0.0
  %5512 = vmatpush1.msra.mxu0 0.0
  %5513 = vmatprep.subr.mxu0 0.0
  %5514 = vmatpush1.msra.mxu0 0.0
  %5515 = vmatprep.subr.mxu0 0.0
  %5516 = vmatpush1.msra.mxu0 0.0
  %5517 = vmatprep.subr.mxu0 0.0
  %5518 = vmatpush1.msra.mxu0 0.0
  %5519 = vmatprep.subr.mxu0 0.0
  %5520 = vmatpush1.msra.mxu0 0.0
  %5521 = vmatprep.subr.mxu0 0.0
  %5522 = vmatpush1.msra.mxu0 0.0
  %5523 = vmatprep.subr.mxu0 0.0
  %5524 = vmatpush1.msra.mxu0 0.0
  %5525 = vmatprep.subr.mxu0 0.0
  %5526 = vmatpush1.msra.mxu0 0.0
  %5527 = vmatprep.subr.mxu0 0.0
  %5528 = vmatpush1.msra.mxu0 0.0
  %5529 = vmatprep.subr.mxu0 0.0
  %5530 = vmatpush1.msra.mxu0 0.0
  %5531 = vmatprep.subr.mxu0 0.0
  %5532 = vmatpush1.msra.mxu0 0.0
  %5533 = vmatprep.subr.mxu0 0.0
  %5534 = vmatpush1.msra.mxu0 0.0
  %5535 = vmatprep.subr.mxu0 0.0
  %5536 = vmatpush1.msra.mxu0 0.0
  %5537 = vmatprep.subr.mxu0 0.0
  %5538 = vmatpush1.msra.mxu0 0.0
  %5539 = vmatprep.subr.mxu0 0.0
  %5540 = vmatpush1.msra.mxu0 0.0
  %5541 = vmatprep.subr.mxu0 0.0
  %5542 = vmatpush1.msra.mxu0 0.0
  %5543 = vmatprep.subr.mxu0 0.0
  %5544 = vmatpush1.msra.mxu0 0.0
  %5545 = vmatprep.subr.mxu0 0.0
  %5546 = vmatpush1.msra.mxu0 0.0
  %5547 = vmatprep.subr.mxu0 0.0
  %5548 = vmatpush1.msra.mxu0 0.0
  %5549 = vmatprep.subr.mxu0 0.0
  %5550 = vmatpush1.msra.mxu0 0.0
  %5551 = vmatprep.subr.mxu0 0.0
  %5552 = vmatpush1.msra.mxu0 0.0
  %5553 = vmatprep.mubr.f32.mxu0 0.0
  %5554 = vmatmul.mubr.f32.gmra.mrb[0].mxu0 %v5484
  %v5555 = vpop.f32.mrb[0].mxu0
  %v5556 = vadd.f32 0.0, %v5555
  %v5557 = vpop.f32.mrb[0].mxu0
  %5558 = vmatprep.mubr.f32.mxu0 0.0
  %5559 = vmatmul.mubr.f32.gmra.mrb[0].mxu0 %v5487
  %v5560 = vpop.f32.mrb[0].mxu0
  %v5561 = vadd.f32 0.0, %v5560
  %v5562 = vpop.f32.mrb[0].mxu0
  %5563 = vdwg.mxu0
  %v5565 = vsel %vm734, %v5070, 0
  %v5568 = vsel %vm734, %v5146, 0
  %5570 = vmatprep.subr.mxu0 0.0
  %5571 = vmatpush1.msra.mxu0 %v4811
  %5572 = vmatprep.subr.mxu0 0.0
  %5573 = vmatpush1.msra.mxu0 0.0
  %5574 = vmatprep.subr.mxu0 0.0
  %5575 = vmatpush1.msra.mxu0 0.0
  %5576 = vmatprep.subr.mxu0 0.0
  %5577 = vmatpush1.msra.mxu0 0.0
  %5578 = vmatprep.subr.mxu0 0.0
  %5579 = vmatpush1.msra.mxu0 0.0
  %5580 = vmatprep.subr.mxu0 0.0
  %5581 = vmatpush1.msra.mxu0 0.0
  %5582 = vmatprep.subr.mxu0 0.0
  %5583 = vmatpush1.msra.mxu0 0.0
  %5584 = vmatprep.subr.mxu0 0.0
  %5585 = vmatpush1.msra.mxu0 0.0
  %5586 = vmatprep.subr.mxu0 0.0
  %5587 = vmatpush1.msra.mxu0 0.0
  %5588 = vmatprep.subr.mxu0 0.0
  %5589 = vmatpush1.msra.mxu0 0.0
  %5590 = vmatprep.subr.mxu0 0.0
  %5591 = vmatpush1.msra.mxu0 0.0
  %5592 = vmatprep.subr.mxu0 0.0
  %5593 = vmatpush1.msra.mxu0 0.0
  %5594 = vmatprep.subr.mxu0 0.0
  %5595 = vmatpush1.msra.mxu0 0.0
  %5596 = vmatprep.subr.mxu0 0.0
  %5597 = vmatpush1.msra.mxu0 0.0
  %5598 = vmatprep.subr.mxu0 0.0
  %5599 = vmatpush1.msra.mxu0 0.0
  %5600 = vmatprep.subr.mxu0 0.0
  %5601 = vmatpush1.msra.mxu0 0.0
  %5602 = vmatprep.subr.mxu0 0.0
  %5603 = vmatpush1.msra.mxu0 0.0
  %5604 = vmatprep.subr.mxu0 0.0
  %5605 = vmatpush1.msra.mxu0 0.0
  %5606 = vmatprep.subr.mxu0 0.0
  %5607 = vmatpush1.msra.mxu0 0.0
  %5608 = vmatprep.subr.mxu0 0.0
  %5609 = vmatpush1.msra.mxu0 0.0
  %5610 = vmatprep.subr.mxu0 0.0
  %5611 = vmatpush1.msra.mxu0 0.0
  %5612 = vmatprep.subr.mxu0 0.0
  %5613 = vmatpush1.msra.mxu0 0.0
  %5614 = vmatprep.subr.mxu0 0.0
  %5615 = vmatpush1.msra.mxu0 0.0
  %5616 = vmatprep.subr.mxu0 0.0
  %5617 = vmatpush1.msra.mxu0 0.0
  %5618 = vmatprep.subr.mxu0 0.0
  %5619 = vmatpush1.msra.mxu0 0.0
  %5620 = vmatprep.subr.mxu0 0.0
  %5621 = vmatpush1.msra.mxu0 0.0
  %5622 = vmatprep.subr.mxu0 0.0
  %5623 = vmatpush1.msra.mxu0 0.0
  %5624 = vmatprep.subr.mxu0 0.0
  %5625 = vmatpush1.msra.mxu0 0.0
  %5626 = vmatprep.subr.mxu0 0.0
  %5627 = vmatpush1.msra.mxu0 0.0
  %5628 = vmatprep.subr.mxu0 0.0
  %5629 = vmatpush1.msra.mxu0 0.0
  %5630 = vmatprep.subr.mxu0 0.0
  %5631 = vmatpush1.msra.mxu0 0.0
  %5632 = vmatprep.subr.mxu0 0.0
  %5633 = vmatpush1.msra.mxu0 0.0
  %5634 = vmatprep.mubr.f32.mxu0 0.0
  %5635 = vmatmul.mubr.f32.gmra.mrb[0].mxu0 %v5565
  %v5636 = vpop.f32.mrb[0].mxu0
  %v5637 = vadd.f32 %v5556, %v5636
  %v5638 = vpop.f32.mrb[0].mxu0
  %5639 = vmatprep.mubr.f32.mxu0 0.0
  %5640 = vmatmul.mubr.f32.gmra.mrb[0].mxu0 %v5568
  %v5641 = vpop.f32.mrb[0].mxu0
  %v5642 = vadd.f32 %v5561, %v5641
  %v5643 = vpop.f32.mrb[0].mxu0
  %5644 = vdwg.mxu0
  %5645 = vrot.lane.b32.xlu0 %v4802, 112
  %v5646 = vpop.permute.xlu0 %5645
  %5647 = vrot.lane.b32.xlu0 %v4802, 80
  %v5648 = vpop.permute.xlu0 %5647
  %v5649 = vsel %vm734, %v5646, 0
  %v5651 = vsel %vm734, %v5648, 0
  %5653 = vmatprep.subr.mxu0 0.0
  %5654 = vmatpush1.xpose.msra.mxu0 %v5651
  %5655 = vmatprep.subr.mxu0 0.0
  %5656 = vmatpush1.xpose.msra.mxu0 0.0
  %5657 = vmatprep.subr.mxu0 0.0
  %5658 = vmatpush1.xpose.msra.mxu0 0.0
  %5659 = vmatprep.subr.mxu0 0.0
  %5660 = vmatpush1.xpose.msra.mxu0 0.0
  %5661 = vmatprep.subr.mxu0 0.0
  %5662 = vmatpush1.xpose.msra.mxu0 0.0
  %5663 = vmatprep.subr.mxu0 0.0
  %5664 = vmatpush1.xpose.msra.mxu0 0.0
  %5665 = vmatprep.subr.mxu0 0.0
  %5666 = vmatpush1.xpose.msra.mxu0 0.0
  %5667 = vmatprep.subr.mxu0 0.0
  %5668 = vmatpush1.xpose.msra.mxu0 0.0
  %5669 = vmatprep.subr.mxu0 0.0
  %5670 = vmatpush1.xpose.msra.mxu0 0.0
  %5671 = vmatprep.subr.mxu0 0.0
  %5672 = vmatpush1.xpose.msra.mxu0 0.0
  %5673 = vmatprep.subr.mxu0 0.0
  %5674 = vmatpush1.xpose.msra.mxu0 0.0
  %5675 = vmatprep.subr.mxu0 0.0
  %5676 = vmatpush1.xpose.msra.mxu0 0.0
  %5677 = vmatprep.subr.mxu0 0.0
  %5678 = vmatpush1.xpose.msra.mxu0 0.0
  %5679 = vmatprep.subr.mxu0 0.0
  %5680 = vmatpush1.xpose.msra.mxu0 0.0
  %5681 = vmatprep.subr.mxu0 0.0
  %5682 = vmatpush1.xpose.msra.mxu0 0.0
  %5683 = vmatprep.subr.mxu0 0.0
  %5684 = vmatpush1.xpose.msra.mxu0 0.0
  %5685 = vmatprep.subr.mxu0 0.0
  %5686 = vmatpush1.xpose.msra.mxu0 0.0
  %5687 = vmatprep.subr.mxu0 0.0
  %5688 = vmatpush1.xpose.msra.mxu0 0.0
  %5689 = vmatprep.subr.mxu0 0.0
  %5690 = vmatpush1.xpose.msra.mxu0 0.0
  %5691 = vmatprep.subr.mxu0 0.0
  %5692 = vmatpush1.xpose.msra.mxu0 0.0
  %5693 = vmatprep.subr.mxu0 0.0
  %5694 = vmatpush1.xpose.msra.mxu0 0.0
  %5695 = vmatprep.subr.mxu0 0.0
  %5696 = vmatpush1.xpose.msra.mxu0 0.0
  %5697 = vmatprep.subr.mxu0 0.0
  %5698 = vmatpush1.xpose.msra.mxu0 0.0
  %5699 = vmatprep.subr.mxu0 0.0
  %5700 = vmatpush1.xpose.msra.mxu0 0.0
  %5701 = vmatprep.subr.mxu0 0.0
  %5702 = vmatpush1.xpose.msra.mxu0 0.0
  %5703 = vmatprep.subr.mxu0 0.0
  %5704 = vmatpush1.xpose.msra.mxu0 0.0
  %5705 = vmatprep.subr.mxu0 0.0
  %5706 = vmatpush1.xpose.msra.mxu0 0.0
  %5707 = vmatprep.subr.mxu0 0.0
  %5708 = vmatpush1.xpose.msra.mxu0 0.0
  %5709 = vmatprep.subr.mxu0 0.0
  %5710 = vmatpush1.xpose.msra.mxu0 0.0
  %5711 = vmatprep.subr.mxu0 0.0
  %5712 = vmatpush1.xpose.msra.mxu0 0.0
  %5713 = vmatprep.subr.mxu0 0.0
  %5714 = vmatpush1.xpose.msra.mxu0 0.0
  %5715 = vmatprep.subr.mxu0 0.0
  %5716 = vmatpush1.xpose.msra.mxu0 0.0
  %5717 = vmatprep.mubr.f32.mxu0 0.0
  %5718 = vmatmul.mubr.f32.gmra.mrb[0].mxu0 %v5649
  %v5719 = vpop.f32.mrb[0].mxu0
  %v5720 = vadd.f32 0.0, %v5719
  %v5721 = vpop.f32.mrb[0].mxu0
  %5722 = vdwg.mxu0
  %5723 = vrot.lane.b32.xlu0 %v4807, 112
  %v5724 = vpop.permute.xlu0 %5723
  %5725 = vrot.lane.b32.xlu0 %v4807, 80
  %v5726 = vpop.permute.xlu0 %5725
  %v5727 = vsel %vm734, %v5724, 0
  %v5729 = vsel %vm734, %v5726, 0
  %5731 = vmatprep.subr.mxu0 0.0
  %5732 = vmatpush1.xpose.msra.mxu0 %v5729
  %5733 = vmatprep.subr.mxu0 0.0
  %5734 = vmatpush1.xpose.msra.mxu0 0.0
  %5735 = vmatprep.subr.mxu0 0.0
  %5736 = vmatpush1.xpose.msra.mxu0 0.0
  %5737 = vmatprep.subr.mxu0 0.0
  %5738 = vmatpush1.xpose.msra.mxu0 0.0
  %5739 = vmatprep.subr.mxu0 0.0
  %5740 = vmatpush1.xpose.msra.mxu0 0.0
  %5741 = vmatprep.subr.mxu0 0.0
  %5742 = vmatpush1.xpose.msra.mxu0 0.0
  %5743 = vmatprep.subr.mxu0 0.0
  %5744 = vmatpush1.xpose.msra.mxu0 0.0
  %5745 = vmatprep.subr.mxu0 0.0
  %5746 = vmatpush1.xpose.msra.mxu0 0.0
  %5747 = vmatprep.subr.mxu0 0.0
  %5748 = vmatpush1.xpose.msra.mxu0 0.0
  %5749 = vmatprep.subr.mxu0 0.0
  %5750 = vmatpush1.xpose.msra.mxu0 0.0
  %5751 = vmatprep.subr.mxu0 0.0
  %5752 = vmatpush1.xpose.msra.mxu0 0.0
  %5753 = vmatprep.subr.mxu0 0.0
  %5754 = vmatpush1.xpose.msra.mxu0 0.0
  %5755 = vmatprep.subr.mxu0 0.0
  %5756 = vmatpush1.xpose.msra.mxu0 0.0
  %5757 = vmatprep.subr.mxu0 0.0
  %5758 = vmatpush1.xpose.msra.mxu0 0.0
  %5759 = vmatprep.subr.mxu0 0.0
  %5760 = vmatpush1.xpose.msra.mxu0 0.0
  %5761 = vmatprep.subr.mxu0 0.0
  %5762 = vmatpush1.xpose.msra.mxu0 0.0
  %5763 = vmatprep.subr.mxu0 0.0
  %5764 = vmatpush1.xpose.msra.mxu0 0.0
  %5765 = vmatprep.subr.mxu0 0.0
  %5766 = vmatpush1.xpose.msra.mxu0 0.0
  %5767 = vmatprep.subr.mxu0 0.0
  %5768 = vmatpush1.xpose.msra.mxu0 0.0
  %5769 = vmatprep.subr.mxu0 0.0
  %5770 = vmatpush1.xpose.msra.mxu0 0.0
  %5771 = vmatprep.subr.mxu0 0.0
  %5772 = vmatpush1.xpose.msra.mxu0 0.0
  %5773 = vmatprep.subr.mxu0 0.0
  %5774 = vmatpush1.xpose.msra.mxu0 0.0
  %5775 = vmatprep.subr.mxu0 0.0
  %5776 = vmatpush1.xpose.msra.mxu0 0.0
  %5777 = vmatprep.subr.mxu0 0.0
  %5778 = vmatpush1.xpose.msra.mxu0 0.0
  %5779 = vmatprep.subr.mxu0 0.0
  %5780 = vmatpush1.xpose.msra.mxu0 0.0
  %5781 = vmatprep.subr.mxu0 0.0
  %5782 = vmatpush1.xpose.msra.mxu0 0.0
  %5783 = vmatprep.subr.mxu0 0.0
  %5784 = vmatpush1.xpose.msra.mxu0 0.0
  %5785 = vmatprep.subr.mxu0 0.0
  %5786 = vmatpush1.xpose.msra.mxu0 0.0
  %5787 = vmatprep.subr.mxu0 0.0
  %5788 = vmatpush1.xpose.msra.mxu0 0.0
  %5789 = vmatprep.subr.mxu0 0.0
  %5790 = vmatpush1.xpose.msra.mxu0 0.0
  %5791 = vmatprep.subr.mxu0 0.0
  %5792 = vmatpush1.xpose.msra.mxu0 0.0
  %5793 = vmatprep.subr.mxu0 0.0
  %5794 = vmatpush1.xpose.msra.mxu0 0.0
  %5795 = vmatprep.mubr.f32.mxu0 0.0
  %5796 = vmatmul.mubr.f32.gmra.mrb[0].mxu0 %v5727
  %v5797 = vpop.f32.mrb[0].mxu0
  %v5798 = vadd.f32 0.0, %v5797
  %v5799 = vpop.f32.mrb[0].mxu0
  %5800 = vdwg.mxu0
  %v5801 = vmul.f32 %v5720, 0.35355338
  %v5802 = vmul.f32 %v5798, 0.35355338
  %v5803 = vadd.f32 %v5801, %v570
  %v5804 = vadd.f32 %v5802, %v571
  %v5805 = vsel %vm734, %v5803, -inf
  %5806 = vmax.xlane.f32.xlu0 %v5805
  %v5807 = vpop.xlane.xlu0 %5806
  %v5808 = vsel %vm734, %v5804, -inf
  %5809 = vmax.xlane.f32.xlu0 %v5808
  %v5810 = vpop.xlane.xlu0 %5809
  %v5811 = vsub.f32 %v5803, %v5807
  %v5812 = vsub.f32 %v5804, %v5810
  %v5813 = vmul.f32 %v5811, 1.442695
  %v5814 = vpow.pop %v5813
  %v5815 = vmul.f32 %v5812, 1.442695
  %v5816 = vpow.pop %v5815
  %v5817 = vsel %vm734, %v5814, 0.0
  %5818 = vadd.xlane.f32.xlu0 %v5817
  %v5819 = vpop.xlane.xlu0 %5818
  %v5820 = vsel %vm734, %v5816, 0.0
  %5821 = vadd.xlane.f32.xlu0 %v5820
  %v5822 = vpop.xlane.xlu0 %5821
  %v5823 = vrcp.pop %v5819
  %v5824 = vrcp.pop %v5822
  %v5825 = vmul.f32 %v5814, %v5823
  %v5826 = vmul.f32 %v5816, %v5824
  %5827 = vrot.lane.b32.xlu0 %v4802, 48
  %v5828 = vpop.permute.xlu0 %5827
  %v5831 = vsel %vm734, %v5825, 0
  %5833 = vmatprep.subr.mxu0 0.0
  %5834 = vmatpush1.msra.mxu0 %v5828
  %5835 = vmatprep.subr.mxu0 0.0
  %5836 = vmatpush1.msra.mxu0 0.0
  %5837 = vmatprep.subr.mxu0 0.0
  %5838 = vmatpush1.msra.mxu0 0.0
  %5839 = vmatprep.subr.mxu0 0.0
  %5840 = vmatpush1.msra.mxu0 0.0
  %5841 = vmatprep.subr.mxu0 0.0
  %5842 = vmatpush1.msra.mxu0 0.0
  %5843 = vmatprep.subr.mxu0 0.0
  %5844 = vmatpush1.msra.mxu0 0.0
  %5845 = vmatprep.subr.mxu0 0.0
  %5846 = vmatpush1.msra.mxu0 0.0
  %5847 = vmatprep.subr.mxu0 0.0
  %5848 = vmatpush1.msra.mxu0 0.0
  %5849 = vmatprep.subr.mxu0 0.0
  %5850 = vmatpush1.msra.mxu0 0.0
  %5851 = vmatprep.subr.mxu0 0.0
  %5852 = vmatpush1.msra.mxu0 0.0
  %5853 = vmatprep.subr.mxu0 0.0
  %5854 = vmatpush1.msra.mxu0 0.0
  %5855 = vmatprep.subr.mxu0 0.0
  %5856 = vmatpush1.msra.mxu0 0.0
  %5857 = vmatprep.subr.mxu0 0.0
  %5858 = vmatpush1.msra.mxu0 0.0
  %5859 = vmatprep.subr.mxu0 0.0
  %5860 = vmatpush1.msra.mxu0 0.0
  %5861 = vmatprep.subr.mxu0 0.0
  %5862 = vmatpush1.msra.mxu0 0.0
  %5863 = vmatprep.subr.mxu0 0.0
  %5864 = vmatpush1.msra.mxu0 0.0
  %5865 = vmatprep.subr.mxu0 0.0
  %5866 = vmatpush1.msra.mxu0 0.0
  %5867 = vmatprep.subr.mxu0 0.0
  %5868 = vmatpush1.msra.mxu0 0.0
  %5869 = vmatprep.subr.mxu0 0.0
  %5870 = vmatpush1.msra.mxu0 0.0
  %5871 = vmatprep.subr.mxu0 0.0
  %5872 = vmatpush1.msra.mxu0 0.0
  %5873 = vmatprep.subr.mxu0 0.0
  %5874 = vmatpush1.msra.mxu0 0.0
  %5875 = vmatprep.subr.mxu0 0.0
  %5876 = vmatpush1.msra.mxu0 0.0
  %5877 = vmatprep.subr.mxu0 0.0
  %5878 = vmatpush1.msra.mxu0 0.0
  %5879 = vmatprep.subr.mxu0 0.0
  %5880 = vmatpush1.msra.mxu0 0.0
  %5881 = vmatprep.subr.mxu0 0.0
  %5882 = vmatpush1.msra.mxu0 0.0
  %5883 = vmatprep.subr.mxu0 0.0
  %5884 = vmatpush1.msra.mxu0 0.0
  %5885 = vmatprep.subr.mxu0 0.0
  %5886 = vmatpush1.msra.mxu0 0.0
  %5887 = vmatprep.subr.mxu0 0.0
  %5888 = vmatpush1.msra.mxu0 0.0
  %5889 = vmatprep.subr.mxu0 0.0
  %5890 = vmatpush1.msra.mxu0 0.0
  %5891 = vmatprep.subr.mxu0 0.0
  %5892 = vmatpush1.msra.mxu0 0.0
  %5893 = vmatprep.subr.mxu0 0.0
  %5894 = vmatpush1.msra.mxu0 0.0
  %5895 = vmatprep.subr.mxu0 0.0
  %5896 = vmatpush1.msra.mxu0 0.0
  %5897 = vmatprep.mubr.f32.mxu0 0.0
  %5898 = vmatmul.mubr.f32.gmra.mrb[0].mxu0 %v5831
  %v5899 = vpop.f32.mrb[0].mxu0
  %v5900 = vadd.f32 0.0, %v5899
  %v5901 = vpop.f32.mrb[0].mxu0
  %5902 = vdwg.mxu0
  %5903 = vrot.lane.b32.xlu0 %v4807, 48
  %v5904 = vpop.permute.xlu0 %5903
  %v5907 = vsel %vm734, %v5826, 0
  %5909 = vmatprep.subr.mxu0 0.0
  %5910 = vmatpush1.msra.mxu0 %v5904
  %5911 = vmatprep.subr.mxu0 0.0
  %5912 = vmatpush1.msra.mxu0 0.0
  %5913 = vmatprep.subr.mxu0 0.0
  %5914 = vmatpush1.msra.mxu0 0.0
  %5915 = vmatprep.subr.mxu0 0.0
  %5916 = vmatpush1.msra.mxu0 0.0
  %5917 = vmatprep.subr.mxu0 0.0
  %5918 = vmatpush1.msra.mxu0 0.0
  %5919 = vmatprep.subr.mxu0 0.0
  %5920 = vmatpush1.msra.mxu0 0.0
  %5921 = vmatprep.subr.mxu0 0.0
  %5922 = vmatpush1.msra.mxu0 0.0
  %5923 = vmatprep.subr.mxu0 0.0
  %5924 = vmatpush1.msra.mxu0 0.0
  %5925 = vmatprep.subr.mxu0 0.0
  %5926 = vmatpush1.msra.mxu0 0.0
  %5927 = vmatprep.subr.mxu0 0.0
  %5928 = vmatpush1.msra.mxu0 0.0
  %5929 = vmatprep.subr.mxu0 0.0
  %5930 = vmatpush1.msra.mxu0 0.0
  %5931 = vmatprep.subr.mxu0 0.0
  %5932 = vmatpush1.msra.mxu0 0.0
  %5933 = vmatprep.subr.mxu0 0.0
  %5934 = vmatpush1.msra.mxu0 0.0
  %5935 = vmatprep.subr.mxu0 0.0
  %5936 = vmatpush1.msra.mxu0 0.0
  %5937 = vmatprep.subr.mxu0 0.0
  %5938 = vmatpush1.msra.mxu0 0.0
  %5939 = vmatprep.subr.mxu0 0.0
  %5940 = vmatpush1.msra.mxu0 0.0
  %5941 = vmatprep.subr.mxu0 0.0
  %5942 = vmatpush1.msra.mxu0 0.0
  %5943 = vmatprep.subr.mxu0 0.0
  %5944 = vmatpush1.msra.mxu0 0.0
  %5945 = vmatprep.subr.mxu0 0.0
  %5946 = vmatpush1.msra.mxu0 0.0
  %5947 = vmatprep.subr.mxu0 0.0
  %5948 = vmatpush1.msra.mxu0 0.0
  %5949 = vmatprep.subr.mxu0 0.0
  %5950 = vmatpush1.msra.mxu0 0.0
  %5951 = vmatprep.subr.mxu0 0.0
  %5952 = vmatpush1.msra.mxu0 0.0
  %5953 = vmatprep.subr.mxu0 0.0
  %5954 = vmatpush1.msra.mxu0 0.0
  %5955 = vmatprep.subr.mxu0 0.0
  %5956 = vmatpush1.msra.mxu0 0.0
  %5957 = vmatprep.subr.mxu0 0.0
  %5958 = vmatpush1.msra.mxu0 0.0
  %5959 = vmatprep.subr.mxu0 0.0
  %5960 = vmatpush1.msra.mxu0 0.0
  %5961 = vmatprep.subr.mxu0 0.0
  %5962 = vmatpush1.msra.mxu0 0.0
  %5963 = vmatprep.subr.mxu0 0.0
  %5964 = vmatpush1.msra.mxu0 0.0
  %5965 = vmatprep.subr.mxu0 0.0
  %5966 = vmatpush1.msra.mxu0 0.0
  %5967 = vmatprep.subr.mxu0 0.0
  %5968 = vmatpush1.msra.mxu0 0.0
  %5969 = vmatprep.subr.mxu0 0.0
  %5970 = vmatpush1.msra.mxu0 0.0
  %5971 = vmatprep.subr.mxu0 0.0
  %5972 = vmatpush1.msra.mxu0 0.0
  %5973 = vmatprep.mubr.f32.mxu0 0.0
  %5974 = vmatmul.mubr.f32.gmra.mrb[0].mxu0 %v5907
  %v5975 = vpop.f32.mrb[0].mxu0
  %v5976 = vadd.f32 0.0, %v5975
  %v5977 = vpop.f32.mrb[0].mxu0
  %5978 = vdwg.mxu0
  %v5980 = vsel %vm734, %v5900, 0
  %v5983 = vsel %vm734, %v5976, 0
  %5985 = vmatprep.subr.mxu0 0.0
  %5986 = vmatpush1.msra.mxu0 %v4813
  %5987 = vmatprep.subr.mxu0 0.0
  %5988 = vmatpush1.msra.mxu0 0.0
  %5989 = vmatprep.subr.mxu0 0.0
  %5990 = vmatpush1.msra.mxu0 0.0
  %5991 = vmatprep.subr.mxu0 0.0
  %5992 = vmatpush1.msra.mxu0 0.0
  %5993 = vmatprep.subr.mxu0 0.0
  %5994 = vmatpush1.msra.mxu0 0.0
  %5995 = vmatprep.subr.mxu0 0.0
  %5996 = vmatpush1.msra.mxu0 0.0
  %5997 = vmatprep.subr.mxu0 0.0
  %5998 = vmatpush1.msra.mxu0 0.0
  %5999 = vmatprep.subr.mxu0 0.0
  %6000 = vmatpush1.msra.mxu0 0.0
  %6001 = vmatprep.subr.mxu0 0.0
  %6002 = vmatpush1.msra.mxu0 0.0
  %6003 = vmatprep.subr.mxu0 0.0
  %6004 = vmatpush1.msra.mxu0 0.0
  %6005 = vmatprep.subr.mxu0 0.0
  %6006 = vmatpush1.msra.mxu0 0.0
  %6007 = vmatprep.subr.mxu0 0.0
  %6008 = vmatpush1.msra.mxu0 0.0
  %6009 = vmatprep.subr.mxu0 0.0
  %6010 = vmatpush1.msra.mxu0 0.0
  %6011 = vmatprep.subr.mxu0 0.0
  %6012 = vmatpush1.msra.mxu0 0.0
  %6013 = vmatprep.subr.mxu0 0.0
  %6014 = vmatpush1.msra.mxu0 0.0
  %6015 = vmatprep.subr.mxu0 0.0
  %6016 = vmatpush1.msra.mxu0 0.0
  %6017 = vmatprep.subr.mxu0 0.0
  %6018 = vmatpush1.msra.mxu0 0.0
  %6019 = vmatprep.subr.mxu0 0.0
  %6020 = vmatpush1.msra.mxu0 0.0
  %6021 = vmatprep.subr.mxu0 0.0
  %6022 = vmatpush1.msra.mxu0 0.0
  %6023 = vmatprep.subr.mxu0 0.0
  %6024 = vmatpush1.msra.mxu0 0.0
  %6025 = vmatprep.subr.mxu0 0.0
  %6026 = vmatpush1.msra.mxu0 0.0
  %6027 = vmatprep.subr.mxu0 0.0
  %6028 = vmatpush1.msra.mxu0 0.0
  %6029 = vmatprep.subr.mxu0 0.0
  %6030 = vmatpush1.msra.mxu0 0.0
  %6031 = vmatprep.subr.mxu0 0.0
  %6032 = vmatpush1.msra.mxu0 0.0
  %6033 = vmatprep.subr.mxu0 0.0
  %6034 = vmatpush1.msra.mxu0 0.0
  %6035 = vmatprep.subr.mxu0 0.0
  %6036 = vmatpush1.msra.mxu0 0.0
  %6037 = vmatprep.subr.mxu0 0.0
  %6038 = vmatpush1.msra.mxu0 0.0
  %6039 = vmatprep.subr.mxu0 0.0
  %6040 = vmatpush1.msra.mxu0 0.0
  %6041 = vmatprep.subr.mxu0 0.0
  %6042 = vmatpush1.msra.mxu0 0.0
  %6043 = vmatprep.subr.mxu0 0.0
  %6044 = vmatpush1.msra.mxu0 0.0
  %6045 = vmatprep.subr.mxu0 0.0
  %6046 = vmatpush1.msra.mxu0 0.0
  %6047 = vmatprep.subr.mxu0 0.0
  %6048 = vmatpush1.msra.mxu0 0.0
  %6049 = vmatprep.mubr.f32.mxu0 0.0
  %6050 = vmatmul.mubr.f32.gmra.mrb[0].mxu0 %v5980
  %v6051 = vpop.f32.mrb[0].mxu0
  %v6052 = vadd.f32 0.0, %v6051
  %v6053 = vpop.f32.mrb[0].mxu0
  %6054 = vmatprep.mubr.f32.mxu0 0.0
  %6055 = vmatmul.mubr.f32.gmra.mrb[0].mxu0 %v5983
  %v6056 = vpop.f32.mrb[0].mxu0
  %v6057 = vadd.f32 0.0, %v6056
  %v6058 = vpop.f32.mrb[0].mxu0
  %6059 = vdwg.mxu0
  %v6060 = vadd.f32 %v5637, %v6052
  %v6061 = vadd.f32 %v5642, %v6057
  %6062 = vrot.lane.b32.xlu0 %v4802, 104
  %v6063 = vpop.permute.xlu0 %6062
  %6064 = vrot.lane.b32.xlu0 %v4802, 72
  %v6065 = vpop.permute.xlu0 %6064
  %v6066 = vsel %vm734, %v6063, 0
  %v6068 = vsel %vm734, %v6065, 0
  %6070 = vmatprep.subr.mxu0 0.0
  %6071 = vmatpush1.xpose.msra.mxu0 %v6068
  %6072 = vmatprep.subr.mxu0 0.0
  %6073 = vmatpush1.xpose.msra.mxu0 0.0
  %6074 = vmatprep.subr.mxu0 0.0
  %6075 = vmatpush1.xpose.msra.mxu0 0.0
  %6076 = vmatprep.subr.mxu0 0.0
  %6077 = vmatpush1.xpose.msra.mxu0 0.0
  %6078 = vmatprep.subr.mxu0 0.0
  %6079 = vmatpush1.xpose.msra.mxu0 0.0
  %6080 = vmatprep.subr.mxu0 0.0
  %6081 = vmatpush1.xpose.msra.mxu0 0.0
  %6082 = vmatprep.subr.mxu0 0.0
  %6083 = vmatpush1.xpose.msra.mxu0 0.0
  %6084 = vmatprep.subr.mxu0 0.0
  %6085 = vmatpush1.xpose.msra.mxu0 0.0
  %6086 = vmatprep.subr.mxu0 0.0
  %6087 = vmatpush1.xpose.msra.mxu0 0.0
  %6088 = vmatprep.subr.mxu0 0.0
  %6089 = vmatpush1.xpose.msra.mxu0 0.0
  %6090 = vmatprep.subr.mxu0 0.0
  %6091 = vmatpush1.xpose.msra.mxu0 0.0
  %6092 = vmatprep.subr.mxu0 0.0
  %6093 = vmatpush1.xpose.msra.mxu0 0.0
  %6094 = vmatprep.subr.mxu0 0.0
  %6095 = vmatpush1.xpose.msra.mxu0 0.0
  %6096 = vmatprep.subr.mxu0 0.0
  %6097 = vmatpush1.xpose.msra.mxu0 0.0
  %6098 = vmatprep.subr.mxu0 0.0
  %6099 = vmatpush1.xpose.msra.mxu0 0.0
  %6100 = vmatprep.subr.mxu0 0.0
  %6101 = vmatpush1.xpose.msra.mxu0 0.0
  %6102 = vmatprep.subr.mxu0 0.0
  %6103 = vmatpush1.xpose.msra.mxu0 0.0
  %6104 = vmatprep.subr.mxu0 0.0
  %6105 = vmatpush1.xpose.msra.mxu0 0.0
  %6106 = vmatprep.subr.mxu0 0.0
  %6107 = vmatpush1.xpose.msra.mxu0 0.0
  %6108 = vmatprep.subr.mxu0 0.0
  %6109 = vmatpush1.xpose.msra.mxu0 0.0
  %6110 = vmatprep.subr.mxu0 0.0
  %6111 = vmatpush1.xpose.msra.mxu0 0.0
  %6112 = vmatprep.subr.mxu0 0.0
  %6113 = vmatpush1.xpose.msra.mxu0 0.0
  %6114 = vmatprep.subr.mxu0 0.0
  %6115 = vmatpush1.xpose.msra.mxu0 0.0
  %6116 = vmatprep.subr.mxu0 0.0
  %6117 = vmatpush1.xpose.msra.mxu0 0.0
  %6118 = vmatprep.subr.mxu0 0.0
  %6119 = vmatpush1.xpose.msra.mxu0 0.0
  %6120 = vmatprep.subr.mxu0 0.0
  %6121 = vmatpush1.xpose.msra.mxu0 0.0
  %6122 = vmatprep.subr.mxu0 0.0
  %6123 = vmatpush1.xpose.msra.mxu0 0.0
  %6124 = vmatprep.subr.mxu0 0.0
  %6125 = vmatpush1.xpose.msra.mxu0 0.0
  %6126 = vmatprep.subr.mxu0 0.0
  %6127 = vmatpush1.xpose.msra.mxu0 0.0
  %6128 = vmatprep.subr.mxu0 0.0
  %6129 = vmatpush1.xpose.msra.mxu0 0.0
  %6130 = vmatprep.subr.mxu0 0.0
  %6131 = vmatpush1.xpose.msra.mxu0 0.0
  %6132 = vmatprep.subr.mxu0 0.0
  %6133 = vmatpush1.xpose.msra.mxu0 0.0
  %6134 = vmatprep.mubr.f32.mxu0 0.0
  %6135 = vmatmul.mubr.f32.gmra.mrb[0].mxu0 %v6066
  %v6136 = vpop.f32.mrb[0].mxu0
  %v6137 = vadd.f32 0.0, %v6136
  %v6138 = vpop.f32.mrb[0].mxu0
  %6139 = vdwg.mxu0
  %6140 = vrot.lane.b32.xlu0 %v4807, 104
  %v6141 = vpop.permute.xlu0 %6140
  %6142 = vrot.lane.b32.xlu0 %v4807, 72
  %v6143 = vpop.permute.xlu0 %6142
  %v6144 = vsel %vm734, %v6141, 0
  %v6146 = vsel %vm734, %v6143, 0
  %6148 = vmatprep.subr.mxu0 0.0
  %6149 = vmatpush1.xpose.msra.mxu0 %v6146
  %6150 = vmatprep.subr.mxu0 0.0
  %6151 = vmatpush1.xpose.msra.mxu0 0.0
  %6152 = vmatprep.subr.mxu0 0.0
  %6153 = vmatpush1.xpose.msra.mxu0 0.0
  %6154 = vmatprep.subr.mxu0 0.0
  %6155 = vmatpush1.xpose.msra.mxu0 0.0
  %6156 = vmatprep.subr.mxu0 0.0
  %6157 = vmatpush1.xpose.msra.mxu0 0.0
  %6158 = vmatprep.subr.mxu0 0.0
  %6159 = vmatpush1.xpose.msra.mxu0 0.0
  %6160 = vmatprep.subr.mxu0 0.0
  %6161 = vmatpush1.xpose.msra.mxu0 0.0
  %6162 = vmatprep.subr.mxu0 0.0
  %6163 = vmatpush1.xpose.msra.mxu0 0.0
  %6164 = vmatprep.subr.mxu0 0.0
  %6165 = vmatpush1.xpose.msra.mxu0 0.0
  %6166 = vmatprep.subr.mxu0 0.0
  %6167 = vmatpush1.xpose.msra.mxu0 0.0
  %6168 = vmatprep.subr.mxu0 0.0
  %6169 = vmatpush1.xpose.msra.mxu0 0.0
  %6170 = vmatprep.subr.mxu0 0.0
  %6171 = vmatpush1.xpose.msra.mxu0 0.0
  %6172 = vmatprep.subr.mxu0 0.0
  %6173 = vmatpush1.xpose.msra.mxu0 0.0
  %6174 = vmatprep.subr.mxu0 0.0
  %6175 = vmatpush1.xpose.msra.mxu0 0.0
  %6176 = vmatprep.subr.mxu0 0.0
  %6177 = vmatpush1.xpose.msra.mxu0 0.0
  %6178 = vmatprep.subr.mxu0 0.0
  %6179 = vmatpush1.xpose.msra.mxu0 0.0
  %6180 = vmatprep.subr.mxu0 0.0
  %6181 = vmatpush1.xpose.msra.mxu0 0.0
  %6182 = vmatprep.subr.mxu0 0.0
  %6183 = vmatpush1.xpose.msra.mxu0 0.0
  %6184 = vmatprep.subr.mxu0 0.0
  %6185 = vmatpush1.xpose.msra.mxu0 0.0
  %6186 = vmatprep.subr.mxu0 0.0
  %6187 = vmatpush1.xpose.msra.mxu0 0.0
  %6188 = vmatprep.subr.mxu0 0.0
  %6189 = vmatpush1.xpose.msra.mxu0 0.0
  %6190 = vmatprep.subr.mxu0 0.0
  %6191 = vmatpush1.xpose.msra.mxu0 0.0
  %6192 = vmatprep.subr.mxu0 0.0
  %6193 = vmatpush1.xpose.msra.mxu0 0.0
  %6194 = vmatprep.subr.mxu0 0.0
  %6195 = vmatpush1.xpose.msra.mxu0 0.0
  %6196 = vmatprep.subr.mxu0 0.0
  %6197 = vmatpush1.xpose.msra.mxu0 0.0
  %6198 = vmatprep.subr.mxu0 0.0
  %6199 = vmatpush1.xpose.msra.mxu0 0.0
  %6200 = vmatprep.subr.mxu0 0.0
  %6201 = vmatpush1.xpose.msra.mxu0 0.0
  %6202 = vmatprep.subr.mxu0 0.0
  %6203 = vmatpush1.xpose.msra.mxu0 0.0
  %6204 = vmatprep.subr.mxu0 0.0
  %6205 = vmatpush1.xpose.msra.mxu0 0.0
  %6206 = vmatprep.subr.mxu0 0.0
  %6207 = vmatpush1.xpose.msra.mxu0 0.0
  %6208 = vmatprep.subr.mxu0 0.0
  %6209 = vmatpush1.xpose.msra.mxu0 0.0
  %6210 = vmatprep.subr.mxu0 0.0
  %6211 = vmatpush1.xpose.msra.mxu0 0.0
  %6212 = vmatprep.mubr.f32.mxu0 0.0
  %6213 = vmatmul.mubr.f32.gmra.mrb[0].mxu0 %v6144
  %v6214 = vpop.f32.mrb[0].mxu0
  %v6215 = vadd.f32 0.0, %v6214
  %v6216 = vpop.f32.mrb[0].mxu0
  %6217 = vdwg.mxu0
  %v6218 = vmul.f32 %v6137, 0.35355338
  %v6219 = vmul.f32 %v6215, 0.35355338
  %v6220 = vadd.f32 %v6218, %v570
  %v6221 = vadd.f32 %v6219, %v571
  %v6222 = vsel %vm734, %v6220, -inf
  %6223 = vmax.xlane.f32.xlu0 %v6222
  %v6224 = vpop.xlane.xlu0 %6223
  %v6225 = vsel %vm734, %v6221, -inf
  %6226 = vmax.xlane.f32.xlu0 %v6225
  %v6227 = vpop.xlane.xlu0 %6226
  %v6228 = vsub.f32 %v6220, %v6224
  %v6229 = vsub.f32 %v6221, %v6227
  %v6230 = vmul.f32 %v6228, 1.442695
  %v6231 = vpow.pop %v6230
  %v6232 = vmul.f32 %v6229, 1.442695
  %v6233 = vpow.pop %v6232
  %v6234 = vsel %vm734, %v6231, 0.0
  %6235 = vadd.xlane.f32.xlu0 %v6234
  %v6236 = vpop.xlane.xlu0 %6235
  %v6237 = vsel %vm734, %v6233, 0.0
  %6238 = vadd.xlane.f32.xlu0 %v6237
  %v6239 = vpop.xlane.xlu0 %6238
  %v6240 = vrcp.pop %v6236
  %v6241 = vrcp.pop %v6239
  %v6242 = vmul.f32 %v6231, %v6240
  %v6243 = vmul.f32 %v6233, %v6241
  %6244 = vrot.lane.b32.xlu0 %v4802, 40
  %v6245 = vpop.permute.xlu0 %6244
  %v6248 = vsel %vm734, %v6242, 0
  %6250 = vmatprep.subr.mxu0 0.0
  %6251 = vmatpush1.msra.mxu0 %v6245
  %6252 = vmatprep.subr.mxu0 0.0
  %6253 = vmatpush1.msra.mxu0 0.0
  %6254 = vmatprep.subr.mxu0 0.0
  %6255 = vmatpush1.msra.mxu0 0.0
  %6256 = vmatprep.subr.mxu0 0.0
  %6257 = vmatpush1.msra.mxu0 0.0
  %6258 = vmatprep.subr.mxu0 0.0
  %6259 = vmatpush1.msra.mxu0 0.0
  %6260 = vmatprep.subr.mxu0 0.0
  %6261 = vmatpush1.msra.mxu0 0.0
  %6262 = vmatprep.subr.mxu0 0.0
  %6263 = vmatpush1.msra.mxu0 0.0
  %6264 = vmatprep.subr.mxu0 0.0
  %6265 = vmatpush1.msra.mxu0 0.0
  %6266 = vmatprep.subr.mxu0 0.0
  %6267 = vmatpush1.msra.mxu0 0.0
  %6268 = vmatprep.subr.mxu0 0.0
  %6269 = vmatpush1.msra.mxu0 0.0
  %6270 = vmatprep.subr.mxu0 0.0
  %6271 = vmatpush1.msra.mxu0 0.0
  %6272 = vmatprep.subr.mxu0 0.0
  %6273 = vmatpush1.msra.mxu0 0.0
  %6274 = vmatprep.subr.mxu0 0.0
  %6275 = vmatpush1.msra.mxu0 0.0
  %6276 = vmatprep.subr.mxu0 0.0
  %6277 = vmatpush1.msra.mxu0 0.0
  %6278 = vmatprep.subr.mxu0 0.0
  %6279 = vmatpush1.msra.mxu0 0.0
  %6280 = vmatprep.subr.mxu0 0.0
  %6281 = vmatpush1.msra.mxu0 0.0
  %6282 = vmatprep.subr.mxu0 0.0
  %6283 = vmatpush1.msra.mxu0 0.0
  %6284 = vmatprep.subr.mxu0 0.0
  %6285 = vmatpush1.msra.mxu0 0.0
  %6286 = vmatprep.subr.mxu0 0.0
  %6287 = vmatpush1.msra.mxu0 0.0
  %6288 = vmatprep.subr.mxu0 0.0
  %6289 = vmatpush1.msra.mxu0 0.0
  %6290 = vmatprep.subr.mxu0 0.0
  %6291 = vmatpush1.msra.mxu0 0.0
  %6292 = vmatprep.subr.mxu0 0.0
  %6293 = vmatpush1.msra.mxu0 0.0
  %6294 = vmatprep.subr.mxu0 0.0
  %6295 = vmatpush1.msra.mxu0 0.0
  %6296 = vmatprep.subr.mxu0 0.0
  %6297 = vmatpush1.msra.mxu0 0.0
  %6298 = vmatprep.subr.mxu0 0.0
  %6299 = vmatpush1.msra.mxu0 0.0
  %6300 = vmatprep.subr.mxu0 0.0
  %6301 = vmatpush1.msra.mxu0 0.0
  %6302 = vmatprep.subr.mxu0 0.0
  %6303 = vmatpush1.msra.mxu0 0.0
  %6304 = vmatprep.subr.mxu0 0.0
  %6305 = vmatpush1.msra.mxu0 0.0
  %6306 = vmatprep.subr.mxu0 0.0
  %6307 = vmatpush1.msra.mxu0 0.0
  %6308 = vmatprep.subr.mxu0 0.0
  %6309 = vmatpush1.msra.mxu0 0.0
  %6310 = vmatprep.subr.mxu0 0.0
  %6311 = vmatpush1.msra.mxu0 0.0
  %6312 = vmatprep.subr.mxu0 0.0
  %6313 = vmatpush1.msra.mxu0 0.0
  %6314 = vmatprep.mubr.f32.mxu0 0.0
  %6315 = vmatmul.mubr.f32.gmra.mrb[0].mxu0 %v6248
  %v6316 = vpop.f32.mrb[0].mxu0
  %v6317 = vadd.f32 0.0, %v6316
  %v6318 = vpop.f32.mrb[0].mxu0
  %6319 = vdwg.mxu0
  %6320 = vrot.lane.b32.xlu0 %v4807, 40
  %v6321 = vpop.permute.xlu0 %6320
  %v6324 = vsel %vm734, %v6243, 0
  %6326 = vmatprep.subr.mxu0 0.0
  %6327 = vmatpush1.msra.mxu0 %v6321
  %6328 = vmatprep.subr.mxu0 0.0
  %6329 = vmatpush1.msra.mxu0 0.0
  %6330 = vmatprep.subr.mxu0 0.0
  %6331 = vmatpush1.msra.mxu0 0.0
  %6332 = vmatprep.subr.mxu0 0.0
  %6333 = vmatpush1.msra.mxu0 0.0
  %6334 = vmatprep.subr.mxu0 0.0
  %6335 = vmatpush1.msra.mxu0 0.0
  %6336 = vmatprep.subr.mxu0 0.0
  %6337 = vmatpush1.msra.mxu0 0.0
  %6338 = vmatprep.subr.mxu0 0.0
  %6339 = vmatpush1.msra.mxu0 0.0
  %6340 = vmatprep.subr.mxu0 0.0
  %6341 = vmatpush1.msra.mxu0 0.0
  %6342 = vmatprep.subr.mxu0 0.0
  %6343 = vmatpush1.msra.mxu0 0.0
  %6344 = vmatprep.subr.mxu0 0.0
  %6345 = vmatpush1.msra.mxu0 0.0
  %6346 = vmatprep.subr.mxu0 0.0
  %6347 = vmatpush1.msra.mxu0 0.0
  %6348 = vmatprep.subr.mxu0 0.0
  %6349 = vmatpush1.msra.mxu0 0.0
  %6350 = vmatprep.subr.mxu0 0.0
  %6351 = vmatpush1.msra.mxu0 0.0
  %6352 = vmatprep.subr.mxu0 0.0
  %6353 = vmatpush1.msra.mxu0 0.0
  %6354 = vmatprep.subr.mxu0 0.0
  %6355 = vmatpush1.msra.mxu0 0.0
  %6356 = vmatprep.subr.mxu0 0.0
  %6357 = vmatpush1.msra.mxu0 0.0
  %6358 = vmatprep.subr.mxu0 0.0
  %6359 = vmatpush1.msra.mxu0 0.0
  %6360 = vmatprep.subr.mxu0 0.0
  %6361 = vmatpush1.msra.mxu0 0.0
  %6362 = vmatprep.subr.mxu0 0.0
  %6363 = vmatpush1.msra.mxu0 0.0
  %6364 = vmatprep.subr.mxu0 0.0
  %6365 = vmatpush1.msra.mxu0 0.0
  %6366 = vmatprep.subr.mxu0 0.0
  %6367 = vmatpush1.msra.mxu0 0.0
  %6368 = vmatprep.subr.mxu0 0.0
  %6369 = vmatpush1.msra.mxu0 0.0
  %6370 = vmatprep.subr.mxu0 0.0
  %6371 = vmatpush1.msra.mxu0 0.0
  %6372 = vmatprep.subr.mxu0 0.0
  %6373 = vmatpush1.msra.mxu0 0.0
  %6374 = vmatprep.subr.mxu0 0.0
  %6375 = vmatpush1.msra.mxu0 0.0
  %6376 = vmatprep.subr.mxu0 0.0
  %6377 = vmatpush1.msra.mxu0 0.0
  %6378 = vmatprep.subr.mxu0 0.0
  %6379 = vmatpush1.msra.mxu0 0.0
  %6380 = vmatprep.subr.mxu0 0.0
  %6381 = vmatpush1.msra.mxu0 0.0
  %6382 = vmatprep.subr.mxu0 0.0
  %6383 = vmatpush1.msra.mxu0 0.0
  %6384 = vmatprep.subr.mxu0 0.0
  %6385 = vmatpush1.msra.mxu0 0.0
  %6386 = vmatprep.subr.mxu0 0.0
  %6387 = vmatpush1.msra.mxu0 0.0
  %6388 = vmatprep.subr.mxu0 0.0
  %6389 = vmatpush1.msra.mxu0 0.0
  %6390 = vmatprep.mubr.f32.mxu0 0.0
  %6391 = vmatmul.mubr.f32.gmra.mrb[0].mxu0 %v6324
  %v6392 = vpop.f32.mrb[0].mxu0
  %v6393 = vadd.f32 0.0, %v6392
  %v6394 = vpop.f32.mrb[0].mxu0
  %6395 = vdwg.mxu0
  %v6397 = vsel %vm734, %v6317, 0
  %v6400 = vsel %vm734, %v6393, 0
  %6402 = vmatprep.subr.mxu0 0.0
  %6403 = vmatpush1.msra.mxu0 %v4814
  %6404 = vmatprep.subr.mxu0 0.0
  %6405 = vmatpush1.msra.mxu0 0.0
  %6406 = vmatprep.subr.mxu0 0.0
  %6407 = vmatpush1.msra.mxu0 0.0
  %6408 = vmatprep.subr.mxu0 0.0
  %6409 = vmatpush1.msra.mxu0 0.0
  %6410 = vmatprep.subr.mxu0 0.0
  %6411 = vmatpush1.msra.mxu0 0.0
  %6412 = vmatprep.subr.mxu0 0.0
  %6413 = vmatpush1.msra.mxu0 0.0
  %6414 = vmatprep.subr.mxu0 0.0
  %6415 = vmatpush1.msra.mxu0 0.0
  %6416 = vmatprep.subr.mxu0 0.0
  %6417 = vmatpush1.msra.mxu0 0.0
  %6418 = vmatprep.subr.mxu0 0.0
  %6419 = vmatpush1.msra.mxu0 0.0
  %6420 = vmatprep.subr.mxu0 0.0
  %6421 = vmatpush1.msra.mxu0 0.0
  %6422 = vmatprep.subr.mxu0 0.0
  %6423 = vmatpush1.msra.mxu0 0.0
  %6424 = vmatprep.subr.mxu0 0.0
  %6425 = vmatpush1.msra.mxu0 0.0
  %6426 = vmatprep.subr.mxu0 0.0
  %6427 = vmatpush1.msra.mxu0 0.0
  %6428 = vmatprep.subr.mxu0 0.0
  %6429 = vmatpush1.msra.mxu0 0.0
  %6430 = vmatprep.subr.mxu0 0.0
  %6431 = vmatpush1.msra.mxu0 0.0
  %6432 = vmatprep.subr.mxu0 0.0
  %6433 = vmatpush1.msra.mxu0 0.0
  %6434 = vmatprep.subr.mxu0 0.0
  %6435 = vmatpush1.msra.mxu0 0.0
  %6436 = vmatprep.subr.mxu0 0.0
  %6437 = vmatpush1.msra.mxu0 0.0
  %6438 = vmatprep.subr.mxu0 0.0
  %6439 = vmatpush1.msra.mxu0 0.0
  %6440 = vmatprep.subr.mxu0 0.0
  %6441 = vmatpush1.msra.mxu0 0.0
  %6442 = vmatprep.subr.mxu0 0.0
  %6443 = vmatpush1.msra.mxu0 0.0
  %6444 = vmatprep.subr.mxu0 0.0
  %6445 = vmatpush1.msra.mxu0 0.0
  %6446 = vmatprep.subr.mxu0 0.0
  %6447 = vmatpush1.msra.mxu0 0.0
  %6448 = vmatprep.subr.mxu0 0.0
  %6449 = vmatpush1.msra.mxu0 0.0
  %6450 = vmatprep.subr.mxu0 0.0
  %6451 = vmatpush1.msra.mxu0 0.0
  %6452 = vmatprep.subr.mxu0 0.0
  %6453 = vmatpush1.msra.mxu0 0.0
  %6454 = vmatprep.subr.mxu0 0.0
  %6455 = vmatpush1.msra.mxu0 0.0
  %6456 = vmatprep.subr.mxu0 0.0
  %6457 = vmatpush1.msra.mxu0 0.0
  %6458 = vmatprep.subr.mxu0 0.0
  %6459 = vmatpush1.msra.mxu0 0.0
  %6460 = vmatprep.subr.mxu0 0.0
  %6461 = vmatpush1.msra.mxu0 0.0
  %6462 = vmatprep.subr.mxu0 0.0
  %6463 = vmatpush1.msra.mxu0 0.0
  %6464 = vmatprep.subr.mxu0 0.0
  %6465 = vmatpush1.msra.mxu0 0.0
  %6466 = vmatprep.mubr.f32.mxu0 0.0
  %6467 = vmatmul.mubr.f32.gmra.mrb[0].mxu0 %v6397
  %v6468 = vpop.f32.mrb[0].mxu0
  %v6469 = vadd.f32 0.0, %v6468
  %v6470 = vpop.f32.mrb[0].mxu0
  %6471 = vmatprep.mubr.f32.mxu0 0.0
  %6472 = vmatmul.mubr.f32.gmra.mrb[0].mxu0 %v6400
  %v6473 = vpop.f32.mrb[0].mxu0
  %v6474 = vadd.f32 0.0, %v6473
  %v6475 = vpop.f32.mrb[0].mxu0
  %6476 = vdwg.mxu0
  %v6477 = vadd.f32 %v6060, %v6469
  %v6478 = vadd.f32 %v6061, %v6474
  %v6480 = vlaneseq
  %v6481 = vshrl.u32 %v6480, 7
  %v6482 = vsub.s32 0, %v6481
  %v6483 = vrot.slane %v4816, %v6482
  %v6485 = vadd.f32 %v6477, %v6483
  %v6486 = vadd.f32 %v6478, %v6483
  %v6487 = vadd.f32 %v4658, %v6485
  %v6488 = vadd.f32 %v4659, %v6486
  %v6489 = vsel %vm580, %v6487, 0.0
  %6490 = vadd.xlane.f32.xlu0 %v6489
  %v6491 = vpop.xlane.xlu0 %6490
  %v6492 = vsel %vm580, %v6488, 0.0
  %6493 = vadd.xlane.f32.xlu0 %v6492
  %v6494 = vpop.xlane.xlu0 %6493
  %v6495 = vmul.f32 %v6491, %v587
  %v6496 = vmul.f32 %v6494, %v587
  %v6497 = vsub.f32 %v6487, %v6495
  %v6498 = vsub.f32 %v6488, %v6496
  %v6499 = vmul.f32 %v6497, %v6497
  %v6500 = vmul.f32 %v6498, %v6498
  %v6501 = vsel %vm580, %v6499, 0.0
  %6502 = vadd.xlane.f32.xlu0 %v6501
  %v6503 = vpop.xlane.xlu0 %6502
  %v6504 = vsel %vm580, %v6500, 0.0
  %6505 = vadd.xlane.f32.xlu0 %v6504
  %v6506 = vpop.xlane.xlu0 %6505
  %v6507 = vmul.f32 %v6503, 0.032258064
  %v6508 = vmul.f32 %v6506, 0.032258064
  %v6509 = vrsqrt.pop %v6507
  %v6510 = vmul.f32 %v6507, %v6509
  %vm6511 = vcmp.eq.f32.partialorder %v6507, inf
  %v6512 = vsel %vm6511, %v6507, %v6510
  %vm6513 = vcmp.eq.f32.partialorder %v6507, 0.0
  %v6514 = vand.u32 %v6507, 2147483648
  %v6515 = vsel %vm6513, %v6514, %v6512
  %v6516 = vrsqrt.pop %v6508
  %v6517 = vmul.f32 %v6508, %v6516
  %vm6518 = vcmp.eq.f32.partialorder %v6508, inf
  %v6519 = vsel %vm6518, %v6508, %v6517
  %vm6520 = vcmp.eq.f32.partialorder %v6508, 0.0
  %v6521 = vand.u32 %v6508, 2147483648
  %v6522 = vsel %vm6520, %v6521, %v6519
  %v6523 = vlaneseq
  %v6524 = vshrl.u32 %v6523, 7
  %v6525 = vsub.s32 1, %v6524
  %v6526 = vrot.slane %v4661, %v6525
  %v6527 = vmul.f32 %v6526, %v6497
  %v6528 = vmul.f32 %v6526, %v6498
  %v6529 = vadd.f32 %v6515, 1e-06
  %v6530 = vadd.f32 %v6522, 1e-06
  %v6531 = vrcp.pop %v6529
  %v6532 = vrcp.pop %v6530
  %v6533 = vmul.f32 %v6527, %v6531
  %v6534 = vmul.f32 %v6528, %v6532
  %v6535 = vlaneseq
  %v6536 = vshrl.u32 %v6535, 7
  %v6537 = vsub.s32 1, %v6536
  %v6538 = vrot.slane %v4663, %v6537
  %v6539 = vadd.f32 %v6533, %v6538
  %v6540 = vadd.f32 %v6534, %v6538
  %s6541 = scalar_lea.vmem %s39, 32
  %v6542 = vld [vmem:[%s6541] sm:$0xff]
  %v6543 = vld [vmem:[%s6541 + $0x8] sm:$0xff]
  %v6544 = vld [vmem:[%s6541 + $0x10] sm:$0xff]
  %v6545 = vld [vmem:[%s6541 + $0x18] sm:$0xff]
  %s6546 = scalar_lea.vmem %s41, 1
  %v6547 = vld [vmem:[%s6546] sm:$0x1]
  %v6549 = vlaneseq
  %v6550 = vshrl.u32 %v6549, 7
  %v6551 = vsub.s32 0, %v6550
  %v6552 = vrot.slane %v6547, %v6551
  %v6555 = vsel %vm580, %v6539, 0
  %v6558 = vsel %vm580, %v6540, 0
  %6560 = vmatprep.subr.mxu0 0.0
  %6561 = vmatpush1.msra.mxu0 %v6542
  %6562 = vmatprep.subr.mxu0 0.0
  %6563 = vmatpush1.msra.mxu0 %v6543
  %6564 = vmatprep.subr.mxu0 0.0
  %6565 = vmatpush1.msra.mxu0 %v6544
  %6566 = vmatprep.subr.mxu0 0.0
  %6567 = vmatpush1.msra.mxu0 %v6545
  %6568 = vmatprep.subr.mxu0 0.0
  %6569 = vmatpush1.msra.mxu0 0.0
  %6570 = vmatprep.subr.mxu0 0.0
  %6571 = vmatpush1.msra.mxu0 0.0
  %6572 = vmatprep.subr.mxu0 0.0
  %6573 = vmatpush1.msra.mxu0 0.0
  %6574 = vmatprep.subr.mxu0 0.0
  %6575 = vmatpush1.msra.mxu0 0.0
  %6576 = vmatprep.subr.mxu0 0.0
  %6577 = vmatpush1.msra.mxu0 0.0
  %6578 = vmatprep.subr.mxu0 0.0
  %6579 = vmatpush1.msra.mxu0 0.0
  %6580 = vmatprep.subr.mxu0 0.0
  %6581 = vmatpush1.msra.mxu0 0.0
  %6582 = vmatprep.subr.mxu0 0.0
  %6583 = vmatpush1.msra.mxu0 0.0
  %6584 = vmatprep.subr.mxu0 0.0
  %6585 = vmatpush1.msra.mxu0 0.0
  %6586 = vmatprep.subr.mxu0 0.0
  %6587 = vmatpush1.msra.mxu0 0.0
  %6588 = vmatprep.subr.mxu0 0.0
  %6589 = vmatpush1.msra.mxu0 0.0
  %6590 = vmatprep.subr.mxu0 0.0
  %6591 = vmatpush1.msra.mxu0 0.0
  %6592 = vmatprep.subr.mxu0 0.0
  %6593 = vmatpush1.msra.mxu0 0.0
  %6594 = vmatprep.subr.mxu0 0.0
  %6595 = vmatpush1.msra.mxu0 0.0
  %6596 = vmatprep.subr.mxu0 0.0
  %6597 = vmatpush1.msra.mxu0 0.0
  %6598 = vmatprep.subr.mxu0 0.0
  %6599 = vmatpush1.msra.mxu0 0.0
  %6600 = vmatprep.subr.mxu0 0.0
  %6601 = vmatpush1.msra.mxu0 0.0
  %6602 = vmatprep.subr.mxu0 0.0
  %6603 = vmatpush1.msra.mxu0 0.0
  %6604 = vmatprep.subr.mxu0 0.0
  %6605 = vmatpush1.msra.mxu0 0.0
  %6606 = vmatprep.subr.mxu0 0.0
  %6607 = vmatpush1.msra.mxu0 0.0
  %6608 = vmatprep.subr.mxu0 0.0
  %6609 = vmatpush1.msra.mxu0 0.0
  %6610 = vmatprep.subr.mxu0 0.0
  %6611 = vmatpush1.msra.mxu0 0.0
  %6612 = vmatprep.subr.mxu0 0.0
  %6613 = vmatpush1.msra.mxu0 0.0
  %6614 = vmatprep.subr.mxu0 0.0
  %6615 = vmatpush1.msra.mxu0 0.0
  %6616 = vmatprep.subr.mxu0 0.0
  %6617 = vmatpush1.msra.mxu0 0.0
  %6618 = vmatprep.subr.mxu0 0.0
  %6619 = vmatpush1.msra.mxu0 0.0
  %6620 = vmatprep.subr.mxu0 0.0
  %6621 = vmatpush1.msra.mxu0 0.0
  %6622 = vmatprep.subr.mxu0 0.0
  %6623 = vmatpush1.msra.mxu0 0.0
  %6624 = vmatprep.mubr.f32.mxu0 0.0
  %6625 = vmatmul.mubr.f32.gmra.mrb[0].mxu0 %v6555
  %v6626 = vpop.f32.mrb[0].mxu0
  %v6627 = vadd.f32 %v6552, %v6626
  %v6628 = vpop.f32.mrb[0].mxu0
  %6629 = vmatprep.mubr.f32.mxu0 0.0
  %6630 = vmatmul.mubr.f32.gmra.mrb[0].mxu0 %v6558
  %v6631 = vpop.f32.mrb[0].mxu0
  %v6632 = vadd.f32 %v6552, %v6631
  %v6633 = vpop.f32.mrb[0].mxu0
  %6634 = vdwg.mxu0
  %s6635 = scalar_lea.vmem %s43, 32
  %v6636 = vld [vmem:[%s6635] sm:$0xff]
  %v6637 = vld [vmem:[%s6635 + $0x8] sm:$0xff]
  %v6638 = vld [vmem:[%s6635 + $0x10] sm:$0xff]
  %v6639 = vld [vmem:[%s6635 + $0x18] sm:$0xff]
  %s6640 = scalar_lea.vmem %s45, 1
  %v6641 = vld [vmem:[%s6640] sm:$0x1]
  %v6643 = vlaneseq
  %v6644 = vshrl.u32 %v6643, 7
  %v6645 = vsub.s32 0, %v6644
  %v6646 = vrot.slane %v6641, %v6645
  %6648 = vmatprep.subr.mxu0 0.0
  %6649 = vmatpush1.msra.mxu0 %v6636
  %6650 = vmatprep.subr.mxu0 0.0
  %6651 = vmatpush1.msra.mxu0 %v6637
  %6652 = vmatprep.subr.mxu0 0.0
  %6653 = vmatpush1.msra.mxu0 %v6638
  %6654 = vmatprep.subr.mxu0 0.0
  %6655 = vmatpush1.msra.mxu0 %v6639
  %6656 = vmatprep.subr.mxu0 0.0
  %6657 = vmatpush1.msra.mxu0 0.0
  %6658 = vmatprep.subr.mxu0 0.0
  %6659 = vmatpush1.msra.mxu0 0.0
  %6660 = vmatprep.subr.mxu0 0.0
  %6661 = vmatpush1.msra.mxu0 0.0
  %6662 = vmatprep.subr.mxu0 0.0
  %6663 = vmatpush1.msra.mxu0 0.0
  %6664 = vmatprep.subr.mxu0 0.0
  %6665 = vmatpush1.msra.mxu0 0.0
  %6666 = vmatprep.subr.mxu0 0.0
  %6667 = vmatpush1.msra.mxu0 0.0
  %6668 = vmatprep.subr.mxu0 0.0
  %6669 = vmatpush1.msra.mxu0 0.0
  %6670 = vmatprep.subr.mxu0 0.0
  %6671 = vmatpush1.msra.mxu0 0.0
  %6672 = vmatprep.subr.mxu0 0.0
  %6673 = vmatpush1.msra.mxu0 0.0
  %6674 = vmatprep.subr.mxu0 0.0
  %6675 = vmatpush1.msra.mxu0 0.0
  %6676 = vmatprep.subr.mxu0 0.0
  %6677 = vmatpush1.msra.mxu0 0.0
  %6678 = vmatprep.subr.mxu0 0.0
  %6679 = vmatpush1.msra.mxu0 0.0
  %6680 = vmatprep.subr.mxu0 0.0
  %6681 = vmatpush1.msra.mxu0 0.0
  %6682 = vmatprep.subr.mxu0 0.0
  %6683 = vmatpush1.msra.mxu0 0.0
  %6684 = vmatprep.subr.mxu0 0.0
  %6685 = vmatpush1.msra.mxu0 0.0
  %6686 = vmatprep.subr.mxu0 0.0
  %6687 = vmatpush1.msra.mxu0 0.0
  %6688 = vmatprep.subr.mxu0 0.0
  %6689 = vmatpush1.msra.mxu0 0.0
  %6690 = vmatprep.subr.mxu0 0.0
  %6691 = vmatpush1.msra.mxu0 0.0
  %6692 = vmatprep.subr.mxu0 0.0
  %6693 = vmatpush1.msra.mxu0 0.0
  %6694 = vmatprep.subr.mxu0 0.0
  %6695 = vmatpush1.msra.mxu0 0.0
  %6696 = vmatprep.subr.mxu0 0.0
  %6697 = vmatpush1.msra.mxu0 0.0
  %6698 = vmatprep.subr.mxu0 0.0
  %6699 = vmatpush1.msra.mxu0 0.0
  %6700 = vmatprep.subr.mxu0 0.0
  %6701 = vmatpush1.msra.mxu0 0.0
  %6702 = vmatprep.subr.mxu0 0.0
  %6703 = vmatpush1.msra.mxu0 0.0
  %6704 = vmatprep.subr.mxu0 0.0
  %6705 = vmatpush1.msra.mxu0 0.0
  %6706 = vmatprep.subr.mxu0 0.0
  %6707 = vmatpush1.msra.mxu0 0.0
  %6708 = vmatprep.subr.mxu0 0.0
  %6709 = vmatpush1.msra.mxu0 0.0
  %6710 = vmatprep.subr.mxu0 0.0
  %6711 = vmatpush1.msra.mxu0 0.0
  %6712 = vmatprep.mubr.f32.mxu0 0.0
  %6713 = vmatmul.mubr.f32.gmra.mrb[0].mxu0 %v2560
  %v6714 = vpop.f32.mrb[0].mxu0
  %v6715 = vadd.f32 %v6646, %v6714
  %v6716 = vpop.f32.mrb[0].mxu0
  %6717 = vmatprep.mubr.f32.mxu0 0.0
  %6718 = vmatmul.mubr.f32.gmra.mrb[0].mxu0 %v2563
  %v6719 = vpop.f32.mrb[0].mxu0
  %v6720 = vadd.f32 %v6646, %v6719
  %v6721 = vpop.f32.mrb[0].mxu0
  %6722 = vdwg.mxu0
  %s6723 = scalar_lea.vmem %s47, 32
  %v6724 = vld [vmem:[%s6723] sm:$0xff]
  %v6725 = vld [vmem:[%s6723 + $0x8] sm:$0xff]
  %v6726 = vld [vmem:[%s6723 + $0x10] sm:$0xff]
  %v6727 = vld [vmem:[%s6723 + $0x18] sm:$0xff]
  %s6728 = scalar_lea.vmem %s49, 1
  %v6729 = vld [vmem:[%s6728] sm:$0x1]
  %v6731 = vsel %vm734, %v6627, 0
  %v6734 = vsel %vm734, %v6715, 0
  %6736 = vmatprep.subr.mxu0 0.0
  %6737 = vmatpush1.xpose.msra.mxu0 %v6734
  %6738 = vmatprep.subr.mxu0 0.0
  %6739 = vmatpush1.xpose.msra.mxu0 0.0
  %6740 = vmatprep.subr.mxu0 0.0
  %6741 = vmatpush1.xpose.msra.mxu0 0.0
  %6742 = vmatprep.subr.mxu0 0.0
  %6743 = vmatpush1.xpose.msra.mxu0 0.0
  %6744 = vmatprep.subr.mxu0 0.0
  %6745 = vmatpush1.xpose.msra.mxu0 0.0
  %6746 = vmatprep.subr.mxu0 0.0
  %6747 = vmatpush1.xpose.msra.mxu0 0.0
  %6748 = vmatprep.subr.mxu0 0.0
  %6749 = vmatpush1.xpose.msra.mxu0 0.0
  %6750 = vmatprep.subr.mxu0 0.0
  %6751 = vmatpush1.xpose.msra.mxu0 0.0
  %6752 = vmatprep.subr.mxu0 0.0
  %6753 = vmatpush1.xpose.msra.mxu0 0.0
  %6754 = vmatprep.subr.mxu0 0.0
  %6755 = vmatpush1.xpose.msra.mxu0 0.0
  %6756 = vmatprep.subr.mxu0 0.0
  %6757 = vmatpush1.xpose.msra.mxu0 0.0
  %6758 = vmatprep.subr.mxu0 0.0
  %6759 = vmatpush1.xpose.msra.mxu0 0.0
  %6760 = vmatprep.subr.mxu0 0.0
  %6761 = vmatpush1.xpose.msra.mxu0 0.0
  %6762 = vmatprep.subr.mxu0 0.0
  %6763 = vmatpush1.xpose.msra.mxu0 0.0
  %6764 = vmatprep.subr.mxu0 0.0
  %6765 = vmatpush1.xpose.msra.mxu0 0.0
  %6766 = vmatprep.subr.mxu0 0.0
  %6767 = vmatpush1.xpose.msra.mxu0 0.0
  %6768 = vmatprep.subr.mxu0 0.0
  %6769 = vmatpush1.xpose.msra.mxu0 0.0
  %6770 = vmatprep.subr.mxu0 0.0
  %6771 = vmatpush1.xpose.msra.mxu0 0.0
  %6772 = vmatprep.subr.mxu0 0.0
  %6773 = vmatpush1.xpose.msra.mxu0 0.0
  %6774 = vmatprep.subr.mxu0 0.0
  %6775 = vmatpush1.xpose.msra.mxu0 0.0
  %6776 = vmatprep.subr.mxu0 0.0
  %6777 = vmatpush1.xpose.msra.mxu0 0.0
  %6778 = vmatprep.subr.mxu0 0.0
  %6779 = vmatpush1.xpose.msra.mxu0 0.0
  %6780 = vmatprep.subr.mxu0 0.0
  %6781 = vmatpush1.xpose.msra.mxu0 0.0
  %6782 = vmatprep.subr.mxu0 0.0
  %6783 = vmatpush1.xpose.msra.mxu0 0.0
  %6784 = vmatprep.subr.mxu0 0.0
  %6785 = vmatpush1.xpose.msra.mxu0 0.0
  %6786 = vmatprep.subr.mxu0 0.0
  %6787 = vmatpush1.xpose.msra.mxu0 0.0
  %6788 = vmatprep.subr.mxu0 0.0
  %6789 = vmatpush1.xpose.msra.mxu0 0.0
  %6790 = vmatprep.subr.mxu0 0.0
  %6791 = vmatpush1.xpose.msra.mxu0 0.0
  %6792 = vmatprep.subr.mxu0 0.0
  %6793 = vmatpush1.xpose.msra.mxu0 0.0
  %6794 = vmatprep.subr.mxu0 0.0
  %6795 = vmatpush1.xpose.msra.mxu0 0.0
  %6796 = vmatprep.subr.mxu0 0.0
  %6797 = vmatpush1.xpose.msra.mxu0 0.0
  %6798 = vmatprep.subr.mxu0 0.0
  %6799 = vmatpush1.xpose.msra.mxu0 0.0
  %6800 = vmatprep.mubr.f32.mxu0 0.0
  %6801 = vmatmul.mubr.f32.gmra.mrb[0].mxu0 %v6731
  %v6802 = vpop.f32.mrb[0].mxu0
  %v6803 = vadd.f32 0.0, %v6802
  %v6804 = vpop.f32.mrb[0].mxu0
  %6805 = vdwg.mxu0
  %v6807 = vsel %vm734, %v6632, 0
  %v6810 = vsel %vm734, %v6720, 0
  %6812 = vmatprep.subr.mxu0 0.0
  %6813 = vmatpush1.xpose.msra.mxu0 %v6810
  %6814 = vmatprep.subr.mxu0 0.0
  %6815 = vmatpush1.xpose.msra.mxu0 0.0
  %6816 = vmatprep.subr.mxu0 0.0
  %6817 = vmatpush1.xpose.msra.mxu0 0.0
  %6818 = vmatprep.subr.mxu0 0.0
  %6819 = vmatpush1.xpose.msra.mxu0 0.0
  %6820 = vmatprep.subr.mxu0 0.0
  %6821 = vmatpush1.xpose.msra.mxu0 0.0
  %6822 = vmatprep.subr.mxu0 0.0
  %6823 = vmatpush1.xpose.msra.mxu0 0.0
  %6824 = vmatprep.subr.mxu0 0.0
  %6825 = vmatpush1.xpose.msra.mxu0 0.0
  %6826 = vmatprep.subr.mxu0 0.0
  %6827 = vmatpush1.xpose.msra.mxu0 0.0
  %6828 = vmatprep.subr.mxu0 0.0
  %6829 = vmatpush1.xpose.msra.mxu0 0.0
  %6830 = vmatprep.subr.mxu0 0.0
  %6831 = vmatpush1.xpose.msra.mxu0 0.0
  %6832 = vmatprep.subr.mxu0 0.0
  %6833 = vmatpush1.xpose.msra.mxu0 0.0
  %6834 = vmatprep.subr.mxu0 0.0
  %6835 = vmatpush1.xpose.msra.mxu0 0.0
  %6836 = vmatprep.subr.mxu0 0.0
  %6837 = vmatpush1.xpose.msra.mxu0 0.0
  %6838 = vmatprep.subr.mxu0 0.0
  %6839 = vmatpush1.xpose.msra.mxu0 0.0
  %6840 = vmatprep.subr.mxu0 0.0
  %6841 = vmatpush1.xpose.msra.mxu0 0.0
  %6842 = vmatprep.subr.mxu0 0.0
  %6843 = vmatpush1.xpose.msra.mxu0 0.0
  %6844 = vmatprep.subr.mxu0 0.0
  %6845 = vmatpush1.xpose.msra.mxu0 0.0
  %6846 = vmatprep.subr.mxu0 0.0
  %6847 = vmatpush1.xpose.msra.mxu0 0.0
  %6848 = vmatprep.subr.mxu0 0.0
  %6849 = vmatpush1.xpose.msra.mxu0 0.0
  %6850 = vmatprep.subr.mxu0 0.0
  %6851 = vmatpush1.xpose.msra.mxu0 0.0
  %6852 = vmatprep.subr.mxu0 0.0
  %6853 = vmatpush1.xpose.msra.mxu0 0.0
  %6854 = vmatprep.subr.mxu0 0.0
  %6855 = vmatpush1.xpose.msra.mxu0 0.0
  %6856 = vmatprep.subr.mxu0 0.0
  %6857 = vmatpush1.xpose.msra.mxu0 0.0
  %6858 = vmatprep.subr.mxu0 0.0
  %6859 = vmatpush1.xpose.msra.mxu0 0.0
  %6860 = vmatprep.subr.mxu0 0.0
  %6861 = vmatpush1.xpose.msra.mxu0 0.0
  %6862 = vmatprep.subr.mxu0 0.0
  %6863 = vmatpush1.xpose.msra.mxu0 0.0
  %6864 = vmatprep.subr.mxu0 0.0
  %6865 = vmatpush1.xpose.msra.mxu0 0.0
  %6866 = vmatprep.subr.mxu0 0.0
  %6867 = vmatpush1.xpose.msra.mxu0 0.0
  %6868 = vmatprep.subr.mxu0 0.0
  %6869 = vmatpush1.xpose.msra.mxu0 0.0
  %6870 = vmatprep.subr.mxu0 0.0
  %6871 = vmatpush1.xpose.msra.mxu0 0.0
  %6872 = vmatprep.subr.mxu0 0.0
  %6873 = vmatpush1.xpose.msra.mxu0 0.0
  %6874 = vmatprep.subr.mxu0 0.0
  %6875 = vmatpush1.xpose.msra.mxu0 0.0
  %6876 = vmatprep.mubr.f32.mxu0 0.0
  %6877 = vmatmul.mubr.f32.gmra.mrb[0].mxu0 %v6807
  %v6878 = vpop.f32.mrb[0].mxu0
  %v6879 = vadd.f32 0.0, %v6878
  %v6880 = vpop.f32.mrb[0].mxu0
  %6881 = vdwg.mxu0
  %v6882 = vmul.f32 %v6803, 0.35355338
  %v6883 = vmul.f32 %v6879, 0.35355338
  %v6884 = vadd.f32 %v6882, %v2804
  %v6885 = vadd.f32 %v6883, %v2808
  %v6886 = vsel %vm734, %v6884, -inf
  %6887 = vmax.xlane.f32.xlu0 %v6886
  %v6888 = vpop.xlane.xlu0 %6887
  %v6889 = vsel %vm734, %v6885, -inf
  %6890 = vmax.xlane.f32.xlu0 %v6889
  %v6891 = vpop.xlane.xlu0 %6890
  %v6892 = vsub.f32 %v6884, %v6888
  %v6893 = vsub.f32 %v6885, %v6891
  %v6894 = vmul.f32 %v6892, 1.442695
  %v6895 = vpow.pop %v6894
  %v6896 = vmul.f32 %v6893, 1.442695
  %v6897 = vpow.pop %v6896
  %v6898 = vsel %vm734, %v6895, 0.0
  %6899 = vadd.xlane.f32.xlu0 %v6898
  %v6900 = vpop.xlane.xlu0 %6899
  %v6901 = vsel %vm734, %v6897, 0.0
  %6902 = vadd.xlane.f32.xlu0 %v6901
  %v6903 = vpop.xlane.xlu0 %6902
  %v6904 = vrcp.pop %v6900
  %v6905 = vrcp.pop %v6903
  %v6906 = vmul.f32 %v6895, %v6904
  %v6907 = vmul.f32 %v6897, %v6905
  %6908 = vrot.lane.b32.xlu0 %v6715, 96
  %v6909 = vpop.permute.xlu0 %6908
  %v6912 = vsel %vm734, %v6906, 0
  %6914 = vmatprep.subr.mxu0 0.0
  %6915 = vmatpush1.msra.mxu0 %v6909
  %6916 = vmatprep.subr.mxu0 0.0
  %6917 = vmatpush1.msra.mxu0 0.0
  %6918 = vmatprep.subr.mxu0 0.0
  %6919 = vmatpush1.msra.mxu0 0.0
  %6920 = vmatprep.subr.mxu0 0.0
  %6921 = vmatpush1.msra.mxu0 0.0
  %6922 = vmatprep.subr.mxu0 0.0
  %6923 = vmatpush1.msra.mxu0 0.0
  %6924 = vmatprep.subr.mxu0 0.0
  %6925 = vmatpush1.msra.mxu0 0.0
  %6926 = vmatprep.subr.mxu0 0.0
  %6927 = vmatpush1.msra.mxu0 0.0
  %6928 = vmatprep.subr.mxu0 0.0
  %6929 = vmatpush1.msra.mxu0 0.0
  %6930 = vmatprep.subr.mxu0 0.0
  %6931 = vmatpush1.msra.mxu0 0.0
  %6932 = vmatprep.subr.mxu0 0.0
  %6933 = vmatpush1.msra.mxu0 0.0
  %6934 = vmatprep.subr.mxu0 0.0
  %6935 = vmatpush1.msra.mxu0 0.0
  %6936 = vmatprep.subr.mxu0 0.0
  %6937 = vmatpush1.msra.mxu0 0.0
  %6938 = vmatprep.subr.mxu0 0.0
  %6939 = vmatpush1.msra.mxu0 0.0
  %6940 = vmatprep.subr.mxu0 0.0
  %6941 = vmatpush1.msra.mxu0 0.0
  %6942 = vmatprep.subr.mxu0 0.0
  %6943 = vmatpush1.msra.mxu0 0.0
  %6944 = vmatprep.subr.mxu0 0.0
  %6945 = vmatpush1.msra.mxu0 0.0
  %6946 = vmatprep.subr.mxu0 0.0
  %6947 = vmatpush1.msra.mxu0 0.0
  %6948 = vmatprep.subr.mxu0 0.0
  %6949 = vmatpush1.msra.mxu0 0.0
  %6950 = vmatprep.subr.mxu0 0.0
  %6951 = vmatpush1.msra.mxu0 0.0
  %6952 = vmatprep.subr.mxu0 0.0
  %6953 = vmatpush1.msra.mxu0 0.0
  %6954 = vmatprep.subr.mxu0 0.0
  %6955 = vmatpush1.msra.mxu0 0.0
  %6956 = vmatprep.subr.mxu0 0.0
  %6957 = vmatpush1.msra.mxu0 0.0
  %6958 = vmatprep.subr.mxu0 0.0
  %6959 = vmatpush1.msra.mxu0 0.0
  %6960 = vmatprep.subr.mxu0 0.0
  %6961 = vmatpush1.msra.mxu0 0.0
  %6962 = vmatprep.subr.mxu0 0.0
  %6963 = vmatpush1.msra.mxu0 0.0
  %6964 = vmatprep.subr.mxu0 0.0
  %6965 = vmatpush1.msra.mxu0 0.0
  %6966 = vmatprep.subr.mxu0 0.0
  %6967 = vmatpush1.msra.mxu0 0.0
  %6968 = vmatprep.subr.mxu0 0.0
  %6969 = vmatpush1.msra.mxu0 0.0
  %6970 = vmatprep.subr.mxu0 0.0
  %6971 = vmatpush1.msra.mxu0 0.0
  %6972 = vmatprep.subr.mxu0 0.0
  %6973 = vmatpush1.msra.mxu0 0.0
  %6974 = vmatprep.subr.mxu0 0.0
  %6975 = vmatpush1.msra.mxu0 0.0
  %6976 = vmatprep.subr.mxu0 0.0
  %6977 = vmatpush1.msra.mxu0 0.0
  %6978 = vmatprep.mubr.f32.mxu0 0.0
  %6979 = vmatmul.mubr.f32.gmra.mrb[0].mxu0 %v6912
  %v6980 = vpop.f32.mrb[0].mxu0
  %v6981 = vadd.f32 0.0, %v6980
  %v6982 = vpop.f32.mrb[0].mxu0
  %6983 = vdwg.mxu0
  %6984 = vrot.lane.b32.xlu0 %v6720, 96
  %v6985 = vpop.permute.xlu0 %6984
  %v6988 = vsel %vm734, %v6907, 0
  %6990 = vmatprep.subr.mxu0 0.0
  %6991 = vmatpush1.msra.mxu0 %v6985
  %6992 = vmatprep.subr.mxu0 0.0
  %6993 = vmatpush1.msra.mxu0 0.0
  %6994 = vmatprep.subr.mxu0 0.0
  %6995 = vmatpush1.msra.mxu0 0.0
  %6996 = vmatprep.subr.mxu0 0.0
  %6997 = vmatpush1.msra.mxu0 0.0
  %6998 = vmatprep.subr.mxu0 0.0
  %6999 = vmatpush1.msra.mxu0 0.0
  %7000 = vmatprep.subr.mxu0 0.0
  %7001 = vmatpush1.msra.mxu0 0.0
  %7002 = vmatprep.subr.mxu0 0.0
  %7003 = vmatpush1.msra.mxu0 0.0
  %7004 = vmatprep.subr.mxu0 0.0
  %7005 = vmatpush1.msra.mxu0 0.0
  %7006 = vmatprep.subr.mxu0 0.0
  %7007 = vmatpush1.msra.mxu0 0.0
  %7008 = vmatprep.subr.mxu0 0.0
  %7009 = vmatpush1.msra.mxu0 0.0
  %7010 = vmatprep.subr.mxu0 0.0
  %7011 = vmatpush1.msra.mxu0 0.0
  %7012 = vmatprep.subr.mxu0 0.0
  %7013 = vmatpush1.msra.mxu0 0.0
  %7014 = vmatprep.subr.mxu0 0.0
  %7015 = vmatpush1.msra.mxu0 0.0
  %7016 = vmatprep.subr.mxu0 0.0
  %7017 = vmatpush1.msra.mxu0 0.0
  %7018 = vmatprep.subr.mxu0 0.0
  %7019 = vmatpush1.msra.mxu0 0.0
  %7020 = vmatprep.subr.mxu0 0.0
  %7021 = vmatpush1.msra.mxu0 0.0
  %7022 = vmatprep.subr.mxu0 0.0
  %7023 = vmatpush1.msra.mxu0 0.0
  %7024 = vmatprep.subr.mxu0 0.0
  %7025 = vmatpush1.msra.mxu0 0.0
  %7026 = vmatprep.subr.mxu0 0.0
  %7027 = vmatpush1.msra.mxu0 0.0
  %7028 = vmatprep.subr.mxu0 0.0
  %7029 = vmatpush1.msra.mxu0 0.0
  %7030 = vmatprep.subr.mxu0 0.0
  %7031 = vmatpush1.msra.mxu0 0.0
  %7032 = vmatprep.subr.mxu0 0.0
  %7033 = vmatpush1.msra.mxu0 0.0
  %7034 = vmatprep.subr.mxu0 0.0
  %7035 = vmatpush1.msra.mxu0 0.0
  %7036 = vmatprep.subr.mxu0 0.0
  %7037 = vmatpush1.msra.mxu0 0.0
  %7038 = vmatprep.subr.mxu0 0.0
  %7039 = vmatpush1.msra.mxu0 0.0
  %7040 = vmatprep.subr.mxu0 0.0
  %7041 = vmatpush1.msra.mxu0 0.0
  %7042 = vmatprep.subr.mxu0 0.0
  %7043 = vmatpush1.msra.mxu0 0.0
  %7044 = vmatprep.subr.mxu0 0.0
  %7045 = vmatpush1.msra.mxu0 0.0
  %7046 = vmatprep.subr.mxu0 0.0
  %7047 = vmatpush1.msra.mxu0 0.0
  %7048 = vmatprep.subr.mxu0 0.0
  %7049 = vmatpush1.msra.mxu0 0.0
  %7050 = vmatprep.subr.mxu0 0.0
  %7051 = vmatpush1.msra.mxu0 0.0
  %7052 = vmatprep.subr.mxu0 0.0
  %7053 = vmatpush1.msra.mxu0 0.0
  %7054 = vmatprep.mubr.f32.mxu0 0.0
  %7055 = vmatmul.mubr.f32.gmra.mrb[0].mxu0 %v6988
  %v7056 = vpop.f32.mrb[0].mxu0
  %v7057 = vadd.f32 0.0, %v7056
  %v7058 = vpop.f32.mrb[0].mxu0
  %7059 = vdwg.mxu0
  %7060 = vrot.lane.b32.xlu0 %v6627, 120
  %v7061 = vpop.permute.xlu0 %7060
  %7062 = vrot.lane.b32.xlu0 %v6715, 120
  %v7063 = vpop.permute.xlu0 %7062
  %v7064 = vsel %vm734, %v7061, 0
  %v7066 = vsel %vm734, %v7063, 0
  %7068 = vmatprep.subr.mxu0 0.0
  %7069 = vmatpush1.xpose.msra.mxu0 %v7066
  %7070 = vmatprep.subr.mxu0 0.0
  %7071 = vmatpush1.xpose.msra.mxu0 0.0
  %7072 = vmatprep.subr.mxu0 0.0
  %7073 = vmatpush1.xpose.msra.mxu0 0.0
  %7074 = vmatprep.subr.mxu0 0.0
  %7075 = vmatpush1.xpose.msra.mxu0 0.0
  %7076 = vmatprep.subr.mxu0 0.0
  %7077 = vmatpush1.xpose.msra.mxu0 0.0
  %7078 = vmatprep.subr.mxu0 0.0
  %7079 = vmatpush1.xpose.msra.mxu0 0.0
  %7080 = vmatprep.subr.mxu0 0.0
  %7081 = vmatpush1.xpose.msra.mxu0 0.0
  %7082 = vmatprep.subr.mxu0 0.0
  %7083 = vmatpush1.xpose.msra.mxu0 0.0
  %7084 = vmatprep.subr.mxu0 0.0
  %7085 = vmatpush1.xpose.msra.mxu0 0.0
  %7086 = vmatprep.subr.mxu0 0.0
  %7087 = vmatpush1.xpose.msra.mxu0 0.0
  %7088 = vmatprep.subr.mxu0 0.0
  %7089 = vmatpush1.xpose.msra.mxu0 0.0
  %7090 = vmatprep.subr.mxu0 0.0
  %7091 = vmatpush1.xpose.msra.mxu0 0.0
  %7092 = vmatprep.subr.mxu0 0.0
  %7093 = vmatpush1.xpose.msra.mxu0 0.0
  %7094 = vmatprep.subr.mxu0 0.0
  %7095 = vmatpush1.xpose.msra.mxu0 0.0
  %7096 = vmatprep.subr.mxu0 0.0
  %7097 = vmatpush1.xpose.msra.mxu0 0.0
  %7098 = vmatprep.subr.mxu0 0.0
  %7099 = vmatpush1.xpose.msra.mxu0 0.0
  %7100 = vmatprep.subr.mxu0 0.0
  %7101 = vmatpush1.xpose.msra.mxu0 0.0
  %7102 = vmatprep.subr.mxu0 0.0
  %7103 = vmatpush1.xpose.msra.mxu0 0.0
  %7104 = vmatprep.subr.mxu0 0.0
  %7105 = vmatpush1.xpose.msra.mxu0 0.0
  %7106 = vmatprep.subr.mxu0 0.0
  %7107 = vmatpush1.xpose.msra.mxu0 0.0
  %7108 = vmatprep.subr.mxu0 0.0
  %7109 = vmatpush1.xpose.msra.mxu0 0.0
  %7110 = vmatprep.subr.mxu0 0.0
  %7111 = vmatpush1.xpose.msra.mxu0 0.0
  %7112 = vmatprep.subr.mxu0 0.0
  %7113 = vmatpush1.xpose.msra.mxu0 0.0
  %7114 = vmatprep.subr.mxu0 0.0
  %7115 = vmatpush1.xpose.msra.mxu0 0.0
  %7116 = vmatprep.subr.mxu0 0.0
  %7117 = vmatpush1.xpose.msra.mxu0 0.0
  %7118 = vmatprep.subr.mxu0 0.0
  %7119 = vmatpush1.xpose.msra.mxu0 0.0
  %7120 = vmatprep.subr.mxu0 0.0
  %7121 = vmatpush1.xpose.msra.mxu0 0.0
  %7122 = vmatprep.subr.mxu0 0.0
  %7123 = vmatpush1.xpose.msra.mxu0 0.0
  %7124 = vmatprep.subr.mxu0 0.0
  %7125 = vmatpush1.xpose.msra.mxu0 0.0
  %7126 = vmatprep.subr.mxu0 0.0
  %7127 = vmatpush1.xpose.msra.mxu0 0.0
  %7128 = vmatprep.subr.mxu0 0.0
  %7129 = vmatpush1.xpose.msra.mxu0 0.0
  %7130 = vmatprep.subr.mxu0 0.0
  %7131 = vmatpush1.xpose.msra.mxu0 0.0
  %7132 = vmatprep.mubr.f32.mxu0 0.0
  %7133 = vmatmul.mubr.f32.gmra.mrb[0].mxu0 %v7064
  %v7134 = vpop.f32.mrb[0].mxu0
  %v7135 = vadd.f32 0.0, %v7134
  %v7136 = vpop.f32.mrb[0].mxu0
  %7137 = vdwg.mxu0
  %7138 = vrot.lane.b32.xlu0 %v6632, 120
  %v7139 = vpop.permute.xlu0 %7138
  %7140 = vrot.lane.b32.xlu0 %v6720, 120
  %v7141 = vpop.permute.xlu0 %7140
  %v7142 = vsel %vm734, %v7139, 0
  %v7144 = vsel %vm734, %v7141, 0
  %7146 = vmatprep.subr.mxu0 0.0
  %7147 = vmatpush1.xpose.msra.mxu0 %v7144
  %7148 = vmatprep.subr.mxu0 0.0
  %7149 = vmatpush1.xpose.msra.mxu0 0.0
  %7150 = vmatprep.subr.mxu0 0.0
  %7151 = vmatpush1.xpose.msra.mxu0 0.0
  %7152 = vmatprep.subr.mxu0 0.0
  %7153 = vmatpush1.xpose.msra.mxu0 0.0
  %7154 = vmatprep.subr.mxu0 0.0
  %7155 = vmatpush1.xpose.msra.mxu0 0.0
  %7156 = vmatprep.subr.mxu0 0.0
  %7157 = vmatpush1.xpose.msra.mxu0 0.0
  %7158 = vmatprep.subr.mxu0 0.0
  %7159 = vmatpush1.xpose.msra.mxu0 0.0
  %7160 = vmatprep.subr.mxu0 0.0
  %7161 = vmatpush1.xpose.msra.mxu0 0.0
  %7162 = vmatprep.subr.mxu0 0.0
  %7163 = vmatpush1.xpose.msra.mxu0 0.0
  %7164 = vmatprep.subr.mxu0 0.0
  %7165 = vmatpush1.xpose.msra.mxu0 0.0
  %7166 = vmatprep.subr.mxu0 0.0
  %7167 = vmatpush1.xpose.msra.mxu0 0.0
  %7168 = vmatprep.subr.mxu0 0.0
  %7169 = vmatpush1.xpose.msra.mxu0 0.0
  %7170 = vmatprep.subr.mxu0 0.0
  %7171 = vmatpush1.xpose.msra.mxu0 0.0
  %7172 = vmatprep.subr.mxu0 0.0
  %7173 = vmatpush1.xpose.msra.mxu0 0.0
  %7174 = vmatprep.subr.mxu0 0.0
  %7175 = vmatpush1.xpose.msra.mxu0 0.0
  %7176 = vmatprep.subr.mxu0 0.0
  %7177 = vmatpush1.xpose.msra.mxu0 0.0
  %7178 = vmatprep.subr.mxu0 0.0
  %7179 = vmatpush1.xpose.msra.mxu0 0.0
  %7180 = vmatprep.subr.mxu0 0.0
  %7181 = vmatpush1.xpose.msra.mxu0 0.0
  %7182 = vmatprep.subr.mxu0 0.0
  %7183 = vmatpush1.xpose.msra.mxu0 0.0
  %7184 = vmatprep.subr.mxu0 0.0
  %7185 = vmatpush1.xpose.msra.mxu0 0.0
  %7186 = vmatprep.subr.mxu0 0.0
  %7187 = vmatpush1.xpose.msra.mxu0 0.0
  %7188 = vmatprep.subr.mxu0 0.0
  %7189 = vmatpush1.xpose.msra.mxu0 0.0
  %7190 = vmatprep.subr.mxu0 0.0
  %7191 = vmatpush1.xpose.msra.mxu0 0.0
  %7192 = vmatprep.subr.mxu0 0.0
  %7193 = vmatpush1.xpose.msra.mxu0 0.0
  %7194 = vmatprep.subr.mxu0 0.0
  %7195 = vmatpush1.xpose.msra.mxu0 0.0
  %7196 = vmatprep.subr.mxu0 0.0
  %7197 = vmatpush1.xpose.msra.mxu0 0.0
  %7198 = vmatprep.subr.mxu0 0.0
  %7199 = vmatpush1.xpose.msra.mxu0 0.0
  %7200 = vmatprep.subr.mxu0 0.0
  %7201 = vmatpush1.xpose.msra.mxu0 0.0
  %7202 = vmatprep.subr.mxu0 0.0
  %7203 = vmatpush1.xpose.msra.mxu0 0.0
  %7204 = vmatprep.subr.mxu0 0.0
  %7205 = vmatpush1.xpose.msra.mxu0 0.0
  %7206 = vmatprep.subr.mxu0 0.0
  %7207 = vmatpush1.xpose.msra.mxu0 0.0
  %7208 = vmatprep.subr.mxu0 0.0
  %7209 = vmatpush1.xpose.msra.mxu0 0.0
  %7210 = vmatprep.mubr.f32.mxu0 0.0
  %7211 = vmatmul.mubr.f32.gmra.mrb[0].mxu0 %v7142
  %v7212 = vpop.f32.mrb[0].mxu0
  %v7213 = vadd.f32 0.0, %v7212
  %v7214 = vpop.f32.mrb[0].mxu0
  %7215 = vdwg.mxu0
  %v7216 = vmul.f32 %v7135, 0.35355338
  %v7217 = vmul.f32 %v7213, 0.35355338
  %v7218 = vadd.f32 %v7216, %v2804
  %v7219 = vadd.f32 %v7217, %v2808
  %v7220 = vsel %vm734, %v7218, -inf
  %7221 = vmax.xlane.f32.xlu0 %v7220
  %v7222 = vpop.xlane.xlu0 %7221
  %v7223 = vsel %vm734, %v7219, -inf
  %7224 = vmax.xlane.f32.xlu0 %v7223
  %v7225 = vpop.xlane.xlu0 %7224
  %v7226 = vsub.f32 %v7218, %v7222
  %v7227 = vsub.f32 %v7219, %v7225
  %v7228 = vmul.f32 %v7226, 1.442695
  %v7229 = vpow.pop %v7228
  %v7230 = vmul.f32 %v7227, 1.442695
  %v7231 = vpow.pop %v7230
  %v7232 = vsel %vm734, %v7229, 0.0
  %7233 = vadd.xlane.f32.xlu0 %v7232
  %v7234 = vpop.xlane.xlu0 %7233
  %v7235 = vsel %vm734, %v7231, 0.0
  %7236 = vadd.xlane.f32.xlu0 %v7235
  %v7237 = vpop.xlane.xlu0 %7236
  %v7238 = vrcp.pop %v7234
  %v7239 = vrcp.pop %v7237
  %v7240 = vmul.f32 %v7229, %v7238
  %v7241 = vmul.f32 %v7231, %v7239
  %7242 = vrot.lane.b32.xlu0 %v6715, 88
  %v7243 = vpop.permute.xlu0 %7242
  %v7246 = vsel %vm734, %v7240, 0
  %7248 = vmatprep.subr.mxu0 0.0
  %7249 = vmatpush1.msra.mxu0 %v7243
  %7250 = vmatprep.subr.mxu0 0.0
  %7251 = vmatpush1.msra.mxu0 0.0
  %7252 = vmatprep.subr.mxu0 0.0
  %7253 = vmatpush1.msra.mxu0 0.0
  %7254 = vmatprep.subr.mxu0 0.0
  %7255 = vmatpush1.msra.mxu0 0.0
  %7256 = vmatprep.subr.mxu0 0.0
  %7257 = vmatpush1.msra.mxu0 0.0
  %7258 = vmatprep.subr.mxu0 0.0
  %7259 = vmatpush1.msra.mxu0 0.0
  %7260 = vmatprep.subr.mxu0 0.0
  %7261 = vmatpush1.msra.mxu0 0.0
  %7262 = vmatprep.subr.mxu0 0.0
  %7263 = vmatpush1.msra.mxu0 0.0
  %7264 = vmatprep.subr.mxu0 0.0
  %7265 = vmatpush1.msra.mxu0 0.0
  %7266 = vmatprep.subr.mxu0 0.0
  %7267 = vmatpush1.msra.mxu0 0.0
  %7268 = vmatprep.subr.mxu0 0.0
  %7269 = vmatpush1.msra.mxu0 0.0
  %7270 = vmatprep.subr.mxu0 0.0
  %7271 = vmatpush1.msra.mxu0 0.0
  %7272 = vmatprep.subr.mxu0 0.0
  %7273 = vmatpush1.msra.mxu0 0.0
  %7274 = vmatprep.subr.mxu0 0.0
  %7275 = vmatpush1.msra.mxu0 0.0
  %7276 = vmatprep.subr.mxu0 0.0
  %7277 = vmatpush1.msra.mxu0 0.0
  %7278 = vmatprep.subr.mxu0 0.0
  %7279 = vmatpush1.msra.mxu0 0.0
  %7280 = vmatprep.subr.mxu0 0.0
  %7281 = vmatpush1.msra.mxu0 0.0
  %7282 = vmatprep.subr.mxu0 0.0
  %7283 = vmatpush1.msra.mxu0 0.0
  %7284 = vmatprep.subr.mxu0 0.0
  %7285 = vmatpush1.msra.mxu0 0.0
  %7286 = vmatprep.subr.mxu0 0.0
  %7287 = vmatpush1.msra.mxu0 0.0
  %7288 = vmatprep.subr.mxu0 0.0
  %7289 = vmatpush1.msra.mxu0 0.0
  %7290 = vmatprep.subr.mxu0 0.0
  %7291 = vmatpush1.msra.mxu0 0.0
  %7292 = vmatprep.subr.mxu0 0.0
  %7293 = vmatpush1.msra.mxu0 0.0
  %7294 = vmatprep.subr.mxu0 0.0
  %7295 = vmatpush1.msra.mxu0 0.0
  %7296 = vmatprep.subr.mxu0 0.0
  %7297 = vmatpush1.msra.mxu0 0.0
  %7298 = vmatprep.subr.mxu0 0.0
  %7299 = vmatpush1.msra.mxu0 0.0
  %7300 = vmatprep.subr.mxu0 0.0
  %7301 = vmatpush1.msra.mxu0 0.0
  %7302 = vmatprep.subr.mxu0 0.0
  %7303 = vmatpush1.msra.mxu0 0.0
  %7304 = vmatprep.subr.mxu0 0.0
  %7305 = vmatpush1.msra.mxu0 0.0
  %7306 = vmatprep.subr.mxu0 0.0
  %7307 = vmatpush1.msra.mxu0 0.0
  %7308 = vmatprep.subr.mxu0 0.0
  %7309 = vmatpush1.msra.mxu0 0.0
  %7310 = vmatprep.subr.mxu0 0.0
  %7311 = vmatpush1.msra.mxu0 0.0
  %7312 = vmatprep.mubr.f32.mxu0 0.0
  %7313 = vmatmul.mubr.f32.gmra.mrb[0].mxu0 %v7246
  %v7314 = vpop.f32.mrb[0].mxu0
  %v7315 = vadd.f32 0.0, %v7314
  %v7316 = vpop.f32.mrb[0].mxu0
  %7317 = vdwg.mxu0
  %7318 = vrot.lane.b32.xlu0 %v6720, 88
  %v7319 = vpop.permute.xlu0 %7318
  %v7322 = vsel %vm734, %v7241, 0
  %7324 = vmatprep.subr.mxu0 0.0
  %7325 = vmatpush1.msra.mxu0 %v7319
  %7326 = vmatprep.subr.mxu0 0.0
  %7327 = vmatpush1.msra.mxu0 0.0
  %7328 = vmatprep.subr.mxu0 0.0
  %7329 = vmatpush1.msra.mxu0 0.0
  %7330 = vmatprep.subr.mxu0 0.0
  %7331 = vmatpush1.msra.mxu0 0.0
  %7332 = vmatprep.subr.mxu0 0.0
  %7333 = vmatpush1.msra.mxu0 0.0
  %7334 = vmatprep.subr.mxu0 0.0
  %7335 = vmatpush1.msra.mxu0 0.0
  %7336 = vmatprep.subr.mxu0 0.0
  %7337 = vmatpush1.msra.mxu0 0.0
  %7338 = vmatprep.subr.mxu0 0.0
  %7339 = vmatpush1.msra.mxu0 0.0
  %7340 = vmatprep.subr.mxu0 0.0
  %7341 = vmatpush1.msra.mxu0 0.0
  %7342 = vmatprep.subr.mxu0 0.0
  %7343 = vmatpush1.msra.mxu0 0.0
  %7344 = vmatprep.subr.mxu0 0.0
  %7345 = vmatpush1.msra.mxu0 0.0
  %7346 = vmatprep.subr.mxu0 0.0
  %7347 = vmatpush1.msra.mxu0 0.0
  %7348 = vmatprep.subr.mxu0 0.0
  %7349 = vmatpush1.msra.mxu0 0.0
  %7350 = vmatprep.subr.mxu0 0.0
  %7351 = vmatpush1.msra.mxu0 0.0
  %7352 = vmatprep.subr.mxu0 0.0
  %7353 = vmatpush1.msra.mxu0 0.0
  %7354 = vmatprep.subr.mxu0 0.0
  %7355 = vmatpush1.msra.mxu0 0.0
  %7356 = vmatprep.subr.mxu0 0.0
  %7357 = vmatpush1.msra.mxu0 0.0
  %7358 = vmatprep.subr.mxu0 0.0
  %7359 = vmatpush1.msra.mxu0 0.0
  %7360 = vmatprep.subr.mxu0 0.0
  %7361 = vmatpush1.msra.mxu0 0.0
  %7362 = vmatprep.subr.mxu0 0.0
  %7363 = vmatpush1.msra.mxu0 0.0
  %7364 = vmatprep.subr.mxu0 0.0
  %7365 = vmatpush1.msra.mxu0 0.0
  %7366 = vmatprep.subr.mxu0 0.0
  %7367 = vmatpush1.msra.mxu0 0.0
  %7368 = vmatprep.subr.mxu0 0.0
  %7369 = vmatpush1.msra.mxu0 0.0
  %7370 = vmatprep.subr.mxu0 0.0
  %7371 = vmatpush1.msra.mxu0 0.0
  %7372 = vmatprep.subr.mxu0 0.0
  %7373 = vmatpush1.msra.mxu0 0.0
  %7374 = vmatprep.subr.mxu0 0.0
  %7375 = vmatpush1.msra.mxu0 0.0
  %7376 = vmatprep.subr.mxu0 0.0
  %7377 = vmatpush1.msra.mxu0 0.0
  %7378 = vmatprep.subr.mxu0 0.0
  %7379 = vmatpush1.msra.mxu0 0.0
  %7380 = vmatprep.subr.mxu0 0.0
  %7381 = vmatpush1.msra.mxu0 0.0
  %7382 = vmatprep.subr.mxu0 0.0
  %7383 = vmatpush1.msra.mxu0 0.0
  %7384 = vmatprep.subr.mxu0 0.0
  %7385 = vmatpush1.msra.mxu0 0.0
  %7386 = vmatprep.subr.mxu0 0.0
  %7387 = vmatpush1.msra.mxu0 0.0
  %7388 = vmatprep.mubr.f32.mxu0 0.0
  %7389 = vmatmul.mubr.f32.gmra.mrb[0].mxu0 %v7322
  %v7390 = vpop.f32.mrb[0].mxu0
  %v7391 = vadd.f32 0.0, %v7390
  %v7392 = vpop.f32.mrb[0].mxu0
  %7393 = vdwg.mxu0
  %v7395 = vsel %vm734, %v7315, 0
  %v7398 = vsel %vm734, %v7391, 0
  %7400 = vmatprep.subr.mxu0 0.0
  %7401 = vmatpush1.msra.mxu0 %v6725
  %7402 = vmatprep.subr.mxu0 0.0
  %7403 = vmatpush1.msra.mxu0 0.0
  %7404 = vmatprep.subr.mxu0 0.0
  %7405 = vmatpush1.msra.mxu0 0.0
  %7406 = vmatprep.subr.mxu0 0.0
  %7407 = vmatpush1.msra.mxu0 0.0
  %7408 = vmatprep.subr.mxu0 0.0
  %7409 = vmatpush1.msra.mxu0 0.0
  %7410 = vmatprep.subr.mxu0 0.0
  %7411 = vmatpush1.msra.mxu0 0.0
  %7412 = vmatprep.subr.mxu0 0.0
  %7413 = vmatpush1.msra.mxu0 0.0
  %7414 = vmatprep.subr.mxu0 0.0
  %7415 = vmatpush1.msra.mxu0 0.0
  %7416 = vmatprep.subr.mxu0 0.0
  %7417 = vmatpush1.msra.mxu0 0.0
  %7418 = vmatprep.subr.mxu0 0.0
  %7419 = vmatpush1.msra.mxu0 0.0
  %7420 = vmatprep.subr.mxu0 0.0
  %7421 = vmatpush1.msra.mxu0 0.0
  %7422 = vmatprep.subr.mxu0 0.0
  %7423 = vmatpush1.msra.mxu0 0.0
  %7424 = vmatprep.subr.mxu0 0.0
  %7425 = vmatpush1.msra.mxu0 0.0
  %7426 = vmatprep.subr.mxu0 0.0
  %7427 = vmatpush1.msra.mxu0 0.0
  %7428 = vmatprep.subr.mxu0 0.0
  %7429 = vmatpush1.msra.mxu0 0.0
  %7430 = vmatprep.subr.mxu0 0.0
  %7431 = vmatpush1.msra.mxu0 0.0
  %7432 = vmatprep.subr.mxu0 0.0
  %7433 = vmatpush1.msra.mxu0 0.0
  %7434 = vmatprep.subr.mxu0 0.0
  %7435 = vmatpush1.msra.mxu0 0.0
  %7436 = vmatprep.subr.mxu0 0.0
  %7437 = vmatpush1.msra.mxu0 0.0
  %7438 = vmatprep.subr.mxu0 0.0
  %7439 = vmatpush1.msra.mxu0 0.0
  %7440 = vmatprep.subr.mxu0 0.0
  %7441 = vmatpush1.msra.mxu0 0.0
  %7442 = vmatprep.subr.mxu0 0.0
  %7443 = vmatpush1.msra.mxu0 0.0
  %7444 = vmatprep.subr.mxu0 0.0
  %7445 = vmatpush1.msra.mxu0 0.0
  %7446 = vmatprep.subr.mxu0 0.0
  %7447 = vmatpush1.msra.mxu0 0.0
  %7448 = vmatprep.subr.mxu0 0.0
  %7449 = vmatpush1.msra.mxu0 0.0
  %7450 = vmatprep.subr.mxu0 0.0
  %7451 = vmatpush1.msra.mxu0 0.0
  %7452 = vmatprep.subr.mxu0 0.0
  %7453 = vmatpush1.msra.mxu0 0.0
  %7454 = vmatprep.subr.mxu0 0.0
  %7455 = vmatpush1.msra.mxu0 0.0
  %7456 = vmatprep.subr.mxu0 0.0
  %7457 = vmatpush1.msra.mxu0 0.0
  %7458 = vmatprep.subr.mxu0 0.0
  %7459 = vmatpush1.msra.mxu0 0.0
  %7460 = vmatprep.subr.mxu0 0.0
  %7461 = vmatpush1.msra.mxu0 0.0
  %7462 = vmatprep.subr.mxu0 0.0
  %7463 = vmatpush1.msra.mxu0 0.0
  %7464 = vmatprep.mubr.f32.mxu0 0.0
  %7465 = vmatmul.mubr.f32.gmra.mrb[0].mxu0 %v7395
  %v7466 = vpop.f32.mrb[0].mxu0
  %v7467 = vadd.f32 0.0, %v7466
  %v7468 = vpop.f32.mrb[0].mxu0
  %7469 = vmatprep.mubr.f32.mxu0 0.0
  %7470 = vmatmul.mubr.f32.gmra.mrb[0].mxu0 %v7398
  %v7471 = vpop.f32.mrb[0].mxu0
  %v7472 = vadd.f32 0.0, %v7471
  %v7473 = vpop.f32.mrb[0].mxu0
  %7474 = vdwg.mxu0
  %v7476 = vsel %vm734, %v6981, 0
  %v7479 = vsel %vm734, %v7057, 0
  %7481 = vmatprep.subr.mxu0 0.0
  %7482 = vmatpush1.msra.mxu0 %v6724
  %7483 = vmatprep.subr.mxu0 0.0
  %7484 = vmatpush1.msra.mxu0 0.0
  %7485 = vmatprep.subr.mxu0 0.0
  %7486 = vmatpush1.msra.mxu0 0.0
  %7487 = vmatprep.subr.mxu0 0.0
  %7488 = vmatpush1.msra.mxu0 0.0
  %7489 = vmatprep.subr.mxu0 0.0
  %7490 = vmatpush1.msra.mxu0 0.0
  %7491 = vmatprep.subr.mxu0 0.0
  %7492 = vmatpush1.msra.mxu0 0.0
  %7493 = vmatprep.subr.mxu0 0.0
  %7494 = vmatpush1.msra.mxu0 0.0
  %7495 = vmatprep.subr.mxu0 0.0
  %7496 = vmatpush1.msra.mxu0 0.0
  %7497 = vmatprep.subr.mxu0 0.0
  %7498 = vmatpush1.msra.mxu0 0.0
  %7499 = vmatprep.subr.mxu0 0.0
  %7500 = vmatpush1.msra.mxu0 0.0
  %7501 = vmatprep.subr.mxu0 0.0
  %7502 = vmatpush1.msra.mxu0 0.0
  %7503 = vmatprep.subr.mxu0 0.0
  %7504 = vmatpush1.msra.mxu0 0.0
  %7505 = vmatprep.subr.mxu0 0.0
  %7506 = vmatpush1.msra.mxu0 0.0
  %7507 = vmatprep.subr.mxu0 0.0
  %7508 = vmatpush1.msra.mxu0 0.0
  %7509 = vmatprep.subr.mxu0 0.0
  %7510 = vmatpush1.msra.mxu0 0.0
  %7511 = vmatprep.subr.mxu0 0.0
  %7512 = vmatpush1.msra.mxu0 0.0
  %7513 = vmatprep.subr.mxu0 0.0
  %7514 = vmatpush1.msra.mxu0 0.0
  %7515 = vmatprep.subr.mxu0 0.0
  %7516 = vmatpush1.msra.mxu0 0.0
  %7517 = vmatprep.subr.mxu0 0.0
  %7518 = vmatpush1.msra.mxu0 0.0
  %7519 = vmatprep.subr.mxu0 0.0
  %7520 = vmatpush1.msra.mxu0 0.0
  %7521 = vmatprep.subr.mxu0 0.0
  %7522 = vmatpush1.msra.mxu0 0.0
  %7523 = vmatprep.subr.mxu0 0.0
  %7524 = vmatpush1.msra.mxu0 0.0
  %7525 = vmatprep.subr.mxu0 0.0
  %7526 = vmatpush1.msra.mxu0 0.0
  %7527 = vmatprep.subr.mxu0 0.0
  %7528 = vmatpush1.msra.mxu0 0.0
  %7529 = vmatprep.subr.mxu0 0.0
  %7530 = vmatpush1.msra.mxu0 0.0
  %7531 = vmatprep.subr.mxu0 0.0
  %7532 = vmatpush1.msra.mxu0 0.0
  %7533 = vmatprep.subr.mxu0 0.0
  %7534 = vmatpush1.msra.mxu0 0.0
  %7535 = vmatprep.subr.mxu0 0.0
  %7536 = vmatpush1.msra.mxu0 0.0
  %7537 = vmatprep.subr.mxu0 0.0
  %7538 = vmatpush1.msra.mxu0 0.0
  %7539 = vmatprep.subr.mxu0 0.0
  %7540 = vmatpush1.msra.mxu0 0.0
  %7541 = vmatprep.subr.mxu0 0.0
  %7542 = vmatpush1.msra.mxu0 0.0
  %7543 = vmatprep.subr.mxu0 0.0
  %7544 = vmatpush1.msra.mxu0 0.0
  %7545 = vmatprep.mubr.f32.mxu0 0.0
  %7546 = vmatmul.mubr.f32.gmra.mrb[0].mxu0 %v7476
  %v7547 = vpop.f32.mrb[0].mxu0
  %v7548 = vadd.f32 %v7467, %v7547
  %v7549 = vpop.f32.mrb[0].mxu0
  %7550 = vmatprep.mubr.f32.mxu0 0.0
  %7551 = vmatmul.mubr.f32.gmra.mrb[0].mxu0 %v7479
  %v7552 = vpop.f32.mrb[0].mxu0
  %v7553 = vadd.f32 %v7472, %v7552
  %v7554 = vpop.f32.mrb[0].mxu0
  %7555 = vdwg.mxu0
  %7556 = vrot.lane.b32.xlu0 %v6627, 112
  %v7557 = vpop.permute.xlu0 %7556
  %7558 = vrot.lane.b32.xlu0 %v6715, 112
  %v7559 = vpop.permute.xlu0 %7558
  %v7560 = vsel %vm734, %v7557, 0
  %v7562 = vsel %vm734, %v7559, 0
  %7564 = vmatprep.subr.mxu0 0.0
  %7565 = vmatpush1.xpose.msra.mxu0 %v7562
  %7566 = vmatprep.subr.mxu0 0.0
  %7567 = vmatpush1.xpose.msra.mxu0 0.0
  %7568 = vmatprep.subr.mxu0 0.0
  %7569 = vmatpush1.xpose.msra.mxu0 0.0
  %7570 = vmatprep.subr.mxu0 0.0
  %7571 = vmatpush1.xpose.msra.mxu0 0.0
  %7572 = vmatprep.subr.mxu0 0.0
  %7573 = vmatpush1.xpose.msra.mxu0 0.0
  %7574 = vmatprep.subr.mxu0 0.0
  %7575 = vmatpush1.xpose.msra.mxu0 0.0
  %7576 = vmatprep.subr.mxu0 0.0
  %7577 = vmatpush1.xpose.msra.mxu0 0.0
  %7578 = vmatprep.subr.mxu0 0.0
  %7579 = vmatpush1.xpose.msra.mxu0 0.0
  %7580 = vmatprep.subr.mxu0 0.0
  %7581 = vmatpush1.xpose.msra.mxu0 0.0
  %7582 = vmatprep.subr.mxu0 0.0
  %7583 = vmatpush1.xpose.msra.mxu0 0.0
  %7584 = vmatprep.subr.mxu0 0.0
  %7585 = vmatpush1.xpose.msra.mxu0 0.0
  %7586 = vmatprep.subr.mxu0 0.0
  %7587 = vmatpush1.xpose.msra.mxu0 0.0
  %7588 = vmatprep.subr.mxu0 0.0
  %7589 = vmatpush1.xpose.msra.mxu0 0.0
  %7590 = vmatprep.subr.mxu0 0.0
  %7591 = vmatpush1.xpose.msra.mxu0 0.0
  %7592 = vmatprep.subr.mxu0 0.0
  %7593 = vmatpush1.xpose.msra.mxu0 0.0
  %7594 = vmatprep.subr.mxu0 0.0
  %7595 = vmatpush1.xpose.msra.mxu0 0.0
  %7596 = vmatprep.subr.mxu0 0.0
  %7597 = vmatpush1.xpose.msra.mxu0 0.0
  %7598 = vmatprep.subr.mxu0 0.0
  %7599 = vmatpush1.xpose.msra.mxu0 0.0
  %7600 = vmatprep.subr.mxu0 0.0
  %7601 = vmatpush1.xpose.msra.mxu0 0.0
  %7602 = vmatprep.subr.mxu0 0.0
  %7603 = vmatpush1.xpose.msra.mxu0 0.0
  %7604 = vmatprep.subr.mxu0 0.0
  %7605 = vmatpush1.xpose.msra.mxu0 0.0
  %7606 = vmatprep.subr.mxu0 0.0
  %7607 = vmatpush1.xpose.msra.mxu0 0.0
  %7608 = vmatprep.subr.mxu0 0.0
  %7609 = vmatpush1.xpose.msra.mxu0 0.0
  %7610 = vmatprep.subr.mxu0 0.0
  %7611 = vmatpush1.xpose.msra.mxu0 0.0
  %7612 = vmatprep.subr.mxu0 0.0
  %7613 = vmatpush1.xpose.msra.mxu0 0.0
  %7614 = vmatprep.subr.mxu0 0.0
  %7615 = vmatpush1.xpose.msra.mxu0 0.0
  %7616 = vmatprep.subr.mxu0 0.0
  %7617 = vmatpush1.xpose.msra.mxu0 0.0
  %7618 = vmatprep.subr.mxu0 0.0
  %7619 = vmatpush1.xpose.msra.mxu0 0.0
  %7620 = vmatprep.subr.mxu0 0.0
  %7621 = vmatpush1.xpose.msra.mxu0 0.0
  %7622 = vmatprep.subr.mxu0 0.0
  %7623 = vmatpush1.xpose.msra.mxu0 0.0
  %7624 = vmatprep.subr.mxu0 0.0
  %7625 = vmatpush1.xpose.msra.mxu0 0.0
  %7626 = vmatprep.subr.mxu0 0.0
  %7627 = vmatpush1.xpose.msra.mxu0 0.0
  %7628 = vmatprep.mubr.f32.mxu0 0.0
  %7629 = vmatmul.mubr.f32.gmra.mrb[0].mxu0 %v7560
  %v7630 = vpop.f32.mrb[0].mxu0
  %v7631 = vadd.f32 0.0, %v7630
  %v7632 = vpop.f32.mrb[0].mxu0
  %7633 = vdwg.mxu0
  %7634 = vrot.lane.b32.xlu0 %v6632, 112
  %v7635 = vpop.permute.xlu0 %7634
  %7636 = vrot.lane.b32.xlu0 %v6720, 112
  %v7637 = vpop.permute.xlu0 %7636
  %v7638 = vsel %vm734, %v7635, 0
  %v7640 = vsel %vm734, %v7637, 0
  %7642 = vmatprep.subr.mxu0 0.0
  %7643 = vmatpush1.xpose.msra.mxu0 %v7640
  %7644 = vmatprep.subr.mxu0 0.0
  %7645 = vmatpush1.xpose.msra.mxu0 0.0
  %7646 = vmatprep.subr.mxu0 0.0
  %7647 = vmatpush1.xpose.msra.mxu0 0.0
  %7648 = vmatprep.subr.mxu0 0.0
  %7649 = vmatpush1.xpose.msra.mxu0 0.0
  %7650 = vmatprep.subr.mxu0 0.0
  %7651 = vmatpush1.xpose.msra.mxu0 0.0
  %7652 = vmatprep.subr.mxu0 0.0
  %7653 = vmatpush1.xpose.msra.mxu0 0.0
  %7654 = vmatprep.subr.mxu0 0.0
  %7655 = vmatpush1.xpose.msra.mxu0 0.0
  %7656 = vmatprep.subr.mxu0 0.0
  %7657 = vmatpush1.xpose.msra.mxu0 0.0
  %7658 = vmatprep.subr.mxu0 0.0
  %7659 = vmatpush1.xpose.msra.mxu0 0.0
  %7660 = vmatprep.subr.mxu0 0.0
  %7661 = vmatpush1.xpose.msra.mxu0 0.0
  %7662 = vmatprep.subr.mxu0 0.0
  %7663 = vmatpush1.xpose.msra.mxu0 0.0
  %7664 = vmatprep.subr.mxu0 0.0
  %7665 = vmatpush1.xpose.msra.mxu0 0.0
  %7666 = vmatprep.subr.mxu0 0.0
  %7667 = vmatpush1.xpose.msra.mxu0 0.0
  %7668 = vmatprep.subr.mxu0 0.0
  %7669 = vmatpush1.xpose.msra.mxu0 0.0
  %7670 = vmatprep.subr.mxu0 0.0
  %7671 = vmatpush1.xpose.msra.mxu0 0.0
  %7672 = vmatprep.subr.mxu0 0.0
  %7673 = vmatpush1.xpose.msra.mxu0 0.0
  %7674 = vmatprep.subr.mxu0 0.0
  %7675 = vmatpush1.xpose.msra.mxu0 0.0
  %7676 = vmatprep.subr.mxu0 0.0
  %7677 = vmatpush1.xpose.msra.mxu0 0.0
  %7678 = vmatprep.subr.mxu0 0.0
  %7679 = vmatpush1.xpose.msra.mxu0 0.0
  %7680 = vmatprep.subr.mxu0 0.0
  %7681 = vmatpush1.xpose.msra.mxu0 0.0
  %7682 = vmatprep.subr.mxu0 0.0
  %7683 = vmatpush1.xpose.msra.mxu0 0.0
  %7684 = vmatprep.subr.mxu0 0.0
  %7685 = vmatpush1.xpose.msra.mxu0 0.0
  %7686 = vmatprep.subr.mxu0 0.0
  %7687 = vmatpush1.xpose.msra.mxu0 0.0
  %7688 = vmatprep.subr.mxu0 0.0
  %7689 = vmatpush1.xpose.msra.mxu0 0.0
  %7690 = vmatprep.subr.mxu0 0.0
  %7691 = vmatpush1.xpose.msra.mxu0 0.0
  %7692 = vmatprep.subr.mxu0 0.0
  %7693 = vmatpush1.xpose.msra.mxu0 0.0
  %7694 = vmatprep.subr.mxu0 0.0
  %7695 = vmatpush1.xpose.msra.mxu0 0.0
  %7696 = vmatprep.subr.mxu0 0.0
  %7697 = vmatpush1.xpose.msra.mxu0 0.0
  %7698 = vmatprep.subr.mxu0 0.0
  %7699 = vmatpush1.xpose.msra.mxu0 0.0
  %7700 = vmatprep.subr.mxu0 0.0
  %7701 = vmatpush1.xpose.msra.mxu0 0.0
  %7702 = vmatprep.subr.mxu0 0.0
  %7703 = vmatpush1.xpose.msra.mxu0 0.0
  %7704 = vmatprep.subr.mxu0 0.0
  %7705 = vmatpush1.xpose.msra.mxu0 0.0
  %7706 = vmatprep.mubr.f32.mxu0 0.0
  %7707 = vmatmul.mubr.f32.gmra.mrb[0].mxu0 %v7638
  %v7708 = vpop.f32.mrb[0].mxu0
  %v7709 = vadd.f32 0.0, %v7708
  %v7710 = vpop.f32.mrb[0].mxu0
  %7711 = vdwg.mxu0
  %v7712 = vmul.f32 %v7631, 0.35355338
  %v7713 = vmul.f32 %v7709, 0.35355338
  %v7714 = vadd.f32 %v7712, %v2804
  %v7715 = vadd.f32 %v7713, %v2808
  %v7716 = vsel %vm734, %v7714, -inf
  %7717 = vmax.xlane.f32.xlu0 %v7716
  %v7718 = vpop.xlane.xlu0 %7717
  %v7719 = vsel %vm734, %v7715, -inf
  %7720 = vmax.xlane.f32.xlu0 %v7719
  %v7721 = vpop.xlane.xlu0 %7720
  %v7722 = vsub.f32 %v7714, %v7718
  %v7723 = vsub.f32 %v7715, %v7721
  %v7724 = vmul.f32 %v7722, 1.442695
  %v7725 = vpow.pop %v7724
  %v7726 = vmul.f32 %v7723, 1.442695
  %v7727 = vpow.pop %v7726
  %v7728 = vsel %vm734, %v7725, 0.0
  %7729 = vadd.xlane.f32.xlu0 %v7728
  %v7730 = vpop.xlane.xlu0 %7729
  %v7731 = vsel %vm734, %v7727, 0.0
  %7732 = vadd.xlane.f32.xlu0 %v7731
  %v7733 = vpop.xlane.xlu0 %7732
  %v7734 = vrcp.pop %v7730
  %v7735 = vrcp.pop %v7733
  %v7736 = vmul.f32 %v7725, %v7734
  %v7737 = vmul.f32 %v7727, %v7735
  %7738 = vrot.lane.b32.xlu0 %v6715, 80
  %v7739 = vpop.permute.xlu0 %7738
  %v7742 = vsel %vm734, %v7736, 0
  %7744 = vmatprep.subr.mxu0 0.0
  %7745 = vmatpush1.msra.mxu0 %v7739
  %7746 = vmatprep.subr.mxu0 0.0
  %7747 = vmatpush1.msra.mxu0 0.0
  %7748 = vmatprep.subr.mxu0 0.0
  %7749 = vmatpush1.msra.mxu0 0.0
  %7750 = vmatprep.subr.mxu0 0.0
  %7751 = vmatpush1.msra.mxu0 0.0
  %7752 = vmatprep.subr.mxu0 0.0
  %7753 = vmatpush1.msra.mxu0 0.0
  %7754 = vmatprep.subr.mxu0 0.0
  %7755 = vmatpush1.msra.mxu0 0.0
  %7756 = vmatprep.subr.mxu0 0.0
  %7757 = vmatpush1.msra.mxu0 0.0
  %7758 = vmatprep.subr.mxu0 0.0
  %7759 = vmatpush1.msra.mxu0 0.0
  %7760 = vmatprep.subr.mxu0 0.0
  %7761 = vmatpush1.msra.mxu0 0.0
  %7762 = vmatprep.subr.mxu0 0.0
  %7763 = vmatpush1.msra.mxu0 0.0
  %7764 = vmatprep.subr.mxu0 0.0
  %7765 = vmatpush1.msra.mxu0 0.0
  %7766 = vmatprep.subr.mxu0 0.0
  %7767 = vmatpush1.msra.mxu0 0.0
  %7768 = vmatprep.subr.mxu0 0.0
  %7769 = vmatpush1.msra.mxu0 0.0
  %7770 = vmatprep.subr.mxu0 0.0
  %7771 = vmatpush1.msra.mxu0 0.0
  %7772 = vmatprep.subr.mxu0 0.0
  %7773 = vmatpush1.msra.mxu0 0.0
  %7774 = vmatprep.subr.mxu0 0.0
  %7775 = vmatpush1.msra.mxu0 0.0
  %7776 = vmatprep.subr.mxu0 0.0
  %7777 = vmatpush1.msra.mxu0 0.0
  %7778 = vmatprep.subr.mxu0 0.0
  %7779 = vmatpush1.msra.mxu0 0.0
  %7780 = vmatprep.subr.mxu0 0.0
  %7781 = vmatpush1.msra.mxu0 0.0
  %7782 = vmatprep.subr.mxu0 0.0
  %7783 = vmatpush1.msra.mxu0 0.0
  %7784 = vmatprep.subr.mxu0 0.0
  %7785 = vmatpush1.msra.mxu0 0.0
  %7786 = vmatprep.subr.mxu0 0.0
  %7787 = vmatpush1.msra.mxu0 0.0
  %7788 = vmatprep.subr.mxu0 0.0
  %7789 = vmatpush1.msra.mxu0 0.0
  %7790 = vmatprep.subr.mxu0 0.0
  %7791 = vmatpush1.msra.mxu0 0.0
  %7792 = vmatprep.subr.mxu0 0.0
  %7793 = vmatpush1.msra.mxu0 0.0
  %7794 = vmatprep.subr.mxu0 0.0
  %7795 = vmatpush1.msra.mxu0 0.0
  %7796 = vmatprep.subr.mxu0 0.0
  %7797 = vmatpush1.msra.mxu0 0.0
  %7798 = vmatprep.subr.mxu0 0.0
  %7799 = vmatpush1.msra.mxu0 0.0
  %7800 = vmatprep.subr.mxu0 0.0
  %7801 = vmatpush1.msra.mxu0 0.0
  %7802 = vmatprep.subr.mxu0 0.0
  %7803 = vmatpush1.msra.mxu0 0.0
  %7804 = vmatprep.subr.mxu0 0.0
  %7805 = vmatpush1.msra.mxu0 0.0
  %7806 = vmatprep.subr.mxu0 0.0
  %7807 = vmatpush1.msra.mxu0 0.0
  %7808 = vmatprep.mubr.f32.mxu0 0.0
  %7809 = vmatmul.mubr.f32.gmra.mrb[0].mxu0 %v7742
  %v7810 = vpop.f32.mrb[0].mxu0
  %v7811 = vadd.f32 0.0, %v7810
  %v7812 = vpop.f32.mrb[0].mxu0
  %7813 = vdwg.mxu0
  %7814 = vrot.lane.b32.xlu0 %v6720, 80
  %v7815 = vpop.permute.xlu0 %7814
  %v7818 = vsel %vm734, %v7737, 0
  %7820 = vmatprep.subr.mxu0 0.0
  %7821 = vmatpush1.msra.mxu0 %v7815
  %7822 = vmatprep.subr.mxu0 0.0
  %7823 = vmatpush1.msra.mxu0 0.0
  %7824 = vmatprep.subr.mxu0 0.0
  %7825 = vmatpush1.msra.mxu0 0.0
  %7826 = vmatprep.subr.mxu0 0.0
  %7827 = vmatpush1.msra.mxu0 0.0
  %7828 = vmatprep.subr.mxu0 0.0
  %7829 = vmatpush1.msra.mxu0 0.0
  %7830 = vmatprep.subr.mxu0 0.0
  %7831 = vmatpush1.msra.mxu0 0.0
  %7832 = vmatprep.subr.mxu0 0.0
  %7833 = vmatpush1.msra.mxu0 0.0
  %7834 = vmatprep.subr.mxu0 0.0
  %7835 = vmatpush1.msra.mxu0 0.0
  %7836 = vmatprep.subr.mxu0 0.0
  %7837 = vmatpush1.msra.mxu0 0.0
  %7838 = vmatprep.subr.mxu0 0.0
  %7839 = vmatpush1.msra.mxu0 0.0
  %7840 = vmatprep.subr.mxu0 0.0
  %7841 = vmatpush1.msra.mxu0 0.0
  %7842 = vmatprep.subr.mxu0 0.0
  %7843 = vmatpush1.msra.mxu0 0.0
  %7844 = vmatprep.subr.mxu0 0.0
  %7845 = vmatpush1.msra.mxu0 0.0
  %7846 = vmatprep.subr.mxu0 0.0
  %7847 = vmatpush1.msra.mxu0 0.0
  %7848 = vmatprep.subr.mxu0 0.0
  %7849 = vmatpush1.msra.mxu0 0.0
  %7850 = vmatprep.subr.mxu0 0.0
  %7851 = vmatpush1.msra.mxu0 0.0
  %7852 = vmatprep.subr.mxu0 0.0
  %7853 = vmatpush1.msra.mxu0 0.0
  %7854 = vmatprep.subr.mxu0 0.0
  %7855 = vmatpush1.msra.mxu0 0.0
  %7856 = vmatprep.subr.mxu0 0.0
  %7857 = vmatpush1.msra.mxu0 0.0
  %7858 = vmatprep.subr.mxu0 0.0
  %7859 = vmatpush1.msra.mxu0 0.0
  %7860 = vmatprep.subr.mxu0 0.0
  %7861 = vmatpush1.msra.mxu0 0.0
  %7862 = vmatprep.subr.mxu0 0.0
  %7863 = vmatpush1.msra.mxu0 0.0
  %7864 = vmatprep.subr.mxu0 0.0
  %7865 = vmatpush1.msra.mxu0 0.0
  %7866 = vmatprep.subr.mxu0 0.0
  %7867 = vmatpush1.msra.mxu0 0.0
  %7868 = vmatprep.subr.mxu0 0.0
  %7869 = vmatpush1.msra.mxu0 0.0
  %7870 = vmatprep.subr.mxu0 0.0
  %7871 = vmatpush1.msra.mxu0 0.0
  %7872 = vmatprep.subr.mxu0 0.0
  %7873 = vmatpush1.msra.mxu0 0.0
  %7874 = vmatprep.subr.mxu0 0.0
  %7875 = vmatpush1.msra.mxu0 0.0
  %7876 = vmatprep.subr.mxu0 0.0
  %7877 = vmatpush1.msra.mxu0 0.0
  %7878 = vmatprep.subr.mxu0 0.0
  %7879 = vmatpush1.msra.mxu0 0.0
  %7880 = vmatprep.subr.mxu0 0.0
  %7881 = vmatpush1.msra.mxu0 0.0
  %7882 = vmatprep.subr.mxu0 0.0
  %7883 = vmatpush1.msra.mxu0 0.0
  %7884 = vmatprep.mubr.f32.mxu0 0.0
  %7885 = vmatmul.mubr.f32.gmra.mrb[0].mxu0 %v7818
  %v7886 = vpop.f32.mrb[0].mxu0
  %v7887 = vadd.f32 0.0, %v7886
  %v7888 = vpop.f32.mrb[0].mxu0
  %7889 = vdwg.mxu0
  %v7891 = vsel %vm734, %v7811, 0
  %v7894 = vsel %vm734, %v7887, 0
  %7896 = vmatprep.subr.mxu0 0.0
  %7897 = vmatpush1.msra.mxu0 %v6726
  %7898 = vmatprep.subr.mxu0 0.0
  %7899 = vmatpush1.msra.mxu0 0.0
  %7900 = vmatprep.subr.mxu0 0.0
  %7901 = vmatpush1.msra.mxu0 0.0
  %7902 = vmatprep.subr.mxu0 0.0
  %7903 = vmatpush1.msra.mxu0 0.0
  %7904 = vmatprep.subr.mxu0 0.0
  %7905 = vmatpush1.msra.mxu0 0.0
  %7906 = vmatprep.subr.mxu0 0.0
  %7907 = vmatpush1.msra.mxu0 0.0
  %7908 = vmatprep.subr.mxu0 0.0
  %7909 = vmatpush1.msra.mxu0 0.0
  %7910 = vmatprep.subr.mxu0 0.0
  %7911 = vmatpush1.msra.mxu0 0.0
  %7912 = vmatprep.subr.mxu0 0.0
  %7913 = vmatpush1.msra.mxu0 0.0
  %7914 = vmatprep.subr.mxu0 0.0
  %7915 = vmatpush1.msra.mxu0 0.0
  %7916 = vmatprep.subr.mxu0 0.0
  %7917 = vmatpush1.msra.mxu0 0.0
  %7918 = vmatprep.subr.mxu0 0.0
  %7919 = vmatpush1.msra.mxu0 0.0
  %7920 = vmatprep.subr.mxu0 0.0
  %7921 = vmatpush1.msra.mxu0 0.0
  %7922 = vmatprep.subr.mxu0 0.0
  %7923 = vmatpush1.msra.mxu0 0.0
  %7924 = vmatprep.subr.mxu0 0.0
  %7925 = vmatpush1.msra.mxu0 0.0
  %7926 = vmatprep.subr.mxu0 0.0
  %7927 = vmatpush1.msra.mxu0 0.0
  %7928 = vmatprep.subr.mxu0 0.0
  %7929 = vmatpush1.msra.mxu0 0.0
  %7930 = vmatprep.subr.mxu0 0.0
  %7931 = vmatpush1.msra.mxu0 0.0
  %7932 = vmatprep.subr.mxu0 0.0
  %7933 = vmatpush1.msra.mxu0 0.0
  %7934 = vmatprep.subr.mxu0 0.0
  %7935 = vmatpush1.msra.mxu0 0.0
  %7936 = vmatprep.subr.mxu0 0.0
  %7937 = vmatpush1.msra.mxu0 0.0
  %7938 = vmatprep.subr.mxu0 0.0
  %7939 = vmatpush1.msra.mxu0 0.0
  %7940 = vmatprep.subr.mxu0 0.0
  %7941 = vmatpush1.msra.mxu0 0.0
  %7942 = vmatprep.subr.mxu0 0.0
  %7943 = vmatpush1.msra.mxu0 0.0
  %7944 = vmatprep.subr.mxu0 0.0
  %7945 = vmatpush1.msra.mxu0 0.0
  %7946 = vmatprep.subr.mxu0 0.0
  %7947 = vmatpush1.msra.mxu0 0.0
  %7948 = vmatprep.subr.mxu0 0.0
  %7949 = vmatpush1.msra.mxu0 0.0
  %7950 = vmatprep.subr.mxu0 0.0
  %7951 = vmatpush1.msra.mxu0 0.0
  %7952 = vmatprep.subr.mxu0 0.0
  %7953 = vmatpush1.msra.mxu0 0.0
  %7954 = vmatprep.subr.mxu0 0.0
  %7955 = vmatpush1.msra.mxu0 0.0
  %7956 = vmatprep.subr.mxu0 0.0
  %7957 = vmatpush1.msra.mxu0 0.0
  %7958 = vmatprep.subr.mxu0 0.0
  %7959 = vmatpush1.msra.mxu0 0.0
  %7960 = vmatprep.mubr.f32.mxu0 0.0
  %7961 = vmatmul.mubr.f32.gmra.mrb[0].mxu0 %v7891
  %v7962 = vpop.f32.mrb[0].mxu0
  %v7963 = vadd.f32 0.0, %v7962
  %v7964 = vpop.f32.mrb[0].mxu0
  %7965 = vmatprep.mubr.f32.mxu0 0.0
  %7966 = vmatmul.mubr.f32.gmra.mrb[0].mxu0 %v7894
  %v7967 = vpop.f32.mrb[0].mxu0
  %v7968 = vadd.f32 0.0, %v7967
  %v7969 = vpop.f32.mrb[0].mxu0
  %7970 = vdwg.mxu0
  %v7971 = vadd.f32 %v7548, %v7963
  %v7972 = vadd.f32 %v7553, %v7968
  %7973 = vrot.lane.b32.xlu0 %v6627, 104
  %v7974 = vpop.permute.xlu0 %7973
  %7975 = vrot.lane.b32.xlu0 %v6715, 104
  %v7976 = vpop.permute.xlu0 %7975
  %v7977 = vsel %vm734, %v7974, 0
  %v7979 = vsel %vm734, %v7976, 0
  %7981 = vmatprep.subr.mxu0 0.0
  %7982 = vmatpush1.xpose.msra.mxu0 %v7979
  %7983 = vmatprep.subr.mxu0 0.0
  %7984 = vmatpush1.xpose.msra.mxu0 0.0
  %7985 = vmatprep.subr.mxu0 0.0
  %7986 = vmatpush1.xpose.msra.mxu0 0.0
  %7987 = vmatprep.subr.mxu0 0.0
  %7988 = vmatpush1.xpose.msra.mxu0 0.0
  %7989 = vmatprep.subr.mxu0 0.0
  %7990 = vmatpush1.xpose.msra.mxu0 0.0
  %7991 = vmatprep.subr.mxu0 0.0
  %7992 = vmatpush1.xpose.msra.mxu0 0.0
  %7993 = vmatprep.subr.mxu0 0.0
  %7994 = vmatpush1.xpose.msra.mxu0 0.0
  %7995 = vmatprep.subr.mxu0 0.0
  %7996 = vmatpush1.xpose.msra.mxu0 0.0
  %7997 = vmatprep.subr.mxu0 0.0
  %7998 = vmatpush1.xpose.msra.mxu0 0.0
  %7999 = vmatprep.subr.mxu0 0.0
  %8000 = vmatpush1.xpose.msra.mxu0 0.0
  %8001 = vmatprep.subr.mxu0 0.0
  %8002 = vmatpush1.xpose.msra.mxu0 0.0
  %8003 = vmatprep.subr.mxu0 0.0
  %8004 = vmatpush1.xpose.msra.mxu0 0.0
  %8005 = vmatprep.subr.mxu0 0.0
  %8006 = vmatpush1.xpose.msra.mxu0 0.0
  %8007 = vmatprep.subr.mxu0 0.0
  %8008 = vmatpush1.xpose.msra.mxu0 0.0
  %8009 = vmatprep.subr.mxu0 0.0
  %8010 = vmatpush1.xpose.msra.mxu0 0.0
  %8011 = vmatprep.subr.mxu0 0.0
  %8012 = vmatpush1.xpose.msra.mxu0 0.0
  %8013 = vmatprep.subr.mxu0 0.0
  %8014 = vmatpush1.xpose.msra.mxu0 0.0
  %8015 = vmatprep.subr.mxu0 0.0
  %8016 = vmatpush1.xpose.msra.mxu0 0.0
  %8017 = vmatprep.subr.mxu0 0.0
  %8018 = vmatpush1.xpose.msra.mxu0 0.0
  %8019 = vmatprep.subr.mxu0 0.0
  %8020 = vmatpush1.xpose.msra.mxu0 0.0
  %8021 = vmatprep.subr.mxu0 0.0
  %8022 = vmatpush1.xpose.msra.mxu0 0.0
  %8023 = vmatprep.subr.mxu0 0.0
  %8024 = vmatpush1.xpose.msra.mxu0 0.0
  %8025 = vmatprep.subr.mxu0 0.0
  %8026 = vmatpush1.xpose.msra.mxu0 0.0
  %8027 = vmatprep.subr.mxu0 0.0
  %8028 = vmatpush1.xpose.msra.mxu0 0.0
  %8029 = vmatprep.subr.mxu0 0.0
  %8030 = vmatpush1.xpose.msra.mxu0 0.0
  %8031 = vmatprep.subr.mxu0 0.0
  %8032 = vmatpush1.xpose.msra.mxu0 0.0
  %8033 = vmatprep.subr.mxu0 0.0
  %8034 = vmatpush1.xpose.msra.mxu0 0.0
  %8035 = vmatprep.subr.mxu0 0.0
  %8036 = vmatpush1.xpose.msra.mxu0 0.0
  %8037 = vmatprep.subr.mxu0 0.0
  %8038 = vmatpush1.xpose.msra.mxu0 0.0
  %8039 = vmatprep.subr.mxu0 0.0
  %8040 = vmatpush1.xpose.msra.mxu0 0.0
  %8041 = vmatprep.subr.mxu0 0.0
  %8042 = vmatpush1.xpose.msra.mxu0 0.0
  %8043 = vmatprep.subr.mxu0 0.0
  %8044 = vmatpush1.xpose.msra.mxu0 0.0
  %8045 = vmatprep.mubr.f32.mxu0 0.0
  %8046 = vmatmul.mubr.f32.gmra.mrb[0].mxu0 %v7977
  %v8047 = vpop.f32.mrb[0].mxu0
  %v8048 = vadd.f32 0.0, %v8047
  %v8049 = vpop.f32.mrb[0].mxu0
  %8050 = vdwg.mxu0
  %8051 = vrot.lane.b32.xlu0 %v6632, 104
  %v8052 = vpop.permute.xlu0 %8051
  %8053 = vrot.lane.b32.xlu0 %v6720, 104
  %v8054 = vpop.permute.xlu0 %8053
  %v8055 = vsel %vm734, %v8052, 0
  %v8057 = vsel %vm734, %v8054, 0
  %8059 = vmatprep.subr.mxu0 0.0
  %8060 = vmatpush1.xpose.msra.mxu0 %v8057
  %8061 = vmatprep.subr.mxu0 0.0
  %8062 = vmatpush1.xpose.msra.mxu0 0.0
  %8063 = vmatprep.subr.mxu0 0.0
  %8064 = vmatpush1.xpose.msra.mxu0 0.0
  %8065 = vmatprep.subr.mxu0 0.0
  %8066 = vmatpush1.xpose.msra.mxu0 0.0
  %8067 = vmatprep.subr.mxu0 0.0
  %8068 = vmatpush1.xpose.msra.mxu0 0.0
  %8069 = vmatprep.subr.mxu0 0.0
  %8070 = vmatpush1.xpose.msra.mxu0 0.0
  %8071 = vmatprep.subr.mxu0 0.0
  %8072 = vmatpush1.xpose.msra.mxu0 0.0
  %8073 = vmatprep.subr.mxu0 0.0
  %8074 = vmatpush1.xpose.msra.mxu0 0.0
  %8075 = vmatprep.subr.mxu0 0.0
  %8076 = vmatpush1.xpose.msra.mxu0 0.0
  %8077 = vmatprep.subr.mxu0 0.0
  %8078 = vmatpush1.xpose.msra.mxu0 0.0
  %8079 = vmatprep.subr.mxu0 0.0
  %8080 = vmatpush1.xpose.msra.mxu0 0.0
  %8081 = vmatprep.subr.mxu0 0.0
  %8082 = vmatpush1.xpose.msra.mxu0 0.0
  %8083 = vmatprep.subr.mxu0 0.0
  %8084 = vmatpush1.xpose.msra.mxu0 0.0
  %8085 = vmatprep.subr.mxu0 0.0
  %8086 = vmatpush1.xpose.msra.mxu0 0.0
  %8087 = vmatprep.subr.mxu0 0.0
  %8088 = vmatpush1.xpose.msra.mxu0 0.0
  %8089 = vmatprep.subr.mxu0 0.0
  %8090 = vmatpush1.xpose.msra.mxu0 0.0
  %8091 = vmatprep.subr.mxu0 0.0
  %8092 = vmatpush1.xpose.msra.mxu0 0.0
  %8093 = vmatprep.subr.mxu0 0.0
  %8094 = vmatpush1.xpose.msra.mxu0 0.0
  %8095 = vmatprep.subr.mxu0 0.0
  %8096 = vmatpush1.xpose.msra.mxu0 0.0
  %8097 = vmatprep.subr.mxu0 0.0
  %8098 = vmatpush1.xpose.msra.mxu0 0.0
  %8099 = vmatprep.subr.mxu0 0.0
  %8100 = vmatpush1.xpose.msra.mxu0 0.0
  %8101 = vmatprep.subr.mxu0 0.0
  %8102 = vmatpush1.xpose.msra.mxu0 0.0
  %8103 = vmatprep.subr.mxu0 0.0
  %8104 = vmatpush1.xpose.msra.mxu0 0.0
  %8105 = vmatprep.subr.mxu0 0.0
  %8106 = vmatpush1.xpose.msra.mxu0 0.0
  %8107 = vmatprep.subr.mxu0 0.0
  %8108 = vmatpush1.xpose.msra.mxu0 0.0
  %8109 = vmatprep.subr.mxu0 0.0
  %8110 = vmatpush1.xpose.msra.mxu0 0.0
  %8111 = vmatprep.subr.mxu0 0.0
  %8112 = vmatpush1.xpose.msra.mxu0 0.0
  %8113 = vmatprep.subr.mxu0 0.0
  %8114 = vmatpush1.xpose.msra.mxu0 0.0
  %8115 = vmatprep.subr.mxu0 0.0
  %8116 = vmatpush1.xpose.msra.mxu0 0.0
  %8117 = vmatprep.subr.mxu0 0.0
  %8118 = vmatpush1.xpose.msra.mxu0 0.0
  %8119 = vmatprep.subr.mxu0 0.0
  %8120 = vmatpush1.xpose.msra.mxu0 0.0
  %8121 = vmatprep.subr.mxu0 0.0
  %8122 = vmatpush1.xpose.msra.mxu0 0.0
  %8123 = vmatprep.mubr.f32.mxu0 0.0
  %8124 = vmatmul.mubr.f32.gmra.mrb[0].mxu0 %v8055
  %v8125 = vpop.f32.mrb[0].mxu0
  %v8126 = vadd.f32 0.0, %v8125
  %v8127 = vpop.f32.mrb[0].mxu0
  %8128 = vdwg.mxu0
  %v8129 = vmul.f32 %v8048, 0.35355338
  %v8130 = vmul.f32 %v8126, 0.35355338
  %v8131 = vadd.f32 %v8129, %v2804
  %v8132 = vadd.f32 %v8130, %v2808
  %v8133 = vsel %vm734, %v8131, -inf
  %8134 = vmax.xlane.f32.xlu0 %v8133
  %v8135 = vpop.xlane.xlu0 %8134
  %v8136 = vsel %vm734, %v8132, -inf
  %8137 = vmax.xlane.f32.xlu0 %v8136
  %v8138 = vpop.xlane.xlu0 %8137
  %v8139 = vsub.f32 %v8131, %v8135
  %v8140 = vsub.f32 %v8132, %v8138
  %v8141 = vmul.f32 %v8139, 1.442695
  %v8142 = vpow.pop %v8141
  %v8143 = vmul.f32 %v8140, 1.442695
  %v8144 = vpow.pop %v8143
  %v8145 = vsel %vm734, %v8142, 0.0
  %8146 = vadd.xlane.f32.xlu0 %v8145
  %v8147 = vpop.xlane.xlu0 %8146
  %v8148 = vsel %vm734, %v8144, 0.0
  %8149 = vadd.xlane.f32.xlu0 %v8148
  %v8150 = vpop.xlane.xlu0 %8149
  %v8151 = vrcp.pop %v8147
  %v8152 = vrcp.pop %v8150
  %v8153 = vmul.f32 %v8142, %v8151
  %v8154 = vmul.f32 %v8144, %v8152
  %8155 = vrot.lane.b32.xlu0 %v6715, 72
  %v8156 = vpop.permute.xlu0 %8155
  %v8159 = vsel %vm734, %v8153, 0
  %8161 = vmatprep.subr.mxu0 0.0
  %8162 = vmatpush1.msra.mxu0 %v8156
  %8163 = vmatprep.subr.mxu0 0.0
  %8164 = vmatpush1.msra.mxu0 0.0
  %8165 = vmatprep.subr.mxu0 0.0
  %8166 = vmatpush1.msra.mxu0 0.0
  %8167 = vmatprep.subr.mxu0 0.0
  %8168 = vmatpush1.msra.mxu0 0.0
  %8169 = vmatprep.subr.mxu0 0.0
  %8170 = vmatpush1.msra.mxu0 0.0
  %8171 = vmatprep.subr.mxu0 0.0
  %8172 = vmatpush1.msra.mxu0 0.0
  %8173 = vmatprep.subr.mxu0 0.0
  %8174 = vmatpush1.msra.mxu0 0.0
  %8175 = vmatprep.subr.mxu0 0.0
  %8176 = vmatpush1.msra.mxu0 0.0
  %8177 = vmatprep.subr.mxu0 0.0
  %8178 = vmatpush1.msra.mxu0 0.0
  %8179 = vmatprep.subr.mxu0 0.0
  %8180 = vmatpush1.msra.mxu0 0.0
  %8181 = vmatprep.subr.mxu0 0.0
  %8182 = vmatpush1.msra.mxu0 0.0
  %8183 = vmatprep.subr.mxu0 0.0
  %8184 = vmatpush1.msra.mxu0 0.0
  %8185 = vmatprep.subr.mxu0 0.0
  %8186 = vmatpush1.msra.mxu0 0.0
  %8187 = vmatprep.subr.mxu0 0.0
  %8188 = vmatpush1.msra.mxu0 0.0
  %8189 = vmatprep.subr.mxu0 0.0
  %8190 = vmatpush1.msra.mxu0 0.0
  %8191 = vmatprep.subr.mxu0 0.0
  %8192 = vmatpush1.msra.mxu0 0.0
  %8193 = vmatprep.subr.mxu0 0.0
  %8194 = vmatpush1.msra.mxu0 0.0
  %8195 = vmatprep.subr.mxu0 0.0
  %8196 = vmatpush1.msra.mxu0 0.0
  %8197 = vmatprep.subr.mxu0 0.0
  %8198 = vmatpush1.msra.mxu0 0.0
  %8199 = vmatprep.subr.mxu0 0.0
  %8200 = vmatpush1.msra.mxu0 0.0
  %8201 = vmatprep.subr.mxu0 0.0
  %8202 = vmatpush1.msra.mxu0 0.0
  %8203 = vmatprep.subr.mxu0 0.0
  %8204 = vmatpush1.msra.mxu0 0.0
  %8205 = vmatprep.subr.mxu0 0.0
  %8206 = vmatpush1.msra.mxu0 0.0
  %8207 = vmatprep.subr.mxu0 0.0
  %8208 = vmatpush1.msra.mxu0 0.0
  %8209 = vmatprep.subr.mxu0 0.0
  %8210 = vmatpush1.msra.mxu0 0.0
  %8211 = vmatprep.subr.mxu0 0.0
  %8212 = vmatpush1.msra.mxu0 0.0
  %8213 = vmatprep.subr.mxu0 0.0
  %8214 = vmatpush1.msra.mxu0 0.0
  %8215 = vmatprep.subr.mxu0 0.0
  %8216 = vmatpush1.msra.mxu0 0.0
  %8217 = vmatprep.subr.mxu0 0.0
  %8218 = vmatpush1.msra.mxu0 0.0
  %8219 = vmatprep.subr.mxu0 0.0
  %8220 = vmatpush1.msra.mxu0 0.0
  %8221 = vmatprep.subr.mxu0 0.0
  %8222 = vmatpush1.msra.mxu0 0.0
  %8223 = vmatprep.subr.mxu0 0.0
  %8224 = vmatpush1.msra.mxu0 0.0
  %8225 = vmatprep.mubr.f32.mxu0 0.0
  %8226 = vmatmul.mubr.f32.gmra.mrb[0].mxu0 %v8159
  %v8227 = vpop.f32.mrb[0].mxu0
  %v8228 = vadd.f32 0.0, %v8227
  %v8229 = vpop.f32.mrb[0].mxu0
  %8230 = vdwg.mxu0
  %8231 = vrot.lane.b32.xlu0 %v6720, 72
  %v8232 = vpop.permute.xlu0 %8231
  %v8235 = vsel %vm734, %v8154, 0
  %8237 = vmatprep.subr.mxu0 0.0
  %8238 = vmatpush1.msra.mxu0 %v8232
  %8239 = vmatprep.subr.mxu0 0.0
  %8240 = vmatpush1.msra.mxu0 0.0
  %8241 = vmatprep.subr.mxu0 0.0
  %8242 = vmatpush1.msra.mxu0 0.0
  %8243 = vmatprep.subr.mxu0 0.0
  %8244 = vmatpush1.msra.mxu0 0.0
  %8245 = vmatprep.subr.mxu0 0.0
  %8246 = vmatpush1.msra.mxu0 0.0
  %8247 = vmatprep.subr.mxu0 0.0
  %8248 = vmatpush1.msra.mxu0 0.0
  %8249 = vmatprep.subr.mxu0 0.0
  %8250 = vmatpush1.msra.mxu0 0.0
  %8251 = vmatprep.subr.mxu0 0.0
  %8252 = vmatpush1.msra.mxu0 0.0
  %8253 = vmatprep.subr.mxu0 0.0
  %8254 = vmatpush1.msra.mxu0 0.0
  %8255 = vmatprep.subr.mxu0 0.0
  %8256 = vmatpush1.msra.mxu0 0.0
  %8257 = vmatprep.subr.mxu0 0.0
  %8258 = vmatpush1.msra.mxu0 0.0
  %8259 = vmatprep.subr.mxu0 0.0
  %8260 = vmatpush1.msra.mxu0 0.0
  %8261 = vmatprep.subr.mxu0 0.0
  %8262 = vmatpush1.msra.mxu0 0.0
  %8263 = vmatprep.subr.mxu0 0.0
  %8264 = vmatpush1.msra.mxu0 0.0
  %8265 = vmatprep.subr.mxu0 0.0
  %8266 = vmatpush1.msra.mxu0 0.0
  %8267 = vmatprep.subr.mxu0 0.0
  %8268 = vmatpush1.msra.mxu0 0.0
  %8269 = vmatprep.subr.mxu0 0.0
  %8270 = vmatpush1.msra.mxu0 0.0
  %8271 = vmatprep.subr.mxu0 0.0
  %8272 = vmatpush1.msra.mxu0 0.0
  %8273 = vmatprep.subr.mxu0 0.0
  %8274 = vmatpush1.msra.mxu0 0.0
  %8275 = vmatprep.subr.mxu0 0.0
  %8276 = vmatpush1.msra.mxu0 0.0
  %8277 = vmatprep.subr.mxu0 0.0
  %8278 = vmatpush1.msra.mxu0 0.0
  %8279 = vmatprep.subr.mxu0 0.0
  %8280 = vmatpush1.msra.mxu0 0.0
  %8281 = vmatprep.subr.mxu0 0.0
  %8282 = vmatpush1.msra.mxu0 0.0
  %8283 = vmatprep.subr.mxu0 0.0
  %8284 = vmatpush1.msra.mxu0 0.0
  %8285 = vmatprep.subr.mxu0 0.0
  %8286 = vmatpush1.msra.mxu0 0.0
  %8287 = vmatprep.subr.mxu0 0.0
  %8288 = vmatpush1.msra.mxu0 0.0
  %8289 = vmatprep.subr.mxu0 0.0
  %8290 = vmatpush1.msra.mxu0 0.0
  %8291 = vmatprep.subr.mxu0 0.0
  %8292 = vmatpush1.msra.mxu0 0.0
  %8293 = vmatprep.subr.mxu0 0.0
  %8294 = vmatpush1.msra.mxu0 0.0
  %8295 = vmatprep.subr.mxu0 0.0
  %8296 = vmatpush1.msra.mxu0 0.0
  %8297 = vmatprep.subr.mxu0 0.0
  %8298 = vmatpush1.msra.mxu0 0.0
  %8299 = vmatprep.subr.mxu0 0.0
  %8300 = vmatpush1.msra.mxu0 0.0
  %8301 = vmatprep.mubr.f32.mxu0 0.0
  %8302 = vmatmul.mubr.f32.gmra.mrb[0].mxu0 %v8235
  %v8303 = vpop.f32.mrb[0].mxu0
  %v8304 = vadd.f32 0.0, %v8303
  %v8305 = vpop.f32.mrb[0].mxu0
  %8306 = vdwg.mxu0
  %v8308 = vsel %vm734, %v8228, 0
  %v8311 = vsel %vm734, %v8304, 0
  %8313 = vmatprep.subr.mxu0 0.0
  %8314 = vmatpush1.msra.mxu0 %v6727
  %8315 = vmatprep.subr.mxu0 0.0
  %8316 = vmatpush1.msra.mxu0 0.0
  %8317 = vmatprep.subr.mxu0 0.0
  %8318 = vmatpush1.msra.mxu0 0.0
  %8319 = vmatprep.subr.mxu0 0.0
  %8320 = vmatpush1.msra.mxu0 0.0
  %8321 = vmatprep.subr.mxu0 0.0
  %8322 = vmatpush1.msra.mxu0 0.0
  %8323 = vmatprep.subr.mxu0 0.0
  %8324 = vmatpush1.msra.mxu0 0.0
  %8325 = vmatprep.subr.mxu0 0.0
  %8326 = vmatpush1.msra.mxu0 0.0
  %8327 = vmatprep.subr.mxu0 0.0
  %8328 = vmatpush1.msra.mxu0 0.0
  %8329 = vmatprep.subr.mxu0 0.0
  %8330 = vmatpush1.msra.mxu0 0.0
  %8331 = vmatprep.subr.mxu0 0.0
  %8332 = vmatpush1.msra.mxu0 0.0
  %8333 = vmatprep.subr.mxu0 0.0
  %8334 = vmatpush1.msra.mxu0 0.0
  %8335 = vmatprep.subr.mxu0 0.0
  %8336 = vmatpush1.msra.mxu0 0.0
  %8337 = vmatprep.subr.mxu0 0.0
  %8338 = vmatpush1.msra.mxu0 0.0
  %8339 = vmatprep.subr.mxu0 0.0
  %8340 = vmatpush1.msra.mxu0 0.0
  %8341 = vmatprep.subr.mxu0 0.0
  %8342 = vmatpush1.msra.mxu0 0.0
  %8343 = vmatprep.subr.mxu0 0.0
  %8344 = vmatpush1.msra.mxu0 0.0
  %8345 = vmatprep.subr.mxu0 0.0
  %8346 = vmatpush1.msra.mxu0 0.0
  %8347 = vmatprep.subr.mxu0 0.0
  %8348 = vmatpush1.msra.mxu0 0.0
  %8349 = vmatprep.subr.mxu0 0.0
  %8350 = vmatpush1.msra.mxu0 0.0
  %8351 = vmatprep.subr.mxu0 0.0
  %8352 = vmatpush1.msra.mxu0 0.0
  %8353 = vmatprep.subr.mxu0 0.0
  %8354 = vmatpush1.msra.mxu0 0.0
  %8355 = vmatprep.subr.mxu0 0.0
  %8356 = vmatpush1.msra.mxu0 0.0
  %8357 = vmatprep.subr.mxu0 0.0
  %8358 = vmatpush1.msra.mxu0 0.0
  %8359 = vmatprep.subr.mxu0 0.0
  %8360 = vmatpush1.msra.mxu0 0.0
  %8361 = vmatprep.subr.mxu0 0.0
  %8362 = vmatpush1.msra.mxu0 0.0
  %8363 = vmatprep.subr.mxu0 0.0
  %8364 = vmatpush1.msra.mxu0 0.0
  %8365 = vmatprep.subr.mxu0 0.0
  %8366 = vmatpush1.msra.mxu0 0.0
  %8367 = vmatprep.subr.mxu0 0.0
  %8368 = vmatpush1.msra.mxu0 0.0
  %8369 = vmatprep.subr.mxu0 0.0
  %8370 = vmatpush1.msra.mxu0 0.0
  %8371 = vmatprep.subr.mxu0 0.0
  %8372 = vmatpush1.msra.mxu0 0.0
  %8373 = vmatprep.subr.mxu0 0.0
  %8374 = vmatpush1.msra.mxu0 0.0
  %8375 = vmatprep.subr.mxu0 0.0
  %8376 = vmatpush1.msra.mxu0 0.0
  %8377 = vmatprep.mubr.f32.mxu0 0.0
  %8378 = vmatmul.mubr.f32.gmra.mrb[0].mxu0 %v8308
  %v8379 = vpop.f32.mrb[0].mxu0
  %v8380 = vadd.f32 0.0, %v8379
  %v8381 = vpop.f32.mrb[0].mxu0
  %8382 = vmatprep.mubr.f32.mxu0 0.0
  %8383 = vmatmul.mubr.f32.gmra.mrb[0].mxu0 %v8311
  %v8384 = vpop.f32.mrb[0].mxu0
  %v8385 = vadd.f32 0.0, %v8384
  %v8386 = vpop.f32.mrb[0].mxu0
  %8387 = vdwg.mxu0
  %v8388 = vadd.f32 %v7971, %v8380
  %v8389 = vadd.f32 %v7972, %v8385
  %v8391 = vlaneseq
  %v8392 = vshrl.u32 %v8391, 7
  %v8393 = vsub.s32 0, %v8392
  %v8394 = vrot.slane %v6729, %v8393
  %v8396 = vadd.f32 %v8388, %v8394
  %v8397 = vadd.f32 %v8389, %v8394
  %v8398 = vadd.f32 %v6487, %v8396
  %v8399 = vadd.f32 %v6488, %v8397
  %v8400 = vsel %vm580, %v8398, 0.0
  %8401 = vadd.xlane.f32.xlu0 %v8400
  %v8402 = vpop.xlane.xlu0 %8401
  %v8403 = vsel %vm580, %v8399, 0.0
  %8404 = vadd.xlane.f32.xlu0 %v8403
  %v8405 = vpop.xlane.xlu0 %8404
  %v8406 = vmul.f32 %v8402, %v587
  %v8407 = vmul.f32 %v8405, %v587
  %v8408 = vsub.f32 %v8398, %v8406
  %v8409 = vsub.f32 %v8399, %v8407
  %v8410 = vmul.f32 %v8408, %v8408
  %v8411 = vmul.f32 %v8409, %v8409
  %v8412 = vsel %vm580, %v8410, 0.0
  %8413 = vadd.xlane.f32.xlu0 %v8412
  %v8414 = vpop.xlane.xlu0 %8413
  %v8415 = vsel %vm580, %v8411, 0.0
  %8416 = vadd.xlane.f32.xlu0 %v8415
  %v8417 = vpop.xlane.xlu0 %8416
  %v8418 = vmul.f32 %v8414, 0.032258064
  %v8419 = vmul.f32 %v8417, 0.032258064
  %v8420 = vrsqrt.pop %v8418
  %v8421 = vmul.f32 %v8418, %v8420
  %vm8422 = vcmp.eq.f32.partialorder %v8418, inf
  %v8423 = vsel %vm8422, %v8418, %v8421
  %vm8424 = vcmp.eq.f32.partialorder %v8418, 0.0
  %v8425 = vand.u32 %v8418, 2147483648
  %v8426 = vsel %vm8424, %v8425, %v8423
  %v8427 = vrsqrt.pop %v8419
  %v8428 = vmul.f32 %v8419, %v8427
  %vm8429 = vcmp.eq.f32.partialorder %v8419, inf
  %v8430 = vsel %vm8429, %v8419, %v8428
  %vm8431 = vcmp.eq.f32.partialorder %v8419, 0.0
  %v8432 = vand.u32 %v8419, 2147483648
  %v8433 = vsel %vm8431, %v8432, %v8430
  %v8434 = vlaneseq
  %v8435 = vshrl.u32 %v8434, 7
  %v8436 = vsub.s32 2, %v8435
  %v8437 = vrot.slane %v4661, %v8436
  %v8438 = vmul.f32 %v8437, %v8408
  %v8439 = vmul.f32 %v8437, %v8409
  %v8440 = vadd.f32 %v8426, 1e-06
  %v8441 = vadd.f32 %v8433, 1e-06
  %v8442 = vrcp.pop %v8440
  %v8443 = vrcp.pop %v8441
  %v8444 = vmul.f32 %v8438, %v8442
  %v8445 = vmul.f32 %v8439, %v8443
  %v8446 = vlaneseq
  %v8447 = vshrl.u32 %v8446, 7
  %v8448 = vsub.s32 2, %v8447
  %v8449 = vrot.slane %v4663, %v8448
  %v8450 = vadd.f32 %v8444, %v8449
  %v8451 = vadd.f32 %v8445, %v8449
  %s8452 = scalar_lea.vmem %s51, 48
  %v8453 = vld [vmem:[%s8452] sm:$0xff]
  %v8454 = vld [vmem:[%s8452 + $0x8] sm:$0xff]
  %v8455 = vld [vmem:[%s8452 + $0x10] sm:$0xff]
  %v8456 = vld [vmem:[%s8452 + $0x18] sm:$0xff]
  %v8457 = vld [vmem:[%s8452 + $0x20] sm:$0xff]
  %v8458 = vld [vmem:[%s8452 + $0x28] sm:$0xff]
  %8459 = vmatprep.subr.mxu0 0.0
  %8460 = vmatpush1.msra.mxu0 %v8457
  %8461 = vmatprep.subr.mxu0 0.0
  %8462 = vmatpush1.msra.mxu0 %v8458
  %8463 = vmatprep.subr.mxu0 0.0
  %8464 = vmatpush1.msra.mxu0 0.0
  %8465 = vmatprep.subr.mxu0 0.0
  %8466 = vmatpush1.msra.mxu0 0.0
  %8467 = vmatprep.subr.mxu0 0.0
  %8468 = vmatpush1.msra.mxu0 0.0
  %8469 = vmatprep.subr.mxu0 0.0
  %8470 = vmatpush1.msra.mxu0 0.0
  %8471 = vmatprep.subr.mxu0 0.0
  %8472 = vmatpush1.msra.mxu0 0.0
  %8473 = vmatprep.subr.mxu0 0.0
  %8474 = vmatpush1.msra.mxu0 0.0
  %8475 = vmatprep.subr.mxu0 0.0
  %8476 = vmatpush1.msra.mxu0 0.0
  %8477 = vmatprep.subr.mxu0 0.0
  %8478 = vmatpush1.msra.mxu0 0.0
  %8479 = vmatprep.subr.mxu0 0.0
  %8480 = vmatpush1.msra.mxu0 0.0
  %8481 = vmatprep.subr.mxu0 0.0
  %8482 = vmatpush1.msra.mxu0 0.0
  %8483 = vmatprep.subr.mxu0 0.0
  %8484 = vmatpush1.msra.mxu0 0.0
  %8485 = vmatprep.subr.mxu0 0.0
  %8486 = vmatpush1.msra.mxu0 0.0
  %8487 = vmatprep.subr.mxu0 0.0
  %8488 = vmatpush1.msra.mxu0 0.0
  %8489 = vmatprep.subr.mxu0 0.0
  %8490 = vmatpush1.msra.mxu0 0.0
  %8491 = vmatprep.subr.mxu0 0.0
  %8492 = vmatpush1.msra.mxu0 0.0
  %8493 = vmatprep.subr.mxu0 0.0
  %8494 = vmatpush1.msra.mxu0 0.0
  %8495 = vmatprep.subr.mxu0 0.0
  %8496 = vmatpush1.msra.mxu0 0.0
  %8497 = vmatprep.subr.mxu0 0.0
  %8498 = vmatpush1.msra.mxu0 0.0
  %8499 = vmatprep.subr.mxu0 0.0
  %8500 = vmatpush1.msra.mxu0 0.0
  %8501 = vmatprep.subr.mxu0 0.0
  %8502 = vmatpush1.msra.mxu0 0.0
  %8503 = vmatprep.subr.mxu0 0.0
  %8504 = vmatpush1.msra.mxu0 0.0
  %8505 = vmatprep.subr.mxu0 0.0
  %8506 = vmatpush1.msra.mxu0 0.0
  %8507 = vmatprep.subr.mxu0 0.0
  %8508 = vmatpush1.msra.mxu0 0.0
  %8509 = vmatprep.subr.mxu0 0.0
  %8510 = vmatpush1.msra.mxu0 0.0
  %8511 = vmatprep.subr.mxu0 0.0
  %8512 = vmatpush1.msra.mxu0 0.0
  %8513 = vmatprep.subr.mxu0 0.0
  %8514 = vmatpush1.msra.mxu0 0.0
  %8515 = vmatprep.subr.mxu0 0.0
  %8516 = vmatpush1.msra.mxu0 0.0
  %8517 = vmatprep.subr.mxu0 0.0
  %8518 = vmatpush1.msra.mxu0 0.0
  %8519 = vmatprep.subr.mxu0 0.0
  %8520 = vmatpush1.msra.mxu0 0.0
  %8521 = vmatprep.subr.mxu0 0.0
  %8522 = vmatpush1.msra.mxu0 0.0
  %8523 = vmatprep.mubr.f32.mxu0 0.0
  %8524 = vmatmul.mubr.f32.gmra.mrb[0].mxu0 %v4387
  %v8525 = vpop.f32.mrb[0].mxu0
  %v8526 = vadd.f32 0.0, %v8525
  %v8527 = vpop.f32.mrb[0].mxu0
  %8528 = vmatprep.mubr.f32.mxu0 0.0
  %8529 = vmatmul.mubr.f32.gmra.mrb[0].mxu0 %v4390
  %v8530 = vpop.f32.mrb[0].mxu0
  %v8531 = vadd.f32 0.0, %v8530
  %v8532 = vpop.f32.mrb[0].mxu0
  %8533 = vdwg.mxu0
  %v8535 = vsel %vm580, %v8450, 0
  %v8538 = vsel %vm580, %v8451, 0
  %8540 = vmatprep.subr.mxu0 0.0
  %8541 = vmatpush1.msra.mxu0 %v8453
  %8542 = vmatprep.subr.mxu0 0.0
  %8543 = vmatpush1.msra.mxu0 %v8454
  %8544 = vmatprep.subr.mxu0 0.0
  %8545 = vmatpush1.msra.mxu0 %v8455
  %8546 = vmatprep.subr.mxu0 0.0
  %8547 = vmatpush1.msra.mxu0 %v8456
  %8548 = vmatprep.subr.mxu0 0.0
  %8549 = vmatpush1.msra.mxu0 0.0
  %8550 = vmatprep.subr.mxu0 0.0
  %8551 = vmatpush1.msra.mxu0 0.0
  %8552 = vmatprep.subr.mxu0 0.0
  %8553 = vmatpush1.msra.mxu0 0.0
  %8554 = vmatprep.subr.mxu0 0.0
  %8555 = vmatpush1.msra.mxu0 0.0
  %8556 = vmatprep.subr.mxu0 0.0
  %8557 = vmatpush1.msra.mxu0 0.0
  %8558 = vmatprep.subr.mxu0 0.0
  %8559 = vmatpush1.msra.mxu0 0.0
  %8560 = vmatprep.subr.mxu0 0.0
  %8561 = vmatpush1.msra.mxu0 0.0
  %8562 = vmatprep.subr.mxu0 0.0
  %8563 = vmatpush1.msra.mxu0 0.0
  %8564 = vmatprep.subr.mxu0 0.0
  %8565 = vmatpush1.msra.mxu0 0.0
  %8566 = vmatprep.subr.mxu0 0.0
  %8567 = vmatpush1.msra.mxu0 0.0
  %8568 = vmatprep.subr.mxu0 0.0
  %8569 = vmatpush1.msra.mxu0 0.0
  %8570 = vmatprep.subr.mxu0 0.0
  %8571 = vmatpush1.msra.mxu0 0.0
  %8572 = vmatprep.subr.mxu0 0.0
  %8573 = vmatpush1.msra.mxu0 0.0
  %8574 = vmatprep.subr.mxu0 0.0
  %8575 = vmatpush1.msra.mxu0 0.0
  %8576 = vmatprep.subr.mxu0 0.0
  %8577 = vmatpush1.msra.mxu0 0.0
  %8578 = vmatprep.subr.mxu0 0.0
  %8579 = vmatpush1.msra.mxu0 0.0
  %8580 = vmatprep.subr.mxu0 0.0
  %8581 = vmatpush1.msra.mxu0 0.0
  %8582 = vmatprep.subr.mxu0 0.0
  %8583 = vmatpush1.msra.mxu0 0.0
  %8584 = vmatprep.subr.mxu0 0.0
  %8585 = vmatpush1.msra.mxu0 0.0
  %8586 = vmatprep.subr.mxu0 0.0
  %8587 = vmatpush1.msra.mxu0 0.0
  %8588 = vmatprep.subr.mxu0 0.0
  %8589 = vmatpush1.msra.mxu0 0.0
  %8590 = vmatprep.subr.mxu0 0.0
  %8591 = vmatpush1.msra.mxu0 0.0
  %8592 = vmatprep.subr.mxu0 0.0
  %8593 = vmatpush1.msra.mxu0 0.0
  %8594 = vmatprep.subr.mxu0 0.0
  %8595 = vmatpush1.msra.mxu0 0.0
  %8596 = vmatprep.subr.mxu0 0.0
  %8597 = vmatpush1.msra.mxu0 0.0
  %8598 = vmatprep.subr.mxu0 0.0
  %8599 = vmatpush1.msra.mxu0 0.0
  %8600 = vmatprep.subr.mxu0 0.0
  %8601 = vmatpush1.msra.mxu0 0.0
  %8602 = vmatprep.subr.mxu0 0.0
  %8603 = vmatpush1.msra.mxu0 0.0
  %8604 = vmatprep.mubr.f32.mxu0 0.0
  %8605 = vmatmul.mubr.f32.gmra.mrb[0].mxu0 %v8535
  %v8606 = vpop.f32.mrb[0].mxu0
  %v8607 = vadd.f32 %v8526, %v8606
  %v8608 = vpop.f32.mrb[0].mxu0
  %8609 = vmatprep.mubr.f32.mxu0 0.0
  %8610 = vmatmul.mubr.f32.gmra.mrb[0].mxu0 %v8538
  %v8611 = vpop.f32.mrb[0].mxu0
  %v8612 = vadd.f32 %v8531, %v8611
  %v8613 = vpop.f32.mrb[0].mxu0
  %8614 = vdwg.mxu0
  %s8615 = scalar_lea.vmem %s53, 1
  %v8616 = vld [vmem:[%s8615] sm:$0x1]
  %v8618 = vlaneseq
  %v8619 = vshrl.u32 %v8618, 7
  %v8620 = vsub.s32 0, %v8619
  %v8621 = vrot.slane %v8616, %v8620
  %v8623 = vadd.f32 %v8607, %v8621
  %v8624 = vadd.f32 %v8612, %v8621
  %v8625 = vmax.f32 %v8623, 0.0
  %v8626 = vmax.f32 %v8624, 0.0
  %s8627 = scalar_lea.vmem %s55, 64
  %v8628 = vld [vmem:[%s8627] sm:$0xff]
  %v8629 = vld [vmem:[%s8627 + $0x8] sm:$0xff]
  %v8630 = vld [vmem:[%s8627 + $0x10] sm:$0xff]
  %v8631 = vld [vmem:[%s8627 + $0x18] sm:$0xff]
  %v8632 = vld [vmem:[%s8627 + $0x20] sm:$0xff]
  %v8633 = vld [vmem:[%s8627 + $0x28] sm:$0xff]
  %v8634 = vld [vmem:[%s8627 + $0x30] sm:$0xff]
  %v8635 = vld [vmem:[%s8627 + $0x38] sm:$0xff]
  %v8637 = vsel %vm4567, %v8625, 0
  %v8640 = vsel %vm4567, %v8626, 0
  %8642 = vmatprep.subr.mxu0 0.0
  %8643 = vmatpush1.msra.mxu0 %v8628
  %8644 = vmatprep.subr.mxu0 0.0
  %8645 = vmatpush1.msra.mxu0 %v8629
  %8646 = vmatprep.subr.mxu0 0.0
  %8647 = vmatpush1.msra.mxu0 %v8630
  %8648 = vmatprep.subr.mxu0 0.0
  %8649 = vmatpush1.msra.mxu0 %v8631
  %8650 = vmatprep.subr.mxu0 0.0
  %8651 = vmatpush1.msra.mxu0 %v8632
  %8652 = vmatprep.subr.mxu0 0.0
  %8653 = vmatpush1.msra.mxu0 %v8633
  %8654 = vmatprep.subr.mxu0 0.0
  %8655 = vmatpush1.msra.mxu0 %v8634
  %8656 = vmatprep.subr.mxu0 0.0
  %8657 = vmatpush1.msra.mxu0 %v8635
  %8658 = vmatprep.subr.mxu0 0.0
  %8659 = vmatpush1.msra.mxu0 0.0
  %8660 = vmatprep.subr.mxu0 0.0
  %8661 = vmatpush1.msra.mxu0 0.0
  %8662 = vmatprep.subr.mxu0 0.0
  %8663 = vmatpush1.msra.mxu0 0.0
  %8664 = vmatprep.subr.mxu0 0.0
  %8665 = vmatpush1.msra.mxu0 0.0
  %8666 = vmatprep.subr.mxu0 0.0
  %8667 = vmatpush1.msra.mxu0 0.0
  %8668 = vmatprep.subr.mxu0 0.0
  %8669 = vmatpush1.msra.mxu0 0.0
  %8670 = vmatprep.subr.mxu0 0.0
  %8671 = vmatpush1.msra.mxu0 0.0
  %8672 = vmatprep.subr.mxu0 0.0
  %8673 = vmatpush1.msra.mxu0 0.0
  %8674 = vmatprep.subr.mxu0 0.0
  %8675 = vmatpush1.msra.mxu0 0.0
  %8676 = vmatprep.subr.mxu0 0.0
  %8677 = vmatpush1.msra.mxu0 0.0
  %8678 = vmatprep.subr.mxu0 0.0
  %8679 = vmatpush1.msra.mxu0 0.0
  %8680 = vmatprep.subr.mxu0 0.0
  %8681 = vmatpush1.msra.mxu0 0.0
  %8682 = vmatprep.subr.mxu0 0.0
  %8683 = vmatpush1.msra.mxu0 0.0
  %8684 = vmatprep.subr.mxu0 0.0
  %8685 = vmatpush1.msra.mxu0 0.0
  %8686 = vmatprep.subr.mxu0 0.0
  %8687 = vmatpush1.msra.mxu0 0.0
  %8688 = vmatprep.subr.mxu0 0.0
  %8689 = vmatpush1.msra.mxu0 0.0
  %8690 = vmatprep.subr.mxu0 0.0
  %8691 = vmatpush1.msra.mxu0 0.0
  %8692 = vmatprep.subr.mxu0 0.0
  %8693 = vmatpush1.msra.mxu0 0.0
  %8694 = vmatprep.subr.mxu0 0.0
  %8695 = vmatpush1.msra.mxu0 0.0
  %8696 = vmatprep.subr.mxu0 0.0
  %8697 = vmatpush1.msra.mxu0 0.0
  %8698 = vmatprep.subr.mxu0 0.0
  %8699 = vmatpush1.msra.mxu0 0.0
  %8700 = vmatprep.subr.mxu0 0.0
  %8701 = vmatpush1.msra.mxu0 0.0
  %8702 = vmatprep.subr.mxu0 0.0
  %8703 = vmatpush1.msra.mxu0 0.0
  %8704 = vmatprep.subr.mxu0 0.0
  %8705 = vmatpush1.msra.mxu0 0.0
  %8706 = vmatprep.mubr.f32.mxu0 0.0
  %8707 = vmatmul.mubr.f32.gmra.mrb[0].mxu0 %v8637
  %v8708 = vpop.f32.mrb[0].mxu0
  %v8709 = vadd.f32 0.0, %v8708
  %v8710 = vpop.f32.mrb[0].mxu0
  %8711 = vmatprep.mubr.f32.mxu0 0.0
  %8712 = vmatmul.mubr.f32.gmra.mrb[0].mxu0 %v8640
  %v8713 = vpop.f32.mrb[0].mxu0
  %v8714 = vadd.f32 0.0, %v8713
  %v8715 = vpop.f32.mrb[0].mxu0
  %8716 = vdwg.mxu0
  %v8717 = vadd.f32 %v8398, %v8709
  %v8718 = vadd.f32 %v8399, %v8714
  %s8719 = scalar_lea.vmem %s57, 1
  %v8720 = vld [vmem:[%s8719] sm:$0x1]
  %v8722 = vlaneseq
  %v8723 = vshrl.u32 %v8722, 7
  %v8724 = vsub.s32 0, %v8723
  %v8725 = vrot.slane %v8720, %v8724
  %v8727 = vadd.f32 %v8717, %v8725
  %v8728 = vadd.f32 %v8718, %v8725
  %v8729 = vld [vmem:[%s23] sm:$0x1]
  %v8730 = vld [vmem:[%s25] sm:$0x1]
  %v8731 = vsel %vm580, %v8727, 0.0
  %8732 = vadd.xlane.f32.xlu0 %v8731
  %v8733 = vpop.xlane.xlu0 %8732
  %v8734 = vsel %vm580, %v8728, 0.0
  %8735 = vadd.xlane.f32.xlu0 %v8734
  %v8736 = vpop.xlane.xlu0 %8735
  %v8737 = vmul.f32 %v8733, %v587
  %v8738 = vmul.f32 %v8736, %v587
  %v8739 = vsub.f32 %v8727, %v8737
  %v8740 = vsub.f32 %v8728, %v8738
  %v8741 = vmul.f32 %v8739, %v8739
  %v8742 = vmul.f32 %v8740, %v8740
  %v8743 = vsel %vm580, %v8741, 0.0
  %8744 = vadd.xlane.f32.xlu0 %v8743
  %v8745 = vpop.xlane.xlu0 %8744
  %v8746 = vsel %vm580, %v8742, 0.0
  %8747 = vadd.xlane.f32.xlu0 %v8746
  %v8748 = vpop.xlane.xlu0 %8747
  %v8749 = vmul.f32 %v8745, 0.032258064
  %v8750 = vmul.f32 %v8748, 0.032258064
  %v8751 = vrsqrt.pop %v8749
  %v8752 = vmul.f32 %v8749, %v8751
  %vm8753 = vcmp.eq.f32.partialorder %v8749, inf
  %v8754 = vsel %vm8753, %v8749, %v8752
  %vm8755 = vcmp.eq.f32.partialorder %v8749, 0.0
  %v8756 = vand.u32 %v8749, 2147483648
  %v8757 = vsel %vm8755, %v8756, %v8754
  %v8758 = vrsqrt.pop %v8750
  %v8759 = vmul.f32 %v8750, %v8758
  %vm8760 = vcmp.eq.f32.partialorder %v8750, inf
  %v8761 = vsel %vm8760, %v8750, %v8759
  %vm8762 = vcmp.eq.f32.partialorder %v8750, 0.0
  %v8763 = vand.u32 %v8750, 2147483648
  %v8764 = vsel %vm8762, %v8763, %v8761
  %v8766 = vlaneseq
  %v8767 = vshrl.u32 %v8766, 7
  %v8768 = vsub.s32 0, %v8767
  %v8769 = vrot.slane %v8729, %v8768
  %v8771 = vmul.f32 %v8769, %v8739
  %v8772 = vmul.f32 %v8769, %v8740
  %v8773 = vadd.f32 %v8757, 1e-06
  %v8774 = vadd.f32 %v8764, 1e-06
  %v8775 = vrcp.pop %v8773
  %v8776 = vrcp.pop %v8774
  %v8777 = vmul.f32 %v8771, %v8775
  %v8778 = vmul.f32 %v8772, %v8776
  %v8780 = vlaneseq
  %v8781 = vshrl.u32 %v8780, 7
  %v8782 = vsub.s32 0, %v8781
  %v8783 = vrot.slane %v8730, %v8782
  %v8785 = vadd.f32 %v8777, %v8783
  %v8786 = vadd.f32 %v8778, %v8783
  %v8787 = vld [vmem:[%s19] sm:$0xff]
  %v8788 = vld [vmem:[%s19 + $0x8] sm:$0xff]
  %v8789 = vld [vmem:[%s19 + $0x10] sm:$0xff]
  %v8790 = vld [vmem:[%s19 + $0x18] sm:$0xff]
  %v8791 = vld [vmem:[%s21] sm:$0x1]
  %v8793 = vlaneseq
  %v8794 = vshrl.u32 %v8793, 7
  %v8795 = vsub.s32 0, %v8794
  %v8796 = vrot.slane %v8791, %v8795
  %v8799 = vsel %vm580, %v8785, 0
  %v8802 = vsel %vm580, %v8786, 0
  %8804 = vmatprep.subr.mxu0 0.0
  %8805 = vmatpush1.msra.mxu0 %v8787
  %8806 = vmatprep.subr.mxu0 0.0
  %8807 = vmatpush1.msra.mxu0 %v8788
  %8808 = vmatprep.subr.mxu0 0.0
  %8809 = vmatpush1.msra.mxu0 %v8789
  %8810 = vmatprep.subr.mxu0 0.0
  %8811 = vmatpush1.msra.mxu0 %v8790
  %8812 = vmatprep.subr.mxu0 0.0
  %8813 = vmatpush1.msra.mxu0 0.0
  %8814 = vmatprep.subr.mxu0 0.0
  %8815 = vmatpush1.msra.mxu0 0.0
  %8816 = vmatprep.subr.mxu0 0.0
  %8817 = vmatpush1.msra.mxu0 0.0
  %8818 = vmatprep.subr.mxu0 0.0
  %8819 = vmatpush1.msra.mxu0 0.0
  %8820 = vmatprep.subr.mxu0 0.0
  %8821 = vmatpush1.msra.mxu0 0.0
  %8822 = vmatprep.subr.mxu0 0.0
  %8823 = vmatpush1.msra.mxu0 0.0
  %8824 = vmatprep.subr.mxu0 0.0
  %8825 = vmatpush1.msra.mxu0 0.0
  %8826 = vmatprep.subr.mxu0 0.0
  %8827 = vmatpush1.msra.mxu0 0.0
  %8828 = vmatprep.subr.mxu0 0.0
  %8829 = vmatpush1.msra.mxu0 0.0
  %8830 = vmatprep.subr.mxu0 0.0
  %8831 = vmatpush1.msra.mxu0 0.0
  %8832 = vmatprep.subr.mxu0 0.0
  %8833 = vmatpush1.msra.mxu0 0.0
  %8834 = vmatprep.subr.mxu0 0.0
  %8835 = vmatpush1.msra.mxu0 0.0
  %8836 = vmatprep.subr.mxu0 0.0
  %8837 = vmatpush1.msra.mxu0 0.0
  %8838 = vmatprep.subr.mxu0 0.0
  %8839 = vmatpush1.msra.mxu0 0.0
  %8840 = vmatprep.subr.mxu0 0.0
  %8841 = vmatpush1.msra.mxu0 0.0
  %8842 = vmatprep.subr.mxu0 0.0
  %8843 = vmatpush1.msra.mxu0 0.0
  %8844 = vmatprep.subr.mxu0 0.0
  %8845 = vmatpush1.msra.mxu0 0.0
  %8846 = vmatprep.subr.mxu0 0.0
  %8847 = vmatpush1.msra.mxu0 0.0
  %8848 = vmatprep.subr.mxu0 0.0
  %8849 = vmatpush1.msra.mxu0 0.0
  %8850 = vmatprep.subr.mxu0 0.0
  %8851 = vmatpush1.msra.mxu0 0.0
  %8852 = vmatprep.subr.mxu0 0.0
  %8853 = vmatpush1.msra.mxu0 0.0
  %8854 = vmatprep.subr.mxu0 0.0
  %8855 = vmatpush1.msra.mxu0 0.0
  %8856 = vmatprep.subr.mxu0 0.0
  %8857 = vmatpush1.msra.mxu0 0.0
  %8858 = vmatprep.subr.mxu0 0.0
  %8859 = vmatpush1.msra.mxu0 0.0
  %8860 = vmatprep.subr.mxu0 0.0
  %8861 = vmatpush1.msra.mxu0 0.0
  %8862 = vmatprep.subr.mxu0 0.0
  %8863 = vmatpush1.msra.mxu0 0.0
  %8864 = vmatprep.subr.mxu0 0.0
  %8865 = vmatpush1.msra.mxu0 0.0
  %8866 = vmatprep.subr.mxu0 0.0
  %8867 = vmatpush1.msra.mxu0 0.0
  %8868 = vmatprep.mubr.f32.mxu0 0.0
  %8869 = vmatmul.mubr.f32.gmra.mrb[0].mxu0 %v8799
  %v8870 = vpop.f32.mrb[0].mxu0
  %v8871 = vadd.f32 %v8796, %v8870
  %v8872 = vpop.f32.mrb[0].mxu0
  %8873 = vmatprep.mubr.f32.mxu0 0.0
  %8874 = vmatmul.mubr.f32.gmra.mrb[0].mxu0 %v8802
  %v8875 = vpop.f32.mrb[0].mxu0
  %v8876 = vadd.f32 %v8796, %v8875
  %v8877 = vpop.f32.mrb[0].mxu0
  %8878 = vdwg.mxu0
  %vm8879 = vcmask 31744
  %8880 = vst.msk [vmem:[%s59] sm:$0xff] %vm8879, %v8871
  %8881 = vst.msk [vmem:[%s59 + $0x8] sm:$0xff] %vm8879, %v8876
  // Predicated region
  $region118: #{decoder_y_forward.1} parent=0 // pred_check
    _
  $region119: #{decoder_y_forward.1} parent=0 // pred_check_branch
    %8883 = sbr.rel (0) target = $region121
  $region120: #{decoder_y_forward.1} parent=0 // pred_region
    _
  $region121: #{decoder_y_forward.1} parent=0 // pred_fallthru
    _
  // Predicated region
  $region122: #{decoder_y_forward.1} parent=0 // pred_check
    _
  $region123: #{decoder_y_forward.1} parent=0 // pred_check_branch
    %8885 = sbr.rel (0) target = $region125
  $region124: #{decoder_y_forward.1} parent=0 // pred_region
    _
  $region125: #{decoder_y_forward.1} parent=0 // pred_fallthru
    _

</llo_original>
